<compile_context>
chip_gen: v7x
topology: tpu7x:2x2x1
jax: 0.10.0
libtpu: 0.0.40
codegen_flags: <defaults>
</compile_context>

<pallas_src>
import functools
import math

import numpy as np
import jax
import jax.numpy as jnp
from jax import lax
from jax.experimental import pallas as pl
from jax.experimental.pallas import tpu as pltpu

F32 = jnp.float32
EPS = 1e-5
SEARCH_SPACE = ('none', 'skip_connect', 'nor_conv_1x1', 'nor_conv_3x3', 'avg_pool_3x3')


def _vmem():
    return pl.BlockSpec(memory_space=pltpu.MemorySpace.VMEM)


def _smem():
    return pl.BlockSpec(memory_space=pltpu.MemorySpace.SMEM)


# ---------------------------------------------------------------------------
# trace-time constant tables (tiny, numpy, cached per shape)
# ---------------------------------------------------------------------------
@functools.lru_cache(maxsize=None)
def _tap_tables(n, h, w):
    # (9, M) tap-validity mask + (1, M) reciprocal valid-neighbour count
    # (count_include_pad=False) for an (n, h, w) map flattened to M = n*h*w lanes.
    m = n * h * w
    r = np.arange(m)
    y = (r // w) % h
    x = r % w
    rows = []
    for dy in (-1, 0, 1):
        for dx in (-1, 0, 1):
            yy, xx = y + dy, x + dx
            rows.append((yy >= 0) & (yy < h) & (xx >= 0) & (xx < w))
    mask = np.stack(rows, axis=0).astype(np.float32)               # (9, M)
    inv = (1.0 / mask.sum(axis=0, keepdims=True)).astype(np.float32)
    return mask, inv


@functools.lru_cache(maxsize=None)
def _stride2_matrix(n, h, w):
    # (M_in, M_out) 0/1 column-selection matrix picking the stride-2 centres.
    ho, wo = h // 2, w // 2
    s = np.zeros((n * h * w, n * ho * wo), np.float32)
    for ni in range(n):
        for yo in range(ho):
            for xo in range(wo):
                s[(ni * h + 2 * yo) * w + 2 * xo, (ni * ho + yo) * wo + xo] = 1.0
    return s


@functools.lru_cache(maxsize=None)
def _gap_matrix(n, hw):
    # (M, n) per-image global-average-pool matrix.
    p = np.zeros((n * hw, n), np.float32)
    for ni in range(n):
        p[ni * hw:(ni + 1) * hw, ni] = 1.0 / hw
    return p


# ---------------------------------------------------------------------------
# parameter re-layout for the fused kernel (run ONCE, outside jit)
# ---------------------------------------------------------------------------
def _flip3x3(w):
    # (3, 3, cin, cout) HWIO -> (cout, 9*cin); column index = tap*cin + ci.
    cout, cin = w.shape[3], w.shape[2]
    return jnp.transpose(w, (3, 0, 1, 2)).reshape(cout, 9 * cin)


def _embed1x1(w1):
    # (cin, cout) 1x1 conv -> (cout, 9*cin) with the weights on the centre-tap
    # columns (the ReLU'd centre tap equals ReLU(node), so folding is exact).
    cin, cout = w1.shape
    e = jnp.zeros((cout, 9 * cin), F32)
    return e.at[:, 4 * cin:5 * cin].set(jnp.transpose(w1))


def pack_params(params, meta):
    mx = meta['max_nodes']
    packed = {
        'stem_w': _flip3x3(params['stem']['w']),
        'stem_g': params['stem']['gamma'].reshape(-1, 1),
        'stem_b': params['stem']['beta'].reshape(-1, 1),
        'la_g': params['lastact']['gamma'].reshape(-1, 1),
        'la_b': params['lastact']['beta'].reshape(-1, 1),
        'cls_w': jnp.transpose(params['cls_w']),          # (ncls, C_prev)
        'cls_b': params['cls_b'].reshape(-1, 1),
        'cells': [],
    }
    for cell, ctype in zip(params['cells'], meta['cell_types']):
        if ctype == 'search':
            srcs = []
            for s in range(mx - 1):
                dests = list(range(s + 1, mx))
                eds = [cell['edges']['{:}<-{:}'.format(i, s)] for i in dests]
                # rows: [3x3 blocks of every outgoing edge] then [folded 1x1 blocks]
                w = jnp.concatenate([_flip3x3(e['c3']['w']) for e in eds]
                                    + [_embed1x1(e['c1']['w']) for e in eds], axis=0)
                g = jnp.concatenate([e['c3']['gamma'] for e in eds]
                                    + [e['c1']['gamma'] for e in eds]).reshape(-1, 1)
                b = jnp.concatenate([e['c3']['beta'] for e in eds]
                                    + [e['c1']['beta'] for e in eds]).reshape(-1, 1)
                srcs.append({'w': w, 'g': g, 'b': b})
            packed['cells'].append({'srcs': srcs})
        else:
            packed['cells'].append({
                'wa': _flip3x3(cell['conv_a']['w']),
                'ga': cell['conv_a']['gamma'].reshape(-1, 1),
                'ba': cell['conv_a']['beta'].reshape(-1, 1),
                'wb': _flip3x3(cell['conv_b']['w']),
                'gb': cell['conv_b']['gamma'].reshape(-1, 1),
                'bb': cell['conv_b']['beta'].reshape(-1, 1),
                'wd': jnp.transpose(cell['down_w']),       # (cout, cin)
            })
    return packed


# ---------------------------------------------------------------------------
# fused forward (one pallas_call)
# ---------------------------------------------------------------------------
def tiny_network_setn_forward(packed, arch_params, x_nchw, meta):
    # TODO(synk): 'urs'/'select'/'dynamic' cell modes use torch.multinomial /
    # random architecture sampling and are not reproduced (deterministic 'joint'
    # mode only).  BatchNorm uses training-mode batch statistics.
    n, cin0, h0, w0 = x_nchw.shape
    mx = meta['max_nodes']
    cell_types = meta['cell_types']
    e2i = meta['edge2index']
    ss = list(meta['search_space'])
    col_skip = ss.index('skip_connect')
    col_c1 = ss.index('nor_conv_1x1')
    col_c3 = ss.index('nor_conv_3x3')
    col_pool = ss.index('avg_pool_3x3')

    # wrapper-side glue: arch softmax + NCHW -> (C, N*H*W) flip
    alphas = jax.nn.softmax(arch_params.astype(F32), axis=-1)
    x_fl = jnp.transpose(x_nchw.astype(F32), (1, 0, 2, 3)).reshape(cin0, n * h0 * w0)

    # ---- static plan -------------------------------------------------------
    n_red = sum(1 for t in cell_types if t == 'resnet')
    res = [(h0 >> j, w0 >> j) for j in range(n_red + 1)]
    for j in range(n_red):
        assert res[j][0] % 2 == 0 and res[j][1] % 2 == 0, \
            "reduction cells require even spatial dims"

    plan, ri = [], 0
    for cell, ctype in zip(packed['cells'], cell_types):
        if ctype == 'search':
            c = cell['srcs'][0]['w'].shape[0] // (2 * (mx - 1))
            plan.append(('search', c, ri))
        else:
            plan.append(('resnet', (cell['wa'].shape[1] // 9, cell['wa'].shape[0]), ri))
            ri += 1
    c_last = packed['cls_w'].shape[1]
    ncls = packed['cls_w'].shape[0]
    hw_last = res[-1][0] * res[-1][1]

    # compile-time constant tables
    masks = [jnp.asarray(_tap_tables(n, hh, ww)[0]) for (hh, ww) in res]
    invs = [jnp.asarray(_tap_tables(n, hh, ww)[1]) for (hh, ww) in res]
    s2s = [jnp.asarray(_stride2_matrix(n, res[j][0], res[j][1])) for j in range(n_red)]
    gap = jnp.asarray(_gap_matrix(n, hw_last))

    # ---- canonical argument order (the kernel consumes refs in this order) --
    args = [alphas, x_fl]
    for j in range(n_red + 1):
        args += [masks[j], invs[j]]
    args += [packed['stem_w'], packed['stem_g'], packed['stem_b']]
    for cell, (ctype, _info, rj) in zip(packed['cells'], plan):
        if ctype == 'search':
            for s in range(mx - 1):
                args += [cell['srcs'][s]['w'], cell['srcs'][s]['g'], cell['srcs'][s]['b']]
        else:
            args += [s2s[rj], cell['wa'], cell['ga'], cell['ba'],
                     cell['wb'], cell['gb'], cell['bb'], cell['wd']]
    args += [packed['la_g'], packed['la_b'], gap, packed['cls_w'], packed['cls_b']]
    num_in = len(args)

    # ---- the fused kernel ----------------------------------------------------
    def kernel(*refs):
        it = iter(refs[:num_in])
        out_ref, logits_ref = refs[num_in], refs[num_in + 1]

        alpha_ref = next(it)                     # (num_edge, 5) in SMEM
        x_ref = next(it)
        mask_refs, inv_refs = [], []
        for _ in range(n_red + 1):
            mask_refs.append(next(it))
            inv_refs.append(next(it))

        def bn(y, g_ref, b_ref):
            # training-mode BatchNorm fused as a matmul epilogue; per-row stats
            # over the N*H*W lane axis == PyTorch's per-channel batch statistics.
            mu = jnp.mean(y, axis=1, keepdims=True)
            var = jnp.mean(jnp.square(y - mu), axis=1, keepdims=True)
            return (y - mu) * lax.rsqrt(var + EPS) * g_ref[...] + b_ref[...]

        def taps(x, j, want_pool):
            # x: (C, M) at resolution index j.  Returns the nine boundary-masked
            # 3x3 taps stacked as (9C, M) plus (optionally) the 3x3 average pool.
            # Shifts are static lane-offset slices of a zero-padded copy.
            cc, mm = x.shape
            w_img = res[j][1]
            p = w_img + 1
            zpad = jnp.zeros((cc, p), F32)
            xp = jnp.concatenate([zpad, x, zpad], axis=1)
            ts, pool = [], None
            k = 0
            for dy in (-1, 0, 1):
                for dx in (-1, 0, 1):
                    d = dy * w_img + dx
                    t = xp[:, p + d:p + d + mm] * mask_refs[j][k:k + 1, :]
                    ts.append(t)
                    if want_pool:
                        pool = t if pool is None else pool + t
                    k += 1
            patches = jnp.concatenate(ts, axis=0)             # sublane-axis concat
            if want_pool:
                pool = pool * inv_refs[j][...]
            return patches, pool

        # ---- stem: conv3x3 (no input ReLU) + BN -----------------------------
        w_st, g_st, b_st = next(it), next(it), next(it)
        p0, _ = taps(x_ref[...], 0, False)
        feat = bn(jnp.dot(w_st[...], p0, preferred_element_type=F32), g_st, b_st)

        # ---- cells ----------------------------------------------------------
        for (ctype, info, rj) in plan:
            if ctype == 'search':
                c = info
                nodes = [feat]
                acc = {}
                for s in range(mx - 1):
                    w_r, g_r, b_r = next(it), next(it), next(it)
                    count = mx - 1 - s
                    patches, pool = taps(nodes[s], rj, True)
                    # one matmul per source node: all outgoing 3x3 edges plus the
                    # folded 1x1 edges, with the BN epilogue fused.
                    y = bn(jnp.dot(w_r[...], jnp.maximum(patches, 0.0),
                                   preferred_element_type=F32), g_r, b_r)
                    for kk, i in enumerate(range(s + 1, mx)):
                        e = e2i['{:}<-{:}'.format(i, s)]
                        contrib = (alpha_ref[e, col_skip] * nodes[s]
                                   + alpha_ref[e, col_c3] * y[kk * c:(kk + 1) * c, :]
                                   + alpha_ref[e, col_c1]
                                   * y[(count + kk) * c:(count + kk + 1) * c, :]
                                   + alpha_ref[e, col_pool] * pool)
                        acc[i] = contrib if i not in acc else acc[i] + contrib
                    nodes.append(acc[s + 1])                   # node s+1 complete
                feat = nodes[mx - 1]
            else:
                cin, cout = info
                s2_r = next(it)
                wa_r, ga_r, ba_r = next(it), next(it), next(it)
                wb_r, gb_r, bb_r = next(it), next(it), next(it)
                wd_r = next(it)
                # conv_a: stride-2 = column-selection matmul on the full-res taps
                patches_in, _ = taps(feat, rj, False)                       # (9cin, Min)
                sel = jnp.dot(patches_in, s2_r[...], preferred_element_type=F32)
                ya = bn(jnp.dot(wa_r[...], jnp.maximum(sel, 0.0),
                                preferred_element_type=F32), ga_r, ba_r)
                # conv_b at the reduced resolution
                patches_b, _ = taps(ya, rj + 1, False)
                yb = bn(jnp.dot(wb_r[...], jnp.maximum(patches_b, 0.0),
                                preferred_element_type=F32), gb_r, bb_r)
                # shortcut: 2x2/2 avg-pool == mean of taps {4,5,7,8} at the
                # stride-2 centres, then the 1x1 conv; residual add fused.
                pooled = 0.25 * (sel[4 * cin:5 * cin, :] + sel[5 * cin:6 * cin, :]
                                 + sel[7 * cin:8 * cin, :] + sel[8 * cin:9 * cin, :])
                feat = yb + jnp.dot(wd_r[...], pooled, preferred_element_type=F32)

        # ---- head: BN + ReLU + global average pool + classifier --------------
        la_g, la_b = next(it), next(it)
        gap_r, cw_r, cb_r = next(it), next(it), next(it)
        yh = jnp.maximum(bn(feat, la_g, la_b), 0.0)                         # (Cp, M)
        pooled = jnp.dot(yh, gap_r[...], preferred_element_type=F32)        # (Cp, N)
        out_ref[...] = pooled
        logits_ref[...] = jnp.dot(cw_r[...], pooled,
                                  preferred_element_type=F32) + cb_r[...]

    # TODO(synk): on v7x the second TensorCore is left idle; a 2-way split of the
    # lane (M) axis with a cross-core BN-stat reduction would be needed to use it.
    out_fl, logits_fl = pl.pallas_call(
        kernel,
        out_shape=(jax.ShapeDtypeStruct((c_last, n), F32),
                   jax.ShapeDtypeStruct((ncls, n), F32)),
        in_specs=[_smem()] + [_vmem()] * (num_in - 1),
        out_specs=(_vmem(), _vmem()),
    )(*args)
    return jnp.transpose(out_fl), jnp.transpose(logits_fl)


# ---------------------------------------------------------------------------
# parameter setup
# ---------------------------------------------------------------------------
def _conv_params(key, kh, kw, cin, cout):
    k1, k2, k3 = jax.random.split(key, 3)
    fan_in = kh * kw * cin
    w = jax.random.normal(k1, (kh, kw, cin, cout), F32) * (1.0 / math.sqrt(fan_in))
    if kh == 1 and kw == 1:
        w = w.reshape(cin, cout)
    gamma = 1.0 + 0.1 * jax.random.normal(k2, (cout,), F32)
    beta = 0.1 * jax.random.normal(k3, (cout,), F32)
    return {'w': w, 'gamma': gamma, 'beta': beta}


def init_tiny_network_setn(key, C=4, N=1, max_nodes=4, num_classes=10,
                           search_space=SEARCH_SPACE):
    edge2index, num_edge = {}, 0
    for i in range(1, max_nodes):
        for j in range(i):
            edge2index['{:}<-{:}'.format(i, j)] = num_edge
            num_edge += 1

    keys = iter(jax.random.split(key, 4096))
    params = {'stem': _conv_params(next(keys), 3, 3, 3, C)}

    layer_channels = [C] * N + [C * 2] + [C * 2] * N + [C * 4] + [C * 4] * N
    layer_reductions = [False] * N + [True] + [False] * N + [True] + [False] * N

    cells, cell_types, c_prev = [], [], C
    for c_curr, reduction in zip(layer_channels, layer_reductions):
        if reduction:
            cells.append({
                'conv_a': _conv_params(next(keys), 3, 3, c_prev, c_curr),
                'conv_b': _conv_params(next(keys), 3, 3, c_curr, c_curr),
                'down_w': jax.random.normal(next(keys), (c_prev, c_curr), F32)
                          * (1.0 / math.sqrt(c_prev)),
            })
            cell_types.append('resnet')
        else:
            edges = {}
            for i in range(1, max_nodes):
                for j in range(i):
                    edges['{:}<-{:}'.format(i, j)] = {
                        'c1': _conv_params(next(keys), 1, 1, c_prev, c_curr),
                        'c3': _conv_params(next(keys), 3, 3, c_prev, c_curr),
                    }
            cells.append({'edges': edges})
            cell_types.append('search')
        c_prev = c_curr
    params['cells'] = cells

    k1, k2, k3, k4, k5 = jax.random.split(next(keys), 5)
    params['lastact'] = {'gamma': 1.0 + 0.1 * jax.random.normal(k1, (c_prev,), F32),
                         'beta': 0.1 * jax.random.normal(k2, (c_prev,), F32)}
    params['cls_w'] = (jax.random.normal(k3, (c_prev, num_classes), F32)
                       * (1.0 / math.sqrt(c_prev)))
    params['cls_b'] = 0.01 * jax.random.normal(k4, (num_classes,), F32)
    params['arch'] = 0.001 * jax.random.normal(k5, (num_edge, len(search_space)), F32)

    meta = {'C': C, 'N': N, 'max_nodes': max_nodes, 'num_classes': num_classes,
            'edge2index': edge2index, 'num_edge': num_edge,
            'search_space': tuple(search_space), 'C_prev': c_prev,
            'cell_types': cell_types}
    return params, meta


# ---------------------------------------------------------------------------
# pure-JAX reference of the PyTorch forward (for validation only)
# ---------------------------------------------------------------------------
def reference_forward(params, meta, x_nchw):
    hp = lax.Precision.HIGHEST
    mx = meta['max_nodes']
    ss = list(meta['search_space'])
    i_sk, i_c1 = ss.index('skip_connect'), ss.index('nor_conv_1x1')
    i_c3, i_ap = ss.index('nor_conv_3x3'), ss.index('avg_pool_3x3')

    def conv(x, w, stride, pad):
        if w.ndim == 2:
            w = w.reshape(1, 1, *w.shape)
        return lax.conv_general_dilated(
            x, w, (stride, stride), ((pad, pad), (pad, pad)),
            dimension_numbers=('NHWC', 'HWIO', 'NHWC'), precision=hp)

    def bn(x, g, b):
        mu = jnp.mean(x, axis=(0, 1, 2), keepdims=True)
        var = jnp.mean(jnp.square(x - mu), axis=(0, 1, 2), keepdims=True)
        return (x - mu) * lax.rsqrt(var + EPS) * g + b

    def rcb(x, p, stride, pad):
        return bn(conv(jax.nn.relu(x), p['w'], stride, pad), p['gamma'], p['beta'])

    def avg3(x):
        cfg = dict(window_dimensions=(1, 3, 3, 1), window_strides=(1, 1, 1, 1),
                   padding=((0, 0), (1, 1), (1, 1), (0, 0)))
        s = lax.reduce_window(x, jnp.float32(0), lax.add, **cfg)
        cnt = lax.reduce_window(jnp.ones_like(x[..., :1]), jnp.float32(0), lax.add, **cfg)
        return s / cnt

    alphas = jax.nn.softmax(params['arch'].astype(F32), axis=-1)
    x = jnp.transpose(x_nchw.astype(F32), (0, 2, 3, 1))
    feat = bn(conv(x, params['stem']['w'], 1, 1),
              params['stem']['gamma'], params['stem']['beta'])
    for cell, ctype in zip(params['cells'], meta['cell_types']):
        if ctype == 'search':
            nodes = [feat]
            for i in range(1, mx):
                agg = 0.0
                for j in range(i):
                    a = alphas[meta['edge2index']['{:}<-{:}'.format(i, j)]]
                    ed = cell['edges']['{:}<-{:}'.format(i, j)]
                    agg = (agg + a[i_sk] * nodes[j]
                           + a[i_c1] * rcb(nodes[j], ed['c1'], 1, 0)
                           + a[i_c3] * rcb(nodes[j], ed['c3'], 1, 1)
                           + a[i_ap] * avg3(nodes[j]))
                nodes.append(agg)
            feat = nodes[-1]
        else:
            ya = rcb(feat, cell['conv_a'], 2, 1)
            yb = rcb(ya, cell['conv_b'], 1, 1)
            sc = lax.reduce_window(feat, jnp.float32(0), lax.add,
                                   window_dimensions=(1, 2, 2, 1),
                                   window_strides=(1, 2, 2, 1),
                                   padding=((0, 0), (0, 0), (0, 0), (0, 0))) * 0.25
            sc = conv(sc, cell['down_w'], 1, 0)
            feat = yb + sc
    y = jax.nn.relu(bn(feat, params['lastact']['gamma'], params['lastact']['beta']))
    pooled = jnp.mean(y, axis=(1, 2))
    logits = jnp.dot(pooled, params['cls_w'], precision=hp) + params['cls_b']
    return pooled, logits


if __name__ == "__main__":
    key = jax.random.PRNGKey(0)
    kp, kx = jax.random.split(key)
    params, meta = init_tiny_network_setn(kp, C=4, N=1, max_nodes=4, num_classes=10)
    x = jax.random.normal(kx, (2, 3, 16, 16), F32)      # NCHW, like the PyTorch module

    packed = pack_params(params, meta)                  # one-time re-layout, outside jit
    fwd = jax.jit(lambda pk, arch, xx: tiny_network_setn_forward(pk, arch, xx, meta))
    out, logits = fwd(packed, params['arch'], x)
    jax.block_until_ready((out, logits))

    assert out.shape == (2, meta['C_prev'])
    assert logits.shape == (2, meta['num_classes'])
    assert bool(jnp.all(jnp.isfinite(out))) and bool(jnp.all(jnp.isfinite(logits)))

    # semantic check against a pure-JAX/XLA reference of the PyTorch forward
    ref_out, ref_logits = jax.jit(lambda p, xx: reference_forward(p, meta, xx))(params, x)
    err = max(float(jnp.max(jnp.abs(out - ref_out))),
              float(jnp.max(jnp.abs(logits - ref_logits))))
    assert err < 5e-2, "mismatch vs reference: {:}".format(err)
    print("KERNEL_OK")
</pallas_src>

<mosaic_0001>
module attributes {stable_mosaic.version = 11 : i64} {
  func.func @kernel(%arg0: memref<6x5xf32, #tpu.memory_space<smem>>, %arg1: memref<3x512xf32, #tpu.memory_space<vmem>>, %arg2: memref<9x512xf32, #tpu.memory_space<vmem>>, %arg3: memref<1x512xf32, #tpu.memory_space<vmem>>, %arg4: memref<9x128xf32, #tpu.memory_space<vmem>>, %arg5: memref<1x128xf32, #tpu.memory_space<vmem>>, %arg6: memref<9x32xf32, #tpu.memory_space<vmem>>, %arg7: memref<1x32xf32, #tpu.memory_space<vmem>>, %arg8: memref<4x27xf32, #tpu.memory_space<vmem>>, %arg9: memref<4x1xf32, #tpu.memory_space<vmem>>, %arg10: memref<4x1xf32, #tpu.memory_space<vmem>>, %arg11: memref<24x36xf32, #tpu.memory_space<vmem>>, %arg12: memref<24x1xf32, #tpu.memory_space<vmem>>, %arg13: memref<24x1xf32, #tpu.memory_space<vmem>>, %arg14: memref<16x36xf32, #tpu.memory_space<vmem>>, %arg15: memref<16x1xf32, #tpu.memory_space<vmem>>, %arg16: memref<16x1xf32, #tpu.memory_space<vmem>>, %arg17: memref<8x36xf32, #tpu.memory_space<vmem>>, %arg18: memref<8x1xf32, #tpu.memory_space<vmem>>, %arg19: memref<8x1xf32, #tpu.memory_space<vmem>>, %arg20: memref<512x128xf32, #tpu.memory_space<vmem>>, %arg21: memref<8x36xf32, #tpu.memory_space<vmem>>, %arg22: memref<8x1xf32, #tpu.memory_space<vmem>>, %arg23: memref<8x1xf32, #tpu.memory_space<vmem>>, %arg24: memref<8x72xf32, #tpu.memory_space<vmem>>, %arg25: memref<8x1xf32, #tpu.memory_space<vmem>>, %arg26: memref<8x1xf32, #tpu.memory_space<vmem>>, %arg27: memref<8x4xf32, #tpu.memory_space<vmem>>, %arg28: memref<48x72xf32, #tpu.memory_space<vmem>>, %arg29: memref<48x1xf32, #tpu.memory_space<vmem>>, %arg30: memref<48x1xf32, #tpu.memory_space<vmem>>, %arg31: memref<32x72xf32, #tpu.memory_space<vmem>>, %arg32: memref<32x1xf32, #tpu.memory_space<vmem>>, %arg33: memref<32x1xf32, #tpu.memory_space<vmem>>, %arg34: memref<16x72xf32, #tpu.memory_space<vmem>>, %arg35: memref<16x1xf32, #tpu.memory_space<vmem>>, %arg36: memref<16x1xf32, #tpu.memory_space<vmem>>, %arg37: memref<128x32xf32, #tpu.memory_space<vmem>>, %arg38: memref<16x72xf32, #tpu.memory_space<vmem>>, %arg39: memref<16x1xf32, #tpu.memory_space<vmem>>, %arg40: memref<16x1xf32, #tpu.memory_space<vmem>>, %arg41: memref<16x144xf32, #tpu.memory_space<vmem>>, %arg42: memref<16x1xf32, #tpu.memory_space<vmem>>, %arg43: memref<16x1xf32, #tpu.memory_space<vmem>>, %arg44: memref<16x8xf32, #tpu.memory_space<vmem>>, %arg45: memref<96x144xf32, #tpu.memory_space<vmem>>, %arg46: memref<96x1xf32, #tpu.memory_space<vmem>>, %arg47: memref<96x1xf32, #tpu.memory_space<vmem>>, %arg48: memref<64x144xf32, #tpu.memory_space<vmem>>, %arg49: memref<64x1xf32, #tpu.memory_space<vmem>>, %arg50: memref<64x1xf32, #tpu.memory_space<vmem>>, %arg51: memref<32x144xf32, #tpu.memory_space<vmem>>, %arg52: memref<32x1xf32, #tpu.memory_space<vmem>>, %arg53: memref<32x1xf32, #tpu.memory_space<vmem>>, %arg54: memref<16x1xf32, #tpu.memory_space<vmem>>, %arg55: memref<16x1xf32, #tpu.memory_space<vmem>>, %arg56: memref<32x2xf32, #tpu.memory_space<vmem>>, %arg57: memref<10x16xf32, #tpu.memory_space<vmem>>, %arg58: memref<10x1xf32, #tpu.memory_space<vmem>>, %arg59: memref<16x2xf32, #tpu.memory_space<vmem>>, %arg60: memref<10x2xf32, #tpu.memory_space<vmem>>) attributes {dimension_semantics = [], scalar_prefetch = 0 : i64, scratch_operands = 0 : i64, tpu.core_type = #tpu.core_type<tc>} {
    %c0 = arith.constant 0 : index
    %c0_0 = arith.constant 0 : index
    %0 = vector.load %arg1[%c0, %c0_0] : memref<3x512xf32, #tpu.memory_space<vmem>>, vector<3x512xf32>
    %cst = arith.constant 0.000000e+00 : f32
    %1 = vector.broadcast %cst : f32 to vector<3x17xf32>
    %2 = tpu.concatenate %1, %0, %1 in 1 : vector<3x17xf32>, vector<3x512xf32>, vector<3x17xf32> -> vector<3x546xf32>
    %3 = vector.extract_strided_slice %2 {offsets = [0, 0], sizes = [3, 512], strides = [1, 1]} : vector<3x546xf32> to vector<3x512xf32>
    %c0_1 = arith.constant 0 : index
    %c0_2 = arith.constant 0 : index
    %4 = vector.load %arg2[%c0_1, %c0_2] : memref<9x512xf32, #tpu.memory_space<vmem>>, vector<1x512xf32>
    %5 = vector.broadcast %4 : vector<1x512xf32> to vector<3x512xf32>
    %6 = arith.mulf %3, %5 : vector<3x512xf32>
    %7 = vector.extract_strided_slice %2 {offsets = [0, 1], sizes = [3, 512], strides = [1, 1]} : vector<3x546xf32> to vector<3x512xf32>
    %c1 = arith.constant 1 : index
    %c0_3 = arith.constant 0 : index
    %8 = vector.load %arg2[%c1, %c0_3] : memref<9x512xf32, #tpu.memory_space<vmem>>, vector<1x512xf32>
    %9 = vector.broadcast %8 : vector<1x512xf32> to vector<3x512xf32>
    %10 = arith.mulf %7, %9 : vector<3x512xf32>
    %11 = vector.extract_strided_slice %2 {offsets = [0, 2], sizes = [3, 512], strides = [1, 1]} : vector<3x546xf32> to vector<3x512xf32>
    %c2 = arith.constant 2 : index
    %c0_4 = arith.constant 0 : index
    %12 = vector.load %arg2[%c2, %c0_4] : memref<9x512xf32, #tpu.memory_space<vmem>>, vector<1x512xf32>
    %13 = vector.broadcast %12 : vector<1x512xf32> to vector<3x512xf32>
    %14 = arith.mulf %11, %13 : vector<3x512xf32>
    %15 = vector.extract_strided_slice %2 {offsets = [0, 16], sizes = [3, 512], strides = [1, 1]} : vector<3x546xf32> to vector<3x512xf32>
    %c3 = arith.constant 3 : index
    %c0_5 = arith.constant 0 : index
    %16 = vector.load %arg2[%c3, %c0_5] : memref<9x512xf32, #tpu.memory_space<vmem>>, vector<1x512xf32>
    %17 = vector.broadcast %16 : vector<1x512xf32> to vector<3x512xf32>
    %18 = arith.mulf %15, %17 : vector<3x512xf32>
    %19 = vector.extract_strided_slice %2 {offsets = [0, 17], sizes = [3, 512], strides = [1, 1]} : vector<3x546xf32> to vector<3x512xf32>
    %c4 = arith.constant 4 : index
    %c0_6 = arith.constant 0 : index
    %20 = vector.load %arg2[%c4, %c0_6] : memref<9x512xf32, #tpu.memory_space<vmem>>, vector<1x512xf32>
    %21 = vector.broadcast %20 : vector<1x512xf32> to vector<3x512xf32>
    %22 = arith.mulf %19, %21 : vector<3x512xf32>
    %23 = vector.extract_strided_slice %2 {offsets = [0, 18], sizes = [3, 512], strides = [1, 1]} : vector<3x546xf32> to vector<3x512xf32>
    %c5 = arith.constant 5 : index
    %c0_7 = arith.constant 0 : index
    %24 = vector.load %arg2[%c5, %c0_7] : memref<9x512xf32, #tpu.memory_space<vmem>>, vector<1x512xf32>
    %25 = vector.broadcast %24 : vector<1x512xf32> to vector<3x512xf32>
    %26 = arith.mulf %23, %25 : vector<3x512xf32>
    %27 = vector.extract_strided_slice %2 {offsets = [0, 32], sizes = [3, 512], strides = [1, 1]} : vector<3x546xf32> to vector<3x512xf32>
    %c6 = arith.constant 6 : index
    %c0_8 = arith.constant 0 : index
    %28 = vector.load %arg2[%c6, %c0_8] : memref<9x512xf32, #tpu.memory_space<vmem>>, vector<1x512xf32>
    %29 = vector.broadcast %28 : vector<1x512xf32> to vector<3x512xf32>
    %30 = arith.mulf %27, %29 : vector<3x512xf32>
    %31 = vector.extract_strided_slice %2 {offsets = [0, 33], sizes = [3, 512], strides = [1, 1]} : vector<3x546xf32> to vector<3x512xf32>
    %c7 = arith.constant 7 : index
    %c0_9 = arith.constant 0 : index
    %32 = vector.load %arg2[%c7, %c0_9] : memref<9x512xf32, #tpu.memory_space<vmem>>, vector<1x512xf32>
    %33 = vector.broadcast %32 : vector<1x512xf32> to vector<3x512xf32>
    %34 = arith.mulf %31, %33 : vector<3x512xf32>
    %35 = vector.extract_strided_slice %2 {offsets = [0, 34], sizes = [3, 512], strides = [1, 1]} : vector<3x546xf32> to vector<3x512xf32>
    %c8 = arith.constant 8 : index
    %c0_10 = arith.constant 0 : index
    %36 = vector.load %arg2[%c8, %c0_10] : memref<9x512xf32, #tpu.memory_space<vmem>>, vector<1x512xf32>
    %37 = vector.broadcast %36 : vector<1x512xf32> to vector<3x512xf32>
    %38 = arith.mulf %35, %37 : vector<3x512xf32>
    %39 = tpu.concatenate %6, %10, %14, %18, %22, %26, %30, %34, %38 in 0 : vector<3x512xf32>, vector<3x512xf32>, vector<3x512xf32>, vector<3x512xf32>, vector<3x512xf32>, vector<3x512xf32>, vector<3x512xf32>, vector<3x512xf32>, vector<3x512xf32> -> vector<27x512xf32>
    %c0_11 = arith.constant 0 : index
    %c0_12 = arith.constant 0 : index
    %40 = vector.load %arg8[%c0_11, %c0_12] : memref<4x27xf32, #tpu.memory_space<vmem>>, vector<4x27xf32>
    %cst_13 = arith.constant dense<0.000000e+00> : vector<4x512xf32>
    %41 = tpu.matmul %40, %39, %cst_13 {dimension_numbers = #tpu.dot_dimension_numbers<[1], [0], [0], [1], [0, 0, 1, 1], [], []>} : vector<4x27xf32>, vector<27x512xf32>, vector<4x512xf32> -> vector<4x512xf32>
    %cst_14 = arith.constant dense<0.000000e+00> : vector<4xf32>
    %42 = vector.multi_reduction <add>, %41, %cst_14 [1] : vector<4x512xf32> to vector<4xf32>
    %43 = vector.shape_cast %42 : vector<4xf32> to vector<4x1xf32>
    %cst_15 = arith.constant 5.120000e+02 : f32
    %44 = vector.broadcast %cst_15 : f32 to vector<4x1xf32>
    %45 = arith.divf %43, %44 : vector<4x1xf32>
    %46 = vector.broadcast %45 : vector<4x1xf32> to vector<4x512xf32>
    %47 = arith.subf %41, %46 : vector<4x512xf32>
    %48 = arith.mulf %47, %47 : vector<4x512xf32>
    %cst_16 = arith.constant dense<0.000000e+00> : vector<4xf32>
    %49 = vector.multi_reduction <add>, %48, %cst_16 [1] : vector<4x512xf32> to vector<4xf32>
    %50 = vector.shape_cast %49 : vector<4xf32> to vector<4x1xf32>
    %cst_17 = arith.constant 5.120000e+02 : f32
    %51 = vector.broadcast %cst_17 : f32 to vector<4x1xf32>
    %52 = arith.divf %50, %51 : vector<4x1xf32>
    %53 = vector.broadcast %45 : vector<4x1xf32> to vector<4x512xf32>
    %54 = arith.subf %41, %53 : vector<4x512xf32>
    %cst_18 = arith.constant 9.99999974E-6 : f32
    %55 = vector.broadcast %cst_18 : f32 to vector<4x1xf32>
    %56 = arith.addf %52, %55 : vector<4x1xf32>
    %57 = math.rsqrt %56 : vector<4x1xf32>
    %58 = vector.broadcast %57 : vector<4x1xf32> to vector<4x512xf32>
    %59 = arith.mulf %54, %58 : vector<4x512xf32>
    %c0_19 = arith.constant 0 : index
    %c0_20 = arith.constant 0 : index
    %60 = vector.load %arg9[%c0_19, %c0_20] : memref<4x1xf32, #tpu.memory_space<vmem>>, vector<4x1xf32>
    %61 = vector.broadcast %60 : vector<4x1xf32> to vector<4x512xf32>
    %62 = arith.mulf %59, %61 : vector<4x512xf32>
    %c0_21 = arith.constant 0 : index
    %c0_22 = arith.constant 0 : index
    %63 = vector.load %arg10[%c0_21, %c0_22] : memref<4x1xf32, #tpu.memory_space<vmem>>, vector<4x1xf32>
    %64 = vector.broadcast %63 : vector<4x1xf32> to vector<4x512xf32>
    %65 = arith.addf %62, %64 : vector<4x512xf32>
    %cst_23 = arith.constant 0.000000e+00 : f32
    %66 = vector.broadcast %cst_23 : f32 to vector<4x17xf32>
    %67 = tpu.concatenate %66, %65, %66 in 1 : vector<4x17xf32>, vector<4x512xf32>, vector<4x17xf32> -> vector<4x546xf32>
    %68 = vector.extract_strided_slice %67 {offsets = [0, 0], sizes = [4, 512], strides = [1, 1]} : vector<4x546xf32> to vector<4x512xf32>
    %c0_24 = arith.constant 0 : index
    %c0_25 = arith.constant 0 : index
    %69 = vector.load %arg2[%c0_24, %c0_25] : memref<9x512xf32, #tpu.memory_space<vmem>>, vector<1x512xf32>
    %70 = vector.broadcast %69 : vector<1x512xf32> to vector<4x512xf32>
    %71 = arith.mulf %68, %70 : vector<4x512xf32>
    %72 = vector.extract_strided_slice %67 {offsets = [0, 1], sizes = [4, 512], strides = [1, 1]} : vector<4x546xf32> to vector<4x512xf32>
    %c1_26 = arith.constant 1 : index
    %c0_27 = arith.constant 0 : index
    %73 = vector.load %arg2[%c1_26, %c0_27] : memref<9x512xf32, #tpu.memory_space<vmem>>, vector<1x512xf32>
    %74 = vector.broadcast %73 : vector<1x512xf32> to vector<4x512xf32>
    %75 = arith.mulf %72, %74 : vector<4x512xf32>
    %76 = arith.addf %71, %75 : vector<4x512xf32>
    %77 = vector.extract_strided_slice %67 {offsets = [0, 2], sizes = [4, 512], strides = [1, 1]} : vector<4x546xf32> to vector<4x512xf32>
    %c2_28 = arith.constant 2 : index
    %c0_29 = arith.constant 0 : index
    %78 = vector.load %arg2[%c2_28, %c0_29] : memref<9x512xf32, #tpu.memory_space<vmem>>, vector<1x512xf32>
    %79 = vector.broadcast %78 : vector<1x512xf32> to vector<4x512xf32>
    %80 = arith.mulf %77, %79 : vector<4x512xf32>
    %81 = arith.addf %76, %80 : vector<4x512xf32>
    %82 = vector.extract_strided_slice %67 {offsets = [0, 16], sizes = [4, 512], strides = [1, 1]} : vector<4x546xf32> to vector<4x512xf32>
    %c3_30 = arith.constant 3 : index
    %c0_31 = arith.constant 0 : index
    %83 = vector.load %arg2[%c3_30, %c0_31] : memref<9x512xf32, #tpu.memory_space<vmem>>, vector<1x512xf32>
    %84 = vector.broadcast %83 : vector<1x512xf32> to vector<4x512xf32>
    %85 = arith.mulf %82, %84 : vector<4x512xf32>
    %86 = arith.addf %81, %85 : vector<4x512xf32>
    %87 = vector.extract_strided_slice %67 {offsets = [0, 17], sizes = [4, 512], strides = [1, 1]} : vector<4x546xf32> to vector<4x512xf32>
    %c4_32 = arith.constant 4 : index
    %c0_33 = arith.constant 0 : index
    %88 = vector.load %arg2[%c4_32, %c0_33] : memref<9x512xf32, #tpu.memory_space<vmem>>, vector<1x512xf32>
    %89 = vector.broadcast %88 : vector<1x512xf32> to vector<4x512xf32>
    %90 = arith.mulf %87, %89 : vector<4x512xf32>
    %91 = arith.addf %86, %90 : vector<4x512xf32>
    %92 = vector.extract_strided_slice %67 {offsets = [0, 18], sizes = [4, 512], strides = [1, 1]} : vector<4x546xf32> to vector<4x512xf32>
    %c5_34 = arith.constant 5 : index
    %c0_35 = arith.constant 0 : index
    %93 = vector.load %arg2[%c5_34, %c0_35] : memref<9x512xf32, #tpu.memory_space<vmem>>, vector<1x512xf32>
    %94 = vector.broadcast %93 : vector<1x512xf32> to vector<4x512xf32>
    %95 = arith.mulf %92, %94 : vector<4x512xf32>
    %96 = arith.addf %91, %95 : vector<4x512xf32>
    %97 = vector.extract_strided_slice %67 {offsets = [0, 32], sizes = [4, 512], strides = [1, 1]} : vector<4x546xf32> to vector<4x512xf32>
    %c6_36 = arith.constant 6 : index
    %c0_37 = arith.constant 0 : index
    %98 = vector.load %arg2[%c6_36, %c0_37] : memref<9x512xf32, #tpu.memory_space<vmem>>, vector<1x512xf32>
    %99 = vector.broadcast %98 : vector<1x512xf32> to vector<4x512xf32>
    %100 = arith.mulf %97, %99 : vector<4x512xf32>
    %101 = arith.addf %96, %100 : vector<4x512xf32>
    %102 = vector.extract_strided_slice %67 {offsets = [0, 33], sizes = [4, 512], strides = [1, 1]} : vector<4x546xf32> to vector<4x512xf32>
    %c7_38 = arith.constant 7 : index
    %c0_39 = arith.constant 0 : index
    %103 = vector.load %arg2[%c7_38, %c0_39] : memref<9x512xf32, #tpu.memory_space<vmem>>, vector<1x512xf32>
    %104 = vector.broadcast %103 : vector<1x512xf32> to vector<4x512xf32>
    %105 = arith.mulf %102, %104 : vector<4x512xf32>
    %106 = arith.addf %101, %105 : vector<4x512xf32>
    %107 = vector.extract_strided_slice %67 {offsets = [0, 34], sizes = [4, 512], strides = [1, 1]} : vector<4x546xf32> to vector<4x512xf32>
    %c8_40 = arith.constant 8 : index
    %c0_41 = arith.constant 0 : index
    %108 = vector.load %arg2[%c8_40, %c0_41] : memref<9x512xf32, #tpu.memory_space<vmem>>, vector<1x512xf32>
    %109 = vector.broadcast %108 : vector<1x512xf32> to vector<4x512xf32>
    %110 = arith.mulf %107, %109 : vector<4x512xf32>
    %111 = arith.addf %106, %110 : vector<4x512xf32>
    %112 = tpu.concatenate %71, %75, %80, %85, %90, %95, %100, %105, %110 in 0 : vector<4x512xf32>, vector<4x512xf32>, vector<4x512xf32>, vector<4x512xf32>, vector<4x512xf32>, vector<4x512xf32>, vector<4x512xf32>, vector<4x512xf32>, vector<4x512xf32> -> vector<36x512xf32>
    %c0_42 = arith.constant 0 : index
    %c0_43 = arith.constant 0 : index
    %113 = vector.load %arg3[%c0_42, %c0_43] : memref<1x512xf32, #tpu.memory_space<vmem>>, vector<1x512xf32>
    %114 = vector.broadcast %113 : vector<1x512xf32> to vector<4x512xf32>
    %115 = arith.mulf %111, %114 : vector<4x512xf32>
    %c0_44 = arith.constant 0 : index
    %c0_45 = arith.constant 0 : index
    %116 = vector.load %arg11[%c0_44, %c0_45] : memref<24x36xf32, #tpu.memory_space<vmem>>, vector<24x36xf32>
    %cst_46 = arith.constant 0.000000e+00 : f32
    %117 = vector.broadcast %cst_46 : f32 to vector<36x512xf32>
    %118 = arith.maximumf %112, %117 : vector<36x512xf32>
    %cst_47 = arith.constant dense<0.000000e+00> : vector<24x512xf32>
    %119 = tpu.matmul %116, %118, %cst_47 {dimension_numbers = #tpu.dot_dimension_numbers<[1], [0], [0], [1], [0, 0, 1, 1], [], []>} : vector<24x36xf32>, vector<36x512xf32>, vector<24x512xf32> -> vector<24x512xf32>
    %cst_48 = arith.constant dense<0.000000e+00> : vector<24xf32>
    %120 = vector.multi_reduction <add>, %119, %cst_48 [1] : vector<24x512xf32> to vector<24xf32>
    %121 = vector.shape_cast %120 : vector<24xf32> to vector<24x1xf32>
    %cst_49 = arith.constant 5.120000e+02 : f32
    %122 = vector.broadcast %cst_49 : f32 to vector<24x1xf32>
    %123 = arith.divf %121, %122 : vector<24x1xf32>
    %124 = vector.broadcast %123 : vector<24x1xf32> to vector<24x512xf32>
    %125 = arith.subf %119, %124 : vector<24x512xf32>
    %126 = arith.mulf %125, %125 : vector<24x512xf32>
    %cst_50 = arith.constant dense<0.000000e+00> : vector<24xf32>
    %127 = vector.multi_reduction <add>, %126, %cst_50 [1] : vector<24x512xf32> to vector<24xf32>
    %128 = vector.shape_cast %127 : vector<24xf32> to vector<24x1xf32>
    %cst_51 = arith.constant 5.120000e+02 : f32
    %129 = vector.broadcast %cst_51 : f32 to vector<24x1xf32>
    %130 = arith.divf %128, %129 : vector<24x1xf32>
    %131 = vector.broadcast %123 : vector<24x1xf32> to vector<24x512xf32>
    %132 = arith.subf %119, %131 : vector<24x512xf32>
    %cst_52 = arith.constant 9.99999974E-6 : f32
    %133 = vector.broadcast %cst_52 : f32 to vector<24x1xf32>
    %134 = arith.addf %130, %133 : vector<24x1xf32>
    %135 = math.rsqrt %134 : vector<24x1xf32>
    %136 = vector.broadcast %135 : vector<24x1xf32> to vector<24x512xf32>
    %137 = arith.mulf %132, %136 : vector<24x512xf32>
    %c0_53 = arith.constant 0 : index
    %c0_54 = arith.constant 0 : index
    %138 = vector.load %arg12[%c0_53, %c0_54] : memref<24x1xf32, #tpu.memory_space<vmem>>, vector<24x1xf32>
    %139 = vector.broadcast %138 : vector<24x1xf32> to vector<24x512xf32>
    %140 = arith.mulf %137, %139 : vector<24x512xf32>
    %c0_55 = arith.constant 0 : index
    %c0_56 = arith.constant 0 : index
    %141 = vector.load %arg13[%c0_55, %c0_56] : memref<24x1xf32, #tpu.memory_space<vmem>>, vector<24x1xf32>
    %142 = vector.broadcast %141 : vector<24x1xf32> to vector<24x512xf32>
    %143 = arith.addf %140, %142 : vector<24x512xf32>
    %c0_57 = arith.constant 0 : index
    %c1_58 = arith.constant 1 : index
    %144 = memref.load %arg0[%c0_57, %c1_58] : memref<6x5xf32, #tpu.memory_space<smem>>
    %145 = vector.broadcast %144 : f32 to vector<4x512xf32>
    %146 = arith.mulf %145, %65 : vector<4x512xf32>
    %c0_59 = arith.constant 0 : index
    %c3_60 = arith.constant 3 : index
    %147 = memref.load %arg0[%c0_59, %c3_60] : memref<6x5xf32, #tpu.memory_space<smem>>
    %148 = vector.extract_strided_slice %143 {offsets = [0, 0], sizes = [4, 512], strides = [1, 1]} : vector<24x512xf32> to vector<4x512xf32>
    %149 = vector.broadcast %147 : f32 to vector<4x512xf32>
    %150 = arith.mulf %149, %148 : vector<4x512xf32>
    %151 = arith.addf %146, %150 : vector<4x512xf32>
    %c0_61 = arith.constant 0 : index
    %c2_62 = arith.constant 2 : index
    %152 = memref.load %arg0[%c0_61, %c2_62] : memref<6x5xf32, #tpu.memory_space<smem>>
    %153 = vector.extract_strided_slice %143 {offsets = [12, 0], sizes = [4, 512], strides = [1, 1]} : vector<24x512xf32> to vector<4x512xf32>
    %154 = vector.broadcast %152 : f32 to vector<4x512xf32>
    %155 = arith.mulf %154, %153 : vector<4x512xf32>
    %156 = arith.addf %151, %155 : vector<4x512xf32>
    %c0_63 = arith.constant 0 : index
    %c4_64 = arith.constant 4 : index
    %157 = memref.load %arg0[%c0_63, %c4_64] : memref<6x5xf32, #tpu.memory_space<smem>>
    %158 = vector.broadcast %157 : f32 to vector<4x512xf32>
    %159 = arith.mulf %158, %115 : vector<4x512xf32>
    %160 = arith.addf %156, %159 : vector<4x512xf32>
    %c1_65 = arith.constant 1 : index
    %c1_66 = arith.constant 1 : index
    %161 = memref.load %arg0[%c1_65, %c1_66] : memref<6x5xf32, #tpu.memory_space<smem>>
    %162 = vector.broadcast %161 : f32 to vector<4x512xf32>
    %163 = arith.mulf %162, %65 : vector<4x512xf32>
    %c1_67 = arith.constant 1 : index
    %c3_68 = arith.constant 3 : index
    %164 = memref.load %arg0[%c1_67, %c3_68] : memref<6x5xf32, #tpu.memory_space<smem>>
    %165 = vector.extract_strided_slice %143 {offsets = [4, 0], sizes = [4, 512], strides = [1, 1]} : vector<24x512xf32> to vector<4x512xf32>
    %166 = vector.broadcast %164 : f32 to vector<4x512xf32>
    %167 = arith.mulf %166, %165 : vector<4x512xf32>
    %168 = arith.addf %163, %167 : vector<4x512xf32>
    %c1_69 = arith.constant 1 : index
    %c2_70 = arith.constant 2 : index
    %169 = memref.load %arg0[%c1_69, %c2_70] : memref<6x5xf32, #tpu.memory_space<smem>>
    %170 = vector.extract_strided_slice %143 {offsets = [16, 0], sizes = [4, 512], strides = [1, 1]} : vector<24x512xf32> to vector<4x512xf32>
    %171 = vector.broadcast %169 : f32 to vector<4x512xf32>
    %172 = arith.mulf %171, %170 : vector<4x512xf32>
    %173 = arith.addf %168, %172 : vector<4x512xf32>
    %c1_71 = arith.constant 1 : index
    %c4_72 = arith.constant 4 : index
    %174 = memref.load %arg0[%c1_71, %c4_72] : memref<6x5xf32, #tpu.memory_space<smem>>
    %175 = vector.broadcast %174 : f32 to vector<4x512xf32>
    %176 = arith.mulf %175, %115 : vector<4x512xf32>
    %177 = arith.addf %173, %176 : vector<4x512xf32>
    %c3_73 = arith.constant 3 : index
    %c1_74 = arith.constant 1 : index
    %178 = memref.load %arg0[%c3_73, %c1_74] : memref<6x5xf32, #tpu.memory_space<smem>>
    %179 = vector.broadcast %178 : f32 to vector<4x512xf32>
    %180 = arith.mulf %179, %65 : vector<4x512xf32>
    %c3_75 = arith.constant 3 : index
    %c3_76 = arith.constant 3 : index
    %181 = memref.load %arg0[%c3_75, %c3_76] : memref<6x5xf32, #tpu.memory_space<smem>>
    %182 = vector.extract_strided_slice %143 {offsets = [8, 0], sizes = [4, 512], strides = [1, 1]} : vector<24x512xf32> to vector<4x512xf32>
    %183 = vector.broadcast %181 : f32 to vector<4x512xf32>
    %184 = arith.mulf %183, %182 : vector<4x512xf32>
    %185 = arith.addf %180, %184 : vector<4x512xf32>
    %c3_77 = arith.constant 3 : index
    %c2_78 = arith.constant 2 : index
    %186 = memref.load %arg0[%c3_77, %c2_78] : memref<6x5xf32, #tpu.memory_space<smem>>
    %187 = vector.extract_strided_slice %143 {offsets = [20, 0], sizes = [4, 512], strides = [1, 1]} : vector<24x512xf32> to vector<4x512xf32>
    %188 = vector.broadcast %186 : f32 to vector<4x512xf32>
    %189 = arith.mulf %188, %187 : vector<4x512xf32>
    %190 = arith.addf %185, %189 : vector<4x512xf32>
    %c3_79 = arith.constant 3 : index
    %c4_80 = arith.constant 4 : index
    %191 = memref.load %arg0[%c3_79, %c4_80] : memref<6x5xf32, #tpu.memory_space<smem>>
    %192 = vector.broadcast %191 : f32 to vector<4x512xf32>
    %193 = arith.mulf %192, %115 : vector<4x512xf32>
    %194 = arith.addf %190, %193 : vector<4x512xf32>
    %cst_81 = arith.constant 0.000000e+00 : f32
    %195 = vector.broadcast %cst_81 : f32 to vector<4x17xf32>
    %196 = tpu.concatenate %195, %160, %195 in 1 : vector<4x17xf32>, vector<4x512xf32>, vector<4x17xf32> -> vector<4x546xf32>
    %197 = vector.extract_strided_slice %196 {offsets = [0, 0], sizes = [4, 512], strides = [1, 1]} : vector<4x546xf32> to vector<4x512xf32>
    %c0_82 = arith.constant 0 : index
    %c0_83 = arith.constant 0 : index
    %198 = vector.load %arg2[%c0_82, %c0_83] : memref<9x512xf32, #tpu.memory_space<vmem>>, vector<1x512xf32>
    %199 = vector.broadcast %198 : vector<1x512xf32> to vector<4x512xf32>
    %200 = arith.mulf %197, %199 : vector<4x512xf32>
    %201 = vector.extract_strided_slice %196 {offsets = [0, 1], sizes = [4, 512], strides = [1, 1]} : vector<4x546xf32> to vector<4x512xf32>
    %c1_84 = arith.constant 1 : index
    %c0_85 = arith.constant 0 : index
    %202 = vector.load %arg2[%c1_84, %c0_85] : memref<9x512xf32, #tpu.memory_space<vmem>>, vector<1x512xf32>
    %203 = vector.broadcast %202 : vector<1x512xf32> to vector<4x512xf32>
    %204 = arith.mulf %201, %203 : vector<4x512xf32>
    %205 = arith.addf %200, %204 : vector<4x512xf32>
    %206 = vector.extract_strided_slice %196 {offsets = [0, 2], sizes = [4, 512], strides = [1, 1]} : vector<4x546xf32> to vector<4x512xf32>
    %c2_86 = arith.constant 2 : index
    %c0_87 = arith.constant 0 : index
    %207 = vector.load %arg2[%c2_86, %c0_87] : memref<9x512xf32, #tpu.memory_space<vmem>>, vector<1x512xf32>
    %208 = vector.broadcast %207 : vector<1x512xf32> to vector<4x512xf32>
    %209 = arith.mulf %206, %208 : vector<4x512xf32>
    %210 = arith.addf %205, %209 : vector<4x512xf32>
    %211 = vector.extract_strided_slice %196 {offsets = [0, 16], sizes = [4, 512], strides = [1, 1]} : vector<4x546xf32> to vector<4x512xf32>
    %c3_88 = arith.constant 3 : index
    %c0_89 = arith.constant 0 : index
    %212 = vector.load %arg2[%c3_88, %c0_89] : memref<9x512xf32, #tpu.memory_space<vmem>>, vector<1x512xf32>
    %213 = vector.broadcast %212 : vector<1x512xf32> to vector<4x512xf32>
    %214 = arith.mulf %211, %213 : vector<4x512xf32>
    %215 = arith.addf %210, %214 : vector<4x512xf32>
    %216 = vector.extract_strided_slice %196 {offsets = [0, 17], sizes = [4, 512], strides = [1, 1]} : vector<4x546xf32> to vector<4x512xf32>
    %c4_90 = arith.constant 4 : index
    %c0_91 = arith.constant 0 : index
    %217 = vector.load %arg2[%c4_90, %c0_91] : memref<9x512xf32, #tpu.memory_space<vmem>>, vector<1x512xf32>
    %218 = vector.broadcast %217 : vector<1x512xf32> to vector<4x512xf32>
    %219 = arith.mulf %216, %218 : vector<4x512xf32>
    %220 = arith.addf %215, %219 : vector<4x512xf32>
    %221 = vector.extract_strided_slice %196 {offsets = [0, 18], sizes = [4, 512], strides = [1, 1]} : vector<4x546xf32> to vector<4x512xf32>
    %c5_92 = arith.constant 5 : index
    %c0_93 = arith.constant 0 : index
    %222 = vector.load %arg2[%c5_92, %c0_93] : memref<9x512xf32, #tpu.memory_space<vmem>>, vector<1x512xf32>
    %223 = vector.broadcast %222 : vector<1x512xf32> to vector<4x512xf32>
    %224 = arith.mulf %221, %223 : vector<4x512xf32>
    %225 = arith.addf %220, %224 : vector<4x512xf32>
    %226 = vector.extract_strided_slice %196 {offsets = [0, 32], sizes = [4, 512], strides = [1, 1]} : vector<4x546xf32> to vector<4x512xf32>
    %c6_94 = arith.constant 6 : index
    %c0_95 = arith.constant 0 : index
    %227 = vector.load %arg2[%c6_94, %c0_95] : memref<9x512xf32, #tpu.memory_space<vmem>>, vector<1x512xf32>
    %228 = vector.broadcast %227 : vector<1x512xf32> to vector<4x512xf32>
    %229 = arith.mulf %226, %228 : vector<4x512xf32>
    %230 = arith.addf %225, %229 : vector<4x512xf32>
    %231 = vector.extract_strided_slice %196 {offsets = [0, 33], sizes = [4, 512], strides = [1, 1]} : vector<4x546xf32> to vector<4x512xf32>
    %c7_96 = arith.constant 7 : index
    %c0_97 = arith.constant 0 : index
    %232 = vector.load %arg2[%c7_96, %c0_97] : memref<9x512xf32, #tpu.memory_space<vmem>>, vector<1x512xf32>
    %233 = vector.broadcast %232 : vector<1x512xf32> to vector<4x512xf32>
    %234 = arith.mulf %231, %233 : vector<4x512xf32>
    %235 = arith.addf %230, %234 : vector<4x512xf32>
    %236 = vector.extract_strided_slice %196 {offsets = [0, 34], sizes = [4, 512], strides = [1, 1]} : vector<4x546xf32> to vector<4x512xf32>
    %c8_98 = arith.constant 8 : index
    %c0_99 = arith.constant 0 : index
    %237 = vector.load %arg2[%c8_98, %c0_99] : memref<9x512xf32, #tpu.memory_space<vmem>>, vector<1x512xf32>
    %238 = vector.broadcast %237 : vector<1x512xf32> to vector<4x512xf32>
    %239 = arith.mulf %236, %238 : vector<4x512xf32>
    %240 = arith.addf %235, %239 : vector<4x512xf32>
    %241 = tpu.concatenate %200, %204, %209, %214, %219, %224, %229, %234, %239 in 0 : vector<4x512xf32>, vector<4x512xf32>, vector<4x512xf32>, vector<4x512xf32>, vector<4x512xf32>, vector<4x512xf32>, vector<4x512xf32>, vector<4x512xf32>, vector<4x512xf32> -> vector<36x512xf32>
    %c0_100 = arith.constant 0 : index
    %c0_101 = arith.constant 0 : index
    %242 = vector.load %arg3[%c0_100, %c0_101] : memref<1x512xf32, #tpu.memory_space<vmem>>, vector<1x512xf32>
    %243 = vector.broadcast %242 : vector<1x512xf32> to vector<4x512xf32>
    %244 = arith.mulf %240, %243 : vector<4x512xf32>
    %c0_102 = arith.constant 0 : index
    %c0_103 = arith.constant 0 : index
    %245 = vector.load %arg14[%c0_102, %c0_103] : memref<16x36xf32, #tpu.memory_space<vmem>>, vector<16x36xf32>
    %cst_104 = arith.constant 0.000000e+00 : f32
    %246 = vector.broadcast %cst_104 : f32 to vector<36x512xf32>
    %247 = arith.maximumf %241, %246 : vector<36x512xf32>
    %cst_105 = arith.constant dense<0.000000e+00> : vector<16x512xf32>
    %248 = tpu.matmul %245, %247, %cst_105 {dimension_numbers = #tpu.dot_dimension_numbers<[1], [0], [0], [1], [0, 0, 1, 1], [], []>} : vector<16x36xf32>, vector<36x512xf32>, vector<16x512xf32> -> vector<16x512xf32>
    %cst_106 = arith.constant dense<0.000000e+00> : vector<16xf32>
    %249 = vector.multi_reduction <add>, %248, %cst_106 [1] : vector<16x512xf32> to vector<16xf32>
    %250 = vector.shape_cast %249 : vector<16xf32> to vector<16x1xf32>
    %cst_107 = arith.constant 5.120000e+02 : f32
    %251 = vector.broadcast %cst_107 : f32 to vector<16x1xf32>
    %252 = arith.divf %250, %251 : vector<16x1xf32>
    %253 = vector.broadcast %252 : vector<16x1xf32> to vector<16x512xf32>
    %254 = arith.subf %248, %253 : vector<16x512xf32>
    %255 = arith.mulf %254, %254 : vector<16x512xf32>
    %cst_108 = arith.constant dense<0.000000e+00> : vector<16xf32>
    %256 = vector.multi_reduction <add>, %255, %cst_108 [1] : vector<16x512xf32> to vector<16xf32>
    %257 = vector.shape_cast %256 : vector<16xf32> to vector<16x1xf32>
    %cst_109 = arith.constant 5.120000e+02 : f32
    %258 = vector.broadcast %cst_109 : f32 to vector<16x1xf32>
    %259 = arith.divf %257, %258 : vector<16x1xf32>
    %260 = vector.broadcast %252 : vector<16x1xf32> to vector<16x512xf32>
    %261 = arith.subf %248, %260 : vector<16x512xf32>
    %cst_110 = arith.constant 9.99999974E-6 : f32
    %262 = vector.broadcast %cst_110 : f32 to vector<16x1xf32>
    %263 = arith.addf %259, %262 : vector<16x1xf32>
    %264 = math.rsqrt %263 : vector<16x1xf32>
    %265 = vector.broadcast %264 : vector<16x1xf32> to vector<16x512xf32>
    %266 = arith.mulf %261, %265 : vector<16x512xf32>
    %c0_111 = arith.constant 0 : index
    %c0_112 = arith.constant 0 : index
    %267 = vector.load %arg15[%c0_111, %c0_112] : memref<16x1xf32, #tpu.memory_space<vmem>>, vector<16x1xf32>
    %268 = vector.broadcast %267 : vector<16x1xf32> to vector<16x512xf32>
    %269 = arith.mulf %266, %268 : vector<16x512xf32>
    %c0_113 = arith.constant 0 : index
    %c0_114 = arith.constant 0 : index
    %270 = vector.load %arg16[%c0_113, %c0_114] : memref<16x1xf32, #tpu.memory_space<vmem>>, vector<16x1xf32>
    %271 = vector.broadcast %270 : vector<16x1xf32> to vector<16x512xf32>
    %272 = arith.addf %269, %271 : vector<16x512xf32>
    %c2_115 = arith.constant 2 : index
    %c1_116 = arith.constant 1 : index
    %273 = memref.load %arg0[%c2_115, %c1_116] : memref<6x5xf32, #tpu.memory_space<smem>>
    %274 = vector.broadcast %273 : f32 to vector<4x512xf32>
    %275 = arith.mulf %274, %160 : vector<4x512xf32>
    %c2_117 = arith.constant 2 : index
    %c3_118 = arith.constant 3 : index
    %276 = memref.load %arg0[%c2_117, %c3_118] : memref<6x5xf32, #tpu.memory_space<smem>>
    %277 = vector.extract_strided_slice %272 {offsets = [0, 0], sizes = [4, 512], strides = [1, 1]} : vector<16x512xf32> to vector<4x512xf32>
    %278 = vector.broadcast %276 : f32 to vector<4x512xf32>
    %279 = arith.mulf %278, %277 : vector<4x512xf32>
    %280 = arith.addf %275, %279 : vector<4x512xf32>
    %c2_119 = arith.constant 2 : index
    %c2_120 = arith.constant 2 : index
    %281 = memref.load %arg0[%c2_119, %c2_120] : memref<6x5xf32, #tpu.memory_space<smem>>
    %282 = vector.extract_strided_slice %272 {offsets = [8, 0], sizes = [4, 512], strides = [1, 1]} : vector<16x512xf32> to vector<4x512xf32>
    %283 = vector.broadcast %281 : f32 to vector<4x512xf32>
    %284 = arith.mulf %283, %282 : vector<4x512xf32>
    %285 = arith.addf %280, %284 : vector<4x512xf32>
    %c2_121 = arith.constant 2 : index
    %c4_122 = arith.constant 4 : index
    %286 = memref.load %arg0[%c2_121, %c4_122] : memref<6x5xf32, #tpu.memory_space<smem>>
    %287 = vector.broadcast %286 : f32 to vector<4x512xf32>
    %288 = arith.mulf %287, %244 : vector<4x512xf32>
    %289 = arith.addf %285, %288 : vector<4x512xf32>
    %290 = arith.addf %177, %289 : vector<4x512xf32>
    %c4_123 = arith.constant 4 : index
    %c1_124 = arith.constant 1 : index
    %291 = memref.load %arg0[%c4_123, %c1_124] : memref<6x5xf32, #tpu.memory_space<smem>>
    %292 = vector.broadcast %291 : f32 to vector<4x512xf32>
    %293 = arith.mulf %292, %160 : vector<4x512xf32>
    %c4_125 = arith.constant 4 : index
    %c3_126 = arith.constant 3 : index
    %294 = memref.load %arg0[%c4_125, %c3_126] : memref<6x5xf32, #tpu.memory_space<smem>>
    %295 = vector.extract_strided_slice %272 {offsets = [4, 0], sizes = [4, 512], strides = [1, 1]} : vector<16x512xf32> to vector<4x512xf32>
    %296 = vector.broadcast %294 : f32 to vector<4x512xf32>
    %297 = arith.mulf %296, %295 : vector<4x512xf32>
    %298 = arith.addf %293, %297 : vector<4x512xf32>
    %c4_127 = arith.constant 4 : index
    %c2_128 = arith.constant 2 : index
    %299 = memref.load %arg0[%c4_127, %c2_128] : memref<6x5xf32, #tpu.memory_space<smem>>
    %300 = vector.extract_strided_slice %272 {offsets = [12, 0], sizes = [4, 512], strides = [1, 1]} : vector<16x512xf32> to vector<4x512xf32>
    %301 = vector.broadcast %299 : f32 to vector<4x512xf32>
    %302 = arith.mulf %301, %300 : vector<4x512xf32>
    %303 = arith.addf %298, %302 : vector<4x512xf32>
    %c4_129 = arith.constant 4 : index
    %c4_130 = arith.constant 4 : index
    %304 = memref.load %arg0[%c4_129, %c4_130] : memref<6x5xf32, #tpu.memory_space<smem>>
    %305 = vector.broadcast %304 : f32 to vector<4x512xf32>
    %306 = arith.mulf %305, %244 : vector<4x512xf32>
    %307 = arith.addf %303, %306 : vector<4x512xf32>
    %308 = arith.addf %194, %307 : vector<4x512xf32>
    %cst_131 = arith.constant 0.000000e+00 : f32
    %309 = vector.broadcast %cst_131 : f32 to vector<4x17xf32>
    %310 = tpu.concatenate %309, %290, %309 in 1 : vector<4x17xf32>, vector<4x512xf32>, vector<4x17xf32> -> vector<4x546xf32>
    %311 = vector.extract_strided_slice %310 {offsets = [0, 0], sizes = [4, 512], strides = [1, 1]} : vector<4x546xf32> to vector<4x512xf32>
    %c0_132 = arith.constant 0 : index
    %c0_133 = arith.constant 0 : index
    %312 = vector.load %arg2[%c0_132, %c0_133] : memref<9x512xf32, #tpu.memory_space<vmem>>, vector<1x512xf32>
    %313 = vector.broadcast %312 : vector<1x512xf32> to vector<4x512xf32>
    %314 = arith.mulf %311, %313 : vector<4x512xf32>
    %315 = vector.extract_strided_slice %310 {offsets = [0, 1], sizes = [4, 512], strides = [1, 1]} : vector<4x546xf32> to vector<4x512xf32>
    %c1_134 = arith.constant 1 : index
    %c0_135 = arith.constant 0 : index
    %316 = vector.load %arg2[%c1_134, %c0_135] : memref<9x512xf32, #tpu.memory_space<vmem>>, vector<1x512xf32>
    %317 = vector.broadcast %316 : vector<1x512xf32> to vector<4x512xf32>
    %318 = arith.mulf %315, %317 : vector<4x512xf32>
    %319 = arith.addf %314, %318 : vector<4x512xf32>
    %320 = vector.extract_strided_slice %310 {offsets = [0, 2], sizes = [4, 512], strides = [1, 1]} : vector<4x546xf32> to vector<4x512xf32>
    %c2_136 = arith.constant 2 : index
    %c0_137 = arith.constant 0 : index
    %321 = vector.load %arg2[%c2_136, %c0_137] : memref<9x512xf32, #tpu.memory_space<vmem>>, vector<1x512xf32>
    %322 = vector.broadcast %321 : vector<1x512xf32> to vector<4x512xf32>
    %323 = arith.mulf %320, %322 : vector<4x512xf32>
    %324 = arith.addf %319, %323 : vector<4x512xf32>
    %325 = vector.extract_strided_slice %310 {offsets = [0, 16], sizes = [4, 512], strides = [1, 1]} : vector<4x546xf32> to vector<4x512xf32>
    %c3_138 = arith.constant 3 : index
    %c0_139 = arith.constant 0 : index
    %326 = vector.load %arg2[%c3_138, %c0_139] : memref<9x512xf32, #tpu.memory_space<vmem>>, vector<1x512xf32>
    %327 = vector.broadcast %326 : vector<1x512xf32> to vector<4x512xf32>
    %328 = arith.mulf %325, %327 : vector<4x512xf32>
    %329 = arith.addf %324, %328 : vector<4x512xf32>
    %330 = vector.extract_strided_slice %310 {offsets = [0, 17], sizes = [4, 512], strides = [1, 1]} : vector<4x546xf32> to vector<4x512xf32>
    %c4_140 = arith.constant 4 : index
    %c0_141 = arith.constant 0 : index
    %331 = vector.load %arg2[%c4_140, %c0_141] : memref<9x512xf32, #tpu.memory_space<vmem>>, vector<1x512xf32>
    %332 = vector.broadcast %331 : vector<1x512xf32> to vector<4x512xf32>
    %333 = arith.mulf %330, %332 : vector<4x512xf32>
    %334 = arith.addf %329, %333 : vector<4x512xf32>
    %335 = vector.extract_strided_slice %310 {offsets = [0, 18], sizes = [4, 512], strides = [1, 1]} : vector<4x546xf32> to vector<4x512xf32>
    %c5_142 = arith.constant 5 : index
    %c0_143 = arith.constant 0 : index
    %336 = vector.load %arg2[%c5_142, %c0_143] : memref<9x512xf32, #tpu.memory_space<vmem>>, vector<1x512xf32>
    %337 = vector.broadcast %336 : vector<1x512xf32> to vector<4x512xf32>
    %338 = arith.mulf %335, %337 : vector<4x512xf32>
    %339 = arith.addf %334, %338 : vector<4x512xf32>
    %340 = vector.extract_strided_slice %310 {offsets = [0, 32], sizes = [4, 512], strides = [1, 1]} : vector<4x546xf32> to vector<4x512xf32>
    %c6_144 = arith.constant 6 : index
    %c0_145 = arith.constant 0 : index
    %341 = vector.load %arg2[%c6_144, %c0_145] : memref<9x512xf32, #tpu.memory_space<vmem>>, vector<1x512xf32>
    %342 = vector.broadcast %341 : vector<1x512xf32> to vector<4x512xf32>
    %343 = arith.mulf %340, %342 : vector<4x512xf32>
    %344 = arith.addf %339, %343 : vector<4x512xf32>
    %345 = vector.extract_strided_slice %310 {offsets = [0, 33], sizes = [4, 512], strides = [1, 1]} : vector<4x546xf32> to vector<4x512xf32>
    %c7_146 = arith.constant 7 : index
    %c0_147 = arith.constant 0 : index
    %346 = vector.load %arg2[%c7_146, %c0_147] : memref<9x512xf32, #tpu.memory_space<vmem>>, vector<1x512xf32>
    %347 = vector.broadcast %346 : vector<1x512xf32> to vector<4x512xf32>
    %348 = arith.mulf %345, %347 : vector<4x512xf32>
    %349 = arith.addf %344, %348 : vector<4x512xf32>
    %350 = vector.extract_strided_slice %310 {offsets = [0, 34], sizes = [4, 512], strides = [1, 1]} : vector<4x546xf32> to vector<4x512xf32>
    %c8_148 = arith.constant 8 : index
    %c0_149 = arith.constant 0 : index
    %351 = vector.load %arg2[%c8_148, %c0_149] : memref<9x512xf32, #tpu.memory_space<vmem>>, vector<1x512xf32>
    %352 = vector.broadcast %351 : vector<1x512xf32> to vector<4x512xf32>
    %353 = arith.mulf %350, %352 : vector<4x512xf32>
    %354 = arith.addf %349, %353 : vector<4x512xf32>
    %355 = tpu.concatenate %314, %318, %323, %328, %333, %338, %343, %348, %353 in 0 : vector<4x512xf32>, vector<4x512xf32>, vector<4x512xf32>, vector<4x512xf32>, vector<4x512xf32>, vector<4x512xf32>, vector<4x512xf32>, vector<4x512xf32>, vector<4x512xf32> -> vector<36x512xf32>
    %c0_150 = arith.constant 0 : index
    %c0_151 = arith.constant 0 : index
    %356 = vector.load %arg3[%c0_150, %c0_151] : memref<1x512xf32, #tpu.memory_space<vmem>>, vector<1x512xf32>
    %357 = vector.broadcast %356 : vector<1x512xf32> to vector<4x512xf32>
    %358 = arith.mulf %354, %357 : vector<4x512xf32>
    %c0_152 = arith.constant 0 : index
    %c0_153 = arith.constant 0 : index
    %359 = vector.load %arg17[%c0_152, %c0_153] : memref<8x36xf32, #tpu.memory_space<vmem>>, vector<8x36xf32>
    %cst_154 = arith.constant 0.000000e+00 : f32
    %360 = vector.broadcast %cst_154 : f32 to vector<36x512xf32>
    %361 = arith.maximumf %355, %360 : vector<36x512xf32>
    %cst_155 = arith.constant dense<0.000000e+00> : vector<8x512xf32>
    %362 = tpu.matmul %359, %361, %cst_155 {dimension_numbers = #tpu.dot_dimension_numbers<[1], [0], [0], [1], [0, 0, 1, 1], [], []>} : vector<8x36xf32>, vector<36x512xf32>, vector<8x512xf32> -> vector<8x512xf32>
    %cst_156 = arith.constant dense<0.000000e+00> : vector<8xf32>
    %363 = vector.multi_reduction <add>, %362, %cst_156 [1] : vector<8x512xf32> to vector<8xf32>
    %364 = vector.shape_cast %363 : vector<8xf32> to vector<8x1xf32>
    %cst_157 = arith.constant 5.120000e+02 : f32
    %365 = vector.broadcast %cst_157 : f32 to vector<8x1xf32>
    %366 = arith.divf %364, %365 : vector<8x1xf32>
    %367 = vector.broadcast %366 : vector<8x1xf32> to vector<8x512xf32>
    %368 = arith.subf %362, %367 : vector<8x512xf32>
    %369 = arith.mulf %368, %368 : vector<8x512xf32>
    %cst_158 = arith.constant dense<0.000000e+00> : vector<8xf32>
    %370 = vector.multi_reduction <add>, %369, %cst_158 [1] : vector<8x512xf32> to vector<8xf32>
    %371 = vector.shape_cast %370 : vector<8xf32> to vector<8x1xf32>
    %cst_159 = arith.constant 5.120000e+02 : f32
    %372 = vector.broadcast %cst_159 : f32 to vector<8x1xf32>
    %373 = arith.divf %371, %372 : vector<8x1xf32>
    %374 = vector.broadcast %366 : vector<8x1xf32> to vector<8x512xf32>
    %375 = arith.subf %362, %374 : vector<8x512xf32>
    %cst_160 = arith.constant 9.99999974E-6 : f32
    %376 = vector.broadcast %cst_160 : f32 to vector<8x1xf32>
    %377 = arith.addf %373, %376 : vector<8x1xf32>
    %378 = math.rsqrt %377 : vector<8x1xf32>
    %379 = vector.broadcast %378 : vector<8x1xf32> to vector<8x512xf32>
    %380 = arith.mulf %375, %379 : vector<8x512xf32>
    %c0_161 = arith.constant 0 : index
    %c0_162 = arith.constant 0 : index
    %381 = vector.load %arg18[%c0_161, %c0_162] : memref<8x1xf32, #tpu.memory_space<vmem>>, vector<8x1xf32>
    %382 = vector.broadcast %381 : vector<8x1xf32> to vector<8x512xf32>
    %383 = arith.mulf %380, %382 : vector<8x512xf32>
    %c0_163 = arith.constant 0 : index
    %c0_164 = arith.constant 0 : index
    %384 = vector.load %arg19[%c0_163, %c0_164] : memref<8x1xf32, #tpu.memory_space<vmem>>, vector<8x1xf32>
    %385 = vector.broadcast %384 : vector<8x1xf32> to vector<8x512xf32>
    %386 = arith.addf %383, %385 : vector<8x512xf32>
    %c5_165 = arith.constant 5 : index
    %c1_166 = arith.constant 1 : index
    %387 = memref.load %arg0[%c5_165, %c1_166] : memref<6x5xf32, #tpu.memory_space<smem>>
    %388 = vector.broadcast %387 : f32 to vector<4x512xf32>
    %389 = arith.mulf %388, %290 : vector<4x512xf32>
    %c5_167 = arith.constant 5 : index
    %c3_168 = arith.constant 3 : index
    %390 = memref.load %arg0[%c5_167, %c3_168] : memref<6x5xf32, #tpu.memory_space<smem>>
    %391 = vector.extract_strided_slice %386 {offsets = [0, 0], sizes = [4, 512], strides = [1, 1]} : vector<8x512xf32> to vector<4x512xf32>
    %392 = vector.broadcast %390 : f32 to vector<4x512xf32>
    %393 = arith.mulf %392, %391 : vector<4x512xf32>
    %394 = arith.addf %389, %393 : vector<4x512xf32>
    %c5_169 = arith.constant 5 : index
    %c2_170 = arith.constant 2 : index
    %395 = memref.load %arg0[%c5_169, %c2_170] : memref<6x5xf32, #tpu.memory_space<smem>>
    %396 = vector.extract_strided_slice %386 {offsets = [4, 0], sizes = [4, 512], strides = [1, 1]} : vector<8x512xf32> to vector<4x512xf32>
    %397 = vector.broadcast %395 : f32 to vector<4x512xf32>
    %398 = arith.mulf %397, %396 : vector<4x512xf32>
    %399 = arith.addf %394, %398 : vector<4x512xf32>
    %c5_171 = arith.constant 5 : index
    %c4_172 = arith.constant 4 : index
    %400 = memref.load %arg0[%c5_171, %c4_172] : memref<6x5xf32, #tpu.memory_space<smem>>
    %401 = vector.broadcast %400 : f32 to vector<4x512xf32>
    %402 = arith.mulf %401, %358 : vector<4x512xf32>
    %403 = arith.addf %399, %402 : vector<4x512xf32>
    %404 = arith.addf %308, %403 : vector<4x512xf32>
    %cst_173 = arith.constant 0.000000e+00 : f32
    %405 = vector.broadcast %cst_173 : f32 to vector<4x17xf32>
    %406 = tpu.concatenate %405, %404, %405 in 1 : vector<4x17xf32>, vector<4x512xf32>, vector<4x17xf32> -> vector<4x546xf32>
    %407 = vector.extract_strided_slice %406 {offsets = [0, 0], sizes = [4, 512], strides = [1, 1]} : vector<4x546xf32> to vector<4x512xf32>
    %c0_174 = arith.constant 0 : index
    %c0_175 = arith.constant 0 : index
    %408 = vector.load %arg2[%c0_174, %c0_175] : memref<9x512xf32, #tpu.memory_space<vmem>>, vector<1x512xf32>
    %409 = vector.broadcast %408 : vector<1x512xf32> to vector<4x512xf32>
    %410 = arith.mulf %407, %409 : vector<4x512xf32>
    %411 = vector.extract_strided_slice %406 {offsets = [0, 1], sizes = [4, 512], strides = [1, 1]} : vector<4x546xf32> to vector<4x512xf32>
    %c1_176 = arith.constant 1 : index
    %c0_177 = arith.constant 0 : index
    %412 = vector.load %arg2[%c1_176, %c0_177] : memref<9x512xf32, #tpu.memory_space<vmem>>, vector<1x512xf32>
    %413 = vector.broadcast %412 : vector<1x512xf32> to vector<4x512xf32>
    %414 = arith.mulf %411, %413 : vector<4x512xf32>
    %415 = vector.extract_strided_slice %406 {offsets = [0, 2], sizes = [4, 512], strides = [1, 1]} : vector<4x546xf32> to vector<4x512xf32>
    %c2_178 = arith.constant 2 : index
    %c0_179 = arith.constant 0 : index
    %416 = vector.load %arg2[%c2_178, %c0_179] : memref<9x512xf32, #tpu.memory_space<vmem>>, vector<1x512xf32>
    %417 = vector.broadcast %416 : vector<1x512xf32> to vector<4x512xf32>
    %418 = arith.mulf %415, %417 : vector<4x512xf32>
    %419 = vector.extract_strided_slice %406 {offsets = [0, 16], sizes = [4, 512], strides = [1, 1]} : vector<4x546xf32> to vector<4x512xf32>
    %c3_180 = arith.constant 3 : index
    %c0_181 = arith.constant 0 : index
    %420 = vector.load %arg2[%c3_180, %c0_181] : memref<9x512xf32, #tpu.memory_space<vmem>>, vector<1x512xf32>
    %421 = vector.broadcast %420 : vector<1x512xf32> to vector<4x512xf32>
    %422 = arith.mulf %419, %421 : vector<4x512xf32>
    %423 = vector.extract_strided_slice %406 {offsets = [0, 17], sizes = [4, 512], strides = [1, 1]} : vector<4x546xf32> to vector<4x512xf32>
    %c4_182 = arith.constant 4 : index
    %c0_183 = arith.constant 0 : index
    %424 = vector.load %arg2[%c4_182, %c0_183] : memref<9x512xf32, #tpu.memory_space<vmem>>, vector<1x512xf32>
    %425 = vector.broadcast %424 : vector<1x512xf32> to vector<4x512xf32>
    %426 = arith.mulf %423, %425 : vector<4x512xf32>
    %427 = vector.extract_strided_slice %406 {offsets = [0, 18], sizes = [4, 512], strides = [1, 1]} : vector<4x546xf32> to vector<4x512xf32>
    %c5_184 = arith.constant 5 : index
    %c0_185 = arith.constant 0 : index
    %428 = vector.load %arg2[%c5_184, %c0_185] : memref<9x512xf32, #tpu.memory_space<vmem>>, vector<1x512xf32>
    %429 = vector.broadcast %428 : vector<1x512xf32> to vector<4x512xf32>
    %430 = arith.mulf %427, %429 : vector<4x512xf32>
    %431 = vector.extract_strided_slice %406 {offsets = [0, 32], sizes = [4, 512], strides = [1, 1]} : vector<4x546xf32> to vector<4x512xf32>
    %c6_186 = arith.constant 6 : index
    %c0_187 = arith.constant 0 : index
    %432 = vector.load %arg2[%c6_186, %c0_187] : memref<9x512xf32, #tpu.memory_space<vmem>>, vector<1x512xf32>
    %433 = vector.broadcast %432 : vector<1x512xf32> to vector<4x512xf32>
    %434 = arith.mulf %431, %433 : vector<4x512xf32>
    %435 = vector.extract_strided_slice %406 {offsets = [0, 33], sizes = [4, 512], strides = [1, 1]} : vector<4x546xf32> to vector<4x512xf32>
    %c7_188 = arith.constant 7 : index
    %c0_189 = arith.constant 0 : index
    %436 = vector.load %arg2[%c7_188, %c0_189] : memref<9x512xf32, #tpu.memory_space<vmem>>, vector<1x512xf32>
    %437 = vector.broadcast %436 : vector<1x512xf32> to vector<4x512xf32>
    %438 = arith.mulf %435, %437 : vector<4x512xf32>
    %439 = vector.extract_strided_slice %406 {offsets = [0, 34], sizes = [4, 512], strides = [1, 1]} : vector<4x546xf32> to vector<4x512xf32>
    %c8_190 = arith.constant 8 : index
    %c0_191 = arith.constant 0 : index
    %440 = vector.load %arg2[%c8_190, %c0_191] : memref<9x512xf32, #tpu.memory_space<vmem>>, vector<1x512xf32>
    %441 = vector.broadcast %440 : vector<1x512xf32> to vector<4x512xf32>
    %442 = arith.mulf %439, %441 : vector<4x512xf32>
    %443 = tpu.concatenate %410, %414, %418, %422, %426, %430, %434, %438, %442 in 0 : vector<4x512xf32>, vector<4x512xf32>, vector<4x512xf32>, vector<4x512xf32>, vector<4x512xf32>, vector<4x512xf32>, vector<4x512xf32>, vector<4x512xf32>, vector<4x512xf32> -> vector<36x512xf32>
    %c0_192 = arith.constant 0 : index
    %c0_193 = arith.constant 0 : index
    %444 = vector.load %arg20[%c0_192, %c0_193] : memref<512x128xf32, #tpu.memory_space<vmem>>, vector<512x128xf32>
    %cst_194 = arith.constant dense<0.000000e+00> : vector<36x128xf32>
    %445 = tpu.matmul %443, %444, %cst_194 {dimension_numbers = #tpu.dot_dimension_numbers<[1], [0], [0], [1], [0, 0, 1, 1], [], []>} : vector<36x512xf32>, vector<512x128xf32>, vector<36x128xf32> -> vector<36x128xf32>
    %c0_195 = arith.constant 0 : index
    %c0_196 = arith.constant 0 : index
    %446 = vector.load %arg21[%c0_195, %c0_196] : memref<8x36xf32, #tpu.memory_space<vmem>>, vector<8x36xf32>
    %cst_197 = arith.constant 0.000000e+00 : f32
    %447 = vector.broadcast %cst_197 : f32 to vector<36x128xf32>
    %448 = arith.maximumf %445, %447 : vector<36x128xf32>
    %cst_198 = arith.constant dense<0.000000e+00> : vector<8x128xf32>
    %449 = tpu.matmul %446, %448, %cst_198 {dimension_numbers = #tpu.dot_dimension_numbers<[1], [0], [0], [1], [0, 0, 1, 1], [], []>} : vector<8x36xf32>, vector<36x128xf32>, vector<8x128xf32> -> vector<8x128xf32>
    %cst_199 = arith.constant dense<0.000000e+00> : vector<8xf32>
    %450 = vector.multi_reduction <add>, %449, %cst_199 [1] : vector<8x128xf32> to vector<8xf32>
    %451 = vector.shape_cast %450 : vector<8xf32> to vector<8x1xf32>
    %cst_200 = arith.constant 1.280000e+02 : f32
    %452 = vector.broadcast %cst_200 : f32 to vector<8x1xf32>
    %453 = arith.divf %451, %452 : vector<8x1xf32>
    %454 = vector.broadcast %453 : vector<8x1xf32> to vector<8x128xf32>
    %455 = arith.subf %449, %454 : vector<8x128xf32>
    %456 = arith.mulf %455, %455 : vector<8x128xf32>
    %cst_201 = arith.constant dense<0.000000e+00> : vector<8xf32>
    %457 = vector.multi_reduction <add>, %456, %cst_201 [1] : vector<8x128xf32> to vector<8xf32>
    %458 = vector.shape_cast %457 : vector<8xf32> to vector<8x1xf32>
    %cst_202 = arith.constant 1.280000e+02 : f32
    %459 = vector.broadcast %cst_202 : f32 to vector<8x1xf32>
    %460 = arith.divf %458, %459 : vector<8x1xf32>
    %461 = vector.broadcast %453 : vector<8x1xf32> to vector<8x128xf32>
    %462 = arith.subf %449, %461 : vector<8x128xf32>
    %cst_203 = arith.constant 9.99999974E-6 : f32
    %463 = vector.broadcast %cst_203 : f32 to vector<8x1xf32>
    %464 = arith.addf %460, %463 : vector<8x1xf32>
    %465 = math.rsqrt %464 : vector<8x1xf32>
    %466 = vector.broadcast %465 : vector<8x1xf32> to vector<8x128xf32>
    %467 = arith.mulf %462, %466 : vector<8x128xf32>
    %c0_204 = arith.constant 0 : index
    %c0_205 = arith.constant 0 : index
    %468 = vector.load %arg22[%c0_204, %c0_205] : memref<8x1xf32, #tpu.memory_space<vmem>>, vector<8x1xf32>
    %469 = vector.broadcast %468 : vector<8x1xf32> to vector<8x128xf32>
    %470 = arith.mulf %467, %469 : vector<8x128xf32>
    %c0_206 = arith.constant 0 : index
    %c0_207 = arith.constant 0 : index
    %471 = vector.load %arg23[%c0_206, %c0_207] : memref<8x1xf32, #tpu.memory_space<vmem>>, vector<8x1xf32>
    %472 = vector.broadcast %471 : vector<8x1xf32> to vector<8x128xf32>
    %473 = arith.addf %470, %472 : vector<8x128xf32>
    %cst_208 = arith.constant 0.000000e+00 : f32
    %474 = vector.broadcast %cst_208 : f32 to vector<8x9xf32>
    %475 = tpu.concatenate %474, %473, %474 in 1 : vector<8x9xf32>, vector<8x128xf32>, vector<8x9xf32> -> vector<8x146xf32>
    %476 = vector.extract_strided_slice %475 {offsets = [0, 0], sizes = [8, 128], strides = [1, 1]} : vector<8x146xf32> to vector<8x128xf32>
    %c0_209 = arith.constant 0 : index
    %c0_210 = arith.constant 0 : index
    %477 = vector.load %arg4[%c0_209, %c0_210] : memref<9x128xf32, #tpu.memory_space<vmem>>, vector<1x128xf32>
    %478 = vector.broadcast %477 : vector<1x128xf32> to vector<8x128xf32>
    %479 = arith.mulf %476, %478 : vector<8x128xf32>
    %480 = vector.extract_strided_slice %475 {offsets = [0, 1], sizes = [8, 128], strides = [1, 1]} : vector<8x146xf32> to vector<8x128xf32>
    %c1_211 = arith.constant 1 : index
    %c0_212 = arith.constant 0 : index
    %481 = vector.load %arg4[%c1_211, %c0_212] : memref<9x128xf32, #tpu.memory_space<vmem>>, vector<1x128xf32>
    %482 = vector.broadcast %481 : vector<1x128xf32> to vector<8x128xf32>
    %483 = arith.mulf %480, %482 : vector<8x128xf32>
    %484 = vector.extract_strided_slice %475 {offsets = [0, 2], sizes = [8, 128], strides = [1, 1]} : vector<8x146xf32> to vector<8x128xf32>
    %c2_213 = arith.constant 2 : index
    %c0_214 = arith.constant 0 : index
    %485 = vector.load %arg4[%c2_213, %c0_214] : memref<9x128xf32, #tpu.memory_space<vmem>>, vector<1x128xf32>
    %486 = vector.broadcast %485 : vector<1x128xf32> to vector<8x128xf32>
    %487 = arith.mulf %484, %486 : vector<8x128xf32>
    %488 = vector.extract_strided_slice %475 {offsets = [0, 8], sizes = [8, 128], strides = [1, 1]} : vector<8x146xf32> to vector<8x128xf32>
    %c3_215 = arith.constant 3 : index
    %c0_216 = arith.constant 0 : index
    %489 = vector.load %arg4[%c3_215, %c0_216] : memref<9x128xf32, #tpu.memory_space<vmem>>, vector<1x128xf32>
    %490 = vector.broadcast %489 : vector<1x128xf32> to vector<8x128xf32>
    %491 = arith.mulf %488, %490 : vector<8x128xf32>
    %492 = vector.extract_strided_slice %475 {offsets = [0, 9], sizes = [8, 128], strides = [1, 1]} : vector<8x146xf32> to vector<8x128xf32>
    %c4_217 = arith.constant 4 : index
    %c0_218 = arith.constant 0 : index
    %493 = vector.load %arg4[%c4_217, %c0_218] : memref<9x128xf32, #tpu.memory_space<vmem>>, vector<1x128xf32>
    %494 = vector.broadcast %493 : vector<1x128xf32> to vector<8x128xf32>
    %495 = arith.mulf %492, %494 : vector<8x128xf32>
    %496 = vector.extract_strided_slice %475 {offsets = [0, 10], sizes = [8, 128], strides = [1, 1]} : vector<8x146xf32> to vector<8x128xf32>
    %c5_219 = arith.constant 5 : index
    %c0_220 = arith.constant 0 : index
    %497 = vector.load %arg4[%c5_219, %c0_220] : memref<9x128xf32, #tpu.memory_space<vmem>>, vector<1x128xf32>
    %498 = vector.broadcast %497 : vector<1x128xf32> to vector<8x128xf32>
    %499 = arith.mulf %496, %498 : vector<8x128xf32>
    %500 = vector.extract_strided_slice %475 {offsets = [0, 16], sizes = [8, 128], strides = [1, 1]} : vector<8x146xf32> to vector<8x128xf32>
    %c6_221 = arith.constant 6 : index
    %c0_222 = arith.constant 0 : index
    %501 = vector.load %arg4[%c6_221, %c0_222] : memref<9x128xf32, #tpu.memory_space<vmem>>, vector<1x128xf32>
    %502 = vector.broadcast %501 : vector<1x128xf32> to vector<8x128xf32>
    %503 = arith.mulf %500, %502 : vector<8x128xf32>
    %504 = vector.extract_strided_slice %475 {offsets = [0, 17], sizes = [8, 128], strides = [1, 1]} : vector<8x146xf32> to vector<8x128xf32>
    %c7_223 = arith.constant 7 : index
    %c0_224 = arith.constant 0 : index
    %505 = vector.load %arg4[%c7_223, %c0_224] : memref<9x128xf32, #tpu.memory_space<vmem>>, vector<1x128xf32>
    %506 = vector.broadcast %505 : vector<1x128xf32> to vector<8x128xf32>
    %507 = arith.mulf %504, %506 : vector<8x128xf32>
    %508 = vector.extract_strided_slice %475 {offsets = [0, 18], sizes = [8, 128], strides = [1, 1]} : vector<8x146xf32> to vector<8x128xf32>
    %c8_225 = arith.constant 8 : index
    %c0_226 = arith.constant 0 : index
    %509 = vector.load %arg4[%c8_225, %c0_226] : memref<9x128xf32, #tpu.memory_space<vmem>>, vector<1x128xf32>
    %510 = vector.broadcast %509 : vector<1x128xf32> to vector<8x128xf32>
    %511 = arith.mulf %508, %510 : vector<8x128xf32>
    %512 = tpu.concatenate %479, %483, %487, %491, %495, %499, %503, %507, %511 in 0 : vector<8x128xf32>, vector<8x128xf32>, vector<8x128xf32>, vector<8x128xf32>, vector<8x128xf32>, vector<8x128xf32>, vector<8x128xf32>, vector<8x128xf32>, vector<8x128xf32> -> vector<72x128xf32>
    %c0_227 = arith.constant 0 : index
    %c0_228 = arith.constant 0 : index
    %513 = vector.load %arg24[%c0_227, %c0_228] : memref<8x72xf32, #tpu.memory_space<vmem>>, vector<8x72xf32>
    %cst_229 = arith.constant 0.000000e+00 : f32
    %514 = vector.broadcast %cst_229 : f32 to vector<72x128xf32>
    %515 = arith.maximumf %512, %514 : vector<72x128xf32>
    %cst_230 = arith.constant dense<0.000000e+00> : vector<8x128xf32>
    %516 = tpu.matmul %513, %515, %cst_230 {dimension_numbers = #tpu.dot_dimension_numbers<[1], [0], [0], [1], [0, 0, 1, 1], [], []>} : vector<8x72xf32>, vector<72x128xf32>, vector<8x128xf32> -> vector<8x128xf32>
    %cst_231 = arith.constant dense<0.000000e+00> : vector<8xf32>
    %517 = vector.multi_reduction <add>, %516, %cst_231 [1] : vector<8x128xf32> to vector<8xf32>
    %518 = vector.shape_cast %517 : vector<8xf32> to vector<8x1xf32>
    %cst_232 = arith.constant 1.280000e+02 : f32
    %519 = vector.broadcast %cst_232 : f32 to vector<8x1xf32>
    %520 = arith.divf %518, %519 : vector<8x1xf32>
    %521 = vector.broadcast %520 : vector<8x1xf32> to vector<8x128xf32>
    %522 = arith.subf %516, %521 : vector<8x128xf32>
    %523 = arith.mulf %522, %522 : vector<8x128xf32>
    %cst_233 = arith.constant dense<0.000000e+00> : vector<8xf32>
    %524 = vector.multi_reduction <add>, %523, %cst_233 [1] : vector<8x128xf32> to vector<8xf32>
    %525 = vector.shape_cast %524 : vector<8xf32> to vector<8x1xf32>
    %cst_234 = arith.constant 1.280000e+02 : f32
    %526 = vector.broadcast %cst_234 : f32 to vector<8x1xf32>
    %527 = arith.divf %525, %526 : vector<8x1xf32>
    %528 = vector.broadcast %520 : vector<8x1xf32> to vector<8x128xf32>
    %529 = arith.subf %516, %528 : vector<8x128xf32>
    %cst_235 = arith.constant 9.99999974E-6 : f32
    %530 = vector.broadcast %cst_235 : f32 to vector<8x1xf32>
    %531 = arith.addf %527, %530 : vector<8x1xf32>
    %532 = math.rsqrt %531 : vector<8x1xf32>
    %533 = vector.broadcast %532 : vector<8x1xf32> to vector<8x128xf32>
    %534 = arith.mulf %529, %533 : vector<8x128xf32>
    %c0_236 = arith.constant 0 : index
    %c0_237 = arith.constant 0 : index
    %535 = vector.load %arg25[%c0_236, %c0_237] : memref<8x1xf32, #tpu.memory_space<vmem>>, vector<8x1xf32>
    %536 = vector.broadcast %535 : vector<8x1xf32> to vector<8x128xf32>
    %537 = arith.mulf %534, %536 : vector<8x128xf32>
    %c0_238 = arith.constant 0 : index
    %c0_239 = arith.constant 0 : index
    %538 = vector.load %arg26[%c0_238, %c0_239] : memref<8x1xf32, #tpu.memory_space<vmem>>, vector<8x1xf32>
    %539 = vector.broadcast %538 : vector<8x1xf32> to vector<8x128xf32>
    %540 = arith.addf %537, %539 : vector<8x128xf32>
    %541 = vector.extract_strided_slice %445 {offsets = [16, 0], sizes = [4, 128], strides = [1, 1]} : vector<36x128xf32> to vector<4x128xf32>
    %542 = vector.extract_strided_slice %445 {offsets = [20, 0], sizes = [4, 128], strides = [1, 1]} : vector<36x128xf32> to vector<4x128xf32>
    %543 = arith.addf %541, %542 : vector<4x128xf32>
    %544 = vector.extract_strided_slice %445 {offsets = [28, 0], sizes = [4, 128], strides = [1, 1]} : vector<36x128xf32> to vector<4x128xf32>
    %545 = arith.addf %543, %544 : vector<4x128xf32>
    %546 = vector.extract_strided_slice %445 {offsets = [32, 0], sizes = [4, 128], strides = [1, 1]} : vector<36x128xf32> to vector<4x128xf32>
    %547 = arith.addf %545, %546 : vector<4x128xf32>
    %cst_240 = arith.constant 2.500000e-01 : f32
    %548 = vector.broadcast %cst_240 : f32 to vector<4x128xf32>
    %549 = arith.mulf %548, %547 : vector<4x128xf32>
    %c0_241 = arith.constant 0 : index
    %c0_242 = arith.constant 0 : index
    %550 = vector.load %arg27[%c0_241, %c0_242] : memref<8x4xf32, #tpu.memory_space<vmem>>, vector<8x4xf32>
    %cst_243 = arith.constant dense<0.000000e+00> : vector<8x128xf32>
    %551 = tpu.matmul %550, %549, %cst_243 {dimension_numbers = #tpu.dot_dimension_numbers<[1], [0], [0], [1], [0, 0, 1, 1], [], []>} : vector<8x4xf32>, vector<4x128xf32>, vector<8x128xf32> -> vector<8x128xf32>
    %552 = arith.addf %540, %551 : vector<8x128xf32>
    %cst_244 = arith.constant 0.000000e+00 : f32
    %553 = vector.broadcast %cst_244 : f32 to vector<8x9xf32>
    %554 = tpu.concatenate %553, %552, %553 in 1 : vector<8x9xf32>, vector<8x128xf32>, vector<8x9xf32> -> vector<8x146xf32>
    %555 = vector.extract_strided_slice %554 {offsets = [0, 0], sizes = [8, 128], strides = [1, 1]} : vector<8x146xf32> to vector<8x128xf32>
    %c0_245 = arith.constant 0 : index
    %c0_246 = arith.constant 0 : index
    %556 = vector.load %arg4[%c0_245, %c0_246] : memref<9x128xf32, #tpu.memory_space<vmem>>, vector<1x128xf32>
    %557 = vector.broadcast %556 : vector<1x128xf32> to vector<8x128xf32>
    %558 = arith.mulf %555, %557 : vector<8x128xf32>
    %559 = vector.extract_strided_slice %554 {offsets = [0, 1], sizes = [8, 128], strides = [1, 1]} : vector<8x146xf32> to vector<8x128xf32>
    %c1_247 = arith.constant 1 : index
    %c0_248 = arith.constant 0 : index
    %560 = vector.load %arg4[%c1_247, %c0_248] : memref<9x128xf32, #tpu.memory_space<vmem>>, vector<1x128xf32>
    %561 = vector.broadcast %560 : vector<1x128xf32> to vector<8x128xf32>
    %562 = arith.mulf %559, %561 : vector<8x128xf32>
    %563 = arith.addf %558, %562 : vector<8x128xf32>
    %564 = vector.extract_strided_slice %554 {offsets = [0, 2], sizes = [8, 128], strides = [1, 1]} : vector<8x146xf32> to vector<8x128xf32>
    %c2_249 = arith.constant 2 : index
    %c0_250 = arith.constant 0 : index
    %565 = vector.load %arg4[%c2_249, %c0_250] : memref<9x128xf32, #tpu.memory_space<vmem>>, vector<1x128xf32>
    %566 = vector.broadcast %565 : vector<1x128xf32> to vector<8x128xf32>
    %567 = arith.mulf %564, %566 : vector<8x128xf32>
    %568 = arith.addf %563, %567 : vector<8x128xf32>
    %569 = vector.extract_strided_slice %554 {offsets = [0, 8], sizes = [8, 128], strides = [1, 1]} : vector<8x146xf32> to vector<8x128xf32>
    %c3_251 = arith.constant 3 : index
    %c0_252 = arith.constant 0 : index
    %570 = vector.load %arg4[%c3_251, %c0_252] : memref<9x128xf32, #tpu.memory_space<vmem>>, vector<1x128xf32>
    %571 = vector.broadcast %570 : vector<1x128xf32> to vector<8x128xf32>
    %572 = arith.mulf %569, %571 : vector<8x128xf32>
    %573 = arith.addf %568, %572 : vector<8x128xf32>
    %574 = vector.extract_strided_slice %554 {offsets = [0, 9], sizes = [8, 128], strides = [1, 1]} : vector<8x146xf32> to vector<8x128xf32>
    %c4_253 = arith.constant 4 : index
    %c0_254 = arith.constant 0 : index
    %575 = vector.load %arg4[%c4_253, %c0_254] : memref<9x128xf32, #tpu.memory_space<vmem>>, vector<1x128xf32>
    %576 = vector.broadcast %575 : vector<1x128xf32> to vector<8x128xf32>
    %577 = arith.mulf %574, %576 : vector<8x128xf32>
    %578 = arith.addf %573, %577 : vector<8x128xf32>
    %579 = vector.extract_strided_slice %554 {offsets = [0, 10], sizes = [8, 128], strides = [1, 1]} : vector<8x146xf32> to vector<8x128xf32>
    %c5_255 = arith.constant 5 : index
    %c0_256 = arith.constant 0 : index
    %580 = vector.load %arg4[%c5_255, %c0_256] : memref<9x128xf32, #tpu.memory_space<vmem>>, vector<1x128xf32>
    %581 = vector.broadcast %580 : vector<1x128xf32> to vector<8x128xf32>
    %582 = arith.mulf %579, %581 : vector<8x128xf32>
    %583 = arith.addf %578, %582 : vector<8x128xf32>
    %584 = vector.extract_strided_slice %554 {offsets = [0, 16], sizes = [8, 128], strides = [1, 1]} : vector<8x146xf32> to vector<8x128xf32>
    %c6_257 = arith.constant 6 : index
    %c0_258 = arith.constant 0 : index
    %585 = vector.load %arg4[%c6_257, %c0_258] : memref<9x128xf32, #tpu.memory_space<vmem>>, vector<1x128xf32>
    %586 = vector.broadcast %585 : vector<1x128xf32> to vector<8x128xf32>
    %587 = arith.mulf %584, %586 : vector<8x128xf32>
    %588 = arith.addf %583, %587 : vector<8x128xf32>
    %589 = vector.extract_strided_slice %554 {offsets = [0, 17], sizes = [8, 128], strides = [1, 1]} : vector<8x146xf32> to vector<8x128xf32>
    %c7_259 = arith.constant 7 : index
    %c0_260 = arith.constant 0 : index
    %590 = vector.load %arg4[%c7_259, %c0_260] : memref<9x128xf32, #tpu.memory_space<vmem>>, vector<1x128xf32>
    %591 = vector.broadcast %590 : vector<1x128xf32> to vector<8x128xf32>
    %592 = arith.mulf %589, %591 : vector<8x128xf32>
    %593 = arith.addf %588, %592 : vector<8x128xf32>
    %594 = vector.extract_strided_slice %554 {offsets = [0, 18], sizes = [8, 128], strides = [1, 1]} : vector<8x146xf32> to vector<8x128xf32>
    %c8_261 = arith.constant 8 : index
    %c0_262 = arith.constant 0 : index
    %595 = vector.load %arg4[%c8_261, %c0_262] : memref<9x128xf32, #tpu.memory_space<vmem>>, vector<1x128xf32>
    %596 = vector.broadcast %595 : vector<1x128xf32> to vector<8x128xf32>
    %597 = arith.mulf %594, %596 : vector<8x128xf32>
    %598 = arith.addf %593, %597 : vector<8x128xf32>
    %599 = tpu.concatenate %558, %562, %567, %572, %577, %582, %587, %592, %597 in 0 : vector<8x128xf32>, vector<8x128xf32>, vector<8x128xf32>, vector<8x128xf32>, vector<8x128xf32>, vector<8x128xf32>, vector<8x128xf32>, vector<8x128xf32>, vector<8x128xf32> -> vector<72x128xf32>
    %c0_263 = arith.constant 0 : index
    %c0_264 = arith.constant 0 : index
    %600 = vector.load %arg5[%c0_263, %c0_264] : memref<1x128xf32, #tpu.memory_space<vmem>>, vector<1x128xf32>
    %601 = vector.broadcast %600 : vector<1x128xf32> to vector<8x128xf32>
    %602 = arith.mulf %598, %601 : vector<8x128xf32>
    %c0_265 = arith.constant 0 : index
    %c0_266 = arith.constant 0 : index
    %603 = vector.load %arg28[%c0_265, %c0_266] : memref<48x72xf32, #tpu.memory_space<vmem>>, vector<48x72xf32>
    %cst_267 = arith.constant 0.000000e+00 : f32
    %604 = vector.broadcast %cst_267 : f32 to vector<72x128xf32>
    %605 = arith.maximumf %599, %604 : vector<72x128xf32>
    %cst_268 = arith.constant dense<0.000000e+00> : vector<48x128xf32>
    %606 = tpu.matmul %603, %605, %cst_268 {dimension_numbers = #tpu.dot_dimension_numbers<[1], [0], [0], [1], [0, 0, 1, 1], [], []>} : vector<48x72xf32>, vector<72x128xf32>, vector<48x128xf32> -> vector<48x128xf32>
    %cst_269 = arith.constant dense<0.000000e+00> : vector<48xf32>
    %607 = vector.multi_reduction <add>, %606, %cst_269 [1] : vector<48x128xf32> to vector<48xf32>
    %608 = vector.shape_cast %607 : vector<48xf32> to vector<48x1xf32>
    %cst_270 = arith.constant 1.280000e+02 : f32
    %609 = vector.broadcast %cst_270 : f32 to vector<48x1xf32>
    %610 = arith.divf %608, %609 : vector<48x1xf32>
    %611 = vector.broadcast %610 : vector<48x1xf32> to vector<48x128xf32>
    %612 = arith.subf %606, %611 : vector<48x128xf32>
    %613 = arith.mulf %612, %612 : vector<48x128xf32>
    %cst_271 = arith.constant dense<0.000000e+00> : vector<48xf32>
    %614 = vector.multi_reduction <add>, %613, %cst_271 [1] : vector<48x128xf32> to vector<48xf32>
    %615 = vector.shape_cast %614 : vector<48xf32> to vector<48x1xf32>
    %cst_272 = arith.constant 1.280000e+02 : f32
    %616 = vector.broadcast %cst_272 : f32 to vector<48x1xf32>
    %617 = arith.divf %615, %616 : vector<48x1xf32>
    %618 = vector.broadcast %610 : vector<48x1xf32> to vector<48x128xf32>
    %619 = arith.subf %606, %618 : vector<48x128xf32>
    %cst_273 = arith.constant 9.99999974E-6 : f32
    %620 = vector.broadcast %cst_273 : f32 to vector<48x1xf32>
    %621 = arith.addf %617, %620 : vector<48x1xf32>
    %622 = math.rsqrt %621 : vector<48x1xf32>
    %623 = vector.broadcast %622 : vector<48x1xf32> to vector<48x128xf32>
    %624 = arith.mulf %619, %623 : vector<48x128xf32>
    %c0_274 = arith.constant 0 : index
    %c0_275 = arith.constant 0 : index
    %625 = vector.load %arg29[%c0_274, %c0_275] : memref<48x1xf32, #tpu.memory_space<vmem>>, vector<48x1xf32>
    %626 = vector.broadcast %625 : vector<48x1xf32> to vector<48x128xf32>
    %627 = arith.mulf %624, %626 : vector<48x128xf32>
    %c0_276 = arith.constant 0 : index
    %c0_277 = arith.constant 0 : index
    %628 = vector.load %arg30[%c0_276, %c0_277] : memref<48x1xf32, #tpu.memory_space<vmem>>, vector<48x1xf32>
    %629 = vector.broadcast %628 : vector<48x1xf32> to vector<48x128xf32>
    %630 = arith.addf %627, %629 : vector<48x128xf32>
    %c0_278 = arith.constant 0 : index
    %c1_279 = arith.constant 1 : index
    %631 = memref.load %arg0[%c0_278, %c1_279] : memref<6x5xf32, #tpu.memory_space<smem>>
    %632 = vector.broadcast %631 : f32 to vector<8x128xf32>
    %633 = arith.mulf %632, %552 : vector<8x128xf32>
    %c0_280 = arith.constant 0 : index
    %c3_281 = arith.constant 3 : index
    %634 = memref.load %arg0[%c0_280, %c3_281] : memref<6x5xf32, #tpu.memory_space<smem>>
    %635 = vector.extract_strided_slice %630 {offsets = [0, 0], sizes = [8, 128], strides = [1, 1]} : vector<48x128xf32> to vector<8x128xf32>
    %636 = vector.broadcast %634 : f32 to vector<8x128xf32>
    %637 = arith.mulf %636, %635 : vector<8x128xf32>
    %638 = arith.addf %633, %637 : vector<8x128xf32>
    %c0_282 = arith.constant 0 : index
    %c2_283 = arith.constant 2 : index
    %639 = memref.load %arg0[%c0_282, %c2_283] : memref<6x5xf32, #tpu.memory_space<smem>>
    %640 = vector.extract_strided_slice %630 {offsets = [24, 0], sizes = [8, 128], strides = [1, 1]} : vector<48x128xf32> to vector<8x128xf32>
    %641 = vector.broadcast %639 : f32 to vector<8x128xf32>
    %642 = arith.mulf %641, %640 : vector<8x128xf32>
    %643 = arith.addf %638, %642 : vector<8x128xf32>
    %c0_284 = arith.constant 0 : index
    %c4_285 = arith.constant 4 : index
    %644 = memref.load %arg0[%c0_284, %c4_285] : memref<6x5xf32, #tpu.memory_space<smem>>
    %645 = vector.broadcast %644 : f32 to vector<8x128xf32>
    %646 = arith.mulf %645, %602 : vector<8x128xf32>
    %647 = arith.addf %643, %646 : vector<8x128xf32>
    %c1_286 = arith.constant 1 : index
    %c1_287 = arith.constant 1 : index
    %648 = memref.load %arg0[%c1_286, %c1_287] : memref<6x5xf32, #tpu.memory_space<smem>>
    %649 = vector.broadcast %648 : f32 to vector<8x128xf32>
    %650 = arith.mulf %649, %552 : vector<8x128xf32>
    %c1_288 = arith.constant 1 : index
    %c3_289 = arith.constant 3 : index
    %651 = memref.load %arg0[%c1_288, %c3_289] : memref<6x5xf32, #tpu.memory_space<smem>>
    %652 = vector.extract_strided_slice %630 {offsets = [8, 0], sizes = [8, 128], strides = [1, 1]} : vector<48x128xf32> to vector<8x128xf32>
    %653 = vector.broadcast %651 : f32 to vector<8x128xf32>
    %654 = arith.mulf %653, %652 : vector<8x128xf32>
    %655 = arith.addf %650, %654 : vector<8x128xf32>
    %c1_290 = arith.constant 1 : index
    %c2_291 = arith.constant 2 : index
    %656 = memref.load %arg0[%c1_290, %c2_291] : memref<6x5xf32, #tpu.memory_space<smem>>
    %657 = vector.extract_strided_slice %630 {offsets = [32, 0], sizes = [8, 128], strides = [1, 1]} : vector<48x128xf32> to vector<8x128xf32>
    %658 = vector.broadcast %656 : f32 to vector<8x128xf32>
    %659 = arith.mulf %658, %657 : vector<8x128xf32>
    %660 = arith.addf %655, %659 : vector<8x128xf32>
    %c1_292 = arith.constant 1 : index
    %c4_293 = arith.constant 4 : index
    %661 = memref.load %arg0[%c1_292, %c4_293] : memref<6x5xf32, #tpu.memory_space<smem>>
    %662 = vector.broadcast %661 : f32 to vector<8x128xf32>
    %663 = arith.mulf %662, %602 : vector<8x128xf32>
    %664 = arith.addf %660, %663 : vector<8x128xf32>
    %c3_294 = arith.constant 3 : index
    %c1_295 = arith.constant 1 : index
    %665 = memref.load %arg0[%c3_294, %c1_295] : memref<6x5xf32, #tpu.memory_space<smem>>
    %666 = vector.broadcast %665 : f32 to vector<8x128xf32>
    %667 = arith.mulf %666, %552 : vector<8x128xf32>
    %c3_296 = arith.constant 3 : index
    %c3_297 = arith.constant 3 : index
    %668 = memref.load %arg0[%c3_296, %c3_297] : memref<6x5xf32, #tpu.memory_space<smem>>
    %669 = vector.extract_strided_slice %630 {offsets = [16, 0], sizes = [8, 128], strides = [1, 1]} : vector<48x128xf32> to vector<8x128xf32>
    %670 = vector.broadcast %668 : f32 to vector<8x128xf32>
    %671 = arith.mulf %670, %669 : vector<8x128xf32>
    %672 = arith.addf %667, %671 : vector<8x128xf32>
    %c3_298 = arith.constant 3 : index
    %c2_299 = arith.constant 2 : index
    %673 = memref.load %arg0[%c3_298, %c2_299] : memref<6x5xf32, #tpu.memory_space<smem>>
    %674 = vector.extract_strided_slice %630 {offsets = [40, 0], sizes = [8, 128], strides = [1, 1]} : vector<48x128xf32> to vector<8x128xf32>
    %675 = vector.broadcast %673 : f32 to vector<8x128xf32>
    %676 = arith.mulf %675, %674 : vector<8x128xf32>
    %677 = arith.addf %672, %676 : vector<8x128xf32>
    %c3_300 = arith.constant 3 : index
    %c4_301 = arith.constant 4 : index
    %678 = memref.load %arg0[%c3_300, %c4_301] : memref<6x5xf32, #tpu.memory_space<smem>>
    %679 = vector.broadcast %678 : f32 to vector<8x128xf32>
    %680 = arith.mulf %679, %602 : vector<8x128xf32>
    %681 = arith.addf %677, %680 : vector<8x128xf32>
    %cst_302 = arith.constant 0.000000e+00 : f32
    %682 = vector.broadcast %cst_302 : f32 to vector<8x9xf32>
    %683 = tpu.concatenate %682, %647, %682 in 1 : vector<8x9xf32>, vector<8x128xf32>, vector<8x9xf32> -> vector<8x146xf32>
    %684 = vector.extract_strided_slice %683 {offsets = [0, 0], sizes = [8, 128], strides = [1, 1]} : vector<8x146xf32> to vector<8x128xf32>
    %c0_303 = arith.constant 0 : index
    %c0_304 = arith.constant 0 : index
    %685 = vector.load %arg4[%c0_303, %c0_304] : memref<9x128xf32, #tpu.memory_space<vmem>>, vector<1x128xf32>
    %686 = vector.broadcast %685 : vector<1x128xf32> to vector<8x128xf32>
    %687 = arith.mulf %684, %686 : vector<8x128xf32>
    %688 = vector.extract_strided_slice %683 {offsets = [0, 1], sizes = [8, 128], strides = [1, 1]} : vector<8x146xf32> to vector<8x128xf32>
    %c1_305 = arith.constant 1 : index
    %c0_306 = arith.constant 0 : index
    %689 = vector.load %arg4[%c1_305, %c0_306] : memref<9x128xf32, #tpu.memory_space<vmem>>, vector<1x128xf32>
    %690 = vector.broadcast %689 : vector<1x128xf32> to vector<8x128xf32>
    %691 = arith.mulf %688, %690 : vector<8x128xf32>
    %692 = arith.addf %687, %691 : vector<8x128xf32>
    %693 = vector.extract_strided_slice %683 {offsets = [0, 2], sizes = [8, 128], strides = [1, 1]} : vector<8x146xf32> to vector<8x128xf32>
    %c2_307 = arith.constant 2 : index
    %c0_308 = arith.constant 0 : index
    %694 = vector.load %arg4[%c2_307, %c0_308] : memref<9x128xf32, #tpu.memory_space<vmem>>, vector<1x128xf32>
    %695 = vector.broadcast %694 : vector<1x128xf32> to vector<8x128xf32>
    %696 = arith.mulf %693, %695 : vector<8x128xf32>
    %697 = arith.addf %692, %696 : vector<8x128xf32>
    %698 = vector.extract_strided_slice %683 {offsets = [0, 8], sizes = [8, 128], strides = [1, 1]} : vector<8x146xf32> to vector<8x128xf32>
    %c3_309 = arith.constant 3 : index
    %c0_310 = arith.constant 0 : index
    %699 = vector.load %arg4[%c3_309, %c0_310] : memref<9x128xf32, #tpu.memory_space<vmem>>, vector<1x128xf32>
    %700 = vector.broadcast %699 : vector<1x128xf32> to vector<8x128xf32>
    %701 = arith.mulf %698, %700 : vector<8x128xf32>
    %702 = arith.addf %697, %701 : vector<8x128xf32>
    %703 = vector.extract_strided_slice %683 {offsets = [0, 9], sizes = [8, 128], strides = [1, 1]} : vector<8x146xf32> to vector<8x128xf32>
    %c4_311 = arith.constant 4 : index
    %c0_312 = arith.constant 0 : index
    %704 = vector.load %arg4[%c4_311, %c0_312] : memref<9x128xf32, #tpu.memory_space<vmem>>, vector<1x128xf32>
    %705 = vector.broadcast %704 : vector<1x128xf32> to vector<8x128xf32>
    %706 = arith.mulf %703, %705 : vector<8x128xf32>
    %707 = arith.addf %702, %706 : vector<8x128xf32>
    %708 = vector.extract_strided_slice %683 {offsets = [0, 10], sizes = [8, 128], strides = [1, 1]} : vector<8x146xf32> to vector<8x128xf32>
    %c5_313 = arith.constant 5 : index
    %c0_314 = arith.constant 0 : index
    %709 = vector.load %arg4[%c5_313, %c0_314] : memref<9x128xf32, #tpu.memory_space<vmem>>, vector<1x128xf32>
    %710 = vector.broadcast %709 : vector<1x128xf32> to vector<8x128xf32>
    %711 = arith.mulf %708, %710 : vector<8x128xf32>
    %712 = arith.addf %707, %711 : vector<8x128xf32>
    %713 = vector.extract_strided_slice %683 {offsets = [0, 16], sizes = [8, 128], strides = [1, 1]} : vector<8x146xf32> to vector<8x128xf32>
    %c6_315 = arith.constant 6 : index
    %c0_316 = arith.constant 0 : index
    %714 = vector.load %arg4[%c6_315, %c0_316] : memref<9x128xf32, #tpu.memory_space<vmem>>, vector<1x128xf32>
    %715 = vector.broadcast %714 : vector<1x128xf32> to vector<8x128xf32>
    %716 = arith.mulf %713, %715 : vector<8x128xf32>
    %717 = arith.addf %712, %716 : vector<8x128xf32>
    %718 = vector.extract_strided_slice %683 {offsets = [0, 17], sizes = [8, 128], strides = [1, 1]} : vector<8x146xf32> to vector<8x128xf32>
    %c7_317 = arith.constant 7 : index
    %c0_318 = arith.constant 0 : index
    %719 = vector.load %arg4[%c7_317, %c0_318] : memref<9x128xf32, #tpu.memory_space<vmem>>, vector<1x128xf32>
    %720 = vector.broadcast %719 : vector<1x128xf32> to vector<8x128xf32>
    %721 = arith.mulf %718, %720 : vector<8x128xf32>
    %722 = arith.addf %717, %721 : vector<8x128xf32>
    %723 = vector.extract_strided_slice %683 {offsets = [0, 18], sizes = [8, 128], strides = [1, 1]} : vector<8x146xf32> to vector<8x128xf32>
    %c8_319 = arith.constant 8 : index
    %c0_320 = arith.constant 0 : index
    %724 = vector.load %arg4[%c8_319, %c0_320] : memref<9x128xf32, #tpu.memory_space<vmem>>, vector<1x128xf32>
    %725 = vector.broadcast %724 : vector<1x128xf32> to vector<8x128xf32>
    %726 = arith.mulf %723, %725 : vector<8x128xf32>
    %727 = arith.addf %722, %726 : vector<8x128xf32>
    %728 = tpu.concatenate %687, %691, %696, %701, %706, %711, %716, %721, %726 in 0 : vector<8x128xf32>, vector<8x128xf32>, vector<8x128xf32>, vector<8x128xf32>, vector<8x128xf32>, vector<8x128xf32>, vector<8x128xf32>, vector<8x128xf32>, vector<8x128xf32> -> vector<72x128xf32>
    %c0_321 = arith.constant 0 : index
    %c0_322 = arith.constant 0 : index
    %729 = vector.load %arg5[%c0_321, %c0_322] : memref<1x128xf32, #tpu.memory_space<vmem>>, vector<1x128xf32>
    %730 = vector.broadcast %729 : vector<1x128xf32> to vector<8x128xf32>
    %731 = arith.mulf %727, %730 : vector<8x128xf32>
    %c0_323 = arith.constant 0 : index
    %c0_324 = arith.constant 0 : index
    %732 = vector.load %arg31[%c0_323, %c0_324] : memref<32x72xf32, #tpu.memory_space<vmem>>, vector<32x72xf32>
    %cst_325 = arith.constant 0.000000e+00 : f32
    %733 = vector.broadcast %cst_325 : f32 to vector<72x128xf32>
    %734 = arith.maximumf %728, %733 : vector<72x128xf32>
    %cst_326 = arith.constant dense<0.000000e+00> : vector<32x128xf32>
    %735 = tpu.matmul %732, %734, %cst_326 {dimension_numbers = #tpu.dot_dimension_numbers<[1], [0], [0], [1], [0, 0, 1, 1], [], []>} : vector<32x72xf32>, vector<72x128xf32>, vector<32x128xf32> -> vector<32x128xf32>
    %cst_327 = arith.constant dense<0.000000e+00> : vector<32xf32>
    %736 = vector.multi_reduction <add>, %735, %cst_327 [1] : vector<32x128xf32> to vector<32xf32>
    %737 = vector.shape_cast %736 : vector<32xf32> to vector<32x1xf32>
    %cst_328 = arith.constant 1.280000e+02 : f32
    %738 = vector.broadcast %cst_328 : f32 to vector<32x1xf32>
    %739 = arith.divf %737, %738 : vector<32x1xf32>
    %740 = vector.broadcast %739 : vector<32x1xf32> to vector<32x128xf32>
    %741 = arith.subf %735, %740 : vector<32x128xf32>
    %742 = arith.mulf %741, %741 : vector<32x128xf32>
    %cst_329 = arith.constant dense<0.000000e+00> : vector<32xf32>
    %743 = vector.multi_reduction <add>, %742, %cst_329 [1] : vector<32x128xf32> to vector<32xf32>
    %744 = vector.shape_cast %743 : vector<32xf32> to vector<32x1xf32>
    %cst_330 = arith.constant 1.280000e+02 : f32
    %745 = vector.broadcast %cst_330 : f32 to vector<32x1xf32>
    %746 = arith.divf %744, %745 : vector<32x1xf32>
    %747 = vector.broadcast %739 : vector<32x1xf32> to vector<32x128xf32>
    %748 = arith.subf %735, %747 : vector<32x128xf32>
    %cst_331 = arith.constant 9.99999974E-6 : f32
    %749 = vector.broadcast %cst_331 : f32 to vector<32x1xf32>
    %750 = arith.addf %746, %749 : vector<32x1xf32>
    %751 = math.rsqrt %750 : vector<32x1xf32>
    %752 = vector.broadcast %751 : vector<32x1xf32> to vector<32x128xf32>
    %753 = arith.mulf %748, %752 : vector<32x128xf32>
    %c0_332 = arith.constant 0 : index
    %c0_333 = arith.constant 0 : index
    %754 = vector.load %arg32[%c0_332, %c0_333] : memref<32x1xf32, #tpu.memory_space<vmem>>, vector<32x1xf32>
    %755 = vector.broadcast %754 : vector<32x1xf32> to vector<32x128xf32>
    %756 = arith.mulf %753, %755 : vector<32x128xf32>
    %c0_334 = arith.constant 0 : index
    %c0_335 = arith.constant 0 : index
    %757 = vector.load %arg33[%c0_334, %c0_335] : memref<32x1xf32, #tpu.memory_space<vmem>>, vector<32x1xf32>
    %758 = vector.broadcast %757 : vector<32x1xf32> to vector<32x128xf32>
    %759 = arith.addf %756, %758 : vector<32x128xf32>
    %c2_336 = arith.constant 2 : index
    %c1_337 = arith.constant 1 : index
    %760 = memref.load %arg0[%c2_336, %c1_337] : memref<6x5xf32, #tpu.memory_space<smem>>
    %761 = vector.broadcast %760 : f32 to vector<8x128xf32>
    %762 = arith.mulf %761, %647 : vector<8x128xf32>
    %c2_338 = arith.constant 2 : index
    %c3_339 = arith.constant 3 : index
    %763 = memref.load %arg0[%c2_338, %c3_339] : memref<6x5xf32, #tpu.memory_space<smem>>
    %764 = vector.extract_strided_slice %759 {offsets = [0, 0], sizes = [8, 128], strides = [1, 1]} : vector<32x128xf32> to vector<8x128xf32>
    %765 = vector.broadcast %763 : f32 to vector<8x128xf32>
    %766 = arith.mulf %765, %764 : vector<8x128xf32>
    %767 = arith.addf %762, %766 : vector<8x128xf32>
    %c2_340 = arith.constant 2 : index
    %c2_341 = arith.constant 2 : index
    %768 = memref.load %arg0[%c2_340, %c2_341] : memref<6x5xf32, #tpu.memory_space<smem>>
    %769 = vector.extract_strided_slice %759 {offsets = [16, 0], sizes = [8, 128], strides = [1, 1]} : vector<32x128xf32> to vector<8x128xf32>
    %770 = vector.broadcast %768 : f32 to vector<8x128xf32>
    %771 = arith.mulf %770, %769 : vector<8x128xf32>
    %772 = arith.addf %767, %771 : vector<8x128xf32>
    %c2_342 = arith.constant 2 : index
    %c4_343 = arith.constant 4 : index
    %773 = memref.load %arg0[%c2_342, %c4_343] : memref<6x5xf32, #tpu.memory_space<smem>>
    %774 = vector.broadcast %773 : f32 to vector<8x128xf32>
    %775 = arith.mulf %774, %731 : vector<8x128xf32>
    %776 = arith.addf %772, %775 : vector<8x128xf32>
    %777 = arith.addf %664, %776 : vector<8x128xf32>
    %c4_344 = arith.constant 4 : index
    %c1_345 = arith.constant 1 : index
    %778 = memref.load %arg0[%c4_344, %c1_345] : memref<6x5xf32, #tpu.memory_space<smem>>
    %779 = vector.broadcast %778 : f32 to vector<8x128xf32>
    %780 = arith.mulf %779, %647 : vector<8x128xf32>
    %c4_346 = arith.constant 4 : index
    %c3_347 = arith.constant 3 : index
    %781 = memref.load %arg0[%c4_346, %c3_347] : memref<6x5xf32, #tpu.memory_space<smem>>
    %782 = vector.extract_strided_slice %759 {offsets = [8, 0], sizes = [8, 128], strides = [1, 1]} : vector<32x128xf32> to vector<8x128xf32>
    %783 = vector.broadcast %781 : f32 to vector<8x128xf32>
    %784 = arith.mulf %783, %782 : vector<8x128xf32>
    %785 = arith.addf %780, %784 : vector<8x128xf32>
    %c4_348 = arith.constant 4 : index
    %c2_349 = arith.constant 2 : index
    %786 = memref.load %arg0[%c4_348, %c2_349] : memref<6x5xf32, #tpu.memory_space<smem>>
    %787 = vector.extract_strided_slice %759 {offsets = [24, 0], sizes = [8, 128], strides = [1, 1]} : vector<32x128xf32> to vector<8x128xf32>
    %788 = vector.broadcast %786 : f32 to vector<8x128xf32>
    %789 = arith.mulf %788, %787 : vector<8x128xf32>
    %790 = arith.addf %785, %789 : vector<8x128xf32>
    %c4_350 = arith.constant 4 : index
    %c4_351 = arith.constant 4 : index
    %791 = memref.load %arg0[%c4_350, %c4_351] : memref<6x5xf32, #tpu.memory_space<smem>>
    %792 = vector.broadcast %791 : f32 to vector<8x128xf32>
    %793 = arith.mulf %792, %731 : vector<8x128xf32>
    %794 = arith.addf %790, %793 : vector<8x128xf32>
    %795 = arith.addf %681, %794 : vector<8x128xf32>
    %cst_352 = arith.constant 0.000000e+00 : f32
    %796 = vector.broadcast %cst_352 : f32 to vector<8x9xf32>
    %797 = tpu.concatenate %796, %777, %796 in 1 : vector<8x9xf32>, vector<8x128xf32>, vector<8x9xf32> -> vector<8x146xf32>
    %798 = vector.extract_strided_slice %797 {offsets = [0, 0], sizes = [8, 128], strides = [1, 1]} : vector<8x146xf32> to vector<8x128xf32>
    %c0_353 = arith.constant 0 : index
    %c0_354 = arith.constant 0 : index
    %799 = vector.load %arg4[%c0_353, %c0_354] : memref<9x128xf32, #tpu.memory_space<vmem>>, vector<1x128xf32>
    %800 = vector.broadcast %799 : vector<1x128xf32> to vector<8x128xf32>
    %801 = arith.mulf %798, %800 : vector<8x128xf32>
    %802 = vector.extract_strided_slice %797 {offsets = [0, 1], sizes = [8, 128], strides = [1, 1]} : vector<8x146xf32> to vector<8x128xf32>
    %c1_355 = arith.constant 1 : index
    %c0_356 = arith.constant 0 : index
    %803 = vector.load %arg4[%c1_355, %c0_356] : memref<9x128xf32, #tpu.memory_space<vmem>>, vector<1x128xf32>
    %804 = vector.broadcast %803 : vector<1x128xf32> to vector<8x128xf32>
    %805 = arith.mulf %802, %804 : vector<8x128xf32>
    %806 = arith.addf %801, %805 : vector<8x128xf32>
    %807 = vector.extract_strided_slice %797 {offsets = [0, 2], sizes = [8, 128], strides = [1, 1]} : vector<8x146xf32> to vector<8x128xf32>
    %c2_357 = arith.constant 2 : index
    %c0_358 = arith.constant 0 : index
    %808 = vector.load %arg4[%c2_357, %c0_358] : memref<9x128xf32, #tpu.memory_space<vmem>>, vector<1x128xf32>
    %809 = vector.broadcast %808 : vector<1x128xf32> to vector<8x128xf32>
    %810 = arith.mulf %807, %809 : vector<8x128xf32>
    %811 = arith.addf %806, %810 : vector<8x128xf32>
    %812 = vector.extract_strided_slice %797 {offsets = [0, 8], sizes = [8, 128], strides = [1, 1]} : vector<8x146xf32> to vector<8x128xf32>
    %c3_359 = arith.constant 3 : index
    %c0_360 = arith.constant 0 : index
    %813 = vector.load %arg4[%c3_359, %c0_360] : memref<9x128xf32, #tpu.memory_space<vmem>>, vector<1x128xf32>
    %814 = vector.broadcast %813 : vector<1x128xf32> to vector<8x128xf32>
    %815 = arith.mulf %812, %814 : vector<8x128xf32>
    %816 = arith.addf %811, %815 : vector<8x128xf32>
    %817 = vector.extract_strided_slice %797 {offsets = [0, 9], sizes = [8, 128], strides = [1, 1]} : vector<8x146xf32> to vector<8x128xf32>
    %c4_361 = arith.constant 4 : index
    %c0_362 = arith.constant 0 : index
    %818 = vector.load %arg4[%c4_361, %c0_362] : memref<9x128xf32, #tpu.memory_space<vmem>>, vector<1x128xf32>
    %819 = vector.broadcast %818 : vector<1x128xf32> to vector<8x128xf32>
    %820 = arith.mulf %817, %819 : vector<8x128xf32>
    %821 = arith.addf %816, %820 : vector<8x128xf32>
    %822 = vector.extract_strided_slice %797 {offsets = [0, 10], sizes = [8, 128], strides = [1, 1]} : vector<8x146xf32> to vector<8x128xf32>
    %c5_363 = arith.constant 5 : index
    %c0_364 = arith.constant 0 : index
    %823 = vector.load %arg4[%c5_363, %c0_364] : memref<9x128xf32, #tpu.memory_space<vmem>>, vector<1x128xf32>
    %824 = vector.broadcast %823 : vector<1x128xf32> to vector<8x128xf32>
    %825 = arith.mulf %822, %824 : vector<8x128xf32>
    %826 = arith.addf %821, %825 : vector<8x128xf32>
    %827 = vector.extract_strided_slice %797 {offsets = [0, 16], sizes = [8, 128], strides = [1, 1]} : vector<8x146xf32> to vector<8x128xf32>
    %c6_365 = arith.constant 6 : index
    %c0_366 = arith.constant 0 : index
    %828 = vector.load %arg4[%c6_365, %c0_366] : memref<9x128xf32, #tpu.memory_space<vmem>>, vector<1x128xf32>
    %829 = vector.broadcast %828 : vector<1x128xf32> to vector<8x128xf32>
    %830 = arith.mulf %827, %829 : vector<8x128xf32>
    %831 = arith.addf %826, %830 : vector<8x128xf32>
    %832 = vector.extract_strided_slice %797 {offsets = [0, 17], sizes = [8, 128], strides = [1, 1]} : vector<8x146xf32> to vector<8x128xf32>
    %c7_367 = arith.constant 7 : index
    %c0_368 = arith.constant 0 : index
    %833 = vector.load %arg4[%c7_367, %c0_368] : memref<9x128xf32, #tpu.memory_space<vmem>>, vector<1x128xf32>
    %834 = vector.broadcast %833 : vector<1x128xf32> to vector<8x128xf32>
    %835 = arith.mulf %832, %834 : vector<8x128xf32>
    %836 = arith.addf %831, %835 : vector<8x128xf32>
    %837 = vector.extract_strided_slice %797 {offsets = [0, 18], sizes = [8, 128], strides = [1, 1]} : vector<8x146xf32> to vector<8x128xf32>
    %c8_369 = arith.constant 8 : index
    %c0_370 = arith.constant 0 : index
    %838 = vector.load %arg4[%c8_369, %c0_370] : memref<9x128xf32, #tpu.memory_space<vmem>>, vector<1x128xf32>
    %839 = vector.broadcast %838 : vector<1x128xf32> to vector<8x128xf32>
    %840 = arith.mulf %837, %839 : vector<8x128xf32>
    %841 = arith.addf %836, %840 : vector<8x128xf32>
    %842 = tpu.concatenate %801, %805, %810, %815, %820, %825, %830, %835, %840 in 0 : vector<8x128xf32>, vector<8x128xf32>, vector<8x128xf32>, vector<8x128xf32>, vector<8x128xf32>, vector<8x128xf32>, vector<8x128xf32>, vector<8x128xf32>, vector<8x128xf32> -> vector<72x128xf32>
    %c0_371 = arith.constant 0 : index
    %c0_372 = arith.constant 0 : index
    %843 = vector.load %arg5[%c0_371, %c0_372] : memref<1x128xf32, #tpu.memory_space<vmem>>, vector<1x128xf32>
    %844 = vector.broadcast %843 : vector<1x128xf32> to vector<8x128xf32>
    %845 = arith.mulf %841, %844 : vector<8x128xf32>
    %c0_373 = arith.constant 0 : index
    %c0_374 = arith.constant 0 : index
    %846 = vector.load %arg34[%c0_373, %c0_374] : memref<16x72xf32, #tpu.memory_space<vmem>>, vector<16x72xf32>
    %cst_375 = arith.constant 0.000000e+00 : f32
    %847 = vector.broadcast %cst_375 : f32 to vector<72x128xf32>
    %848 = arith.maximumf %842, %847 : vector<72x128xf32>
    %cst_376 = arith.constant dense<0.000000e+00> : vector<16x128xf32>
    %849 = tpu.matmul %846, %848, %cst_376 {dimension_numbers = #tpu.dot_dimension_numbers<[1], [0], [0], [1], [0, 0, 1, 1], [], []>} : vector<16x72xf32>, vector<72x128xf32>, vector<16x128xf32> -> vector<16x128xf32>
    %cst_377 = arith.constant dense<0.000000e+00> : vector<16xf32>
    %850 = vector.multi_reduction <add>, %849, %cst_377 [1] : vector<16x128xf32> to vector<16xf32>
    %851 = vector.shape_cast %850 : vector<16xf32> to vector<16x1xf32>
    %cst_378 = arith.constant 1.280000e+02 : f32
    %852 = vector.broadcast %cst_378 : f32 to vector<16x1xf32>
    %853 = arith.divf %851, %852 : vector<16x1xf32>
    %854 = vector.broadcast %853 : vector<16x1xf32> to vector<16x128xf32>
    %855 = arith.subf %849, %854 : vector<16x128xf32>
    %856 = arith.mulf %855, %855 : vector<16x128xf32>
    %cst_379 = arith.constant dense<0.000000e+00> : vector<16xf32>
    %857 = vector.multi_reduction <add>, %856, %cst_379 [1] : vector<16x128xf32> to vector<16xf32>
    %858 = vector.shape_cast %857 : vector<16xf32> to vector<16x1xf32>
    %cst_380 = arith.constant 1.280000e+02 : f32
    %859 = vector.broadcast %cst_380 : f32 to vector<16x1xf32>
    %860 = arith.divf %858, %859 : vector<16x1xf32>
    %861 = vector.broadcast %853 : vector<16x1xf32> to vector<16x128xf32>
    %862 = arith.subf %849, %861 : vector<16x128xf32>
    %cst_381 = arith.constant 9.99999974E-6 : f32
    %863 = vector.broadcast %cst_381 : f32 to vector<16x1xf32>
    %864 = arith.addf %860, %863 : vector<16x1xf32>
    %865 = math.rsqrt %864 : vector<16x1xf32>
    %866 = vector.broadcast %865 : vector<16x1xf32> to vector<16x128xf32>
    %867 = arith.mulf %862, %866 : vector<16x128xf32>
    %c0_382 = arith.constant 0 : index
    %c0_383 = arith.constant 0 : index
    %868 = vector.load %arg35[%c0_382, %c0_383] : memref<16x1xf32, #tpu.memory_space<vmem>>, vector<16x1xf32>
    %869 = vector.broadcast %868 : vector<16x1xf32> to vector<16x128xf32>
    %870 = arith.mulf %867, %869 : vector<16x128xf32>
    %c0_384 = arith.constant 0 : index
    %c0_385 = arith.constant 0 : index
    %871 = vector.load %arg36[%c0_384, %c0_385] : memref<16x1xf32, #tpu.memory_space<vmem>>, vector<16x1xf32>
    %872 = vector.broadcast %871 : vector<16x1xf32> to vector<16x128xf32>
    %873 = arith.addf %870, %872 : vector<16x128xf32>
    %c5_386 = arith.constant 5 : index
    %c1_387 = arith.constant 1 : index
    %874 = memref.load %arg0[%c5_386, %c1_387] : memref<6x5xf32, #tpu.memory_space<smem>>
    %875 = vector.broadcast %874 : f32 to vector<8x128xf32>
    %876 = arith.mulf %875, %777 : vector<8x128xf32>
    %c5_388 = arith.constant 5 : index
    %c3_389 = arith.constant 3 : index
    %877 = memref.load %arg0[%c5_388, %c3_389] : memref<6x5xf32, #tpu.memory_space<smem>>
    %878 = vector.extract_strided_slice %873 {offsets = [0, 0], sizes = [8, 128], strides = [1, 1]} : vector<16x128xf32> to vector<8x128xf32>
    %879 = vector.broadcast %877 : f32 to vector<8x128xf32>
    %880 = arith.mulf %879, %878 : vector<8x128xf32>
    %881 = arith.addf %876, %880 : vector<8x128xf32>
    %c5_390 = arith.constant 5 : index
    %c2_391 = arith.constant 2 : index
    %882 = memref.load %arg0[%c5_390, %c2_391] : memref<6x5xf32, #tpu.memory_space<smem>>
    %883 = vector.extract_strided_slice %873 {offsets = [8, 0], sizes = [8, 128], strides = [1, 1]} : vector<16x128xf32> to vector<8x128xf32>
    %884 = vector.broadcast %882 : f32 to vector<8x128xf32>
    %885 = arith.mulf %884, %883 : vector<8x128xf32>
    %886 = arith.addf %881, %885 : vector<8x128xf32>
    %c5_392 = arith.constant 5 : index
    %c4_393 = arith.constant 4 : index
    %887 = memref.load %arg0[%c5_392, %c4_393] : memref<6x5xf32, #tpu.memory_space<smem>>
    %888 = vector.broadcast %887 : f32 to vector<8x128xf32>
    %889 = arith.mulf %888, %845 : vector<8x128xf32>
    %890 = arith.addf %886, %889 : vector<8x128xf32>
    %891 = arith.addf %795, %890 : vector<8x128xf32>
    %cst_394 = arith.constant 0.000000e+00 : f32
    %892 = vector.broadcast %cst_394 : f32 to vector<8x9xf32>
    %893 = tpu.concatenate %892, %891, %892 in 1 : vector<8x9xf32>, vector<8x128xf32>, vector<8x9xf32> -> vector<8x146xf32>
    %894 = vector.extract_strided_slice %893 {offsets = [0, 0], sizes = [8, 128], strides = [1, 1]} : vector<8x146xf32> to vector<8x128xf32>
    %c0_395 = arith.constant 0 : index
    %c0_396 = arith.constant 0 : index
    %895 = vector.load %arg4[%c0_395, %c0_396] : memref<9x128xf32, #tpu.memory_space<vmem>>, vector<1x128xf32>
    %896 = vector.broadcast %895 : vector<1x128xf32> to vector<8x128xf32>
    %897 = arith.mulf %894, %896 : vector<8x128xf32>
    %898 = vector.extract_strided_slice %893 {offsets = [0, 1], sizes = [8, 128], strides = [1, 1]} : vector<8x146xf32> to vector<8x128xf32>
    %c1_397 = arith.constant 1 : index
    %c0_398 = arith.constant 0 : index
    %899 = vector.load %arg4[%c1_397, %c0_398] : memref<9x128xf32, #tpu.memory_space<vmem>>, vector<1x128xf32>
    %900 = vector.broadcast %899 : vector<1x128xf32> to vector<8x128xf32>
    %901 = arith.mulf %898, %900 : vector<8x128xf32>
    %902 = vector.extract_strided_slice %893 {offsets = [0, 2], sizes = [8, 128], strides = [1, 1]} : vector<8x146xf32> to vector<8x128xf32>
    %c2_399 = arith.constant 2 : index
    %c0_400 = arith.constant 0 : index
    %903 = vector.load %arg4[%c2_399, %c0_400] : memref<9x128xf32, #tpu.memory_space<vmem>>, vector<1x128xf32>
    %904 = vector.broadcast %903 : vector<1x128xf32> to vector<8x128xf32>
    %905 = arith.mulf %902, %904 : vector<8x128xf32>
    %906 = vector.extract_strided_slice %893 {offsets = [0, 8], sizes = [8, 128], strides = [1, 1]} : vector<8x146xf32> to vector<8x128xf32>
    %c3_401 = arith.constant 3 : index
    %c0_402 = arith.constant 0 : index
    %907 = vector.load %arg4[%c3_401, %c0_402] : memref<9x128xf32, #tpu.memory_space<vmem>>, vector<1x128xf32>
    %908 = vector.broadcast %907 : vector<1x128xf32> to vector<8x128xf32>
    %909 = arith.mulf %906, %908 : vector<8x128xf32>
    %910 = vector.extract_strided_slice %893 {offsets = [0, 9], sizes = [8, 128], strides = [1, 1]} : vector<8x146xf32> to vector<8x128xf32>
    %c4_403 = arith.constant 4 : index
    %c0_404 = arith.constant 0 : index
    %911 = vector.load %arg4[%c4_403, %c0_404] : memref<9x128xf32, #tpu.memory_space<vmem>>, vector<1x128xf32>
    %912 = vector.broadcast %911 : vector<1x128xf32> to vector<8x128xf32>
    %913 = arith.mulf %910, %912 : vector<8x128xf32>
    %914 = vector.extract_strided_slice %893 {offsets = [0, 10], sizes = [8, 128], strides = [1, 1]} : vector<8x146xf32> to vector<8x128xf32>
    %c5_405 = arith.constant 5 : index
    %c0_406 = arith.constant 0 : index
    %915 = vector.load %arg4[%c5_405, %c0_406] : memref<9x128xf32, #tpu.memory_space<vmem>>, vector<1x128xf32>
    %916 = vector.broadcast %915 : vector<1x128xf32> to vector<8x128xf32>
    %917 = arith.mulf %914, %916 : vector<8x128xf32>
    %918 = vector.extract_strided_slice %893 {offsets = [0, 16], sizes = [8, 128], strides = [1, 1]} : vector<8x146xf32> to vector<8x128xf32>
    %c6_407 = arith.constant 6 : index
    %c0_408 = arith.constant 0 : index
    %919 = vector.load %arg4[%c6_407, %c0_408] : memref<9x128xf32, #tpu.memory_space<vmem>>, vector<1x128xf32>
    %920 = vector.broadcast %919 : vector<1x128xf32> to vector<8x128xf32>
    %921 = arith.mulf %918, %920 : vector<8x128xf32>
    %922 = vector.extract_strided_slice %893 {offsets = [0, 17], sizes = [8, 128], strides = [1, 1]} : vector<8x146xf32> to vector<8x128xf32>
    %c7_409 = arith.constant 7 : index
    %c0_410 = arith.constant 0 : index
    %923 = vector.load %arg4[%c7_409, %c0_410] : memref<9x128xf32, #tpu.memory_space<vmem>>, vector<1x128xf32>
    %924 = vector.broadcast %923 : vector<1x128xf32> to vector<8x128xf32>
    %925 = arith.mulf %922, %924 : vector<8x128xf32>
    %926 = vector.extract_strided_slice %893 {offsets = [0, 18], sizes = [8, 128], strides = [1, 1]} : vector<8x146xf32> to vector<8x128xf32>
    %c8_411 = arith.constant 8 : index
    %c0_412 = arith.constant 0 : index
    %927 = vector.load %arg4[%c8_411, %c0_412] : memref<9x128xf32, #tpu.memory_space<vmem>>, vector<1x128xf32>
    %928 = vector.broadcast %927 : vector<1x128xf32> to vector<8x128xf32>
    %929 = arith.mulf %926, %928 : vector<8x128xf32>
    %930 = tpu.concatenate %897, %901, %905, %909, %913, %917, %921, %925, %929 in 0 : vector<8x128xf32>, vector<8x128xf32>, vector<8x128xf32>, vector<8x128xf32>, vector<8x128xf32>, vector<8x128xf32>, vector<8x128xf32>, vector<8x128xf32>, vector<8x128xf32> -> vector<72x128xf32>
    %c0_413 = arith.constant 0 : index
    %c0_414 = arith.constant 0 : index
    %931 = vector.load %arg37[%c0_413, %c0_414] : memref<128x32xf32, #tpu.memory_space<vmem>>, vector<128x32xf32>
    %cst_415 = arith.constant dense<0.000000e+00> : vector<72x32xf32>
    %932 = tpu.matmul %930, %931, %cst_415 {dimension_numbers = #tpu.dot_dimension_numbers<[1], [0], [0], [1], [0, 0, 1, 1], [], []>} : vector<72x128xf32>, vector<128x32xf32>, vector<72x32xf32> -> vector<72x32xf32>
    %c0_416 = arith.constant 0 : index
    %c0_417 = arith.constant 0 : index
    %933 = vector.load %arg38[%c0_416, %c0_417] : memref<16x72xf32, #tpu.memory_space<vmem>>, vector<16x72xf32>
    %cst_418 = arith.constant 0.000000e+00 : f32
    %934 = vector.broadcast %cst_418 : f32 to vector<72x32xf32>
    %935 = arith.maximumf %932, %934 : vector<72x32xf32>
    %cst_419 = arith.constant dense<0.000000e+00> : vector<16x32xf32>
    %936 = tpu.matmul %933, %935, %cst_419 {dimension_numbers = #tpu.dot_dimension_numbers<[1], [0], [0], [1], [0, 0, 1, 1], [], []>} : vector<16x72xf32>, vector<72x32xf32>, vector<16x32xf32> -> vector<16x32xf32>
    %cst_420 = arith.constant dense<0.000000e+00> : vector<16xf32>
    %937 = vector.multi_reduction <add>, %936, %cst_420 [1] : vector<16x32xf32> to vector<16xf32>
    %938 = vector.shape_cast %937 : vector<16xf32> to vector<16x1xf32>
    %cst_421 = arith.constant 3.200000e+01 : f32
    %939 = vector.broadcast %cst_421 : f32 to vector<16x1xf32>
    %940 = arith.divf %938, %939 : vector<16x1xf32>
    %941 = vector.broadcast %940 : vector<16x1xf32> to vector<16x32xf32>
    %942 = arith.subf %936, %941 : vector<16x32xf32>
    %943 = arith.mulf %942, %942 : vector<16x32xf32>
    %cst_422 = arith.constant dense<0.000000e+00> : vector<16xf32>
    %944 = vector.multi_reduction <add>, %943, %cst_422 [1] : vector<16x32xf32> to vector<16xf32>
    %945 = vector.shape_cast %944 : vector<16xf32> to vector<16x1xf32>
    %cst_423 = arith.constant 3.200000e+01 : f32
    %946 = vector.broadcast %cst_423 : f32 to vector<16x1xf32>
    %947 = arith.divf %945, %946 : vector<16x1xf32>
    %948 = vector.broadcast %940 : vector<16x1xf32> to vector<16x32xf32>
    %949 = arith.subf %936, %948 : vector<16x32xf32>
    %cst_424 = arith.constant 9.99999974E-6 : f32
    %950 = vector.broadcast %cst_424 : f32 to vector<16x1xf32>
    %951 = arith.addf %947, %950 : vector<16x1xf32>
    %952 = math.rsqrt %951 : vector<16x1xf32>
    %953 = vector.broadcast %952 : vector<16x1xf32> to vector<16x32xf32>
    %954 = arith.mulf %949, %953 : vector<16x32xf32>
    %c0_425 = arith.constant 0 : index
    %c0_426 = arith.constant 0 : index
    %955 = vector.load %arg39[%c0_425, %c0_426] : memref<16x1xf32, #tpu.memory_space<vmem>>, vector<16x1xf32>
    %956 = vector.broadcast %955 : vector<16x1xf32> to vector<16x32xf32>
    %957 = arith.mulf %954, %956 : vector<16x32xf32>
    %c0_427 = arith.constant 0 : index
    %c0_428 = arith.constant 0 : index
    %958 = vector.load %arg40[%c0_427, %c0_428] : memref<16x1xf32, #tpu.memory_space<vmem>>, vector<16x1xf32>
    %959 = vector.broadcast %958 : vector<16x1xf32> to vector<16x32xf32>
    %960 = arith.addf %957, %959 : vector<16x32xf32>
    %cst_429 = arith.constant 0.000000e+00 : f32
    %961 = vector.broadcast %cst_429 : f32 to vector<16x5xf32>
    %962 = tpu.concatenate %961, %960, %961 in 1 : vector<16x5xf32>, vector<16x32xf32>, vector<16x5xf32> -> vector<16x42xf32>
    %963 = vector.extract_strided_slice %962 {offsets = [0, 0], sizes = [16, 32], strides = [1, 1]} : vector<16x42xf32> to vector<16x32xf32>
    %c0_430 = arith.constant 0 : index
    %c0_431 = arith.constant 0 : index
    %964 = vector.load %arg6[%c0_430, %c0_431] : memref<9x32xf32, #tpu.memory_space<vmem>>, vector<1x32xf32>
    %965 = vector.broadcast %964 : vector<1x32xf32> to vector<16x32xf32>
    %966 = arith.mulf %963, %965 : vector<16x32xf32>
    %967 = vector.extract_strided_slice %962 {offsets = [0, 1], sizes = [16, 32], strides = [1, 1]} : vector<16x42xf32> to vector<16x32xf32>
    %c1_432 = arith.constant 1 : index
    %c0_433 = arith.constant 0 : index
    %968 = vector.load %arg6[%c1_432, %c0_433] : memref<9x32xf32, #tpu.memory_space<vmem>>, vector<1x32xf32>
    %969 = vector.broadcast %968 : vector<1x32xf32> to vector<16x32xf32>
    %970 = arith.mulf %967, %969 : vector<16x32xf32>
    %971 = vector.extract_strided_slice %962 {offsets = [0, 2], sizes = [16, 32], strides = [1, 1]} : vector<16x42xf32> to vector<16x32xf32>
    %c2_434 = arith.constant 2 : index
    %c0_435 = arith.constant 0 : index
    %972 = vector.load %arg6[%c2_434, %c0_435] : memref<9x32xf32, #tpu.memory_space<vmem>>, vector<1x32xf32>
    %973 = vector.broadcast %972 : vector<1x32xf32> to vector<16x32xf32>
    %974 = arith.mulf %971, %973 : vector<16x32xf32>
    %975 = vector.extract_strided_slice %962 {offsets = [0, 4], sizes = [16, 32], strides = [1, 1]} : vector<16x42xf32> to vector<16x32xf32>
    %c3_436 = arith.constant 3 : index
    %c0_437 = arith.constant 0 : index
    %976 = vector.load %arg6[%c3_436, %c0_437] : memref<9x32xf32, #tpu.memory_space<vmem>>, vector<1x32xf32>
    %977 = vector.broadcast %976 : vector<1x32xf32> to vector<16x32xf32>
    %978 = arith.mulf %975, %977 : vector<16x32xf32>
    %979 = vector.extract_strided_slice %962 {offsets = [0, 5], sizes = [16, 32], strides = [1, 1]} : vector<16x42xf32> to vector<16x32xf32>
    %c4_438 = arith.constant 4 : index
    %c0_439 = arith.constant 0 : index
    %980 = vector.load %arg6[%c4_438, %c0_439] : memref<9x32xf32, #tpu.memory_space<vmem>>, vector<1x32xf32>
    %981 = vector.broadcast %980 : vector<1x32xf32> to vector<16x32xf32>
    %982 = arith.mulf %979, %981 : vector<16x32xf32>
    %983 = vector.extract_strided_slice %962 {offsets = [0, 6], sizes = [16, 32], strides = [1, 1]} : vector<16x42xf32> to vector<16x32xf32>
    %c5_440 = arith.constant 5 : index
    %c0_441 = arith.constant 0 : index
    %984 = vector.load %arg6[%c5_440, %c0_441] : memref<9x32xf32, #tpu.memory_space<vmem>>, vector<1x32xf32>
    %985 = vector.broadcast %984 : vector<1x32xf32> to vector<16x32xf32>
    %986 = arith.mulf %983, %985 : vector<16x32xf32>
    %987 = vector.extract_strided_slice %962 {offsets = [0, 8], sizes = [16, 32], strides = [1, 1]} : vector<16x42xf32> to vector<16x32xf32>
    %c6_442 = arith.constant 6 : index
    %c0_443 = arith.constant 0 : index
    %988 = vector.load %arg6[%c6_442, %c0_443] : memref<9x32xf32, #tpu.memory_space<vmem>>, vector<1x32xf32>
    %989 = vector.broadcast %988 : vector<1x32xf32> to vector<16x32xf32>
    %990 = arith.mulf %987, %989 : vector<16x32xf32>
    %991 = vector.extract_strided_slice %962 {offsets = [0, 9], sizes = [16, 32], strides = [1, 1]} : vector<16x42xf32> to vector<16x32xf32>
    %c7_444 = arith.constant 7 : index
    %c0_445 = arith.constant 0 : index
    %992 = vector.load %arg6[%c7_444, %c0_445] : memref<9x32xf32, #tpu.memory_space<vmem>>, vector<1x32xf32>
    %993 = vector.broadcast %992 : vector<1x32xf32> to vector<16x32xf32>
    %994 = arith.mulf %991, %993 : vector<16x32xf32>
    %995 = vector.extract_strided_slice %962 {offsets = [0, 10], sizes = [16, 32], strides = [1, 1]} : vector<16x42xf32> to vector<16x32xf32>
    %c8_446 = arith.constant 8 : index
    %c0_447 = arith.constant 0 : index
    %996 = vector.load %arg6[%c8_446, %c0_447] : memref<9x32xf32, #tpu.memory_space<vmem>>, vector<1x32xf32>
    %997 = vector.broadcast %996 : vector<1x32xf32> to vector<16x32xf32>
    %998 = arith.mulf %995, %997 : vector<16x32xf32>
    %999 = tpu.concatenate %966, %970, %974, %978, %982, %986, %990, %994, %998 in 0 : vector<16x32xf32>, vector<16x32xf32>, vector<16x32xf32>, vector<16x32xf32>, vector<16x32xf32>, vector<16x32xf32>, vector<16x32xf32>, vector<16x32xf32>, vector<16x32xf32> -> vector<144x32xf32>
    %c0_448 = arith.constant 0 : index
    %c0_449 = arith.constant 0 : index
    %1000 = vector.load %arg41[%c0_448, %c0_449] : memref<16x144xf32, #tpu.memory_space<vmem>>, vector<16x144xf32>
    %cst_450 = arith.constant 0.000000e+00 : f32
    %1001 = vector.broadcast %cst_450 : f32 to vector<144x32xf32>
    %1002 = arith.maximumf %999, %1001 : vector<144x32xf32>
    %cst_451 = arith.constant dense<0.000000e+00> : vector<16x32xf32>
    %1003 = tpu.matmul %1000, %1002, %cst_451 {dimension_numbers = #tpu.dot_dimension_numbers<[1], [0], [0], [1], [0, 0, 1, 1], [], []>} : vector<16x144xf32>, vector<144x32xf32>, vector<16x32xf32> -> vector<16x32xf32>
    %cst_452 = arith.constant dense<0.000000e+00> : vector<16xf32>
    %1004 = vector.multi_reduction <add>, %1003, %cst_452 [1] : vector<16x32xf32> to vector<16xf32>
    %1005 = vector.shape_cast %1004 : vector<16xf32> to vector<16x1xf32>
    %cst_453 = arith.constant 3.200000e+01 : f32
    %1006 = vector.broadcast %cst_453 : f32 to vector<16x1xf32>
    %1007 = arith.divf %1005, %1006 : vector<16x1xf32>
    %1008 = vector.broadcast %1007 : vector<16x1xf32> to vector<16x32xf32>
    %1009 = arith.subf %1003, %1008 : vector<16x32xf32>
    %1010 = arith.mulf %1009, %1009 : vector<16x32xf32>
    %cst_454 = arith.constant dense<0.000000e+00> : vector<16xf32>
    %1011 = vector.multi_reduction <add>, %1010, %cst_454 [1] : vector<16x32xf32> to vector<16xf32>
    %1012 = vector.shape_cast %1011 : vector<16xf32> to vector<16x1xf32>
    %cst_455 = arith.constant 3.200000e+01 : f32
    %1013 = vector.broadcast %cst_455 : f32 to vector<16x1xf32>
    %1014 = arith.divf %1012, %1013 : vector<16x1xf32>
    %1015 = vector.broadcast %1007 : vector<16x1xf32> to vector<16x32xf32>
    %1016 = arith.subf %1003, %1015 : vector<16x32xf32>
    %cst_456 = arith.constant 9.99999974E-6 : f32
    %1017 = vector.broadcast %cst_456 : f32 to vector<16x1xf32>
    %1018 = arith.addf %1014, %1017 : vector<16x1xf32>
    %1019 = math.rsqrt %1018 : vector<16x1xf32>
    %1020 = vector.broadcast %1019 : vector<16x1xf32> to vector<16x32xf32>
    %1021 = arith.mulf %1016, %1020 : vector<16x32xf32>
    %c0_457 = arith.constant 0 : index
    %c0_458 = arith.constant 0 : index
    %1022 = vector.load %arg42[%c0_457, %c0_458] : memref<16x1xf32, #tpu.memory_space<vmem>>, vector<16x1xf32>
    %1023 = vector.broadcast %1022 : vector<16x1xf32> to vector<16x32xf32>
    %1024 = arith.mulf %1021, %1023 : vector<16x32xf32>
    %c0_459 = arith.constant 0 : index
    %c0_460 = arith.constant 0 : index
    %1025 = vector.load %arg43[%c0_459, %c0_460] : memref<16x1xf32, #tpu.memory_space<vmem>>, vector<16x1xf32>
    %1026 = vector.broadcast %1025 : vector<16x1xf32> to vector<16x32xf32>
    %1027 = arith.addf %1024, %1026 : vector<16x32xf32>
    %1028 = vector.extract_strided_slice %932 {offsets = [32, 0], sizes = [8, 32], strides = [1, 1]} : vector<72x32xf32> to vector<8x32xf32>
    %1029 = vector.extract_strided_slice %932 {offsets = [40, 0], sizes = [8, 32], strides = [1, 1]} : vector<72x32xf32> to vector<8x32xf32>
    %1030 = arith.addf %1028, %1029 : vector<8x32xf32>
    %1031 = vector.extract_strided_slice %932 {offsets = [56, 0], sizes = [8, 32], strides = [1, 1]} : vector<72x32xf32> to vector<8x32xf32>
    %1032 = arith.addf %1030, %1031 : vector<8x32xf32>
    %1033 = vector.extract_strided_slice %932 {offsets = [64, 0], sizes = [8, 32], strides = [1, 1]} : vector<72x32xf32> to vector<8x32xf32>
    %1034 = arith.addf %1032, %1033 : vector<8x32xf32>
    %cst_461 = arith.constant 2.500000e-01 : f32
    %1035 = vector.broadcast %cst_461 : f32 to vector<8x32xf32>
    %1036 = arith.mulf %1035, %1034 : vector<8x32xf32>
    %c0_462 = arith.constant 0 : index
    %c0_463 = arith.constant 0 : index
    %1037 = vector.load %arg44[%c0_462, %c0_463] : memref<16x8xf32, #tpu.memory_space<vmem>>, vector<16x8xf32>
    %cst_464 = arith.constant dense<0.000000e+00> : vector<16x32xf32>
    %1038 = tpu.matmul %1037, %1036, %cst_464 {dimension_numbers = #tpu.dot_dimension_numbers<[1], [0], [0], [1], [0, 0, 1, 1], [], []>} : vector<16x8xf32>, vector<8x32xf32>, vector<16x32xf32> -> vector<16x32xf32>
    %1039 = arith.addf %1027, %1038 : vector<16x32xf32>
    %cst_465 = arith.constant 0.000000e+00 : f32
    %1040 = vector.broadcast %cst_465 : f32 to vector<16x5xf32>
    %1041 = tpu.concatenate %1040, %1039, %1040 in 1 : vector<16x5xf32>, vector<16x32xf32>, vector<16x5xf32> -> vector<16x42xf32>
    %1042 = vector.extract_strided_slice %1041 {offsets = [0, 0], sizes = [16, 32], strides = [1, 1]} : vector<16x42xf32> to vector<16x32xf32>
    %c0_466 = arith.constant 0 : index
    %c0_467 = arith.constant 0 : index
    %1043 = vector.load %arg6[%c0_466, %c0_467] : memref<9x32xf32, #tpu.memory_space<vmem>>, vector<1x32xf32>
    %1044 = vector.broadcast %1043 : vector<1x32xf32> to vector<16x32xf32>
    %1045 = arith.mulf %1042, %1044 : vector<16x32xf32>
    %1046 = vector.extract_strided_slice %1041 {offsets = [0, 1], sizes = [16, 32], strides = [1, 1]} : vector<16x42xf32> to vector<16x32xf32>
    %c1_468 = arith.constant 1 : index
    %c0_469 = arith.constant 0 : index
    %1047 = vector.load %arg6[%c1_468, %c0_469] : memref<9x32xf32, #tpu.memory_space<vmem>>, vector<1x32xf32>
    %1048 = vector.broadcast %1047 : vector<1x32xf32> to vector<16x32xf32>
    %1049 = arith.mulf %1046, %1048 : vector<16x32xf32>
    %1050 = arith.addf %1045, %1049 : vector<16x32xf32>
    %1051 = vector.extract_strided_slice %1041 {offsets = [0, 2], sizes = [16, 32], strides = [1, 1]} : vector<16x42xf32> to vector<16x32xf32>
    %c2_470 = arith.constant 2 : index
    %c0_471 = arith.constant 0 : index
    %1052 = vector.load %arg6[%c2_470, %c0_471] : memref<9x32xf32, #tpu.memory_space<vmem>>, vector<1x32xf32>
    %1053 = vector.broadcast %1052 : vector<1x32xf32> to vector<16x32xf32>
    %1054 = arith.mulf %1051, %1053 : vector<16x32xf32>
    %1055 = arith.addf %1050, %1054 : vector<16x32xf32>
    %1056 = vector.extract_strided_slice %1041 {offsets = [0, 4], sizes = [16, 32], strides = [1, 1]} : vector<16x42xf32> to vector<16x32xf32>
    %c3_472 = arith.constant 3 : index
    %c0_473 = arith.constant 0 : index
    %1057 = vector.load %arg6[%c3_472, %c0_473] : memref<9x32xf32, #tpu.memory_space<vmem>>, vector<1x32xf32>
    %1058 = vector.broadcast %1057 : vector<1x32xf32> to vector<16x32xf32>
    %1059 = arith.mulf %1056, %1058 : vector<16x32xf32>
    %1060 = arith.addf %1055, %1059 : vector<16x32xf32>
    %1061 = vector.extract_strided_slice %1041 {offsets = [0, 5], sizes = [16, 32], strides = [1, 1]} : vector<16x42xf32> to vector<16x32xf32>
    %c4_474 = arith.constant 4 : index
    %c0_475 = arith.constant 0 : index
    %1062 = vector.load %arg6[%c4_474, %c0_475] : memref<9x32xf32, #tpu.memory_space<vmem>>, vector<1x32xf32>
    %1063 = vector.broadcast %1062 : vector<1x32xf32> to vector<16x32xf32>
    %1064 = arith.mulf %1061, %1063 : vector<16x32xf32>
    %1065 = arith.addf %1060, %1064 : vector<16x32xf32>
    %1066 = vector.extract_strided_slice %1041 {offsets = [0, 6], sizes = [16, 32], strides = [1, 1]} : vector<16x42xf32> to vector<16x32xf32>
    %c5_476 = arith.constant 5 : index
    %c0_477 = arith.constant 0 : index
    %1067 = vector.load %arg6[%c5_476, %c0_477] : memref<9x32xf32, #tpu.memory_space<vmem>>, vector<1x32xf32>
    %1068 = vector.broadcast %1067 : vector<1x32xf32> to vector<16x32xf32>
    %1069 = arith.mulf %1066, %1068 : vector<16x32xf32>
    %1070 = arith.addf %1065, %1069 : vector<16x32xf32>
    %1071 = vector.extract_strided_slice %1041 {offsets = [0, 8], sizes = [16, 32], strides = [1, 1]} : vector<16x42xf32> to vector<16x32xf32>
    %c6_478 = arith.constant 6 : index
    %c0_479 = arith.constant 0 : index
    %1072 = vector.load %arg6[%c6_478, %c0_479] : memref<9x32xf32, #tpu.memory_space<vmem>>, vector<1x32xf32>
    %1073 = vector.broadcast %1072 : vector<1x32xf32> to vector<16x32xf32>
    %1074 = arith.mulf %1071, %1073 : vector<16x32xf32>
    %1075 = arith.addf %1070, %1074 : vector<16x32xf32>
    %1076 = vector.extract_strided_slice %1041 {offsets = [0, 9], sizes = [16, 32], strides = [1, 1]} : vector<16x42xf32> to vector<16x32xf32>
    %c7_480 = arith.constant 7 : index
    %c0_481 = arith.constant 0 : index
    %1077 = vector.load %arg6[%c7_480, %c0_481] : memref<9x32xf32, #tpu.memory_space<vmem>>, vector<1x32xf32>
    %1078 = vector.broadcast %1077 : vector<1x32xf32> to vector<16x32xf32>
    %1079 = arith.mulf %1076, %1078 : vector<16x32xf32>
    %1080 = arith.addf %1075, %1079 : vector<16x32xf32>
    %1081 = vector.extract_strided_slice %1041 {offsets = [0, 10], sizes = [16, 32], strides = [1, 1]} : vector<16x42xf32> to vector<16x32xf32>
    %c8_482 = arith.constant 8 : index
    %c0_483 = arith.constant 0 : index
    %1082 = vector.load %arg6[%c8_482, %c0_483] : memref<9x32xf32, #tpu.memory_space<vmem>>, vector<1x32xf32>
    %1083 = vector.broadcast %1082 : vector<1x32xf32> to vector<16x32xf32>
    %1084 = arith.mulf %1081, %1083 : vector<16x32xf32>
    %1085 = arith.addf %1080, %1084 : vector<16x32xf32>
    %1086 = tpu.concatenate %1045, %1049, %1054, %1059, %1064, %1069, %1074, %1079, %1084 in 0 : vector<16x32xf32>, vector<16x32xf32>, vector<16x32xf32>, vector<16x32xf32>, vector<16x32xf32>, vector<16x32xf32>, vector<16x32xf32>, vector<16x32xf32>, vector<16x32xf32> -> vector<144x32xf32>
    %c0_484 = arith.constant 0 : index
    %c0_485 = arith.constant 0 : index
    %1087 = vector.load %arg7[%c0_484, %c0_485] : memref<1x32xf32, #tpu.memory_space<vmem>>, vector<1x32xf32>
    %1088 = vector.broadcast %1087 : vector<1x32xf32> to vector<16x32xf32>
    %1089 = arith.mulf %1085, %1088 : vector<16x32xf32>
    %c0_486 = arith.constant 0 : index
    %c0_487 = arith.constant 0 : index
    %1090 = vector.load %arg45[%c0_486, %c0_487] : memref<96x144xf32, #tpu.memory_space<vmem>>, vector<96x144xf32>
    %cst_488 = arith.constant 0.000000e+00 : f32
    %1091 = vector.broadcast %cst_488 : f32 to vector<144x32xf32>
    %1092 = arith.maximumf %1086, %1091 : vector<144x32xf32>
    %cst_489 = arith.constant dense<0.000000e+00> : vector<96x32xf32>
    %1093 = tpu.matmul %1090, %1092, %cst_489 {dimension_numbers = #tpu.dot_dimension_numbers<[1], [0], [0], [1], [0, 0, 1, 1], [], []>} : vector<96x144xf32>, vector<144x32xf32>, vector<96x32xf32> -> vector<96x32xf32>
    %cst_490 = arith.constant dense<0.000000e+00> : vector<96xf32>
    %1094 = vector.multi_reduction <add>, %1093, %cst_490 [1] : vector<96x32xf32> to vector<96xf32>
    %1095 = vector.shape_cast %1094 : vector<96xf32> to vector<96x1xf32>
    %cst_491 = arith.constant 3.200000e+01 : f32
    %1096 = vector.broadcast %cst_491 : f32 to vector<96x1xf32>
    %1097 = arith.divf %1095, %1096 : vector<96x1xf32>
    %1098 = vector.broadcast %1097 : vector<96x1xf32> to vector<96x32xf32>
    %1099 = arith.subf %1093, %1098 : vector<96x32xf32>
    %1100 = arith.mulf %1099, %1099 : vector<96x32xf32>
    %cst_492 = arith.constant dense<0.000000e+00> : vector<96xf32>
    %1101 = vector.multi_reduction <add>, %1100, %cst_492 [1] : vector<96x32xf32> to vector<96xf32>
    %1102 = vector.shape_cast %1101 : vector<96xf32> to vector<96x1xf32>
    %cst_493 = arith.constant 3.200000e+01 : f32
    %1103 = vector.broadcast %cst_493 : f32 to vector<96x1xf32>
    %1104 = arith.divf %1102, %1103 : vector<96x1xf32>
    %1105 = vector.broadcast %1097 : vector<96x1xf32> to vector<96x32xf32>
    %1106 = arith.subf %1093, %1105 : vector<96x32xf32>
    %cst_494 = arith.constant 9.99999974E-6 : f32
    %1107 = vector.broadcast %cst_494 : f32 to vector<96x1xf32>
    %1108 = arith.addf %1104, %1107 : vector<96x1xf32>
    %1109 = math.rsqrt %1108 : vector<96x1xf32>
    %1110 = vector.broadcast %1109 : vector<96x1xf32> to vector<96x32xf32>
    %1111 = arith.mulf %1106, %1110 : vector<96x32xf32>
    %c0_495 = arith.constant 0 : index
    %c0_496 = arith.constant 0 : index
    %1112 = vector.load %arg46[%c0_495, %c0_496] : memref<96x1xf32, #tpu.memory_space<vmem>>, vector<96x1xf32>
    %1113 = vector.broadcast %1112 : vector<96x1xf32> to vector<96x32xf32>
    %1114 = arith.mulf %1111, %1113 : vector<96x32xf32>
    %c0_497 = arith.constant 0 : index
    %c0_498 = arith.constant 0 : index
    %1115 = vector.load %arg47[%c0_497, %c0_498] : memref<96x1xf32, #tpu.memory_space<vmem>>, vector<96x1xf32>
    %1116 = vector.broadcast %1115 : vector<96x1xf32> to vector<96x32xf32>
    %1117 = arith.addf %1114, %1116 : vector<96x32xf32>
    %c0_499 = arith.constant 0 : index
    %c1_500 = arith.constant 1 : index
    %1118 = memref.load %arg0[%c0_499, %c1_500] : memref<6x5xf32, #tpu.memory_space<smem>>
    %1119 = vector.broadcast %1118 : f32 to vector<16x32xf32>
    %1120 = arith.mulf %1119, %1039 : vector<16x32xf32>
    %c0_501 = arith.constant 0 : index
    %c3_502 = arith.constant 3 : index
    %1121 = memref.load %arg0[%c0_501, %c3_502] : memref<6x5xf32, #tpu.memory_space<smem>>
    %1122 = vector.extract_strided_slice %1117 {offsets = [0, 0], sizes = [16, 32], strides = [1, 1]} : vector<96x32xf32> to vector<16x32xf32>
    %1123 = vector.broadcast %1121 : f32 to vector<16x32xf32>
    %1124 = arith.mulf %1123, %1122 : vector<16x32xf32>
    %1125 = arith.addf %1120, %1124 : vector<16x32xf32>
    %c0_503 = arith.constant 0 : index
    %c2_504 = arith.constant 2 : index
    %1126 = memref.load %arg0[%c0_503, %c2_504] : memref<6x5xf32, #tpu.memory_space<smem>>
    %1127 = vector.extract_strided_slice %1117 {offsets = [48, 0], sizes = [16, 32], strides = [1, 1]} : vector<96x32xf32> to vector<16x32xf32>
    %1128 = vector.broadcast %1126 : f32 to vector<16x32xf32>
    %1129 = arith.mulf %1128, %1127 : vector<16x32xf32>
    %1130 = arith.addf %1125, %1129 : vector<16x32xf32>
    %c0_505 = arith.constant 0 : index
    %c4_506 = arith.constant 4 : index
    %1131 = memref.load %arg0[%c0_505, %c4_506] : memref<6x5xf32, #tpu.memory_space<smem>>
    %1132 = vector.broadcast %1131 : f32 to vector<16x32xf32>
    %1133 = arith.mulf %1132, %1089 : vector<16x32xf32>
    %1134 = arith.addf %1130, %1133 : vector<16x32xf32>
    %c1_507 = arith.constant 1 : index
    %c1_508 = arith.constant 1 : index
    %1135 = memref.load %arg0[%c1_507, %c1_508] : memref<6x5xf32, #tpu.memory_space<smem>>
    %1136 = vector.broadcast %1135 : f32 to vector<16x32xf32>
    %1137 = arith.mulf %1136, %1039 : vector<16x32xf32>
    %c1_509 = arith.constant 1 : index
    %c3_510 = arith.constant 3 : index
    %1138 = memref.load %arg0[%c1_509, %c3_510] : memref<6x5xf32, #tpu.memory_space<smem>>
    %1139 = vector.extract_strided_slice %1117 {offsets = [16, 0], sizes = [16, 32], strides = [1, 1]} : vector<96x32xf32> to vector<16x32xf32>
    %1140 = vector.broadcast %1138 : f32 to vector<16x32xf32>
    %1141 = arith.mulf %1140, %1139 : vector<16x32xf32>
    %1142 = arith.addf %1137, %1141 : vector<16x32xf32>
    %c1_511 = arith.constant 1 : index
    %c2_512 = arith.constant 2 : index
    %1143 = memref.load %arg0[%c1_511, %c2_512] : memref<6x5xf32, #tpu.memory_space<smem>>
    %1144 = vector.extract_strided_slice %1117 {offsets = [64, 0], sizes = [16, 32], strides = [1, 1]} : vector<96x32xf32> to vector<16x32xf32>
    %1145 = vector.broadcast %1143 : f32 to vector<16x32xf32>
    %1146 = arith.mulf %1145, %1144 : vector<16x32xf32>
    %1147 = arith.addf %1142, %1146 : vector<16x32xf32>
    %c1_513 = arith.constant 1 : index
    %c4_514 = arith.constant 4 : index
    %1148 = memref.load %arg0[%c1_513, %c4_514] : memref<6x5xf32, #tpu.memory_space<smem>>
    %1149 = vector.broadcast %1148 : f32 to vector<16x32xf32>
    %1150 = arith.mulf %1149, %1089 : vector<16x32xf32>
    %1151 = arith.addf %1147, %1150 : vector<16x32xf32>
    %c3_515 = arith.constant 3 : index
    %c1_516 = arith.constant 1 : index
    %1152 = memref.load %arg0[%c3_515, %c1_516] : memref<6x5xf32, #tpu.memory_space<smem>>
    %1153 = vector.broadcast %1152 : f32 to vector<16x32xf32>
    %1154 = arith.mulf %1153, %1039 : vector<16x32xf32>
    %c3_517 = arith.constant 3 : index
    %c3_518 = arith.constant 3 : index
    %1155 = memref.load %arg0[%c3_517, %c3_518] : memref<6x5xf32, #tpu.memory_space<smem>>
    %1156 = vector.extract_strided_slice %1117 {offsets = [32, 0], sizes = [16, 32], strides = [1, 1]} : vector<96x32xf32> to vector<16x32xf32>
    %1157 = vector.broadcast %1155 : f32 to vector<16x32xf32>
    %1158 = arith.mulf %1157, %1156 : vector<16x32xf32>
    %1159 = arith.addf %1154, %1158 : vector<16x32xf32>
    %c3_519 = arith.constant 3 : index
    %c2_520 = arith.constant 2 : index
    %1160 = memref.load %arg0[%c3_519, %c2_520] : memref<6x5xf32, #tpu.memory_space<smem>>
    %1161 = vector.extract_strided_slice %1117 {offsets = [80, 0], sizes = [16, 32], strides = [1, 1]} : vector<96x32xf32> to vector<16x32xf32>
    %1162 = vector.broadcast %1160 : f32 to vector<16x32xf32>
    %1163 = arith.mulf %1162, %1161 : vector<16x32xf32>
    %1164 = arith.addf %1159, %1163 : vector<16x32xf32>
    %c3_521 = arith.constant 3 : index
    %c4_522 = arith.constant 4 : index
    %1165 = memref.load %arg0[%c3_521, %c4_522] : memref<6x5xf32, #tpu.memory_space<smem>>
    %1166 = vector.broadcast %1165 : f32 to vector<16x32xf32>
    %1167 = arith.mulf %1166, %1089 : vector<16x32xf32>
    %1168 = arith.addf %1164, %1167 : vector<16x32xf32>
    %cst_523 = arith.constant 0.000000e+00 : f32
    %1169 = vector.broadcast %cst_523 : f32 to vector<16x5xf32>
    %1170 = tpu.concatenate %1169, %1134, %1169 in 1 : vector<16x5xf32>, vector<16x32xf32>, vector<16x5xf32> -> vector<16x42xf32>
    %1171 = vector.extract_strided_slice %1170 {offsets = [0, 0], sizes = [16, 32], strides = [1, 1]} : vector<16x42xf32> to vector<16x32xf32>
    %c0_524 = arith.constant 0 : index
    %c0_525 = arith.constant 0 : index
    %1172 = vector.load %arg6[%c0_524, %c0_525] : memref<9x32xf32, #tpu.memory_space<vmem>>, vector<1x32xf32>
    %1173 = vector.broadcast %1172 : vector<1x32xf32> to vector<16x32xf32>
    %1174 = arith.mulf %1171, %1173 : vector<16x32xf32>
    %1175 = vector.extract_strided_slice %1170 {offsets = [0, 1], sizes = [16, 32], strides = [1, 1]} : vector<16x42xf32> to vector<16x32xf32>
    %c1_526 = arith.constant 1 : index
    %c0_527 = arith.constant 0 : index
    %1176 = vector.load %arg6[%c1_526, %c0_527] : memref<9x32xf32, #tpu.memory_space<vmem>>, vector<1x32xf32>
    %1177 = vector.broadcast %1176 : vector<1x32xf32> to vector<16x32xf32>
    %1178 = arith.mulf %1175, %1177 : vector<16x32xf32>
    %1179 = arith.addf %1174, %1178 : vector<16x32xf32>
    %1180 = vector.extract_strided_slice %1170 {offsets = [0, 2], sizes = [16, 32], strides = [1, 1]} : vector<16x42xf32> to vector<16x32xf32>
    %c2_528 = arith.constant 2 : index
    %c0_529 = arith.constant 0 : index
    %1181 = vector.load %arg6[%c2_528, %c0_529] : memref<9x32xf32, #tpu.memory_space<vmem>>, vector<1x32xf32>
    %1182 = vector.broadcast %1181 : vector<1x32xf32> to vector<16x32xf32>
    %1183 = arith.mulf %1180, %1182 : vector<16x32xf32>
    %1184 = arith.addf %1179, %1183 : vector<16x32xf32>
    %1185 = vector.extract_strided_slice %1170 {offsets = [0, 4], sizes = [16, 32], strides = [1, 1]} : vector<16x42xf32> to vector<16x32xf32>
    %c3_530 = arith.constant 3 : index
    %c0_531 = arith.constant 0 : index
    %1186 = vector.load %arg6[%c3_530, %c0_531] : memref<9x32xf32, #tpu.memory_space<vmem>>, vector<1x32xf32>
    %1187 = vector.broadcast %1186 : vector<1x32xf32> to vector<16x32xf32>
    %1188 = arith.mulf %1185, %1187 : vector<16x32xf32>
    %1189 = arith.addf %1184, %1188 : vector<16x32xf32>
    %1190 = vector.extract_strided_slice %1170 {offsets = [0, 5], sizes = [16, 32], strides = [1, 1]} : vector<16x42xf32> to vector<16x32xf32>
    %c4_532 = arith.constant 4 : index
    %c0_533 = arith.constant 0 : index
    %1191 = vector.load %arg6[%c4_532, %c0_533] : memref<9x32xf32, #tpu.memory_space<vmem>>, vector<1x32xf32>
    %1192 = vector.broadcast %1191 : vector<1x32xf32> to vector<16x32xf32>
    %1193 = arith.mulf %1190, %1192 : vector<16x32xf32>
    %1194 = arith.addf %1189, %1193 : vector<16x32xf32>
    %1195 = vector.extract_strided_slice %1170 {offsets = [0, 6], sizes = [16, 32], strides = [1, 1]} : vector<16x42xf32> to vector<16x32xf32>
    %c5_534 = arith.constant 5 : index
    %c0_535 = arith.constant 0 : index
    %1196 = vector.load %arg6[%c5_534, %c0_535] : memref<9x32xf32, #tpu.memory_space<vmem>>, vector<1x32xf32>
    %1197 = vector.broadcast %1196 : vector<1x32xf32> to vector<16x32xf32>
    %1198 = arith.mulf %1195, %1197 : vector<16x32xf32>
    %1199 = arith.addf %1194, %1198 : vector<16x32xf32>
    %1200 = vector.extract_strided_slice %1170 {offsets = [0, 8], sizes = [16, 32], strides = [1, 1]} : vector<16x42xf32> to vector<16x32xf32>
    %c6_536 = arith.constant 6 : index
    %c0_537 = arith.constant 0 : index
    %1201 = vector.load %arg6[%c6_536, %c0_537] : memref<9x32xf32, #tpu.memory_space<vmem>>, vector<1x32xf32>
    %1202 = vector.broadcast %1201 : vector<1x32xf32> to vector<16x32xf32>
    %1203 = arith.mulf %1200, %1202 : vector<16x32xf32>
    %1204 = arith.addf %1199, %1203 : vector<16x32xf32>
    %1205 = vector.extract_strided_slice %1170 {offsets = [0, 9], sizes = [16, 32], strides = [1, 1]} : vector<16x42xf32> to vector<16x32xf32>
    %c7_538 = arith.constant 7 : index
    %c0_539 = arith.constant 0 : index
    %1206 = vector.load %arg6[%c7_538, %c0_539] : memref<9x32xf32, #tpu.memory_space<vmem>>, vector<1x32xf32>
    %1207 = vector.broadcast %1206 : vector<1x32xf32> to vector<16x32xf32>
    %1208 = arith.mulf %1205, %1207 : vector<16x32xf32>
    %1209 = arith.addf %1204, %1208 : vector<16x32xf32>
    %1210 = vector.extract_strided_slice %1170 {offsets = [0, 10], sizes = [16, 32], strides = [1, 1]} : vector<16x42xf32> to vector<16x32xf32>
    %c8_540 = arith.constant 8 : index
    %c0_541 = arith.constant 0 : index
    %1211 = vector.load %arg6[%c8_540, %c0_541] : memref<9x32xf32, #tpu.memory_space<vmem>>, vector<1x32xf32>
    %1212 = vector.broadcast %1211 : vector<1x32xf32> to vector<16x32xf32>
    %1213 = arith.mulf %1210, %1212 : vector<16x32xf32>
    %1214 = arith.addf %1209, %1213 : vector<16x32xf32>
    %1215 = tpu.concatenate %1174, %1178, %1183, %1188, %1193, %1198, %1203, %1208, %1213 in 0 : vector<16x32xf32>, vector<16x32xf32>, vector<16x32xf32>, vector<16x32xf32>, vector<16x32xf32>, vector<16x32xf32>, vector<16x32xf32>, vector<16x32xf32>, vector<16x32xf32> -> vector<144x32xf32>
    %c0_542 = arith.constant 0 : index
    %c0_543 = arith.constant 0 : index
    %1216 = vector.load %arg7[%c0_542, %c0_543] : memref<1x32xf32, #tpu.memory_space<vmem>>, vector<1x32xf32>
    %1217 = vector.broadcast %1216 : vector<1x32xf32> to vector<16x32xf32>
    %1218 = arith.mulf %1214, %1217 : vector<16x32xf32>
    %c0_544 = arith.constant 0 : index
    %c0_545 = arith.constant 0 : index
    %1219 = vector.load %arg48[%c0_544, %c0_545] : memref<64x144xf32, #tpu.memory_space<vmem>>, vector<64x144xf32>
    %cst_546 = arith.constant 0.000000e+00 : f32
    %1220 = vector.broadcast %cst_546 : f32 to vector<144x32xf32>
    %1221 = arith.maximumf %1215, %1220 : vector<144x32xf32>
    %cst_547 = arith.constant dense<0.000000e+00> : vector<64x32xf32>
    %1222 = tpu.matmul %1219, %1221, %cst_547 {dimension_numbers = #tpu.dot_dimension_numbers<[1], [0], [0], [1], [0, 0, 1, 1], [], []>} : vector<64x144xf32>, vector<144x32xf32>, vector<64x32xf32> -> vector<64x32xf32>
    %cst_548 = arith.constant dense<0.000000e+00> : vector<64xf32>
    %1223 = vector.multi_reduction <add>, %1222, %cst_548 [1] : vector<64x32xf32> to vector<64xf32>
    %1224 = vector.shape_cast %1223 : vector<64xf32> to vector<64x1xf32>
    %cst_549 = arith.constant 3.200000e+01 : f32
    %1225 = vector.broadcast %cst_549 : f32 to vector<64x1xf32>
    %1226 = arith.divf %1224, %1225 : vector<64x1xf32>
    %1227 = vector.broadcast %1226 : vector<64x1xf32> to vector<64x32xf32>
    %1228 = arith.subf %1222, %1227 : vector<64x32xf32>
    %1229 = arith.mulf %1228, %1228 : vector<64x32xf32>
    %cst_550 = arith.constant dense<0.000000e+00> : vector<64xf32>
    %1230 = vector.multi_reduction <add>, %1229, %cst_550 [1] : vector<64x32xf32> to vector<64xf32>
    %1231 = vector.shape_cast %1230 : vector<64xf32> to vector<64x1xf32>
    %cst_551 = arith.constant 3.200000e+01 : f32
    %1232 = vector.broadcast %cst_551 : f32 to vector<64x1xf32>
    %1233 = arith.divf %1231, %1232 : vector<64x1xf32>
    %1234 = vector.broadcast %1226 : vector<64x1xf32> to vector<64x32xf32>
    %1235 = arith.subf %1222, %1234 : vector<64x32xf32>
    %cst_552 = arith.constant 9.99999974E-6 : f32
    %1236 = vector.broadcast %cst_552 : f32 to vector<64x1xf32>
    %1237 = arith.addf %1233, %1236 : vector<64x1xf32>
    %1238 = math.rsqrt %1237 : vector<64x1xf32>
    %1239 = vector.broadcast %1238 : vector<64x1xf32> to vector<64x32xf32>
    %1240 = arith.mulf %1235, %1239 : vector<64x32xf32>
    %c0_553 = arith.constant 0 : index
    %c0_554 = arith.constant 0 : index
    %1241 = vector.load %arg49[%c0_553, %c0_554] : memref<64x1xf32, #tpu.memory_space<vmem>>, vector<64x1xf32>
    %1242 = vector.broadcast %1241 : vector<64x1xf32> to vector<64x32xf32>
    %1243 = arith.mulf %1240, %1242 : vector<64x32xf32>
    %c0_555 = arith.constant 0 : index
    %c0_556 = arith.constant 0 : index
    %1244 = vector.load %arg50[%c0_555, %c0_556] : memref<64x1xf32, #tpu.memory_space<vmem>>, vector<64x1xf32>
    %1245 = vector.broadcast %1244 : vector<64x1xf32> to vector<64x32xf32>
    %1246 = arith.addf %1243, %1245 : vector<64x32xf32>
    %c2_557 = arith.constant 2 : index
    %c1_558 = arith.constant 1 : index
    %1247 = memref.load %arg0[%c2_557, %c1_558] : memref<6x5xf32, #tpu.memory_space<smem>>
    %1248 = vector.broadcast %1247 : f32 to vector<16x32xf32>
    %1249 = arith.mulf %1248, %1134 : vector<16x32xf32>
    %c2_559 = arith.constant 2 : index
    %c3_560 = arith.constant 3 : index
    %1250 = memref.load %arg0[%c2_559, %c3_560] : memref<6x5xf32, #tpu.memory_space<smem>>
    %1251 = vector.extract_strided_slice %1246 {offsets = [0, 0], sizes = [16, 32], strides = [1, 1]} : vector<64x32xf32> to vector<16x32xf32>
    %1252 = vector.broadcast %1250 : f32 to vector<16x32xf32>
    %1253 = arith.mulf %1252, %1251 : vector<16x32xf32>
    %1254 = arith.addf %1249, %1253 : vector<16x32xf32>
    %c2_561 = arith.constant 2 : index
    %c2_562 = arith.constant 2 : index
    %1255 = memref.load %arg0[%c2_561, %c2_562] : memref<6x5xf32, #tpu.memory_space<smem>>
    %1256 = vector.extract_strided_slice %1246 {offsets = [32, 0], sizes = [16, 32], strides = [1, 1]} : vector<64x32xf32> to vector<16x32xf32>
    %1257 = vector.broadcast %1255 : f32 to vector<16x32xf32>
    %1258 = arith.mulf %1257, %1256 : vector<16x32xf32>
    %1259 = arith.addf %1254, %1258 : vector<16x32xf32>
    %c2_563 = arith.constant 2 : index
    %c4_564 = arith.constant 4 : index
    %1260 = memref.load %arg0[%c2_563, %c4_564] : memref<6x5xf32, #tpu.memory_space<smem>>
    %1261 = vector.broadcast %1260 : f32 to vector<16x32xf32>
    %1262 = arith.mulf %1261, %1218 : vector<16x32xf32>
    %1263 = arith.addf %1259, %1262 : vector<16x32xf32>
    %1264 = arith.addf %1151, %1263 : vector<16x32xf32>
    %c4_565 = arith.constant 4 : index
    %c1_566 = arith.constant 1 : index
    %1265 = memref.load %arg0[%c4_565, %c1_566] : memref<6x5xf32, #tpu.memory_space<smem>>
    %1266 = vector.broadcast %1265 : f32 to vector<16x32xf32>
    %1267 = arith.mulf %1266, %1134 : vector<16x32xf32>
    %c4_567 = arith.constant 4 : index
    %c3_568 = arith.constant 3 : index
    %1268 = memref.load %arg0[%c4_567, %c3_568] : memref<6x5xf32, #tpu.memory_space<smem>>
    %1269 = vector.extract_strided_slice %1246 {offsets = [16, 0], sizes = [16, 32], strides = [1, 1]} : vector<64x32xf32> to vector<16x32xf32>
    %1270 = vector.broadcast %1268 : f32 to vector<16x32xf32>
    %1271 = arith.mulf %1270, %1269 : vector<16x32xf32>
    %1272 = arith.addf %1267, %1271 : vector<16x32xf32>
    %c4_569 = arith.constant 4 : index
    %c2_570 = arith.constant 2 : index
    %1273 = memref.load %arg0[%c4_569, %c2_570] : memref<6x5xf32, #tpu.memory_space<smem>>
    %1274 = vector.extract_strided_slice %1246 {offsets = [48, 0], sizes = [16, 32], strides = [1, 1]} : vector<64x32xf32> to vector<16x32xf32>
    %1275 = vector.broadcast %1273 : f32 to vector<16x32xf32>
    %1276 = arith.mulf %1275, %1274 : vector<16x32xf32>
    %1277 = arith.addf %1272, %1276 : vector<16x32xf32>
    %c4_571 = arith.constant 4 : index
    %c4_572 = arith.constant 4 : index
    %1278 = memref.load %arg0[%c4_571, %c4_572] : memref<6x5xf32, #tpu.memory_space<smem>>
    %1279 = vector.broadcast %1278 : f32 to vector<16x32xf32>
    %1280 = arith.mulf %1279, %1218 : vector<16x32xf32>
    %1281 = arith.addf %1277, %1280 : vector<16x32xf32>
    %1282 = arith.addf %1168, %1281 : vector<16x32xf32>
    %cst_573 = arith.constant 0.000000e+00 : f32
    %1283 = vector.broadcast %cst_573 : f32 to vector<16x5xf32>
    %1284 = tpu.concatenate %1283, %1264, %1283 in 1 : vector<16x5xf32>, vector<16x32xf32>, vector<16x5xf32> -> vector<16x42xf32>
    %1285 = vector.extract_strided_slice %1284 {offsets = [0, 0], sizes = [16, 32], strides = [1, 1]} : vector<16x42xf32> to vector<16x32xf32>
    %c0_574 = arith.constant 0 : index
    %c0_575 = arith.constant 0 : index
    %1286 = vector.load %arg6[%c0_574, %c0_575] : memref<9x32xf32, #tpu.memory_space<vmem>>, vector<1x32xf32>
    %1287 = vector.broadcast %1286 : vector<1x32xf32> to vector<16x32xf32>
    %1288 = arith.mulf %1285, %1287 : vector<16x32xf32>
    %1289 = vector.extract_strided_slice %1284 {offsets = [0, 1], sizes = [16, 32], strides = [1, 1]} : vector<16x42xf32> to vector<16x32xf32>
    %c1_576 = arith.constant 1 : index
    %c0_577 = arith.constant 0 : index
    %1290 = vector.load %arg6[%c1_576, %c0_577] : memref<9x32xf32, #tpu.memory_space<vmem>>, vector<1x32xf32>
    %1291 = vector.broadcast %1290 : vector<1x32xf32> to vector<16x32xf32>
    %1292 = arith.mulf %1289, %1291 : vector<16x32xf32>
    %1293 = arith.addf %1288, %1292 : vector<16x32xf32>
    %1294 = vector.extract_strided_slice %1284 {offsets = [0, 2], sizes = [16, 32], strides = [1, 1]} : vector<16x42xf32> to vector<16x32xf32>
    %c2_578 = arith.constant 2 : index
    %c0_579 = arith.constant 0 : index
    %1295 = vector.load %arg6[%c2_578, %c0_579] : memref<9x32xf32, #tpu.memory_space<vmem>>, vector<1x32xf32>
    %1296 = vector.broadcast %1295 : vector<1x32xf32> to vector<16x32xf32>
    %1297 = arith.mulf %1294, %1296 : vector<16x32xf32>
    %1298 = arith.addf %1293, %1297 : vector<16x32xf32>
    %1299 = vector.extract_strided_slice %1284 {offsets = [0, 4], sizes = [16, 32], strides = [1, 1]} : vector<16x42xf32> to vector<16x32xf32>
    %c3_580 = arith.constant 3 : index
    %c0_581 = arith.constant 0 : index
    %1300 = vector.load %arg6[%c3_580, %c0_581] : memref<9x32xf32, #tpu.memory_space<vmem>>, vector<1x32xf32>
    %1301 = vector.broadcast %1300 : vector<1x32xf32> to vector<16x32xf32>
    %1302 = arith.mulf %1299, %1301 : vector<16x32xf32>
    %1303 = arith.addf %1298, %1302 : vector<16x32xf32>
    %1304 = vector.extract_strided_slice %1284 {offsets = [0, 5], sizes = [16, 32], strides = [1, 1]} : vector<16x42xf32> to vector<16x32xf32>
    %c4_582 = arith.constant 4 : index
    %c0_583 = arith.constant 0 : index
    %1305 = vector.load %arg6[%c4_582, %c0_583] : memref<9x32xf32, #tpu.memory_space<vmem>>, vector<1x32xf32>
    %1306 = vector.broadcast %1305 : vector<1x32xf32> to vector<16x32xf32>
    %1307 = arith.mulf %1304, %1306 : vector<16x32xf32>
    %1308 = arith.addf %1303, %1307 : vector<16x32xf32>
    %1309 = vector.extract_strided_slice %1284 {offsets = [0, 6], sizes = [16, 32], strides = [1, 1]} : vector<16x42xf32> to vector<16x32xf32>
    %c5_584 = arith.constant 5 : index
    %c0_585 = arith.constant 0 : index
    %1310 = vector.load %arg6[%c5_584, %c0_585] : memref<9x32xf32, #tpu.memory_space<vmem>>, vector<1x32xf32>
    %1311 = vector.broadcast %1310 : vector<1x32xf32> to vector<16x32xf32>
    %1312 = arith.mulf %1309, %1311 : vector<16x32xf32>
    %1313 = arith.addf %1308, %1312 : vector<16x32xf32>
    %1314 = vector.extract_strided_slice %1284 {offsets = [0, 8], sizes = [16, 32], strides = [1, 1]} : vector<16x42xf32> to vector<16x32xf32>
    %c6_586 = arith.constant 6 : index
    %c0_587 = arith.constant 0 : index
    %1315 = vector.load %arg6[%c6_586, %c0_587] : memref<9x32xf32, #tpu.memory_space<vmem>>, vector<1x32xf32>
    %1316 = vector.broadcast %1315 : vector<1x32xf32> to vector<16x32xf32>
    %1317 = arith.mulf %1314, %1316 : vector<16x32xf32>
    %1318 = arith.addf %1313, %1317 : vector<16x32xf32>
    %1319 = vector.extract_strided_slice %1284 {offsets = [0, 9], sizes = [16, 32], strides = [1, 1]} : vector<16x42xf32> to vector<16x32xf32>
    %c7_588 = arith.constant 7 : index
    %c0_589 = arith.constant 0 : index
    %1320 = vector.load %arg6[%c7_588, %c0_589] : memref<9x32xf32, #tpu.memory_space<vmem>>, vector<1x32xf32>
    %1321 = vector.broadcast %1320 : vector<1x32xf32> to vector<16x32xf32>
    %1322 = arith.mulf %1319, %1321 : vector<16x32xf32>
    %1323 = arith.addf %1318, %1322 : vector<16x32xf32>
    %1324 = vector.extract_strided_slice %1284 {offsets = [0, 10], sizes = [16, 32], strides = [1, 1]} : vector<16x42xf32> to vector<16x32xf32>
    %c8_590 = arith.constant 8 : index
    %c0_591 = arith.constant 0 : index
    %1325 = vector.load %arg6[%c8_590, %c0_591] : memref<9x32xf32, #tpu.memory_space<vmem>>, vector<1x32xf32>
    %1326 = vector.broadcast %1325 : vector<1x32xf32> to vector<16x32xf32>
    %1327 = arith.mulf %1324, %1326 : vector<16x32xf32>
    %1328 = arith.addf %1323, %1327 : vector<16x32xf32>
    %1329 = tpu.concatenate %1288, %1292, %1297, %1302, %1307, %1312, %1317, %1322, %1327 in 0 : vector<16x32xf32>, vector<16x32xf32>, vector<16x32xf32>, vector<16x32xf32>, vector<16x32xf32>, vector<16x32xf32>, vector<16x32xf32>, vector<16x32xf32>, vector<16x32xf32> -> vector<144x32xf32>
    %c0_592 = arith.constant 0 : index
    %c0_593 = arith.constant 0 : index
    %1330 = vector.load %arg7[%c0_592, %c0_593] : memref<1x32xf32, #tpu.memory_space<vmem>>, vector<1x32xf32>
    %1331 = vector.broadcast %1330 : vector<1x32xf32> to vector<16x32xf32>
    %1332 = arith.mulf %1328, %1331 : vector<16x32xf32>
    %c0_594 = arith.constant 0 : index
    %c0_595 = arith.constant 0 : index
    %1333 = vector.load %arg51[%c0_594, %c0_595] : memref<32x144xf32, #tpu.memory_space<vmem>>, vector<32x144xf32>
    %cst_596 = arith.constant 0.000000e+00 : f32
    %1334 = vector.broadcast %cst_596 : f32 to vector<144x32xf32>
    %1335 = arith.maximumf %1329, %1334 : vector<144x32xf32>
    %cst_597 = arith.constant dense<0.000000e+00> : vector<32x32xf32>
    %1336 = tpu.matmul %1333, %1335, %cst_597 {dimension_numbers = #tpu.dot_dimension_numbers<[1], [0], [0], [1], [0, 0, 1, 1], [], []>} : vector<32x144xf32>, vector<144x32xf32>, vector<32x32xf32> -> vector<32x32xf32>
    %cst_598 = arith.constant dense<0.000000e+00> : vector<32xf32>
    %1337 = vector.multi_reduction <add>, %1336, %cst_598 [1] : vector<32x32xf32> to vector<32xf32>
    %1338 = vector.shape_cast %1337 : vector<32xf32> to vector<32x1xf32>
    %cst_599 = arith.constant 3.200000e+01 : f32
    %1339 = vector.broadcast %cst_599 : f32 to vector<32x1xf32>
    %1340 = arith.divf %1338, %1339 : vector<32x1xf32>
    %1341 = vector.broadcast %1340 : vector<32x1xf32> to vector<32x32xf32>
    %1342 = arith.subf %1336, %1341 : vector<32x32xf32>
    %1343 = arith.mulf %1342, %1342 : vector<32x32xf32>
    %cst_600 = arith.constant dense<0.000000e+00> : vector<32xf32>
    %1344 = vector.multi_reduction <add>, %1343, %cst_600 [1] : vector<32x32xf32> to vector<32xf32>
    %1345 = vector.shape_cast %1344 : vector<32xf32> to vector<32x1xf32>
    %cst_601 = arith.constant 3.200000e+01 : f32
    %1346 = vector.broadcast %cst_601 : f32 to vector<32x1xf32>
    %1347 = arith.divf %1345, %1346 : vector<32x1xf32>
    %1348 = vector.broadcast %1340 : vector<32x1xf32> to vector<32x32xf32>
    %1349 = arith.subf %1336, %1348 : vector<32x32xf32>
    %cst_602 = arith.constant 9.99999974E-6 : f32
    %1350 = vector.broadcast %cst_602 : f32 to vector<32x1xf32>
    %1351 = arith.addf %1347, %1350 : vector<32x1xf32>
    %1352 = math.rsqrt %1351 : vector<32x1xf32>
    %1353 = vector.broadcast %1352 : vector<32x1xf32> to vector<32x32xf32>
    %1354 = arith.mulf %1349, %1353 : vector<32x32xf32>
    %c0_603 = arith.constant 0 : index
    %c0_604 = arith.constant 0 : index
    %1355 = vector.load %arg52[%c0_603, %c0_604] : memref<32x1xf32, #tpu.memory_space<vmem>>, vector<32x1xf32>
    %1356 = vector.broadcast %1355 : vector<32x1xf32> to vector<32x32xf32>
    %1357 = arith.mulf %1354, %1356 : vector<32x32xf32>
    %c0_605 = arith.constant 0 : index
    %c0_606 = arith.constant 0 : index
    %1358 = vector.load %arg53[%c0_605, %c0_606] : memref<32x1xf32, #tpu.memory_space<vmem>>, vector<32x1xf32>
    %1359 = vector.broadcast %1358 : vector<32x1xf32> to vector<32x32xf32>
    %1360 = arith.addf %1357, %1359 : vector<32x32xf32>
    %c5_607 = arith.constant 5 : index
    %c1_608 = arith.constant 1 : index
    %1361 = memref.load %arg0[%c5_607, %c1_608] : memref<6x5xf32, #tpu.memory_space<smem>>
    %1362 = vector.broadcast %1361 : f32 to vector<16x32xf32>
    %1363 = arith.mulf %1362, %1264 : vector<16x32xf32>
    %c5_609 = arith.constant 5 : index
    %c3_610 = arith.constant 3 : index
    %1364 = memref.load %arg0[%c5_609, %c3_610] : memref<6x5xf32, #tpu.memory_space<smem>>
    %1365 = vector.extract_strided_slice %1360 {offsets = [0, 0], sizes = [16, 32], strides = [1, 1]} : vector<32x32xf32> to vector<16x32xf32>
    %1366 = vector.broadcast %1364 : f32 to vector<16x32xf32>
    %1367 = arith.mulf %1366, %1365 : vector<16x32xf32>
    %1368 = arith.addf %1363, %1367 : vector<16x32xf32>
    %c5_611 = arith.constant 5 : index
    %c2_612 = arith.constant 2 : index
    %1369 = memref.load %arg0[%c5_611, %c2_612] : memref<6x5xf32, #tpu.memory_space<smem>>
    %1370 = vector.extract_strided_slice %1360 {offsets = [16, 0], sizes = [16, 32], strides = [1, 1]} : vector<32x32xf32> to vector<16x32xf32>
    %1371 = vector.broadcast %1369 : f32 to vector<16x32xf32>
    %1372 = arith.mulf %1371, %1370 : vector<16x32xf32>
    %1373 = arith.addf %1368, %1372 : vector<16x32xf32>
    %c5_613 = arith.constant 5 : index
    %c4_614 = arith.constant 4 : index
    %1374 = memref.load %arg0[%c5_613, %c4_614] : memref<6x5xf32, #tpu.memory_space<smem>>
    %1375 = vector.broadcast %1374 : f32 to vector<16x32xf32>
    %1376 = arith.mulf %1375, %1332 : vector<16x32xf32>
    %1377 = arith.addf %1373, %1376 : vector<16x32xf32>
    %1378 = arith.addf %1282, %1377 : vector<16x32xf32>
    %cst_615 = arith.constant dense<0.000000e+00> : vector<16xf32>
    %1379 = vector.multi_reduction <add>, %1378, %cst_615 [1] : vector<16x32xf32> to vector<16xf32>
    %1380 = vector.shape_cast %1379 : vector<16xf32> to vector<16x1xf32>
    %cst_616 = arith.constant 3.200000e+01 : f32
    %1381 = vector.broadcast %cst_616 : f32 to vector<16x1xf32>
    %1382 = arith.divf %1380, %1381 : vector<16x1xf32>
    %1383 = vector.broadcast %1382 : vector<16x1xf32> to vector<16x32xf32>
    %1384 = arith.subf %1378, %1383 : vector<16x32xf32>
    %1385 = arith.mulf %1384, %1384 : vector<16x32xf32>
    %cst_617 = arith.constant dense<0.000000e+00> : vector<16xf32>
    %1386 = vector.multi_reduction <add>, %1385, %cst_617 [1] : vector<16x32xf32> to vector<16xf32>
    %1387 = vector.shape_cast %1386 : vector<16xf32> to vector<16x1xf32>
    %cst_618 = arith.constant 3.200000e+01 : f32
    %1388 = vector.broadcast %cst_618 : f32 to vector<16x1xf32>
    %1389 = arith.divf %1387, %1388 : vector<16x1xf32>
    %1390 = vector.broadcast %1382 : vector<16x1xf32> to vector<16x32xf32>
    %1391 = arith.subf %1378, %1390 : vector<16x32xf32>
    %cst_619 = arith.constant 9.99999974E-6 : f32
    %1392 = vector.broadcast %cst_619 : f32 to vector<16x1xf32>
    %1393 = arith.addf %1389, %1392 : vector<16x1xf32>
    %1394 = math.rsqrt %1393 : vector<16x1xf32>
    %1395 = vector.broadcast %1394 : vector<16x1xf32> to vector<16x32xf32>
    %1396 = arith.mulf %1391, %1395 : vector<16x32xf32>
    %c0_620 = arith.constant 0 : index
    %c0_621 = arith.constant 0 : index
    %1397 = vector.load %arg54[%c0_620, %c0_621] : memref<16x1xf32, #tpu.memory_space<vmem>>, vector<16x1xf32>
    %1398 = vector.broadcast %1397 : vector<16x1xf32> to vector<16x32xf32>
    %1399 = arith.mulf %1396, %1398 : vector<16x32xf32>
    %c0_622 = arith.constant 0 : index
    %c0_623 = arith.constant 0 : index
    %1400 = vector.load %arg55[%c0_622, %c0_623] : memref<16x1xf32, #tpu.memory_space<vmem>>, vector<16x1xf32>
    %1401 = vector.broadcast %1400 : vector<16x1xf32> to vector<16x32xf32>
    %1402 = arith.addf %1399, %1401 : vector<16x32xf32>
    %cst_624 = arith.constant 0.000000e+00 : f32
    %1403 = vector.broadcast %cst_624 : f32 to vector<16x32xf32>
    %1404 = arith.maximumf %1402, %1403 : vector<16x32xf32>
    %c0_625 = arith.constant 0 : index
    %c0_626 = arith.constant 0 : index
    %1405 = vector.load %arg56[%c0_625, %c0_626] : memref<32x2xf32, #tpu.memory_space<vmem>>, vector<32x2xf32>
    %cst_627 = arith.constant dense<0.000000e+00> : vector<16x2xf32>
    %1406 = tpu.matmul %1404, %1405, %cst_627 {dimension_numbers = #tpu.dot_dimension_numbers<[1], [0], [0], [1], [0, 0, 1, 1], [], []>} : vector<16x32xf32>, vector<32x2xf32>, vector<16x2xf32> -> vector<16x2xf32>
    %c0_628 = arith.constant 0 : index
    %c0_629 = arith.constant 0 : index
    %1407 = vector.load %arg59[%c0_628, %c0_629] : memref<16x2xf32, #tpu.memory_space<vmem>>, vector<16x2xf32>
    tpu.vector_store %arg59[%c0_628, %c0_629], %1406 {strides = array<i32>} : memref<16x2xf32, #tpu.memory_space<vmem>>, vector<16x2xf32>,
    %c0_630 = arith.constant 0 : index
    %c0_631 = arith.constant 0 : index
    %1408 = vector.load %arg57[%c0_630, %c0_631] : memref<10x16xf32, #tpu.memory_space<vmem>>, vector<10x16xf32>
    %cst_632 = arith.constant dense<0.000000e+00> : vector<10x2xf32>
    %1409 = tpu.matmul %1408, %1406, %cst_632 {dimension_numbers = #tpu.dot_dimension_numbers<[1], [0], [0], [1], [0, 0, 1, 1], [], []>} : vector<10x16xf32>, vector<16x2xf32>, vector<10x2xf32> -> vector<10x2xf32>
    %c0_633 = arith.constant 0 : index
    %c0_634 = arith.constant 0 : index
    %1410 = vector.load %arg58[%c0_633, %c0_634] : memref<10x1xf32, #tpu.memory_space<vmem>>, vector<10x1xf32>
    %1411 = vector.broadcast %1410 : vector<10x1xf32> to vector<10x2xf32>
    %1412 = arith.addf %1409, %1411 : vector<10x2xf32>
    %c0_635 = arith.constant 0 : index
    %c0_636 = arith.constant 0 : index
    %1413 = vector.load %arg60[%c0_635, %c0_636] : memref<10x2xf32, #tpu.memory_space<vmem>>, vector<10x2xf32>
    tpu.vector_store %arg60[%c0_635, %c0_636], %1412 {strides = array<i32>} : memref<10x2xf32, #tpu.memory_space<vmem>>, vector<10x2xf32>,
    return
  }
}

</mosaic_0001>

<llo_original>
// kernel: _lambda_.1
$region0: #{_lambda_.1}
  #allocation0 [shape = 'u32[]', space=smem, size = 0x4, offset = 0x4, fixed_abs, tag = 'smem constant byte address 0x4 - core index']
  #allocation1 [shape = 'u32[144,128]{1,0:T(1,128)}', space=vmem, size = 0x12000, scoped, tag = 'internal scratch']
  %s0 = inlined_call_operand.smem [shape: u32[61], index: -1, kind: input, shape index: {}]
  %s1 = sld [smem:[%s0]]
  %s2 = scalar_lea.smem %s0, 1
  %s3 = sld [smem:[%s2]]
  %s4 = scalar_lea.smem %s0, 2
  %s5 = sld [smem:[%s4]]
  %s6 = scalar_lea.smem %s0, 3
  %s7 = sld [smem:[%s6]]
  %s8 = scalar_lea.smem %s0, 4
  %s9 = sld [smem:[%s8]]
  %s10 = scalar_lea.smem %s0, 5
  %s11 = sld [smem:[%s10]]
  %s12 = scalar_lea.smem %s0, 6
  %s13 = sld [smem:[%s12]]
  %s14 = scalar_lea.smem %s0, 7
  %s15 = sld [smem:[%s14]]
  %s16 = scalar_lea.smem %s0, 8
  %s17 = sld [smem:[%s16]]
  %s18 = scalar_lea.smem %s0, 9
  %s19 = sld [smem:[%s18]]
  %s20 = scalar_lea.smem %s0, 10
  %s21 = sld [smem:[%s20]]
  %s22 = scalar_lea.smem %s0, 11
  %s23 = sld [smem:[%s22]]
  %s24 = scalar_lea.smem %s0, 12
  %s25 = sld [smem:[%s24]]
  %s26 = scalar_lea.smem %s0, 13
  %s27 = sld [smem:[%s26]]
  %s28 = scalar_lea.smem %s0, 14
  %s29 = sld [smem:[%s28]]
  %s30 = scalar_lea.smem %s0, 15
  %s31 = sld [smem:[%s30]]
  %s32 = scalar_lea.smem %s0, 16
  %s33 = sld [smem:[%s32]]
  %s34 = scalar_lea.smem %s0, 17
  %s35 = sld [smem:[%s34]]
  %s36 = scalar_lea.smem %s0, 18
  %s37 = sld [smem:[%s36]]
  %s38 = scalar_lea.smem %s0, 19
  %s39 = sld [smem:[%s38]]
  %s40 = scalar_lea.smem %s0, 20
  %s41 = sld [smem:[%s40]]
  %s42 = scalar_lea.smem %s0, 21
  %s43 = sld [smem:[%s42]]
  %s44 = scalar_lea.smem %s0, 22
  %s45 = sld [smem:[%s44]]
  %s46 = scalar_lea.smem %s0, 23
  %s47 = sld [smem:[%s46]]
  %s48 = scalar_lea.smem %s0, 24
  %s49 = sld [smem:[%s48]]
  %s50 = scalar_lea.smem %s0, 25
  %s51 = sld [smem:[%s50]]
  %s52 = scalar_lea.smem %s0, 26
  %s53 = sld [smem:[%s52]]
  %s54 = scalar_lea.smem %s0, 27
  %s55 = sld [smem:[%s54]]
  %s56 = scalar_lea.smem %s0, 28
  %s57 = sld [smem:[%s56]]
  %s58 = scalar_lea.smem %s0, 29
  %s59 = sld [smem:[%s58]]
  %s60 = scalar_lea.smem %s0, 30
  %s61 = sld [smem:[%s60]]
  %s62 = scalar_lea.smem %s0, 31
  %s63 = sld [smem:[%s62]]
  %s64 = scalar_lea.smem %s0, 32
  %s65 = sld [smem:[%s64]]
  %s66 = scalar_lea.smem %s0, 33
  %s67 = sld [smem:[%s66]]
  %s68 = scalar_lea.smem %s0, 34
  %s69 = sld [smem:[%s68]]
  %s70 = scalar_lea.smem %s0, 35
  %s71 = sld [smem:[%s70]]
  %s72 = scalar_lea.smem %s0, 36
  %s73 = sld [smem:[%s72]]
  %s74 = scalar_lea.smem %s0, 37
  %s75 = sld [smem:[%s74]]
  %s76 = scalar_lea.smem %s0, 38
  %s77 = sld [smem:[%s76]]
  %s78 = scalar_lea.smem %s0, 39
  %s79 = sld [smem:[%s78]]
  %s80 = scalar_lea.smem %s0, 40
  %s81 = sld [smem:[%s80]]
  %s82 = scalar_lea.smem %s0, 41
  %s83 = sld [smem:[%s82]]
  %s84 = scalar_lea.smem %s0, 42
  %s85 = sld [smem:[%s84]]
  %s86 = scalar_lea.smem %s0, 43
  %s87 = sld [smem:[%s86]]
  %s88 = scalar_lea.smem %s0, 44
  %s89 = sld [smem:[%s88]]
  %s90 = scalar_lea.smem %s0, 45
  %s91 = sld [smem:[%s90]]
  %s92 = scalar_lea.smem %s0, 46
  %s93 = sld [smem:[%s92]]
  %s94 = scalar_lea.smem %s0, 47
  %s95 = sld [smem:[%s94]]
  %s96 = scalar_lea.smem %s0, 48
  %s97 = sld [smem:[%s96]]
  %s98 = scalar_lea.smem %s0, 49
  %s99 = sld [smem:[%s98]]
  %s100 = scalar_lea.smem %s0, 50
  %s101 = sld [smem:[%s100]]
  %s102 = scalar_lea.smem %s0, 51
  %s103 = sld [smem:[%s102]]
  %s104 = scalar_lea.smem %s0, 52
  %s105 = sld [smem:[%s104]]
  %s106 = scalar_lea.smem %s0, 53
  %s107 = sld [smem:[%s106]]
  %s108 = scalar_lea.smem %s0, 54
  %s109 = sld [smem:[%s108]]
  %s110 = scalar_lea.smem %s0, 55
  %s111 = sld [smem:[%s110]]
  %s112 = scalar_lea.smem %s0, 56
  %s113 = sld [smem:[%s112]]
  %s114 = scalar_lea.smem %s0, 57
  %s115 = sld [smem:[%s114]]
  %s116 = scalar_lea.smem %s0, 58
  %s117 = sld [smem:[%s116]]
  %s118 = scalar_lea.smem %s0, 59
  %s119 = sld [smem:[%s118]]
  %s120 = scalar_lea.smem %s0, 60
  %s121 = sld [smem:[%s120]]
  %122 = xla_tuple %s119, %s121
  %s123 = sld [smem:[#allocation0]]
  $region258: #{_lambda_.1} parent=0
    _
  %s125 = ssub.s32 1, %s123
  %s126 = scalar_select 0, %s125, %s123
  $region1: #{_lambda_.1} parent=0
    #allocation2 [shape = 'u8[4096]{0}', space=smem, size = 0x1000, scoped, tag = 'input window, operand 0, single buffered']
    #allocation3 [shape = 's32[1]{0}', space=sflag, size = 0x4, scoped, tag = 'scoped memory for _lambda_.1']
    %127 = vsyncpa [#allocation3], 0
    // Predicated region
    $region2: #{_lambda_.1} parent=1 // pred_check
      _
    $region3: #{_lambda_.1} parent=1 // pred_check_branch
      %129 = sbr.rel (0) target = $region5
    $region4: #{_lambda_.1} parent=1 // pred_region
      %s131 = ssub.s32 128, 128
      %132 = vsyncadd [#allocation3], %s131
      %s134 = sshll.u32 %s1, 4
      %s135 = int_to_ptr.vmem [resolvable:$true] %s134
      %137 = dma.vmem_to_smem %s135, 128, [#allocation2], [#allocation3]
    $region5: #{_lambda_.1} parent=1 // pred_fallthru
      _
    // Predicated region
    $region6: #{_lambda_.1} parent=1 // pred_check
      _
    $region7: #{_lambda_.1} parent=1 // pred_check_branch
      %139 = sbr.rel (0) target = $region9
    $region8: #{_lambda_.1} parent=1 // pred_region
      _
    $region9: #{_lambda_.1} parent=1 // pred_fallthru
      _
    // Predicated region
    $region10: #{_lambda_.1} parent=1 // pred_check
      _
    $region11: #{_lambda_.1} parent=1 // pred_check_branch
      %141 = sbr.rel (0) target = $region13
    $region12: #{_lambda_.1} parent=1 // pred_region
      _
    $region13: #{_lambda_.1} parent=1 // pred_fallthru
      _
    // Predicated region
    $region14: #{_lambda_.1} parent=1 // pred_check
      _
    $region15: #{_lambda_.1} parent=1 // pred_check_branch
      %143 = sbr.rel (0) target = $region17
    $region16: #{_lambda_.1} parent=1 // pred_region
      _
    $region17: #{_lambda_.1} parent=1 // pred_fallthru
      _
    // Predicated region
    $region18: #{_lambda_.1} parent=1 // pred_check
      _
    $region19: #{_lambda_.1} parent=1 // pred_check_branch
      %145 = sbr.rel (0) target = $region21
    $region20: #{_lambda_.1} parent=1 // pred_region
      _
    $region21: #{_lambda_.1} parent=1 // pred_fallthru
      _
    // Predicated region
    $region22: #{_lambda_.1} parent=1 // pred_check
      _
    $region23: #{_lambda_.1} parent=1 // pred_check_branch
      %147 = sbr.rel (0) target = $region25
    $region24: #{_lambda_.1} parent=1 // pred_region
      _
    $region25: #{_lambda_.1} parent=1 // pred_fallthru
      _
    // Predicated region
    $region26: #{_lambda_.1} parent=1 // pred_check
      _
    $region27: #{_lambda_.1} parent=1 // pred_check_branch
      %149 = sbr.rel (0) target = $region29
    $region28: #{_lambda_.1} parent=1 // pred_region
      _
    $region29: #{_lambda_.1} parent=1 // pred_fallthru
      _
    // Predicated region
    $region30: #{_lambda_.1} parent=1 // pred_check
      _
    $region31: #{_lambda_.1} parent=1 // pred_check_branch
      %151 = sbr.rel (0) target = $region33
    $region32: #{_lambda_.1} parent=1 // pred_region
      _
    $region33: #{_lambda_.1} parent=1 // pred_fallthru
      _
    // Predicated region
    $region34: #{_lambda_.1} parent=1 // pred_check
      _
    $region35: #{_lambda_.1} parent=1 // pred_check_branch
      %153 = sbr.rel (0) target = $region37
    $region36: #{_lambda_.1} parent=1 // pred_region
      _
    $region37: #{_lambda_.1} parent=1 // pred_fallthru
      _
    // Predicated region
    $region38: #{_lambda_.1} parent=1 // pred_check
      _
    $region39: #{_lambda_.1} parent=1 // pred_check_branch
      %155 = sbr.rel (0) target = $region41
    $region40: #{_lambda_.1} parent=1 // pred_region
      _
    $region41: #{_lambda_.1} parent=1 // pred_fallthru
      _
    // Predicated region
    $region42: #{_lambda_.1} parent=1 // pred_check
      _
    $region43: #{_lambda_.1} parent=1 // pred_check_branch
      %157 = sbr.rel (0) target = $region45
    $region44: #{_lambda_.1} parent=1 // pred_region
      _
    $region45: #{_lambda_.1} parent=1 // pred_fallthru
      _
    // Predicated region
    $region46: #{_lambda_.1} parent=1 // pred_check
      _
    $region47: #{_lambda_.1} parent=1 // pred_check_branch
      %159 = sbr.rel (0) target = $region49
    $region48: #{_lambda_.1} parent=1 // pred_region
      _
    $region49: #{_lambda_.1} parent=1 // pred_fallthru
      _
    // Predicated region
    $region50: #{_lambda_.1} parent=1 // pred_check
      _
    $region51: #{_lambda_.1} parent=1 // pred_check_branch
      %161 = sbr.rel (0) target = $region53
    $region52: #{_lambda_.1} parent=1 // pred_region
      _
    $region53: #{_lambda_.1} parent=1 // pred_fallthru
      _
    // Predicated region
    $region54: #{_lambda_.1} parent=1 // pred_check
      _
    $region55: #{_lambda_.1} parent=1 // pred_check_branch
      %163 = sbr.rel (0) target = $region57
    $region56: #{_lambda_.1} parent=1 // pred_region
      _
    $region57: #{_lambda_.1} parent=1 // pred_fallthru
      _
    // Predicated region
    $region58: #{_lambda_.1} parent=1 // pred_check
      _
    $region59: #{_lambda_.1} parent=1 // pred_check_branch
      %165 = sbr.rel (0) target = $region61
    $region60: #{_lambda_.1} parent=1 // pred_region
      _
    $region61: #{_lambda_.1} parent=1 // pred_fallthru
      _
    // Predicated region
    $region62: #{_lambda_.1} parent=1 // pred_check
      _
    $region63: #{_lambda_.1} parent=1 // pred_check_branch
      %167 = sbr.rel (0) target = $region65
    $region64: #{_lambda_.1} parent=1 // pred_region
      _
    $region65: #{_lambda_.1} parent=1 // pred_fallthru
      _
    // Predicated region
    $region66: #{_lambda_.1} parent=1 // pred_check
      _
    $region67: #{_lambda_.1} parent=1 // pred_check_branch
      %169 = sbr.rel (0) target = $region69
    $region68: #{_lambda_.1} parent=1 // pred_region
      _
    $region69: #{_lambda_.1} parent=1 // pred_fallthru
      _
    // Predicated region
    $region70: #{_lambda_.1} parent=1 // pred_check
      _
    $region71: #{_lambda_.1} parent=1 // pred_check_branch
      %171 = sbr.rel (0) target = $region73
    $region72: #{_lambda_.1} parent=1 // pred_region
      _
    $region73: #{_lambda_.1} parent=1 // pred_fallthru
      _
    // Predicated region
    $region74: #{_lambda_.1} parent=1 // pred_check
      _
    $region75: #{_lambda_.1} parent=1 // pred_check_branch
      %173 = sbr.rel (0) target = $region77
    $region76: #{_lambda_.1} parent=1 // pred_region
      _
    $region77: #{_lambda_.1} parent=1 // pred_fallthru
      _
    // Predicated region
    $region78: #{_lambda_.1} parent=1 // pred_check
      _
    $region79: #{_lambda_.1} parent=1 // pred_check_branch
      %175 = sbr.rel (0) target = $region81
    $region80: #{_lambda_.1} parent=1 // pred_region
      _
    $region81: #{_lambda_.1} parent=1 // pred_fallthru
      _
    // Predicated region
    $region82: #{_lambda_.1} parent=1 // pred_check
      _
    $region83: #{_lambda_.1} parent=1 // pred_check_branch
      %177 = sbr.rel (0) target = $region85
    $region84: #{_lambda_.1} parent=1 // pred_region
      _
    $region85: #{_lambda_.1} parent=1 // pred_fallthru
      _
    // Predicated region
    $region86: #{_lambda_.1} parent=1 // pred_check
      _
    $region87: #{_lambda_.1} parent=1 // pred_check_branch
      %179 = sbr.rel (0) target = $region89
    $region88: #{_lambda_.1} parent=1 // pred_region
      _
    $region89: #{_lambda_.1} parent=1 // pred_fallthru
      _
    // Predicated region
    $region90: #{_lambda_.1} parent=1 // pred_check
      _
    $region91: #{_lambda_.1} parent=1 // pred_check_branch
      %181 = sbr.rel (0) target = $region93
    $region92: #{_lambda_.1} parent=1 // pred_region
      _
    $region93: #{_lambda_.1} parent=1 // pred_fallthru
      _
    // Predicated region
    $region94: #{_lambda_.1} parent=1 // pred_check
      _
    $region95: #{_lambda_.1} parent=1 // pred_check_branch
      %183 = sbr.rel (0) target = $region97
    $region96: #{_lambda_.1} parent=1 // pred_region
      _
    $region97: #{_lambda_.1} parent=1 // pred_fallthru
      _
    // Predicated region
    $region98: #{_lambda_.1} parent=1 // pred_check
      _
    $region99: #{_lambda_.1} parent=1 // pred_check_branch
      %185 = sbr.rel (0) target = $region101
    $region100: #{_lambda_.1} parent=1 // pred_region
      _
    $region101: #{_lambda_.1} parent=1 // pred_fallthru
      _
    // Predicated region
    $region102: #{_lambda_.1} parent=1 // pred_check
      _
    $region103: #{_lambda_.1} parent=1 // pred_check_branch
      %187 = sbr.rel (0) target = $region105
    $region104: #{_lambda_.1} parent=1 // pred_region
      _
    $region105: #{_lambda_.1} parent=1 // pred_fallthru
      _
    // Predicated region
    $region106: #{_lambda_.1} parent=1 // pred_check
      _
    $region107: #{_lambda_.1} parent=1 // pred_check_branch
      %189 = sbr.rel (0) target = $region109
    $region108: #{_lambda_.1} parent=1 // pred_region
      _
    $region109: #{_lambda_.1} parent=1 // pred_fallthru
      _
    // Predicated region
    $region110: #{_lambda_.1} parent=1 // pred_check
      _
    $region111: #{_lambda_.1} parent=1 // pred_check_branch
      %191 = sbr.rel (0) target = $region113
    $region112: #{_lambda_.1} parent=1 // pred_region
      _
    $region113: #{_lambda_.1} parent=1 // pred_fallthru
      _
    // Predicated region
    $region114: #{_lambda_.1} parent=1 // pred_check
      _
    $region115: #{_lambda_.1} parent=1 // pred_check_branch
      %193 = sbr.rel (0) target = $region117
    $region116: #{_lambda_.1} parent=1 // pred_region
      _
    $region117: #{_lambda_.1} parent=1 // pred_fallthru
      _
    // Predicated region
    $region118: #{_lambda_.1} parent=1 // pred_check
      _
    $region119: #{_lambda_.1} parent=1 // pred_check_branch
      %195 = sbr.rel (0) target = $region121
    $region120: #{_lambda_.1} parent=1 // pred_region
      _
    $region121: #{_lambda_.1} parent=1 // pred_fallthru
      _
    // Predicated region
    $region122: #{_lambda_.1} parent=1 // pred_check
      _
    $region123: #{_lambda_.1} parent=1 // pred_check_branch
      %197 = sbr.rel (0) target = $region125
    $region124: #{_lambda_.1} parent=1 // pred_region
      _
    $region125: #{_lambda_.1} parent=1 // pred_fallthru
      _
    // Predicated region
    $region126: #{_lambda_.1} parent=1 // pred_check
      _
    $region127: #{_lambda_.1} parent=1 // pred_check_branch
      %199 = sbr.rel (0) target = $region129
    $region128: #{_lambda_.1} parent=1 // pred_region
      _
    $region129: #{_lambda_.1} parent=1 // pred_fallthru
      _
    // Predicated region
    $region130: #{_lambda_.1} parent=1 // pred_check
      _
    $region131: #{_lambda_.1} parent=1 // pred_check_branch
      %201 = sbr.rel (0) target = $region133
    $region132: #{_lambda_.1} parent=1 // pred_region
      _
    $region133: #{_lambda_.1} parent=1 // pred_fallthru
      _
    // Predicated region
    $region134: #{_lambda_.1} parent=1 // pred_check
      _
    $region135: #{_lambda_.1} parent=1 // pred_check_branch
      %203 = sbr.rel (0) target = $region137
    $region136: #{_lambda_.1} parent=1 // pred_region
      _
    $region137: #{_lambda_.1} parent=1 // pred_fallthru
      _
    // Predicated region
    $region138: #{_lambda_.1} parent=1 // pred_check
      _
    $region139: #{_lambda_.1} parent=1 // pred_check_branch
      %205 = sbr.rel (0) target = $region141
    $region140: #{_lambda_.1} parent=1 // pred_region
      _
    $region141: #{_lambda_.1} parent=1 // pred_fallthru
      _
    // Predicated region
    $region142: #{_lambda_.1} parent=1 // pred_check
      _
    $region143: #{_lambda_.1} parent=1 // pred_check_branch
      %207 = sbr.rel (0) target = $region145
    $region144: #{_lambda_.1} parent=1 // pred_region
      _
    $region145: #{_lambda_.1} parent=1 // pred_fallthru
      _
    // Predicated region
    $region146: #{_lambda_.1} parent=1 // pred_check
      _
    $region147: #{_lambda_.1} parent=1 // pred_check_branch
      %209 = sbr.rel (0) target = $region149
    $region148: #{_lambda_.1} parent=1 // pred_region
      _
    $region149: #{_lambda_.1} parent=1 // pred_fallthru
      _
    // Predicated region
    $region150: #{_lambda_.1} parent=1 // pred_check
      _
    $region151: #{_lambda_.1} parent=1 // pred_check_branch
      %211 = sbr.rel (0) target = $region153
    $region152: #{_lambda_.1} parent=1 // pred_region
      _
    $region153: #{_lambda_.1} parent=1 // pred_fallthru
      _
    // Predicated region
    $region154: #{_lambda_.1} parent=1 // pred_check
      _
    $region155: #{_lambda_.1} parent=1 // pred_check_branch
      %213 = sbr.rel (0) target = $region157
    $region156: #{_lambda_.1} parent=1 // pred_region
      _
    $region157: #{_lambda_.1} parent=1 // pred_fallthru
      _
    // Predicated region
    $region158: #{_lambda_.1} parent=1 // pred_check
      _
    $region159: #{_lambda_.1} parent=1 // pred_check_branch
      %215 = sbr.rel (0) target = $region161
    $region160: #{_lambda_.1} parent=1 // pred_region
      _
    $region161: #{_lambda_.1} parent=1 // pred_fallthru
      _
    // Predicated region
    $region162: #{_lambda_.1} parent=1 // pred_check
      _
    $region163: #{_lambda_.1} parent=1 // pred_check_branch
      %217 = sbr.rel (0) target = $region165
    $region164: #{_lambda_.1} parent=1 // pred_region
      _
    $region165: #{_lambda_.1} parent=1 // pred_fallthru
      _
    // Predicated region
    $region166: #{_lambda_.1} parent=1 // pred_check
      _
    $region167: #{_lambda_.1} parent=1 // pred_check_branch
      %219 = sbr.rel (0) target = $region169
    $region168: #{_lambda_.1} parent=1 // pred_region
      _
    $region169: #{_lambda_.1} parent=1 // pred_fallthru
      _
    // Predicated region
    $region170: #{_lambda_.1} parent=1 // pred_check
      _
    $region171: #{_lambda_.1} parent=1 // pred_check_branch
      %221 = sbr.rel (0) target = $region173
    $region172: #{_lambda_.1} parent=1 // pred_region
      _
    $region173: #{_lambda_.1} parent=1 // pred_fallthru
      _
    // Predicated region
    $region174: #{_lambda_.1} parent=1 // pred_check
      _
    $region175: #{_lambda_.1} parent=1 // pred_check_branch
      %223 = sbr.rel (0) target = $region177
    $region176: #{_lambda_.1} parent=1 // pred_region
      _
    $region177: #{_lambda_.1} parent=1 // pred_fallthru
      _
    // Predicated region
    $region178: #{_lambda_.1} parent=1 // pred_check
      _
    $region179: #{_lambda_.1} parent=1 // pred_check_branch
      %225 = sbr.rel (0) target = $region181
    $region180: #{_lambda_.1} parent=1 // pred_region
      _
    $region181: #{_lambda_.1} parent=1 // pred_fallthru
      _
    // Predicated region
    $region182: #{_lambda_.1} parent=1 // pred_check
      _
    $region183: #{_lambda_.1} parent=1 // pred_check_branch
      %227 = sbr.rel (0) target = $region185
    $region184: #{_lambda_.1} parent=1 // pred_region
      _
    $region185: #{_lambda_.1} parent=1 // pred_fallthru
      _
    // Predicated region
    $region186: #{_lambda_.1} parent=1 // pred_check
      _
    $region187: #{_lambda_.1} parent=1 // pred_check_branch
      %229 = sbr.rel (0) target = $region189
    $region188: #{_lambda_.1} parent=1 // pred_region
      _
    $region189: #{_lambda_.1} parent=1 // pred_fallthru
      _
    // Predicated region
    $region190: #{_lambda_.1} parent=1 // pred_check
      _
    $region191: #{_lambda_.1} parent=1 // pred_check_branch
      %231 = sbr.rel (0) target = $region193
    $region192: #{_lambda_.1} parent=1 // pred_region
      _
    $region193: #{_lambda_.1} parent=1 // pred_fallthru
      _
    // Predicated region
    $region194: #{_lambda_.1} parent=1 // pred_check
      _
    $region195: #{_lambda_.1} parent=1 // pred_check_branch
      %233 = sbr.rel (0) target = $region197
    $region196: #{_lambda_.1} parent=1 // pred_region
      _
    $region197: #{_lambda_.1} parent=1 // pred_fallthru
      _
    // Predicated region
    $region198: #{_lambda_.1} parent=1 // pred_check
      _
    $region199: #{_lambda_.1} parent=1 // pred_check_branch
      %235 = sbr.rel (0) target = $region201
    $region200: #{_lambda_.1} parent=1 // pred_region
      _
    $region201: #{_lambda_.1} parent=1 // pred_fallthru
      _
    // Predicated region
    $region202: #{_lambda_.1} parent=1 // pred_check
      _
    $region203: #{_lambda_.1} parent=1 // pred_check_branch
      %237 = sbr.rel (0) target = $region205
    $region204: #{_lambda_.1} parent=1 // pred_region
      _
    $region205: #{_lambda_.1} parent=1 // pred_fallthru
      _
    // Predicated region
    $region206: #{_lambda_.1} parent=1 // pred_check
      _
    $region207: #{_lambda_.1} parent=1 // pred_check_branch
      %239 = sbr.rel (0) target = $region209
    $region208: #{_lambda_.1} parent=1 // pred_region
      _
    $region209: #{_lambda_.1} parent=1 // pred_fallthru
      _
    // Predicated region
    $region210: #{_lambda_.1} parent=1 // pred_check
      _
    $region211: #{_lambda_.1} parent=1 // pred_check_branch
      %241 = sbr.rel (0) target = $region213
    $region212: #{_lambda_.1} parent=1 // pred_region
      _
    $region213: #{_lambda_.1} parent=1 // pred_fallthru
      _
    // Predicated region
    $region214: #{_lambda_.1} parent=1 // pred_check
      _
    $region215: #{_lambda_.1} parent=1 // pred_check_branch
      %243 = sbr.rel (0) target = $region217
    $region216: #{_lambda_.1} parent=1 // pred_region
      _
    $region217: #{_lambda_.1} parent=1 // pred_fallthru
      _
    // Predicated region
    $region218: #{_lambda_.1} parent=1 // pred_check
      _
    $region219: #{_lambda_.1} parent=1 // pred_check_branch
      %245 = sbr.rel (0) target = $region221
    $region220: #{_lambda_.1} parent=1 // pred_region
      _
    $region221: #{_lambda_.1} parent=1 // pred_fallthru
      _
    // Predicated region
    $region222: #{_lambda_.1} parent=1 // pred_check
      _
    $region223: #{_lambda_.1} parent=1 // pred_check_branch
      %247 = sbr.rel (0) target = $region225
    $region224: #{_lambda_.1} parent=1 // pred_region
      _
    $region225: #{_lambda_.1} parent=1 // pred_fallthru
      _
    // Predicated region
    $region226: #{_lambda_.1} parent=1 // pred_check
      _
    $region227: #{_lambda_.1} parent=1 // pred_check_branch
      %249 = sbr.rel (0) target = $region229
    $region228: #{_lambda_.1} parent=1 // pred_region
      _
    $region229: #{_lambda_.1} parent=1 // pred_fallthru
      _
    // Predicated region
    $region230: #{_lambda_.1} parent=1 // pred_check
      _
    $region231: #{_lambda_.1} parent=1 // pred_check_branch
      %251 = sbr.rel (0) target = $region233
    $region232: #{_lambda_.1} parent=1 // pred_region
      _
    $region233: #{_lambda_.1} parent=1 // pred_fallthru
      _
    // Predicated region
    $region234: #{_lambda_.1} parent=1 // pred_check
      _
    $region235: #{_lambda_.1} parent=1 // pred_check_branch
      %253 = sbr.rel (0) target = $region237
    $region236: #{_lambda_.1} parent=1 // pred_region
      _
    $region237: #{_lambda_.1} parent=1 // pred_fallthru
      _
    // Predicated region
    $region238: #{_lambda_.1} parent=1 // pred_check
      _
    $region239: #{_lambda_.1} parent=1 // pred_check_branch
      %255 = sbr.rel (0) target = $region241
    $region240: #{_lambda_.1} parent=1 // pred_region
      %256 = dma.done [#allocation3], 128
    $region241: #{_lambda_.1} parent=1 // pred_fallthru
      _
    %257 = sfence
    %v258 = vld [vmem:[%s3] sm:$0x77]
    %v259 = vld [vmem:[%s3 + $0x8] sm:$0x77]
    %v262 = vcombine.high %v258, %v258
    %v263 = vcombine.high %v259, %v259
    %264 = vrot.lane.b32.xlu0 %v258, 17
    %v265 = vpop.permute.xlu0 %264
    %266 = vrot.lane.b32.xlu0 %v262, 17
    %v267 = vpop.permute.xlu0 %266
    %268 = vrot.lane.b32.xlu0 %v259, 17
    %v269 = vpop.permute.xlu0 %268
    %270 = vrot.lane.b32.xlu0 %v263, 17
    %v271 = vpop.permute.xlu0 %270
    %vm272 = vcmask 138240
    %v273 = vsel %vm272, %v265, %v267
    %v274 = vsel %vm272, %v267, %v269
    %v275 = vsel %vm272, %v269, %v271
    %v281 = vsel %vm272, 0.0, %v265
    %v282 = vsel %vm272, %v271, 0.0
    %v283 = vld [vmem:[%s5] ss:$8 sm:$0xf]
    %v285 = vlaneseq
    %v286 = vshrl.u32 %v285, 7
    %v287 = vsub.s32 0, %v286
    %v288 = vrot.slane %v283, %v287
    %v289 = vlaneseq
    %v290 = vshrl.u32 %v289, 7
    %v291 = vsub.s32 1, %v290
    %v292 = vrot.slane %v283, %v291
    %v293 = vlaneseq
    %v294 = vshrl.u32 %v293, 7
    %v295 = vsub.s32 2, %v294
    %v296 = vrot.slane %v283, %v295
    %v297 = vlaneseq
    %v298 = vshrl.u32 %v297, 7
    %v299 = vsub.s32 3, %v298
    %v300 = vrot.slane %v283, %v299
    %v305 = vmul.f32 %v281, %v288
    %v306 = vmul.f32 %v273, %v292
    %v307 = vmul.f32 %v274, %v296
    %v308 = vmul.f32 %v275, %v300
    %s309 = scalar_lea.vmem %s5, 1
    %v310 = vld [vmem:[%s309] ss:$8 sm:$0xf]
    %v312 = vlaneseq
    %v313 = vshrl.u32 %v312, 7
    %v314 = vsub.s32 0, %v313
    %v315 = vrot.slane %v310, %v314
    %v316 = vlaneseq
    %v317 = vshrl.u32 %v316, 7
    %v318 = vsub.s32 1, %v317
    %v319 = vrot.slane %v310, %v318
    %v320 = vlaneseq
    %v321 = vshrl.u32 %v320, 7
    %v322 = vsub.s32 2, %v321
    %v323 = vrot.slane %v310, %v322
    %v324 = vlaneseq
    %v325 = vshrl.u32 %v324, 7
    %v326 = vsub.s32 3, %v325
    %v327 = vrot.slane %v310, %v326
    %328 = vrot.lane.b32.xlu0 %v315, 1
    %v329 = vpop.permute.xlu0 %328
    %330 = vrot.lane.b32.xlu0 %v319, 1
    %v331 = vpop.permute.xlu0 %330
    %332 = vrot.lane.b32.xlu0 %v323, 1
    %v333 = vpop.permute.xlu0 %332
    %334 = vrot.lane.b32.xlu0 %v327, 1
    %v335 = vpop.permute.xlu0 %334
    %vm336 = vcmask 7168
    %v337 = vsel %vm336, %v329, %v331
    %v338 = vsel %vm336, %v331, %v333
    %v339 = vsel %vm336, %v333, %v335
    %v345 = vmul.f32 %v281, %v329
    %v346 = vmul.f32 %v273, %v337
    %v347 = vmul.f32 %v274, %v338
    %v348 = vmul.f32 %v275, %v339
    %v349 = vmul.f32 %v282, %v335
    %s350 = scalar_lea.vmem %s5, 2
    %v351 = vld [vmem:[%s350] ss:$8 sm:$0xf]
    %v353 = vlaneseq
    %v354 = vshrl.u32 %v353, 7
    %v355 = vsub.s32 0, %v354
    %v356 = vrot.slane %v351, %v355
    %v357 = vlaneseq
    %v358 = vshrl.u32 %v357, 7
    %v359 = vsub.s32 1, %v358
    %v360 = vrot.slane %v351, %v359
    %v361 = vlaneseq
    %v362 = vshrl.u32 %v361, 7
    %v363 = vsub.s32 2, %v362
    %v364 = vrot.slane %v351, %v363
    %v365 = vlaneseq
    %v366 = vshrl.u32 %v365, 7
    %v367 = vsub.s32 3, %v366
    %v368 = vrot.slane %v351, %v367
    %369 = vrot.lane.b32.xlu0 %v356, 2
    %v370 = vpop.permute.xlu0 %369
    %371 = vrot.lane.b32.xlu0 %v360, 2
    %v372 = vpop.permute.xlu0 %371
    %373 = vrot.lane.b32.xlu0 %v364, 2
    %v374 = vpop.permute.xlu0 %373
    %375 = vrot.lane.b32.xlu0 %v368, 2
    %v376 = vpop.permute.xlu0 %375
    %vm377 = vcmask 15360
    %v378 = vsel %vm377, %v370, %v372
    %v379 = vsel %vm377, %v372, %v374
    %v380 = vsel %vm377, %v374, %v376
    %v386 = vmul.f32 %v281, %v370
    %v387 = vmul.f32 %v273, %v378
    %v388 = vmul.f32 %v274, %v379
    %v389 = vmul.f32 %v275, %v380
    %v390 = vmul.f32 %v282, %v376
    %s391 = scalar_lea.vmem %s5, 3
    %v392 = vld [vmem:[%s391] ss:$8 sm:$0xf]
    %v394 = vlaneseq
    %v395 = vshrl.u32 %v394, 7
    %v396 = vsub.s32 0, %v395
    %v397 = vrot.slane %v392, %v396
    %v398 = vlaneseq
    %v399 = vshrl.u32 %v398, 7
    %v400 = vsub.s32 1, %v399
    %v401 = vrot.slane %v392, %v400
    %v402 = vlaneseq
    %v403 = vshrl.u32 %v402, 7
    %v404 = vsub.s32 2, %v403
    %v405 = vrot.slane %v392, %v404
    %v406 = vlaneseq
    %v407 = vshrl.u32 %v406, 7
    %v408 = vsub.s32 3, %v407
    %v409 = vrot.slane %v392, %v408
    %410 = vrot.lane.b32.xlu0 %v397, 16
    %v411 = vpop.permute.xlu0 %410
    %412 = vrot.lane.b32.xlu0 %v401, 16
    %v413 = vpop.permute.xlu0 %412
    %414 = vrot.lane.b32.xlu0 %v405, 16
    %v415 = vpop.permute.xlu0 %414
    %416 = vrot.lane.b32.xlu0 %v409, 16
    %v417 = vpop.permute.xlu0 %416
    %vm418 = vcmask 130048
    %v419 = vsel %vm418, %v411, %v413
    %v420 = vsel %vm418, %v413, %v415
    %v421 = vsel %vm418, %v415, %v417
    %v427 = vmul.f32 %v281, %v411
    %v428 = vmul.f32 %v273, %v419
    %v429 = vmul.f32 %v274, %v420
    %v430 = vmul.f32 %v275, %v421
    %v431 = vmul.f32 %v282, %v417
    %s432 = scalar_lea.vmem %s5, 4
    %v433 = vld [vmem:[%s432] ss:$8 sm:$0xf]
    %v435 = vlaneseq
    %v436 = vshrl.u32 %v435, 7
    %v437 = vsub.s32 0, %v436
    %v438 = vrot.slane %v433, %v437
    %v439 = vlaneseq
    %v440 = vshrl.u32 %v439, 7
    %v441 = vsub.s32 1, %v440
    %v442 = vrot.slane %v433, %v441
    %v443 = vlaneseq
    %v444 = vshrl.u32 %v443, 7
    %v445 = vsub.s32 2, %v444
    %v446 = vrot.slane %v433, %v445
    %v447 = vlaneseq
    %v448 = vshrl.u32 %v447, 7
    %v449 = vsub.s32 3, %v448
    %v450 = vrot.slane %v433, %v449
    %451 = vrot.lane.b32.xlu0 %v438, 17
    %v452 = vpop.permute.xlu0 %451
    %453 = vrot.lane.b32.xlu0 %v442, 17
    %v454 = vpop.permute.xlu0 %453
    %455 = vrot.lane.b32.xlu0 %v446, 17
    %v456 = vpop.permute.xlu0 %455
    %457 = vrot.lane.b32.xlu0 %v450, 17
    %v458 = vpop.permute.xlu0 %457
    %v459 = vsel %vm272, %v452, %v454
    %v460 = vsel %vm272, %v454, %v456
    %v461 = vsel %vm272, %v456, %v458
    %v467 = vmul.f32 %v281, %v452
    %v468 = vmul.f32 %v273, %v459
    %v469 = vmul.f32 %v274, %v460
    %v470 = vmul.f32 %v275, %v461
    %v471 = vmul.f32 %v282, %v458
    %s472 = scalar_lea.vmem %s5, 5
    %v473 = vld [vmem:[%s472] ss:$8 sm:$0xf]
    %v475 = vlaneseq
    %v476 = vshrl.u32 %v475, 7
    %v477 = vsub.s32 0, %v476
    %v478 = vrot.slane %v473, %v477
    %v479 = vlaneseq
    %v480 = vshrl.u32 %v479, 7
    %v481 = vsub.s32 1, %v480
    %v482 = vrot.slane %v473, %v481
    %v483 = vlaneseq
    %v484 = vshrl.u32 %v483, 7
    %v485 = vsub.s32 2, %v484
    %v486 = vrot.slane %v473, %v485
    %v487 = vlaneseq
    %v488 = vshrl.u32 %v487, 7
    %v489 = vsub.s32 3, %v488
    %v490 = vrot.slane %v473, %v489
    %491 = vrot.lane.b32.xlu0 %v478, 18
    %v492 = vpop.permute.xlu0 %491
    %493 = vrot.lane.b32.xlu0 %v482, 18
    %v494 = vpop.permute.xlu0 %493
    %495 = vrot.lane.b32.xlu0 %v486, 18
    %v496 = vpop.permute.xlu0 %495
    %497 = vrot.lane.b32.xlu0 %v490, 18
    %v498 = vpop.permute.xlu0 %497
    %vm499 = vcmask 146432
    %v500 = vsel %vm499, %v492, %v494
    %v501 = vsel %vm499, %v494, %v496
    %v502 = vsel %vm499, %v496, %v498
    %v508 = vmul.f32 %v281, %v492
    %v509 = vmul.f32 %v273, %v500
    %v510 = vmul.f32 %v274, %v501
    %v511 = vmul.f32 %v275, %v502
    %v512 = vmul.f32 %v282, %v498
    %s513 = scalar_lea.vmem %s5, 6
    %v514 = vld [vmem:[%s513] ss:$8 sm:$0xf]
    %v516 = vlaneseq
    %v517 = vshrl.u32 %v516, 7
    %v518 = vsub.s32 0, %v517
    %v519 = vrot.slane %v514, %v518
    %v520 = vlaneseq
    %v521 = vshrl.u32 %v520, 7
    %v522 = vsub.s32 1, %v521
    %v523 = vrot.slane %v514, %v522
    %v524 = vlaneseq
    %v525 = vshrl.u32 %v524, 7
    %v526 = vsub.s32 2, %v525
    %v527 = vrot.slane %v514, %v526
    %v528 = vlaneseq
    %v529 = vshrl.u32 %v528, 7
    %v530 = vsub.s32 3, %v529
    %v531 = vrot.slane %v514, %v530
    %532 = vrot.lane.b32.xlu0 %v519, 32
    %v533 = vpop.permute.xlu0 %532
    %534 = vrot.lane.b32.xlu0 %v523, 32
    %v535 = vpop.permute.xlu0 %534
    %536 = vrot.lane.b32.xlu0 %v527, 32
    %v537 = vpop.permute.xlu0 %536
    %538 = vrot.lane.b32.xlu0 %v531, 32
    %v539 = vpop.permute.xlu0 %538
    %vm540 = vcmask 261120
    %v541 = vsel %vm540, %v533, %v535
    %v542 = vsel %vm540, %v535, %v537
    %v543 = vsel %vm540, %v537, %v539
    %v549 = vmul.f32 %v281, %v533
    %v550 = vmul.f32 %v273, %v541
    %v551 = vmul.f32 %v274, %v542
    %v552 = vmul.f32 %v275, %v543
    %v553 = vmul.f32 %v282, %v539
    %s554 = scalar_lea.vmem %s5, 7
    %v555 = vld [vmem:[%s554] ss:$8 sm:$0xf]
    %v557 = vlaneseq
    %v558 = vshrl.u32 %v557, 7
    %v559 = vsub.s32 0, %v558
    %v560 = vrot.slane %v555, %v559
    %v561 = vlaneseq
    %v562 = vshrl.u32 %v561, 7
    %v563 = vsub.s32 1, %v562
    %v564 = vrot.slane %v555, %v563
    %v565 = vlaneseq
    %v566 = vshrl.u32 %v565, 7
    %v567 = vsub.s32 2, %v566
    %v568 = vrot.slane %v555, %v567
    %v569 = vlaneseq
    %v570 = vshrl.u32 %v569, 7
    %v571 = vsub.s32 3, %v570
    %v572 = vrot.slane %v555, %v571
    %573 = vrot.lane.b32.xlu0 %v560, 33
    %v574 = vpop.permute.xlu0 %573
    %575 = vrot.lane.b32.xlu0 %v564, 33
    %v576 = vpop.permute.xlu0 %575
    %577 = vrot.lane.b32.xlu0 %v568, 33
    %v578 = vpop.permute.xlu0 %577
    %579 = vrot.lane.b32.xlu0 %v572, 33
    %v580 = vpop.permute.xlu0 %579
    %vm581 = vcmask 269312
    %v582 = vsel %vm581, %v574, %v576
    %v583 = vsel %vm581, %v576, %v578
    %v584 = vsel %vm581, %v578, %v580
    %v590 = vmul.f32 %v281, %v574
    %v591 = vmul.f32 %v273, %v582
    %v592 = vmul.f32 %v274, %v583
    %v593 = vmul.f32 %v275, %v584
    %v594 = vmul.f32 %v282, %v580
    %s595 = scalar_lea.vmem %s5, 32
    %v596 = vld [vmem:[%s595] ss:$8 sm:$0xf]
    %v598 = vlaneseq
    %v599 = vshrl.u32 %v598, 7
    %v600 = vsub.s32 0, %v599
    %v601 = vrot.slane %v596, %v600
    %v602 = vlaneseq
    %v603 = vshrl.u32 %v602, 7
    %v604 = vsub.s32 1, %v603
    %v605 = vrot.slane %v596, %v604
    %v606 = vlaneseq
    %v607 = vshrl.u32 %v606, 7
    %v608 = vsub.s32 2, %v607
    %v609 = vrot.slane %v596, %v608
    %v610 = vlaneseq
    %v611 = vshrl.u32 %v610, 7
    %v612 = vsub.s32 3, %v611
    %v613 = vrot.slane %v596, %v612
    %614 = vrot.lane.b32.xlu0 %v601, 34
    %v615 = vpop.permute.xlu0 %614
    %616 = vrot.lane.b32.xlu0 %v605, 34
    %v617 = vpop.permute.xlu0 %616
    %618 = vrot.lane.b32.xlu0 %v609, 34
    %v619 = vpop.permute.xlu0 %618
    %620 = vrot.lane.b32.xlu0 %v613, 34
    %v621 = vpop.permute.xlu0 %620
    %vm622 = vcmask 277504
    %v623 = vsel %vm622, %v615, %v617
    %v624 = vsel %vm622, %v617, %v619
    %v625 = vsel %vm622, %v619, %v621
    %v631 = vmul.f32 %v281, %v615
    %v632 = vmul.f32 %v273, %v623
    %v633 = vmul.f32 %v274, %v624
    %v634 = vmul.f32 %v275, %v625
    %v635 = vmul.f32 %v282, %v621
    %v641 = vrot.slane %v345, 5
    %v642 = vrot.slane %v346, 5
    %v643 = vrot.slane %v347, 5
    %v644 = vrot.slane %v348, 5
    %v645 = vrot.slane %v349, 5
    %646 = vrot.lane.b32.xlu0 %v641, 127
    %v647 = vpop.permute.xlu0 %646
    %648 = vrot.lane.b32.xlu0 %v642, 127
    %v649 = vpop.permute.xlu0 %648
    %650 = vrot.lane.b32.xlu0 %v643, 127
    %v651 = vpop.permute.xlu0 %650
    %652 = vrot.lane.b32.xlu0 %v644, 127
    %v653 = vpop.permute.xlu0 %652
    %654 = vrot.lane.b32.xlu0 %v645, 127
    %v655 = vpop.permute.xlu0 %654
    %vm656 = vcmask 1039360
    %v657 = vsel %vm656, %v647, %v649
    %v658 = vsel %vm656, %v649, %v651
    %v659 = vsel %vm656, %v651, %v653
    %v660 = vsel %vm656, %v653, %v655
    %v670 = vrot.slane %v386, 2
    %v671 = vrot.slane %v387, 2
    %v672 = vrot.slane %v388, 2
    %v673 = vrot.slane %v389, 2
    %v674 = vrot.slane %v390, 2
    %675 = vrot.lane.b32.xlu0 %v670, 126
    %v676 = vpop.permute.xlu0 %675
    %677 = vrot.lane.b32.xlu0 %v671, 126
    %v678 = vpop.permute.xlu0 %677
    %679 = vrot.lane.b32.xlu0 %v672, 126
    %v680 = vpop.permute.xlu0 %679
    %681 = vrot.lane.b32.xlu0 %v673, 126
    %v682 = vpop.permute.xlu0 %681
    %683 = vrot.lane.b32.xlu0 %v674, 126
    %v684 = vpop.permute.xlu0 %683
    %vm685 = vcmask 1031168
    %v686 = vsel %vm685, %v676, %v678
    %v687 = vsel %vm685, %v678, %v680
    %v688 = vsel %vm685, %v680, %v682
    %v689 = vsel %vm685, %v682, %v684
    %v699 = vrot.slane %v427, 7
    %v700 = vrot.slane %v428, 7
    %v701 = vrot.slane %v429, 7
    %v702 = vrot.slane %v430, 7
    %v703 = vrot.slane %v431, 7
    %704 = vrot.lane.b32.xlu0 %v699, 112
    %v705 = vpop.permute.xlu0 %704
    %706 = vrot.lane.b32.xlu0 %v700, 112
    %v707 = vpop.permute.xlu0 %706
    %708 = vrot.lane.b32.xlu0 %v701, 112
    %v709 = vpop.permute.xlu0 %708
    %710 = vrot.lane.b32.xlu0 %v702, 112
    %v711 = vpop.permute.xlu0 %710
    %712 = vrot.lane.b32.xlu0 %v703, 112
    %v713 = vpop.permute.xlu0 %712
    %vm714 = vcmask 916480
    %v715 = vsel %vm714, %v705, %v707
    %v716 = vsel %vm714, %v707, %v709
    %v717 = vsel %vm714, %v709, %v711
    %v718 = vsel %vm714, %v711, %v713
    %v728 = vrot.slane %v467, 4
    %v729 = vrot.slane %v468, 4
    %v730 = vrot.slane %v469, 4
    %v731 = vrot.slane %v470, 4
    %v732 = vrot.slane %v471, 4
    %733 = vrot.lane.b32.xlu0 %v728, 111
    %v734 = vpop.permute.xlu0 %733
    %735 = vrot.lane.b32.xlu0 %v729, 111
    %v736 = vpop.permute.xlu0 %735
    %737 = vrot.lane.b32.xlu0 %v730, 111
    %v738 = vpop.permute.xlu0 %737
    %739 = vrot.lane.b32.xlu0 %v731, 111
    %v740 = vpop.permute.xlu0 %739
    %741 = vrot.lane.b32.xlu0 %v732, 111
    %v742 = vpop.permute.xlu0 %741
    %vm743 = vcmask 908288
    %v744 = vsel %vm743, %v734, %v736
    %v745 = vsel %vm743, %v736, %v738
    %v746 = vsel %vm743, %v738, %v740
    %v747 = vsel %vm743, %v740, %v742
    %v757 = vrot.slane %v508, 1
    %v758 = vrot.slane %v509, 1
    %v759 = vrot.slane %v510, 1
    %v760 = vrot.slane %v511, 1
    %v761 = vrot.slane %v512, 1
    %762 = vrot.lane.b32.xlu0 %v757, 110
    %v763 = vpop.permute.xlu0 %762
    %764 = vrot.lane.b32.xlu0 %v758, 110
    %v765 = vpop.permute.xlu0 %764
    %766 = vrot.lane.b32.xlu0 %v759, 110
    %v767 = vpop.permute.xlu0 %766
    %768 = vrot.lane.b32.xlu0 %v760, 110
    %v769 = vpop.permute.xlu0 %768
    %770 = vrot.lane.b32.xlu0 %v761, 110
    %v771 = vpop.permute.xlu0 %770
    %vm772 = vcmask 900096
    %v773 = vsel %vm772, %v763, %v765
    %v774 = vsel %vm772, %v765, %v767
    %v775 = vsel %vm772, %v767, %v769
    %v776 = vsel %vm772, %v769, %v771
    %v786 = vrot.slane %v549, 6
    %v787 = vrot.slane %v550, 6
    %v788 = vrot.slane %v551, 6
    %v789 = vrot.slane %v552, 6
    %v790 = vrot.slane %v553, 6
    %791 = vrot.lane.b32.xlu0 %v786, 96
    %v792 = vpop.permute.xlu0 %791
    %793 = vrot.lane.b32.xlu0 %v787, 96
    %v794 = vpop.permute.xlu0 %793
    %795 = vrot.lane.b32.xlu0 %v788, 96
    %v796 = vpop.permute.xlu0 %795
    %797 = vrot.lane.b32.xlu0 %v789, 96
    %v798 = vpop.permute.xlu0 %797
    %799 = vrot.lane.b32.xlu0 %v790, 96
    %v800 = vpop.permute.xlu0 %799
    %vm801 = vcmask 785408
    %v802 = vsel %vm801, %v792, %v794
    %v803 = vsel %vm801, %v794, %v796
    %v804 = vsel %vm801, %v796, %v798
    %v805 = vsel %vm801, %v798, %v800
    %v815 = vrot.slane %v590, 3
    %v816 = vrot.slane %v591, 3
    %v817 = vrot.slane %v592, 3
    %v818 = vrot.slane %v593, 3
    %v819 = vrot.slane %v594, 3
    %820 = vrot.lane.b32.xlu0 %v815, 95
    %v821 = vpop.permute.xlu0 %820
    %822 = vrot.lane.b32.xlu0 %v816, 95
    %v823 = vpop.permute.xlu0 %822
    %824 = vrot.lane.b32.xlu0 %v817, 95
    %v825 = vpop.permute.xlu0 %824
    %826 = vrot.lane.b32.xlu0 %v818, 95
    %v827 = vpop.permute.xlu0 %826
    %828 = vrot.lane.b32.xlu0 %v819, 95
    %v829 = vpop.permute.xlu0 %828
    %vm830 = vcmask 777216
    %v831 = vsel %vm830, %v821, %v823
    %v832 = vsel %vm830, %v823, %v825
    %v833 = vsel %vm830, %v825, %v827
    %v834 = vsel %vm830, %v827, %v829
    %844 = vrot.lane.b32.xlu0 %v631, 94
    %v845 = vpop.permute.xlu0 %844
    %846 = vrot.lane.b32.xlu0 %v632, 94
    %v847 = vpop.permute.xlu0 %846
    %848 = vrot.lane.b32.xlu0 %v633, 94
    %v849 = vpop.permute.xlu0 %848
    %850 = vrot.lane.b32.xlu0 %v634, 94
    %v851 = vpop.permute.xlu0 %850
    %852 = vrot.lane.b32.xlu0 %v635, 94
    %v853 = vpop.permute.xlu0 %852
    %vm854 = vcmask 769024
    %v855 = vsel %vm854, %v845, %v847
    %v856 = vsel %vm854, %v847, %v849
    %v857 = vsel %vm854, %v849, %v851
    %v858 = vsel %vm854, %v851, %v853
    %vm859 = vcmask 1042432
    %v860 = vsel %vm859, %v305, %v657
    %v861 = vsel %vm859, %v306, %v658
    %v862 = vsel %vm859, %v307, %v659
    %v863 = vsel %vm859, %v308, %v660
    %vm864 = vcmask 1045504
    %v865 = vsel %vm864, %v860, %v686
    %v866 = vsel %vm864, %v861, %v687
    %v867 = vsel %vm864, %v862, %v688
    %v868 = vsel %vm864, %v863, %v689
    %vm869 = vcmask 1040384
    %v870 = vsel %vm869, %v686, %v715
    %v871 = vsel %vm869, %v687, %v716
    %v872 = vsel %vm869, %v688, %v717
    %v873 = vsel %vm869, %v689, %v718
    %vm874 = vcmask 1043456
    %v875 = vsel %vm874, %v870, %v744
    %v876 = vsel %vm874, %v871, %v745
    %v877 = vsel %vm874, %v872, %v746
    %v878 = vsel %vm874, %v873, %v747
    %vm879 = vcmask 1046528
    %v880 = vsel %vm879, %v875, %v773
    %v881 = vsel %vm879, %v876, %v774
    %v882 = vsel %vm879, %v877, %v775
    %v883 = vsel %vm879, %v878, %v776
    %vm884 = vcmask 1041408
    %v885 = vsel %vm884, %v773, %v802
    %v886 = vsel %vm884, %v774, %v803
    %v887 = vsel %vm884, %v775, %v804
    %v888 = vsel %vm884, %v776, %v805
    %vm889 = vcmask 1044480
    %v890 = vsel %vm889, %v885, %v831
    %v891 = vsel %vm889, %v886, %v832
    %v892 = vsel %vm889, %v887, %v833
    %v893 = vsel %vm889, %v888, %v834
    %v894 = vld [vmem:[%s17] sm:$0xf]
    %vm895 = vcmask 220160
    %v897 = vsel %vm895, %v894, 0
    %v899 = vsel %vm859, %v855, 0
    %v901 = vsel %vm859, %v856, 0
    %v903 = vsel %vm859, %v857, 0
    %v905 = vsel %vm859, %v858, 0
    %907 = vmatprep.subr.mxu0 %v866
    %908 = vmatpush1.msra.mxu0 %v865
    %909 = vmatprep.subr.mxu0 %v881
    %910 = vmatpush1.msra.mxu0 %v880
    %911 = vmatprep.subr.mxu0 %v891
    %912 = vmatpush1.msra.mxu0 %v890
    %913 = vmatprep.subr.mxu0 %v901
    %914 = vmatpush1.msra.mxu0 %v899
    %915 = vmatprep.subr.mxu0 0.0
    %916 = vmatpush1.msra.mxu0 0.0
    %917 = vmatprep.subr.mxu0 0.0
    %918 = vmatpush1.msra.mxu0 0.0
    %919 = vmatprep.subr.mxu0 0.0
    %920 = vmatpush1.msra.mxu0 0.0
    %921 = vmatprep.subr.mxu0 0.0
    %922 = vmatpush1.msra.mxu0 0.0
    %923 = vmatprep.subr.mxu0 0.0
    %924 = vmatpush1.msra.mxu0 0.0
    %925 = vmatprep.subr.mxu0 0.0
    %926 = vmatpush1.msra.mxu0 0.0
    %927 = vmatprep.subr.mxu0 0.0
    %928 = vmatpush1.msra.mxu0 0.0
    %929 = vmatprep.subr.mxu0 0.0
    %930 = vmatpush1.msra.mxu0 0.0
    %931 = vmatprep.subr.mxu0 0.0
    %932 = vmatpush1.msra.mxu0 0.0
    %933 = vmatprep.subr.mxu0 0.0
    %934 = vmatpush1.msra.mxu0 0.0
    %935 = vmatprep.subr.mxu0 0.0
    %936 = vmatpush1.msra.mxu0 0.0
    %937 = vmatprep.subr.mxu0 0.0
    %938 = vmatpush1.msra.mxu0 0.0
    %939 = vmatprep.subr.mxu0 0.0
    %940 = vmatpush1.msra.mxu0 0.0
    %941 = vmatprep.subr.mxu0 0.0
    %942 = vmatpush1.msra.mxu0 0.0
    %943 = vmatprep.subr.mxu0 0.0
    %944 = vmatpush1.msra.mxu0 0.0
    %945 = vmatprep.subr.mxu0 0.0
    %946 = vmatpush1.msra.mxu0 0.0
    %947 = vmatprep.subr.mxu0 0.0
    %948 = vmatpush1.msra.mxu0 0.0
    %949 = vmatprep.subr.mxu0 0.0
    %950 = vmatpush1.msra.mxu0 0.0
    %951 = vmatprep.subr.mxu0 0.0
    %952 = vmatpush1.msra.mxu0 0.0
    %953 = vmatprep.subr.mxu0 0.0
    %954 = vmatpush1.msra.mxu0 0.0
    %955 = vmatprep.subr.mxu0 0.0
    %956 = vmatpush1.msra.mxu0 0.0
    %957 = vmatprep.subr.mxu0 0.0
    %958 = vmatpush1.msra.mxu0 0.0
    %959 = vmatprep.subr.mxu0 0.0
    %960 = vmatpush1.msra.mxu0 0.0
    %961 = vmatprep.subr.mxu0 0.0
    %962 = vmatpush1.msra.mxu0 0.0
    %963 = vmatprep.subr.mxu0 0.0
    %964 = vmatpush1.msra.mxu0 0.0
    %965 = vmatprep.subr.mxu0 0.0
    %966 = vmatpush1.msra.mxu0 0.0
    %967 = vmatprep.subr.mxu0 0.0
    %968 = vmatpush1.msra.mxu0 0.0
    %969 = vmatprep.subr.mxu0 0.0
    %970 = vmatpush1.msra.mxu0 0.0
    %971 = vmatprep.mubr.f32.mxu0 0.0
    %972 = vmatmul.mubr.f32.gmra.mrb[0].mxu0 %v897
    %v973 = vpop.f32.mrb[0].mxu0
    %v974 = vadd.f32 0.0, %v973
    %v975 = vpop.f32.mrb[0].mxu0
    %v976 = vadd.f32 0.0, %v975
    %977 = vdwg.mxu0
    %978 = vmatprep.subr.mxu0 %v868
    %979 = vmatpush1.msra.mxu0 %v867
    %980 = vmatprep.subr.mxu0 %v883
    %981 = vmatpush1.msra.mxu0 %v882
    %982 = vmatprep.subr.mxu0 %v893
    %983 = vmatpush1.msra.mxu0 %v892
    %984 = vmatprep.subr.mxu0 %v905
    %985 = vmatpush1.msra.mxu0 %v903
    %986 = vmatprep.subr.mxu0 0.0
    %987 = vmatpush1.msra.mxu0 0.0
    %988 = vmatprep.subr.mxu0 0.0
    %989 = vmatpush1.msra.mxu0 0.0
    %990 = vmatprep.subr.mxu0 0.0
    %991 = vmatpush1.msra.mxu0 0.0
    %992 = vmatprep.subr.mxu0 0.0
    %993 = vmatpush1.msra.mxu0 0.0
    %994 = vmatprep.subr.mxu0 0.0
    %995 = vmatpush1.msra.mxu0 0.0
    %996 = vmatprep.subr.mxu0 0.0
    %997 = vmatpush1.msra.mxu0 0.0
    %998 = vmatprep.subr.mxu0 0.0
    %999 = vmatpush1.msra.mxu0 0.0
    %1000 = vmatprep.subr.mxu0 0.0
    %1001 = vmatpush1.msra.mxu0 0.0
    %1002 = vmatprep.subr.mxu0 0.0
    %1003 = vmatpush1.msra.mxu0 0.0
    %1004 = vmatprep.subr.mxu0 0.0
    %1005 = vmatpush1.msra.mxu0 0.0
    %1006 = vmatprep.subr.mxu0 0.0
    %1007 = vmatpush1.msra.mxu0 0.0
    %1008 = vmatprep.subr.mxu0 0.0
    %1009 = vmatpush1.msra.mxu0 0.0
    %1010 = vmatprep.subr.mxu0 0.0
    %1011 = vmatpush1.msra.mxu0 0.0
    %1012 = vmatprep.subr.mxu0 0.0
    %1013 = vmatpush1.msra.mxu0 0.0
    %1014 = vmatprep.subr.mxu0 0.0
    %1015 = vmatpush1.msra.mxu0 0.0
    %1016 = vmatprep.subr.mxu0 0.0
    %1017 = vmatpush1.msra.mxu0 0.0
    %1018 = vmatprep.subr.mxu0 0.0
    %1019 = vmatpush1.msra.mxu0 0.0
    %1020 = vmatprep.subr.mxu0 0.0
    %1021 = vmatpush1.msra.mxu0 0.0
    %1022 = vmatprep.subr.mxu0 0.0
    %1023 = vmatpush1.msra.mxu0 0.0
    %1024 = vmatprep.subr.mxu0 0.0
    %1025 = vmatpush1.msra.mxu0 0.0
    %1026 = vmatprep.subr.mxu0 0.0
    %1027 = vmatpush1.msra.mxu0 0.0
    %1028 = vmatprep.subr.mxu0 0.0
    %1029 = vmatpush1.msra.mxu0 0.0
    %1030 = vmatprep.subr.mxu0 0.0
    %1031 = vmatpush1.msra.mxu0 0.0
    %1032 = vmatprep.subr.mxu0 0.0
    %1033 = vmatpush1.msra.mxu0 0.0
    %1034 = vmatprep.subr.mxu0 0.0
    %1035 = vmatpush1.msra.mxu0 0.0
    %1036 = vmatprep.subr.mxu0 0.0
    %1037 = vmatpush1.msra.mxu0 0.0
    %1038 = vmatprep.subr.mxu0 0.0
    %1039 = vmatpush1.msra.mxu0 0.0
    %1040 = vmatprep.subr.mxu0 0.0
    %1041 = vmatpush1.msra.mxu0 0.0
    %1042 = vmatprep.mubr.f32.mxu0 0.0
    %1043 = vmatmul.mubr.f32.gmra.mrb[0].mxu0 %v897
    %v1044 = vpop.f32.mrb[0].mxu0
    %v1045 = vadd.f32 0.0, %v1044
    %v1046 = vpop.f32.mrb[0].mxu0
    %v1047 = vadd.f32 0.0, %v1046
    %1048 = vdwg.mxu0
    %v1049 = vsel %vm874, %v974, 0.0
    %v1050 = vsel %vm874, %v976, 0.0
    %v1051 = vadd.f32 %v1049, %v1050
    %v1052 = vsel %vm874, %v1045, 0.0
    %v1053 = vadd.f32 %v1051, %v1052
    %v1054 = vsel %vm874, %v1047, 0.0
    %v1055 = vadd.f32 %v1053, %v1054
    %1056 = vadd.xlane.f32.xlu0 %v1055
    %v1057 = vpop.xlane.xlu0 %1056
    %v1058 = vrcp.pop 512.0
    %v1059 = vmul.f32 %v1057, %v1058
    %v1060 = vsub.f32 %v974, %v1059
    %v1061 = vsub.f32 %v976, %v1059
    %v1062 = vsub.f32 %v1045, %v1059
    %v1063 = vsub.f32 %v1047, %v1059
    %v1064 = vmul.f32 %v1060, %v1060
    %v1065 = vmul.f32 %v1061, %v1061
    %v1066 = vmul.f32 %v1062, %v1062
    %v1067 = vmul.f32 %v1063, %v1063
    %v1068 = vsel %vm874, %v1064, 0.0
    %v1069 = vsel %vm874, %v1065, 0.0
    %v1070 = vadd.f32 %v1068, %v1069
    %v1071 = vsel %vm874, %v1066, 0.0
    %v1072 = vadd.f32 %v1070, %v1071
    %v1073 = vsel %vm874, %v1067, 0.0
    %v1074 = vadd.f32 %v1072, %v1073
    %1075 = vadd.xlane.f32.xlu0 %v1074
    %v1076 = vpop.xlane.xlu0 %1075
    %v1077 = vmul.f32 %v1076, %v1058
    %v1078 = vadd.f32 %v1077, 1e-05
    %v1079 = vrsqrt.pop %v1078
    %v1080 = vmul.f32 %v1060, %v1079
    %v1081 = vmul.f32 %v1061, %v1079
    %v1082 = vmul.f32 %v1062, %v1079
    %v1083 = vmul.f32 %v1063, %v1079
    %v1084 = vld [vmem:[%s19] sm:$0xf]
    %1086 = vset.pattern.permute.xlu0 0
    %1087 = vperm.xlu0 %1086, %v1084
    %v1088 = vpop.permute.xlu0 %1087
    %v1090 = vmul.f32 %v1080, %v1088
    %v1091 = vmul.f32 %v1081, %v1088
    %v1092 = vmul.f32 %v1082, %v1088
    %v1093 = vmul.f32 %v1083, %v1088
    %v1094 = vld [vmem:[%s21] sm:$0xf]
    %1096 = vset.pattern.permute.xlu0 0
    %1097 = vperm.xlu0 %1096, %v1094
    %v1098 = vpop.permute.xlu0 %1097
    %v1100 = vadd.f32 %v1090, %v1098
    %v1101 = vadd.f32 %v1091, %v1098
    %v1102 = vadd.f32 %v1092, %v1098
    %v1103 = vadd.f32 %v1093, %v1098
    %1108 = vrot.lane.b32.xlu0 %v1100, 17
    %v1109 = vpop.permute.xlu0 %1108
    %1110 = vrot.lane.b32.xlu0 %v1101, 17
    %v1111 = vpop.permute.xlu0 %1110
    %1112 = vrot.lane.b32.xlu0 %v1102, 17
    %v1113 = vpop.permute.xlu0 %1112
    %1114 = vrot.lane.b32.xlu0 %v1103, 17
    %v1115 = vpop.permute.xlu0 %1114
    %v1116 = vsel %vm272, %v1109, %v1111
    %v1117 = vsel %vm272, %v1111, %v1113
    %v1118 = vsel %vm272, %v1113, %v1115
    %v1124 = vsel %vm272, 0.0, %v1109
    %v1125 = vsel %vm272, %v1115, 0.0
    %v1126 = vmul.f32 %v1124, %v288
    %v1127 = vmul.f32 %v1116, %v292
    %v1128 = vmul.f32 %v1117, %v296
    %v1129 = vmul.f32 %v1118, %v300
    %v1130 = vmul.f32 %v1124, %v329
    %v1131 = vmul.f32 %v1116, %v337
    %v1132 = vmul.f32 %v1117, %v338
    %v1133 = vmul.f32 %v1118, %v339
    %v1134 = vmul.f32 %v1125, %v335
    %1140 = vrot.lane.b32.xlu0 %v1130, 127
    %v1141 = vpop.permute.xlu0 %1140
    %1142 = vrot.lane.b32.xlu0 %v1131, 127
    %v1143 = vpop.permute.xlu0 %1142
    %1144 = vrot.lane.b32.xlu0 %v1132, 127
    %v1145 = vpop.permute.xlu0 %1144
    %1146 = vrot.lane.b32.xlu0 %v1133, 127
    %v1147 = vpop.permute.xlu0 %1146
    %1148 = vrot.lane.b32.xlu0 %v1134, 127
    %v1149 = vpop.permute.xlu0 %1148
    %v1150 = vsel %vm656, %v1141, %v1143
    %v1151 = vsel %vm656, %v1143, %v1145
    %v1152 = vsel %vm656, %v1145, %v1147
    %v1153 = vsel %vm656, %v1147, %v1149
    %v1158 = vadd.f32 %v1126, %v1150
    %v1159 = vadd.f32 %v1127, %v1151
    %v1160 = vadd.f32 %v1128, %v1152
    %v1161 = vadd.f32 %v1129, %v1153
    %v1162 = vmul.f32 %v1124, %v370
    %v1163 = vmul.f32 %v1116, %v378
    %v1164 = vmul.f32 %v1117, %v379
    %v1165 = vmul.f32 %v1118, %v380
    %v1166 = vmul.f32 %v1125, %v376
    %1172 = vrot.lane.b32.xlu0 %v1162, 126
    %v1173 = vpop.permute.xlu0 %1172
    %1174 = vrot.lane.b32.xlu0 %v1163, 126
    %v1175 = vpop.permute.xlu0 %1174
    %1176 = vrot.lane.b32.xlu0 %v1164, 126
    %v1177 = vpop.permute.xlu0 %1176
    %1178 = vrot.lane.b32.xlu0 %v1165, 126
    %v1179 = vpop.permute.xlu0 %1178
    %1180 = vrot.lane.b32.xlu0 %v1166, 126
    %v1181 = vpop.permute.xlu0 %1180
    %v1182 = vsel %vm685, %v1173, %v1175
    %v1183 = vsel %vm685, %v1175, %v1177
    %v1184 = vsel %vm685, %v1177, %v1179
    %v1185 = vsel %vm685, %v1179, %v1181
    %v1190 = vadd.f32 %v1158, %v1182
    %v1191 = vadd.f32 %v1159, %v1183
    %v1192 = vadd.f32 %v1160, %v1184
    %v1193 = vadd.f32 %v1161, %v1185
    %v1194 = vmul.f32 %v1124, %v411
    %v1195 = vmul.f32 %v1116, %v419
    %v1196 = vmul.f32 %v1117, %v420
    %v1197 = vmul.f32 %v1118, %v421
    %v1198 = vmul.f32 %v1125, %v417
    %1204 = vrot.lane.b32.xlu0 %v1194, 112
    %v1205 = vpop.permute.xlu0 %1204
    %1206 = vrot.lane.b32.xlu0 %v1195, 112
    %v1207 = vpop.permute.xlu0 %1206
    %1208 = vrot.lane.b32.xlu0 %v1196, 112
    %v1209 = vpop.permute.xlu0 %1208
    %1210 = vrot.lane.b32.xlu0 %v1197, 112
    %v1211 = vpop.permute.xlu0 %1210
    %1212 = vrot.lane.b32.xlu0 %v1198, 112
    %v1213 = vpop.permute.xlu0 %1212
    %v1214 = vsel %vm714, %v1205, %v1207
    %v1215 = vsel %vm714, %v1207, %v1209
    %v1216 = vsel %vm714, %v1209, %v1211
    %v1217 = vsel %vm714, %v1211, %v1213
    %v1222 = vadd.f32 %v1190, %v1214
    %v1223 = vadd.f32 %v1191, %v1215
    %v1224 = vadd.f32 %v1192, %v1216
    %v1225 = vadd.f32 %v1193, %v1217
    %v1226 = vmul.f32 %v1124, %v452
    %v1227 = vmul.f32 %v1116, %v459
    %v1228 = vmul.f32 %v1117, %v460
    %v1229 = vmul.f32 %v1118, %v461
    %v1230 = vmul.f32 %v1125, %v458
    %1236 = vrot.lane.b32.xlu0 %v1226, 111
    %v1237 = vpop.permute.xlu0 %1236
    %1238 = vrot.lane.b32.xlu0 %v1227, 111
    %v1239 = vpop.permute.xlu0 %1238
    %1240 = vrot.lane.b32.xlu0 %v1228, 111
    %v1241 = vpop.permute.xlu0 %1240
    %1242 = vrot.lane.b32.xlu0 %v1229, 111
    %v1243 = vpop.permute.xlu0 %1242
    %1244 = vrot.lane.b32.xlu0 %v1230, 111
    %v1245 = vpop.permute.xlu0 %1244
    %v1246 = vsel %vm743, %v1237, %v1239
    %v1247 = vsel %vm743, %v1239, %v1241
    %v1248 = vsel %vm743, %v1241, %v1243
    %v1249 = vsel %vm743, %v1243, %v1245
    %v1254 = vadd.f32 %v1222, %v1246
    %v1255 = vadd.f32 %v1223, %v1247
    %v1256 = vadd.f32 %v1224, %v1248
    %v1257 = vadd.f32 %v1225, %v1249
    %v1258 = vmul.f32 %v1124, %v492
    %v1259 = vmul.f32 %v1116, %v500
    %v1260 = vmul.f32 %v1117, %v501
    %v1261 = vmul.f32 %v1118, %v502
    %v1262 = vmul.f32 %v1125, %v498
    %1268 = vrot.lane.b32.xlu0 %v1258, 110
    %v1269 = vpop.permute.xlu0 %1268
    %1270 = vrot.lane.b32.xlu0 %v1259, 110
    %v1271 = vpop.permute.xlu0 %1270
    %1272 = vrot.lane.b32.xlu0 %v1260, 110
    %v1273 = vpop.permute.xlu0 %1272
    %1274 = vrot.lane.b32.xlu0 %v1261, 110
    %v1275 = vpop.permute.xlu0 %1274
    %1276 = vrot.lane.b32.xlu0 %v1262, 110
    %v1277 = vpop.permute.xlu0 %1276
    %v1278 = vsel %vm772, %v1269, %v1271
    %v1279 = vsel %vm772, %v1271, %v1273
    %v1280 = vsel %vm772, %v1273, %v1275
    %v1281 = vsel %vm772, %v1275, %v1277
    %v1286 = vadd.f32 %v1254, %v1278
    %v1287 = vadd.f32 %v1255, %v1279
    %v1288 = vadd.f32 %v1256, %v1280
    %v1289 = vadd.f32 %v1257, %v1281
    %v1290 = vmul.f32 %v1124, %v533
    %v1291 = vmul.f32 %v1116, %v541
    %v1292 = vmul.f32 %v1117, %v542
    %v1293 = vmul.f32 %v1118, %v543
    %v1294 = vmul.f32 %v1125, %v539
    %1300 = vrot.lane.b32.xlu0 %v1290, 96
    %v1301 = vpop.permute.xlu0 %1300
    %1302 = vrot.lane.b32.xlu0 %v1291, 96
    %v1303 = vpop.permute.xlu0 %1302
    %1304 = vrot.lane.b32.xlu0 %v1292, 96
    %v1305 = vpop.permute.xlu0 %1304
    %1306 = vrot.lane.b32.xlu0 %v1293, 96
    %v1307 = vpop.permute.xlu0 %1306
    %1308 = vrot.lane.b32.xlu0 %v1294, 96
    %v1309 = vpop.permute.xlu0 %1308
    %v1310 = vsel %vm801, %v1301, %v1303
    %v1311 = vsel %vm801, %v1303, %v1305
    %v1312 = vsel %vm801, %v1305, %v1307
    %v1313 = vsel %vm801, %v1307, %v1309
    %v1318 = vadd.f32 %v1286, %v1310
    %v1319 = vadd.f32 %v1287, %v1311
    %v1320 = vadd.f32 %v1288, %v1312
    %v1321 = vadd.f32 %v1289, %v1313
    %v1322 = vmul.f32 %v1124, %v574
    %v1323 = vmul.f32 %v1116, %v582
    %v1324 = vmul.f32 %v1117, %v583
    %v1325 = vmul.f32 %v1118, %v584
    %v1326 = vmul.f32 %v1125, %v580
    %1332 = vrot.lane.b32.xlu0 %v1322, 95
    %v1333 = vpop.permute.xlu0 %1332
    %1334 = vrot.lane.b32.xlu0 %v1323, 95
    %v1335 = vpop.permute.xlu0 %1334
    %1336 = vrot.lane.b32.xlu0 %v1324, 95
    %v1337 = vpop.permute.xlu0 %1336
    %1338 = vrot.lane.b32.xlu0 %v1325, 95
    %v1339 = vpop.permute.xlu0 %1338
    %1340 = vrot.lane.b32.xlu0 %v1326, 95
    %v1341 = vpop.permute.xlu0 %1340
    %v1342 = vsel %vm830, %v1333, %v1335
    %v1343 = vsel %vm830, %v1335, %v1337
    %v1344 = vsel %vm830, %v1337, %v1339
    %v1345 = vsel %vm830, %v1339, %v1341
    %v1350 = vadd.f32 %v1318, %v1342
    %v1351 = vadd.f32 %v1319, %v1343
    %v1352 = vadd.f32 %v1320, %v1344
    %v1353 = vadd.f32 %v1321, %v1345
    %v1354 = vmul.f32 %v1124, %v615
    %v1355 = vmul.f32 %v1116, %v623
    %v1356 = vmul.f32 %v1117, %v624
    %v1357 = vmul.f32 %v1118, %v625
    %v1358 = vmul.f32 %v1125, %v621
    %1364 = vrot.lane.b32.xlu0 %v1354, 94
    %v1365 = vpop.permute.xlu0 %1364
    %1366 = vrot.lane.b32.xlu0 %v1355, 94
    %v1367 = vpop.permute.xlu0 %1366
    %1368 = vrot.lane.b32.xlu0 %v1356, 94
    %v1369 = vpop.permute.xlu0 %1368
    %1370 = vrot.lane.b32.xlu0 %v1357, 94
    %v1371 = vpop.permute.xlu0 %1370
    %1372 = vrot.lane.b32.xlu0 %v1358, 94
    %v1373 = vpop.permute.xlu0 %1372
    %v1374 = vsel %vm854, %v1365, %v1367
    %v1375 = vsel %vm854, %v1367, %v1369
    %v1376 = vsel %vm854, %v1369, %v1371
    %v1377 = vsel %vm854, %v1371, %v1373
    %v1382 = vadd.f32 %v1350, %v1374
    %v1383 = vadd.f32 %v1351, %v1375
    %v1384 = vadd.f32 %v1352, %v1376
    %v1385 = vadd.f32 %v1353, %v1377
    %v1386 = vrot.slane %v1130, 4
    %v1387 = vrot.slane %v1131, 4
    %v1388 = vrot.slane %v1132, 4
    %v1389 = vrot.slane %v1133, 4
    %v1390 = vrot.slane %v1134, 4
    %1391 = vrot.lane.b32.xlu0 %v1386, 127
    %v1392 = vpop.permute.xlu0 %1391
    %1393 = vrot.lane.b32.xlu0 %v1387, 127
    %v1394 = vpop.permute.xlu0 %1393
    %1395 = vrot.lane.b32.xlu0 %v1388, 127
    %v1396 = vpop.permute.xlu0 %1395
    %1397 = vrot.lane.b32.xlu0 %v1389, 127
    %v1398 = vpop.permute.xlu0 %1397
    %1399 = vrot.lane.b32.xlu0 %v1390, 127
    %v1400 = vpop.permute.xlu0 %1399
    %v1401 = vsel %vm656, %v1392, %v1394
    %v1402 = vsel %vm656, %v1394, %v1396
    %v1403 = vsel %vm656, %v1396, %v1398
    %v1404 = vsel %vm656, %v1398, %v1400
    %v1409 = vrot.slane %v1194, 4
    %v1410 = vrot.slane %v1195, 4
    %v1411 = vrot.slane %v1196, 4
    %v1412 = vrot.slane %v1197, 4
    %v1413 = vrot.slane %v1198, 4
    %1414 = vrot.lane.b32.xlu0 %v1409, 112
    %v1415 = vpop.permute.xlu0 %1414
    %1416 = vrot.lane.b32.xlu0 %v1410, 112
    %v1417 = vpop.permute.xlu0 %1416
    %1418 = vrot.lane.b32.xlu0 %v1411, 112
    %v1419 = vpop.permute.xlu0 %1418
    %1420 = vrot.lane.b32.xlu0 %v1412, 112
    %v1421 = vpop.permute.xlu0 %1420
    %1422 = vrot.lane.b32.xlu0 %v1413, 112
    %v1423 = vpop.permute.xlu0 %1422
    %v1424 = vsel %vm714, %v1415, %v1417
    %v1425 = vsel %vm714, %v1417, %v1419
    %v1426 = vsel %vm714, %v1419, %v1421
    %v1427 = vsel %vm714, %v1421, %v1423
    %v1432 = vrot.slane %v1258, 4
    %v1433 = vrot.slane %v1259, 4
    %v1434 = vrot.slane %v1260, 4
    %v1435 = vrot.slane %v1261, 4
    %v1436 = vrot.slane %v1262, 4
    %1437 = vrot.lane.b32.xlu0 %v1432, 110
    %v1438 = vpop.permute.xlu0 %1437
    %1439 = vrot.lane.b32.xlu0 %v1433, 110
    %v1440 = vpop.permute.xlu0 %1439
    %1441 = vrot.lane.b32.xlu0 %v1434, 110
    %v1442 = vpop.permute.xlu0 %1441
    %1443 = vrot.lane.b32.xlu0 %v1435, 110
    %v1444 = vpop.permute.xlu0 %1443
    %1445 = vrot.lane.b32.xlu0 %v1436, 110
    %v1446 = vpop.permute.xlu0 %1445
    %v1447 = vsel %vm772, %v1438, %v1440
    %v1448 = vsel %vm772, %v1440, %v1442
    %v1449 = vsel %vm772, %v1442, %v1444
    %v1450 = vsel %vm772, %v1444, %v1446
    %v1455 = vrot.slane %v1322, 4
    %v1456 = vrot.slane %v1323, 4
    %v1457 = vrot.slane %v1324, 4
    %v1458 = vrot.slane %v1325, 4
    %v1459 = vrot.slane %v1326, 4
    %1460 = vrot.lane.b32.xlu0 %v1455, 95
    %v1461 = vpop.permute.xlu0 %1460
    %1462 = vrot.lane.b32.xlu0 %v1456, 95
    %v1463 = vpop.permute.xlu0 %1462
    %1464 = vrot.lane.b32.xlu0 %v1457, 95
    %v1465 = vpop.permute.xlu0 %1464
    %1466 = vrot.lane.b32.xlu0 %v1458, 95
    %v1467 = vpop.permute.xlu0 %1466
    %1468 = vrot.lane.b32.xlu0 %v1459, 95
    %v1469 = vpop.permute.xlu0 %1468
    %v1470 = vsel %vm830, %v1461, %v1463
    %v1471 = vsel %vm830, %v1463, %v1465
    %v1472 = vsel %vm830, %v1465, %v1467
    %v1473 = vsel %vm830, %v1467, %v1469
    %v1478 = vsel %vm874, %v1126, %v1401
    %v1479 = vsel %vm874, %v1127, %v1402
    %v1480 = vsel %vm874, %v1128, %v1403
    %v1481 = vsel %vm874, %v1129, %v1404
    %v1482 = vsel %vm874, %v1182, %v1424
    %v1483 = vsel %vm874, %v1183, %v1425
    %v1484 = vsel %vm874, %v1184, %v1426
    %v1485 = vsel %vm874, %v1185, %v1427
    %v1486 = vsel %vm874, %v1246, %v1447
    %v1487 = vsel %vm874, %v1247, %v1448
    %v1488 = vsel %vm874, %v1248, %v1449
    %v1489 = vsel %vm874, %v1249, %v1450
    %v1490 = vsel %vm874, %v1310, %v1470
    %v1491 = vsel %vm874, %v1311, %v1471
    %v1492 = vsel %vm874, %v1312, %v1472
    %v1493 = vsel %vm874, %v1313, %v1473
    %v1494 = vld [vmem:[%s7] sm:$0xf]
    %v1496 = vlaneseq
    %v1497 = vshrl.u32 %v1496, 7
    %v1498 = vsub.s32 0, %v1497
    %v1499 = vrot.slane %v1494, %v1498
    %v1500 = vlaneseq
    %v1501 = vshrl.u32 %v1500, 7
    %v1502 = vsub.s32 1, %v1501
    %v1503 = vrot.slane %v1494, %v1502
    %v1504 = vlaneseq
    %v1505 = vshrl.u32 %v1504, 7
    %v1506 = vsub.s32 2, %v1505
    %v1507 = vrot.slane %v1494, %v1506
    %v1508 = vlaneseq
    %v1509 = vshrl.u32 %v1508, 7
    %v1510 = vsub.s32 3, %v1509
    %v1511 = vrot.slane %v1494, %v1510
    %v1516 = vmul.f32 %v1382, %v1499
    %v1517 = vmul.f32 %v1383, %v1503
    %v1518 = vmul.f32 %v1384, %v1507
    %v1519 = vmul.f32 %v1385, %v1511
    %v1520 = vld [vmem:[%s23] sm:$0xff]
    %v1521 = vld [vmem:[%s23 + $0x8] sm:$0xff]
    %v1522 = vld [vmem:[%s23 + $0x10] sm:$0xff]
    %v1523 = vmax.f32 %v1478, 0.0
    %v1524 = vmax.f32 %v1479, 0.0
    %v1525 = vmax.f32 %v1480, 0.0
    %v1526 = vmax.f32 %v1481, 0.0
    %v1527 = vmax.f32 %v1482, 0.0
    %v1528 = vmax.f32 %v1483, 0.0
    %v1529 = vmax.f32 %v1484, 0.0
    %v1530 = vmax.f32 %v1485, 0.0
    %v1531 = vmax.f32 %v1486, 0.0
    %v1532 = vmax.f32 %v1487, 0.0
    %v1533 = vmax.f32 %v1488, 0.0
    %v1534 = vmax.f32 %v1489, 0.0
    %v1535 = vmax.f32 %v1490, 0.0
    %v1536 = vmax.f32 %v1491, 0.0
    %v1537 = vmax.f32 %v1492, 0.0
    %v1538 = vmax.f32 %v1493, 0.0
    %v1539 = vmax.f32 %v1374, 0.0
    %v1540 = vmax.f32 %v1375, 0.0
    %v1541 = vmax.f32 %v1376, 0.0
    %v1542 = vmax.f32 %v1377, 0.0
    %vm1543 = vcmask 293888
    %v1545 = vsel %vm1543, %v1520, 0
    %v1548 = vsel %vm1543, %v1521, 0
    %v1551 = vsel %vm1543, %v1522, 0
    %v1554 = vsel %vm874, %v1539, 0
    %v1557 = vsel %vm874, %v1540, 0
    %v1560 = vsel %vm874, %v1541, 0
    %v1563 = vsel %vm874, %v1542, 0
    %1565 = vmatprep.subr.mxu0 %v1524
    %1566 = vmatpush1.msra.mxu0 %v1523
    %1567 = vmatprep.subr.mxu0 %v1528
    %1568 = vmatpush1.msra.mxu0 %v1527
    %1569 = vmatprep.subr.mxu0 %v1532
    %1570 = vmatpush1.msra.mxu0 %v1531
    %1571 = vmatprep.subr.mxu0 %v1536
    %1572 = vmatpush1.msra.mxu0 %v1535
    %1573 = vmatprep.subr.mxu0 %v1557
    %1574 = vmatpush1.msra.mxu0 %v1554
    %1575 = vmatprep.subr.mxu0 0.0
    %1576 = vmatpush1.msra.mxu0 0.0
    %1577 = vmatprep.subr.mxu0 0.0
    %1578 = vmatpush1.msra.mxu0 0.0
    %1579 = vmatprep.subr.mxu0 0.0
    %1580 = vmatpush1.msra.mxu0 0.0
    %1581 = vmatprep.subr.mxu0 0.0
    %1582 = vmatpush1.msra.mxu0 0.0
    %1583 = vmatprep.subr.mxu0 0.0
    %1584 = vmatpush1.msra.mxu0 0.0
    %1585 = vmatprep.subr.mxu0 0.0
    %1586 = vmatpush1.msra.mxu0 0.0
    %1587 = vmatprep.subr.mxu0 0.0
    %1588 = vmatpush1.msra.mxu0 0.0
    %1589 = vmatprep.subr.mxu0 0.0
    %1590 = vmatpush1.msra.mxu0 0.0
    %1591 = vmatprep.subr.mxu0 0.0
    %1592 = vmatpush1.msra.mxu0 0.0
    %1593 = vmatprep.subr.mxu0 0.0
    %1594 = vmatpush1.msra.mxu0 0.0
    %1595 = vmatprep.subr.mxu0 0.0
    %1596 = vmatpush1.msra.mxu0 0.0
    %1597 = vmatprep.subr.mxu0 0.0
    %1598 = vmatpush1.msra.mxu0 0.0
    %1599 = vmatprep.subr.mxu0 0.0
    %1600 = vmatpush1.msra.mxu0 0.0
    %1601 = vmatprep.subr.mxu0 0.0
    %1602 = vmatpush1.msra.mxu0 0.0
    %1603 = vmatprep.subr.mxu0 0.0
    %1604 = vmatpush1.msra.mxu0 0.0
    %1605 = vmatprep.subr.mxu0 0.0
    %1606 = vmatpush1.msra.mxu0 0.0
    %1607 = vmatprep.subr.mxu0 0.0
    %1608 = vmatpush1.msra.mxu0 0.0
    %1609 = vmatprep.subr.mxu0 0.0
    %1610 = vmatpush1.msra.mxu0 0.0
    %1611 = vmatprep.subr.mxu0 0.0
    %1612 = vmatpush1.msra.mxu0 0.0
    %1613 = vmatprep.subr.mxu0 0.0
    %1614 = vmatpush1.msra.mxu0 0.0
    %1615 = vmatprep.subr.mxu0 0.0
    %1616 = vmatpush1.msra.mxu0 0.0
    %1617 = vmatprep.subr.mxu0 0.0
    %1618 = vmatpush1.msra.mxu0 0.0
    %1619 = vmatprep.subr.mxu0 0.0
    %1620 = vmatpush1.msra.mxu0 0.0
    %1621 = vmatprep.subr.mxu0 0.0
    %1622 = vmatpush1.msra.mxu0 0.0
    %1623 = vmatprep.subr.mxu0 0.0
    %1624 = vmatpush1.msra.mxu0 0.0
    %1625 = vmatprep.subr.mxu0 0.0
    %1626 = vmatpush1.msra.mxu0 0.0
    %1627 = vmatprep.subr.mxu0 0.0
    %1628 = vmatpush1.msra.mxu0 0.0
    %1629 = vmatprep.mubr.f32.mxu0 0.0
    %1630 = vmatmul.mubr.f32.gmra.mrb[0].mxu0 %v1545
    %v1631 = vpop.f32.mrb[0].mxu0
    %v1632 = vadd.f32 0.0, %v1631
    %v1633 = vpop.f32.mrb[0].mxu0
    %v1634 = vadd.f32 0.0, %v1633
    %1635 = vmatprep.mubr.f32.mxu0 0.0
    %1636 = vmatmul.mubr.f32.gmra.mrb[0].mxu0 %v1548
    %v1637 = vpop.f32.mrb[0].mxu0
    %v1638 = vadd.f32 0.0, %v1637
    %v1639 = vpop.f32.mrb[0].mxu0
    %v1640 = vadd.f32 0.0, %v1639
    %1641 = vmatprep.mubr.f32.mxu0 0.0
    %1642 = vmatmul.mubr.f32.gmra.mrb[0].mxu0 %v1551
    %v1643 = vpop.f32.mrb[0].mxu0
    %v1644 = vadd.f32 0.0, %v1643
    %v1645 = vpop.f32.mrb[0].mxu0
    %v1646 = vadd.f32 0.0, %v1645
    %1647 = vdwg.mxu0
    %1648 = vmatprep.subr.mxu0 %v1526
    %1649 = vmatpush1.msra.mxu0 %v1525
    %1650 = vmatprep.subr.mxu0 %v1530
    %1651 = vmatpush1.msra.mxu0 %v1529
    %1652 = vmatprep.subr.mxu0 %v1534
    %1653 = vmatpush1.msra.mxu0 %v1533
    %1654 = vmatprep.subr.mxu0 %v1538
    %1655 = vmatpush1.msra.mxu0 %v1537
    %1656 = vmatprep.subr.mxu0 %v1563
    %1657 = vmatpush1.msra.mxu0 %v1560
    %1658 = vmatprep.subr.mxu0 0.0
    %1659 = vmatpush1.msra.mxu0 0.0
    %1660 = vmatprep.subr.mxu0 0.0
    %1661 = vmatpush1.msra.mxu0 0.0
    %1662 = vmatprep.subr.mxu0 0.0
    %1663 = vmatpush1.msra.mxu0 0.0
    %1664 = vmatprep.subr.mxu0 0.0
    %1665 = vmatpush1.msra.mxu0 0.0
    %1666 = vmatprep.subr.mxu0 0.0
    %1667 = vmatpush1.msra.mxu0 0.0
    %1668 = vmatprep.subr.mxu0 0.0
    %1669 = vmatpush1.msra.mxu0 0.0
    %1670 = vmatprep.subr.mxu0 0.0
    %1671 = vmatpush1.msra.mxu0 0.0
    %1672 = vmatprep.subr.mxu0 0.0
    %1673 = vmatpush1.msra.mxu0 0.0
    %1674 = vmatprep.subr.mxu0 0.0
    %1675 = vmatpush1.msra.mxu0 0.0
    %1676 = vmatprep.subr.mxu0 0.0
    %1677 = vmatpush1.msra.mxu0 0.0
    %1678 = vmatprep.subr.mxu0 0.0
    %1679 = vmatpush1.msra.mxu0 0.0
    %1680 = vmatprep.subr.mxu0 0.0
    %1681 = vmatpush1.msra.mxu0 0.0
    %1682 = vmatprep.subr.mxu0 0.0
    %1683 = vmatpush1.msra.mxu0 0.0
    %1684 = vmatprep.subr.mxu0 0.0
    %1685 = vmatpush1.msra.mxu0 0.0
    %1686 = vmatprep.subr.mxu0 0.0
    %1687 = vmatpush1.msra.mxu0 0.0
    %1688 = vmatprep.subr.mxu0 0.0
    %1689 = vmatpush1.msra.mxu0 0.0
    %1690 = vmatprep.subr.mxu0 0.0
    %1691 = vmatpush1.msra.mxu0 0.0
    %1692 = vmatprep.subr.mxu0 0.0
    %1693 = vmatpush1.msra.mxu0 0.0
    %1694 = vmatprep.subr.mxu0 0.0
    %1695 = vmatpush1.msra.mxu0 0.0
    %1696 = vmatprep.subr.mxu0 0.0
    %1697 = vmatpush1.msra.mxu0 0.0
    %1698 = vmatprep.subr.mxu0 0.0
    %1699 = vmatpush1.msra.mxu0 0.0
    %1700 = vmatprep.subr.mxu0 0.0
    %1701 = vmatpush1.msra.mxu0 0.0
    %1702 = vmatprep.subr.mxu0 0.0
    %1703 = vmatpush1.msra.mxu0 0.0
    %1704 = vmatprep.subr.mxu0 0.0
    %1705 = vmatpush1.msra.mxu0 0.0
    %1706 = vmatprep.subr.mxu0 0.0
    %1707 = vmatpush1.msra.mxu0 0.0
    %1708 = vmatprep.subr.mxu0 0.0
    %1709 = vmatpush1.msra.mxu0 0.0
    %1710 = vmatprep.subr.mxu0 0.0
    %1711 = vmatpush1.msra.mxu0 0.0
    %1712 = vmatprep.mubr.f32.mxu0 0.0
    %1713 = vmatmul.mubr.f32.gmra.mrb[0].mxu0 %v1545
    %v1714 = vpop.f32.mrb[0].mxu0
    %v1715 = vadd.f32 0.0, %v1714
    %v1716 = vpop.f32.mrb[0].mxu0
    %v1717 = vadd.f32 0.0, %v1716
    %1718 = vmatprep.mubr.f32.mxu0 0.0
    %1719 = vmatmul.mubr.f32.gmra.mrb[0].mxu0 %v1548
    %v1720 = vpop.f32.mrb[0].mxu0
    %v1721 = vadd.f32 0.0, %v1720
    %v1722 = vpop.f32.mrb[0].mxu0
    %v1723 = vadd.f32 0.0, %v1722
    %1724 = vmatprep.mubr.f32.mxu0 0.0
    %1725 = vmatmul.mubr.f32.gmra.mrb[0].mxu0 %v1551
    %v1726 = vpop.f32.mrb[0].mxu0
    %v1727 = vadd.f32 0.0, %v1726
    %v1728 = vpop.f32.mrb[0].mxu0
    %v1729 = vadd.f32 0.0, %v1728
    %1730 = vdwg.mxu0
    %v1731 = vadd.f32 %v1632, %v1634
    %v1732 = vadd.f32 %v1731, %v1715
    %v1733 = vadd.f32 %v1732, %v1717
    %1734 = vadd.xlane.f32.xlu0 %v1733
    %v1735 = vpop.xlane.xlu0 %1734
    %v1736 = vadd.f32 %v1638, %v1640
    %v1737 = vadd.f32 %v1736, %v1721
    %v1738 = vadd.f32 %v1737, %v1723
    %1739 = vadd.xlane.f32.xlu0 %v1738
    %v1740 = vpop.xlane.xlu0 %1739
    %v1741 = vadd.f32 %v1644, %v1646
    %v1742 = vadd.f32 %v1741, %v1727
    %v1743 = vadd.f32 %v1742, %v1729
    %1744 = vadd.xlane.f32.xlu0 %v1743
    %v1745 = vpop.xlane.xlu0 %1744
    %v1746 = vmul.f32 %v1735, %v1058
    %v1747 = vmul.f32 %v1740, %v1058
    %v1748 = vmul.f32 %v1745, %v1058
    %v1749 = vsub.f32 %v1632, %v1746
    %v1750 = vsub.f32 %v1634, %v1746
    %v1751 = vsub.f32 %v1715, %v1746
    %v1752 = vsub.f32 %v1717, %v1746
    %v1753 = vsub.f32 %v1638, %v1747
    %v1754 = vsub.f32 %v1640, %v1747
    %v1755 = vsub.f32 %v1721, %v1747
    %v1756 = vsub.f32 %v1723, %v1747
    %v1757 = vsub.f32 %v1644, %v1748
    %v1758 = vsub.f32 %v1646, %v1748
    %v1759 = vsub.f32 %v1727, %v1748
    %v1760 = vsub.f32 %v1729, %v1748
    %v1761 = vmul.f32 %v1749, %v1749
    %v1762 = vmul.f32 %v1750, %v1750
    %v1763 = vmul.f32 %v1751, %v1751
    %v1764 = vmul.f32 %v1752, %v1752
    %v1765 = vmul.f32 %v1753, %v1753
    %v1766 = vmul.f32 %v1754, %v1754
    %v1767 = vmul.f32 %v1755, %v1755
    %v1768 = vmul.f32 %v1756, %v1756
    %v1769 = vmul.f32 %v1757, %v1757
    %v1770 = vmul.f32 %v1758, %v1758
    %v1771 = vmul.f32 %v1759, %v1759
    %v1772 = vmul.f32 %v1760, %v1760
    %v1773 = vadd.f32 %v1761, %v1762
    %v1774 = vadd.f32 %v1773, %v1763
    %v1775 = vadd.f32 %v1774, %v1764
    %1776 = vadd.xlane.f32.xlu0 %v1775
    %v1777 = vpop.xlane.xlu0 %1776
    %v1778 = vadd.f32 %v1765, %v1766
    %v1779 = vadd.f32 %v1778, %v1767
    %v1780 = vadd.f32 %v1779, %v1768
    %1781 = vadd.xlane.f32.xlu0 %v1780
    %v1782 = vpop.xlane.xlu0 %1781
    %v1783 = vadd.f32 %v1769, %v1770
    %v1784 = vadd.f32 %v1783, %v1771
    %v1785 = vadd.f32 %v1784, %v1772
    %1786 = vadd.xlane.f32.xlu0 %v1785
    %v1787 = vpop.xlane.xlu0 %1786
    %v1788 = vmul.f32 %v1777, %v1058
    %v1789 = vmul.f32 %v1782, %v1058
    %v1790 = vmul.f32 %v1787, %v1058
    %v1791 = vadd.f32 %v1788, 1e-05
    %v1792 = vadd.f32 %v1789, 1e-05
    %v1793 = vadd.f32 %v1790, 1e-05
    %v1794 = vrsqrt.pop %v1791
    %v1795 = vrsqrt.pop %v1792
    %v1796 = vrsqrt.pop %v1793
    %v1797 = vmul.f32 %v1749, %v1794
    %v1798 = vmul.f32 %v1750, %v1794
    %v1799 = vmul.f32 %v1751, %v1794
    %v1800 = vmul.f32 %v1752, %v1794
    %v1801 = vmul.f32 %v1753, %v1795
    %v1802 = vmul.f32 %v1754, %v1795
    %v1803 = vmul.f32 %v1755, %v1795
    %v1804 = vmul.f32 %v1756, %v1795
    %v1805 = vmul.f32 %v1757, %v1796
    %v1806 = vmul.f32 %v1758, %v1796
    %v1807 = vmul.f32 %v1759, %v1796
    %v1808 = vmul.f32 %v1760, %v1796
    %v1809 = vld [vmem:[%s25] sm:$0xff]
    %v1810 = vld [vmem:[%s25 + $0x8] sm:$0xff]
    %v1811 = vld [vmem:[%s25 + $0x10] sm:$0xff]
    %1813 = vset.pattern.permute.xlu0 0
    %1814 = vperm.xlu0 %1813, %v1809
    %v1815 = vpop.permute.xlu0 %1814
    %1818 = vset.pattern.permute.xlu0 0
    %1819 = vperm.xlu0 %1818, %v1810
    %v1820 = vpop.permute.xlu0 %1819
    %1823 = vset.pattern.permute.xlu0 0
    %1824 = vperm.xlu0 %1823, %v1811
    %v1825 = vpop.permute.xlu0 %1824
    %v1827 = vmul.f32 %v1797, %v1815
    %v1828 = vmul.f32 %v1798, %v1815
    %v1829 = vmul.f32 %v1799, %v1815
    %v1830 = vmul.f32 %v1800, %v1815
    %v1831 = vmul.f32 %v1801, %v1820
    %v1832 = vmul.f32 %v1802, %v1820
    %v1833 = vmul.f32 %v1803, %v1820
    %v1834 = vmul.f32 %v1804, %v1820
    %v1835 = vmul.f32 %v1805, %v1825
    %v1836 = vmul.f32 %v1806, %v1825
    %v1837 = vmul.f32 %v1807, %v1825
    %v1838 = vmul.f32 %v1808, %v1825
    %v1839 = vld [vmem:[%s27] sm:$0xff]
    %v1840 = vld [vmem:[%s27 + $0x8] sm:$0xff]
    %v1841 = vld [vmem:[%s27 + $0x10] sm:$0xff]
    %1843 = vset.pattern.permute.xlu0 0
    %1844 = vperm.xlu0 %1843, %v1839
    %v1845 = vpop.permute.xlu0 %1844
    %1848 = vset.pattern.permute.xlu0 0
    %1849 = vperm.xlu0 %1848, %v1840
    %v1850 = vpop.permute.xlu0 %1849
    %1853 = vset.pattern.permute.xlu0 0
    %1854 = vperm.xlu0 %1853, %v1841
    %v1855 = vpop.permute.xlu0 %1854
    %v1857 = vadd.f32 %v1827, %v1845
    %v1858 = vadd.f32 %v1828, %v1845
    %v1859 = vadd.f32 %v1829, %v1845
    %v1860 = vadd.f32 %v1830, %v1845
    %v1861 = vadd.f32 %v1831, %v1850
    %v1862 = vadd.f32 %v1832, %v1850
    %v1863 = vadd.f32 %v1833, %v1850
    %v1864 = vadd.f32 %v1834, %v1850
    %v1865 = vadd.f32 %v1835, %v1855
    %v1866 = vadd.f32 %v1836, %v1855
    %v1867 = vadd.f32 %v1837, %v1855
    %v1868 = vadd.f32 %v1838, %v1855
    %s1869 = sld [smem:[#allocation2 + $0x1]]
    %v1870 = vstv %s1869
    %v1871 = vmul.f32 %v1870, %v1100
    %v1872 = vmul.f32 %v1870, %v1101
    %v1873 = vmul.f32 %v1870, %v1102
    %v1874 = vmul.f32 %v1870, %v1103
    %s1875 = sld [smem:[#allocation2 + $0x3]]
    %v1876 = vstv %s1875
    %v1877 = vmul.f32 %v1876, %v1857
    %v1878 = vmul.f32 %v1876, %v1858
    %v1879 = vmul.f32 %v1876, %v1859
    %v1880 = vmul.f32 %v1876, %v1860
    %v1881 = vadd.f32 %v1871, %v1877
    %v1882 = vadd.f32 %v1872, %v1878
    %v1883 = vadd.f32 %v1873, %v1879
    %v1884 = vadd.f32 %v1874, %v1880
    %s1885 = sld [smem:[#allocation2 + $0x2]]
    %v1886 = vstv %s1885
    %v1887 = vmul.f32 %v1886, %v1861
    %v1888 = vmul.f32 %v1886, %v1862
    %v1889 = vmul.f32 %v1886, %v1863
    %v1890 = vmul.f32 %v1886, %v1864
    %v1895 = vrot.slane %v1887, 4
    %v1896 = vrot.slane %v1888, 4
    %v1897 = vrot.slane %v1889, 4
    %v1898 = vrot.slane %v1890, 4
    %v1903 = vadd.f32 %v1881, %v1895
    %v1904 = vadd.f32 %v1882, %v1896
    %v1905 = vadd.f32 %v1883, %v1897
    %v1906 = vadd.f32 %v1884, %v1898
    %s1907 = sld [smem:[#allocation2 + $0x4]]
    %v1908 = vstv %s1907
    %v1909 = vmul.f32 %v1908, %v1516
    %v1910 = vmul.f32 %v1908, %v1517
    %v1911 = vmul.f32 %v1908, %v1518
    %v1912 = vmul.f32 %v1908, %v1519
    %v1913 = vadd.f32 %v1903, %v1909
    %v1914 = vadd.f32 %v1904, %v1910
    %v1915 = vadd.f32 %v1905, %v1911
    %v1916 = vadd.f32 %v1906, %v1912
    %s1917 = sld [smem:[#allocation2 + $0x81]]
    %v1918 = vstv %s1917
    %v1919 = vmul.f32 %v1918, %v1100
    %v1920 = vmul.f32 %v1918, %v1101
    %v1921 = vmul.f32 %v1918, %v1102
    %v1922 = vmul.f32 %v1918, %v1103
    %s1923 = sld [smem:[#allocation2 + $0x83]]
    %v1924 = vstv %s1923
    %v1925 = vmul.f32 %v1924, %v1857
    %v1926 = vmul.f32 %v1924, %v1858
    %v1927 = vmul.f32 %v1924, %v1859
    %v1928 = vmul.f32 %v1924, %v1860
    %v1933 = vrot.slane %v1925, 4
    %v1934 = vrot.slane %v1926, 4
    %v1935 = vrot.slane %v1927, 4
    %v1936 = vrot.slane %v1928, 4
    %v1941 = vadd.f32 %v1919, %v1933
    %v1942 = vadd.f32 %v1920, %v1934
    %v1943 = vadd.f32 %v1921, %v1935
    %v1944 = vadd.f32 %v1922, %v1936
    %s1945 = sld [smem:[#allocation2 + $0x82]]
    %v1946 = vstv %s1945
    %v1947 = vmul.f32 %v1946, %v1865
    %v1948 = vmul.f32 %v1946, %v1866
    %v1949 = vmul.f32 %v1946, %v1867
    %v1950 = vmul.f32 %v1946, %v1868
    %v1951 = vadd.f32 %v1941, %v1947
    %v1952 = vadd.f32 %v1942, %v1948
    %v1953 = vadd.f32 %v1943, %v1949
    %v1954 = vadd.f32 %v1944, %v1950
    %s1955 = sld [smem:[#allocation2 + $0x84]]
    %v1956 = vstv %s1955
    %v1957 = vmul.f32 %v1956, %v1516
    %v1958 = vmul.f32 %v1956, %v1517
    %v1959 = vmul.f32 %v1956, %v1518
    %v1960 = vmul.f32 %v1956, %v1519
    %v1961 = vadd.f32 %v1951, %v1957
    %v1962 = vadd.f32 %v1952, %v1958
    %v1963 = vadd.f32 %v1953, %v1959
    %v1964 = vadd.f32 %v1954, %v1960
    %s1965 = sld [smem:[#allocation2 + $0x181]]
    %v1966 = vstv %s1965
    %v1967 = vmul.f32 %v1966, %v1100
    %v1968 = vmul.f32 %v1966, %v1101
    %v1969 = vmul.f32 %v1966, %v1102
    %v1970 = vmul.f32 %v1966, %v1103
    %s1971 = sld [smem:[#allocation2 + $0x183]]
    %v1972 = vstv %s1971
    %v1973 = vmul.f32 %v1972, %v1861
    %v1974 = vmul.f32 %v1972, %v1862
    %v1975 = vmul.f32 %v1972, %v1863
    %v1976 = vmul.f32 %v1972, %v1864
    %v1977 = vadd.f32 %v1967, %v1973
    %v1978 = vadd.f32 %v1968, %v1974
    %v1979 = vadd.f32 %v1969, %v1975
    %v1980 = vadd.f32 %v1970, %v1976
    %s1981 = sld [smem:[#allocation2 + $0x182]]
    %v1982 = vstv %s1981
    %v1983 = vmul.f32 %v1982, %v1865
    %v1984 = vmul.f32 %v1982, %v1866
    %v1985 = vmul.f32 %v1982, %v1867
    %v1986 = vmul.f32 %v1982, %v1868
    %v1991 = vrot.slane %v1983, 4
    %v1992 = vrot.slane %v1984, 4
    %v1993 = vrot.slane %v1985, 4
    %v1994 = vrot.slane %v1986, 4
    %v1999 = vadd.f32 %v1977, %v1991
    %v2000 = vadd.f32 %v1978, %v1992
    %v2001 = vadd.f32 %v1979, %v1993
    %v2002 = vadd.f32 %v1980, %v1994
    %s2003 = sld [smem:[#allocation2 + $0x184]]
    %v2004 = vstv %s2003
    %v2005 = vmul.f32 %v2004, %v1516
    %v2006 = vmul.f32 %v2004, %v1517
    %v2007 = vmul.f32 %v2004, %v1518
    %v2008 = vmul.f32 %v2004, %v1519
    %v2009 = vadd.f32 %v1999, %v2005
    %v2010 = vadd.f32 %v2000, %v2006
    %v2011 = vadd.f32 %v2001, %v2007
    %v2012 = vadd.f32 %v2002, %v2008
    %2017 = vrot.lane.b32.xlu0 %v1913, 17
    %v2018 = vpop.permute.xlu0 %2017
    %2019 = vrot.lane.b32.xlu0 %v1914, 17
    %v2020 = vpop.permute.xlu0 %2019
    %2021 = vrot.lane.b32.xlu0 %v1915, 17
    %v2022 = vpop.permute.xlu0 %2021
    %2023 = vrot.lane.b32.xlu0 %v1916, 17
    %v2024 = vpop.permute.xlu0 %2023
    %v2025 = vsel %vm272, %v2018, %v2020
    %v2026 = vsel %vm272, %v2020, %v2022
    %v2027 = vsel %vm272, %v2022, %v2024
    %v2033 = vsel %vm272, 0.0, %v2018
    %v2034 = vsel %vm272, %v2024, 0.0
    %v2035 = vmul.f32 %v2033, %v288
    %v2036 = vmul.f32 %v2025, %v292
    %v2037 = vmul.f32 %v2026, %v296
    %v2038 = vmul.f32 %v2027, %v300
    %v2039 = vmul.f32 %v2033, %v329
    %v2040 = vmul.f32 %v2025, %v337
    %v2041 = vmul.f32 %v2026, %v338
    %v2042 = vmul.f32 %v2027, %v339
    %v2043 = vmul.f32 %v2034, %v335
    %2049 = vrot.lane.b32.xlu0 %v2039, 127
    %v2050 = vpop.permute.xlu0 %2049
    %2051 = vrot.lane.b32.xlu0 %v2040, 127
    %v2052 = vpop.permute.xlu0 %2051
    %2053 = vrot.lane.b32.xlu0 %v2041, 127
    %v2054 = vpop.permute.xlu0 %2053
    %2055 = vrot.lane.b32.xlu0 %v2042, 127
    %v2056 = vpop.permute.xlu0 %2055
    %2057 = vrot.lane.b32.xlu0 %v2043, 127
    %v2058 = vpop.permute.xlu0 %2057
    %v2059 = vsel %vm656, %v2050, %v2052
    %v2060 = vsel %vm656, %v2052, %v2054
    %v2061 = vsel %vm656, %v2054, %v2056
    %v2062 = vsel %vm656, %v2056, %v2058
    %v2067 = vadd.f32 %v2035, %v2059
    %v2068 = vadd.f32 %v2036, %v2060
    %v2069 = vadd.f32 %v2037, %v2061
    %v2070 = vadd.f32 %v2038, %v2062
    %v2071 = vmul.f32 %v2033, %v370
    %v2072 = vmul.f32 %v2025, %v378
    %v2073 = vmul.f32 %v2026, %v379
    %v2074 = vmul.f32 %v2027, %v380
    %v2075 = vmul.f32 %v2034, %v376
    %2081 = vrot.lane.b32.xlu0 %v2071, 126
    %v2082 = vpop.permute.xlu0 %2081
    %2083 = vrot.lane.b32.xlu0 %v2072, 126
    %v2084 = vpop.permute.xlu0 %2083
    %2085 = vrot.lane.b32.xlu0 %v2073, 126
    %v2086 = vpop.permute.xlu0 %2085
    %2087 = vrot.lane.b32.xlu0 %v2074, 126
    %v2088 = vpop.permute.xlu0 %2087
    %2089 = vrot.lane.b32.xlu0 %v2075, 126
    %v2090 = vpop.permute.xlu0 %2089
    %v2091 = vsel %vm685, %v2082, %v2084
    %v2092 = vsel %vm685, %v2084, %v2086
    %v2093 = vsel %vm685, %v2086, %v2088
    %v2094 = vsel %vm685, %v2088, %v2090
    %v2099 = vadd.f32 %v2067, %v2091
    %v2100 = vadd.f32 %v2068, %v2092
    %v2101 = vadd.f32 %v2069, %v2093
    %v2102 = vadd.f32 %v2070, %v2094
    %v2103 = vmul.f32 %v2033, %v411
    %v2104 = vmul.f32 %v2025, %v419
    %v2105 = vmul.f32 %v2026, %v420
    %v2106 = vmul.f32 %v2027, %v421
    %v2107 = vmul.f32 %v2034, %v417
    %2113 = vrot.lane.b32.xlu0 %v2103, 112
    %v2114 = vpop.permute.xlu0 %2113
    %2115 = vrot.lane.b32.xlu0 %v2104, 112
    %v2116 = vpop.permute.xlu0 %2115
    %2117 = vrot.lane.b32.xlu0 %v2105, 112
    %v2118 = vpop.permute.xlu0 %2117
    %2119 = vrot.lane.b32.xlu0 %v2106, 112
    %v2120 = vpop.permute.xlu0 %2119
    %2121 = vrot.lane.b32.xlu0 %v2107, 112
    %v2122 = vpop.permute.xlu0 %2121
    %v2123 = vsel %vm714, %v2114, %v2116
    %v2124 = vsel %vm714, %v2116, %v2118
    %v2125 = vsel %vm714, %v2118, %v2120
    %v2126 = vsel %vm714, %v2120, %v2122
    %v2131 = vadd.f32 %v2099, %v2123
    %v2132 = vadd.f32 %v2100, %v2124
    %v2133 = vadd.f32 %v2101, %v2125
    %v2134 = vadd.f32 %v2102, %v2126
    %v2135 = vmul.f32 %v2033, %v452
    %v2136 = vmul.f32 %v2025, %v459
    %v2137 = vmul.f32 %v2026, %v460
    %v2138 = vmul.f32 %v2027, %v461
    %v2139 = vmul.f32 %v2034, %v458
    %2145 = vrot.lane.b32.xlu0 %v2135, 111
    %v2146 = vpop.permute.xlu0 %2145
    %2147 = vrot.lane.b32.xlu0 %v2136, 111
    %v2148 = vpop.permute.xlu0 %2147
    %2149 = vrot.lane.b32.xlu0 %v2137, 111
    %v2150 = vpop.permute.xlu0 %2149
    %2151 = vrot.lane.b32.xlu0 %v2138, 111
    %v2152 = vpop.permute.xlu0 %2151
    %2153 = vrot.lane.b32.xlu0 %v2139, 111
    %v2154 = vpop.permute.xlu0 %2153
    %v2155 = vsel %vm743, %v2146, %v2148
    %v2156 = vsel %vm743, %v2148, %v2150
    %v2157 = vsel %vm743, %v2150, %v2152
    %v2158 = vsel %vm743, %v2152, %v2154
    %v2163 = vadd.f32 %v2131, %v2155
    %v2164 = vadd.f32 %v2132, %v2156
    %v2165 = vadd.f32 %v2133, %v2157
    %v2166 = vadd.f32 %v2134, %v2158
    %v2167 = vmul.f32 %v2033, %v492
    %v2168 = vmul.f32 %v2025, %v500
    %v2169 = vmul.f32 %v2026, %v501
    %v2170 = vmul.f32 %v2027, %v502
    %v2171 = vmul.f32 %v2034, %v498
    %2177 = vrot.lane.b32.xlu0 %v2167, 110
    %v2178 = vpop.permute.xlu0 %2177
    %2179 = vrot.lane.b32.xlu0 %v2168, 110
    %v2180 = vpop.permute.xlu0 %2179
    %2181 = vrot.lane.b32.xlu0 %v2169, 110
    %v2182 = vpop.permute.xlu0 %2181
    %2183 = vrot.lane.b32.xlu0 %v2170, 110
    %v2184 = vpop.permute.xlu0 %2183
    %2185 = vrot.lane.b32.xlu0 %v2171, 110
    %v2186 = vpop.permute.xlu0 %2185
    %v2187 = vsel %vm772, %v2178, %v2180
    %v2188 = vsel %vm772, %v2180, %v2182
    %v2189 = vsel %vm772, %v2182, %v2184
    %v2190 = vsel %vm772, %v2184, %v2186
    %v2195 = vadd.f32 %v2163, %v2187
    %v2196 = vadd.f32 %v2164, %v2188
    %v2197 = vadd.f32 %v2165, %v2189
    %v2198 = vadd.f32 %v2166, %v2190
    %v2199 = vmul.f32 %v2033, %v533
    %v2200 = vmul.f32 %v2025, %v541
    %v2201 = vmul.f32 %v2026, %v542
    %v2202 = vmul.f32 %v2027, %v543
    %v2203 = vmul.f32 %v2034, %v539
    %2209 = vrot.lane.b32.xlu0 %v2199, 96
    %v2210 = vpop.permute.xlu0 %2209
    %2211 = vrot.lane.b32.xlu0 %v2200, 96
    %v2212 = vpop.permute.xlu0 %2211
    %2213 = vrot.lane.b32.xlu0 %v2201, 96
    %v2214 = vpop.permute.xlu0 %2213
    %2215 = vrot.lane.b32.xlu0 %v2202, 96
    %v2216 = vpop.permute.xlu0 %2215
    %2217 = vrot.lane.b32.xlu0 %v2203, 96
    %v2218 = vpop.permute.xlu0 %2217
    %v2219 = vsel %vm801, %v2210, %v2212
    %v2220 = vsel %vm801, %v2212, %v2214
    %v2221 = vsel %vm801, %v2214, %v2216
    %v2222 = vsel %vm801, %v2216, %v2218
    %v2227 = vadd.f32 %v2195, %v2219
    %v2228 = vadd.f32 %v2196, %v2220
    %v2229 = vadd.f32 %v2197, %v2221
    %v2230 = vadd.f32 %v2198, %v2222
    %v2231 = vmul.f32 %v2033, %v574
    %v2232 = vmul.f32 %v2025, %v582
    %v2233 = vmul.f32 %v2026, %v583
    %v2234 = vmul.f32 %v2027, %v584
    %v2235 = vmul.f32 %v2034, %v580
    %2241 = vrot.lane.b32.xlu0 %v2231, 95
    %v2242 = vpop.permute.xlu0 %2241
    %2243 = vrot.lane.b32.xlu0 %v2232, 95
    %v2244 = vpop.permute.xlu0 %2243
    %2245 = vrot.lane.b32.xlu0 %v2233, 95
    %v2246 = vpop.permute.xlu0 %2245
    %2247 = vrot.lane.b32.xlu0 %v2234, 95
    %v2248 = vpop.permute.xlu0 %2247
    %2249 = vrot.lane.b32.xlu0 %v2235, 95
    %v2250 = vpop.permute.xlu0 %2249
    %v2251 = vsel %vm830, %v2242, %v2244
    %v2252 = vsel %vm830, %v2244, %v2246
    %v2253 = vsel %vm830, %v2246, %v2248
    %v2254 = vsel %vm830, %v2248, %v2250
    %v2259 = vadd.f32 %v2227, %v2251
    %v2260 = vadd.f32 %v2228, %v2252
    %v2261 = vadd.f32 %v2229, %v2253
    %v2262 = vadd.f32 %v2230, %v2254
    %v2263 = vmul.f32 %v2033, %v615
    %v2264 = vmul.f32 %v2025, %v623
    %v2265 = vmul.f32 %v2026, %v624
    %v2266 = vmul.f32 %v2027, %v625
    %v2267 = vmul.f32 %v2034, %v621
    %2273 = vrot.lane.b32.xlu0 %v2263, 94
    %v2274 = vpop.permute.xlu0 %2273
    %2275 = vrot.lane.b32.xlu0 %v2264, 94
    %v2276 = vpop.permute.xlu0 %2275
    %2277 = vrot.lane.b32.xlu0 %v2265, 94
    %v2278 = vpop.permute.xlu0 %2277
    %2279 = vrot.lane.b32.xlu0 %v2266, 94
    %v2280 = vpop.permute.xlu0 %2279
    %2281 = vrot.lane.b32.xlu0 %v2267, 94
    %v2282 = vpop.permute.xlu0 %2281
    %v2283 = vsel %vm854, %v2274, %v2276
    %v2284 = vsel %vm854, %v2276, %v2278
    %v2285 = vsel %vm854, %v2278, %v2280
    %v2286 = vsel %vm854, %v2280, %v2282
    %v2291 = vadd.f32 %v2259, %v2283
    %v2292 = vadd.f32 %v2260, %v2284
    %v2293 = vadd.f32 %v2261, %v2285
    %v2294 = vadd.f32 %v2262, %v2286
    %v2295 = vrot.slane %v2039, 4
    %v2296 = vrot.slane %v2040, 4
    %v2297 = vrot.slane %v2041, 4
    %v2298 = vrot.slane %v2042, 4
    %v2299 = vrot.slane %v2043, 4
    %2300 = vrot.lane.b32.xlu0 %v2295, 127
    %v2301 = vpop.permute.xlu0 %2300
    %2302 = vrot.lane.b32.xlu0 %v2296, 127
    %v2303 = vpop.permute.xlu0 %2302
    %2304 = vrot.lane.b32.xlu0 %v2297, 127
    %v2305 = vpop.permute.xlu0 %2304
    %2306 = vrot.lane.b32.xlu0 %v2298, 127
    %v2307 = vpop.permute.xlu0 %2306
    %2308 = vrot.lane.b32.xlu0 %v2299, 127
    %v2309 = vpop.permute.xlu0 %2308
    %v2310 = vsel %vm656, %v2301, %v2303
    %v2311 = vsel %vm656, %v2303, %v2305
    %v2312 = vsel %vm656, %v2305, %v2307
    %v2313 = vsel %vm656, %v2307, %v2309
    %v2318 = vrot.slane %v2103, 4
    %v2319 = vrot.slane %v2104, 4
    %v2320 = vrot.slane %v2105, 4
    %v2321 = vrot.slane %v2106, 4
    %v2322 = vrot.slane %v2107, 4
    %2323 = vrot.lane.b32.xlu0 %v2318, 112
    %v2324 = vpop.permute.xlu0 %2323
    %2325 = vrot.lane.b32.xlu0 %v2319, 112
    %v2326 = vpop.permute.xlu0 %2325
    %2327 = vrot.lane.b32.xlu0 %v2320, 112
    %v2328 = vpop.permute.xlu0 %2327
    %2329 = vrot.lane.b32.xlu0 %v2321, 112
    %v2330 = vpop.permute.xlu0 %2329
    %2331 = vrot.lane.b32.xlu0 %v2322, 112
    %v2332 = vpop.permute.xlu0 %2331
    %v2333 = vsel %vm714, %v2324, %v2326
    %v2334 = vsel %vm714, %v2326, %v2328
    %v2335 = vsel %vm714, %v2328, %v2330
    %v2336 = vsel %vm714, %v2330, %v2332
    %v2341 = vrot.slane %v2167, 4
    %v2342 = vrot.slane %v2168, 4
    %v2343 = vrot.slane %v2169, 4
    %v2344 = vrot.slane %v2170, 4
    %v2345 = vrot.slane %v2171, 4
    %2346 = vrot.lane.b32.xlu0 %v2341, 110
    %v2347 = vpop.permute.xlu0 %2346
    %2348 = vrot.lane.b32.xlu0 %v2342, 110
    %v2349 = vpop.permute.xlu0 %2348
    %2350 = vrot.lane.b32.xlu0 %v2343, 110
    %v2351 = vpop.permute.xlu0 %2350
    %2352 = vrot.lane.b32.xlu0 %v2344, 110
    %v2353 = vpop.permute.xlu0 %2352
    %2354 = vrot.lane.b32.xlu0 %v2345, 110
    %v2355 = vpop.permute.xlu0 %2354
    %v2356 = vsel %vm772, %v2347, %v2349
    %v2357 = vsel %vm772, %v2349, %v2351
    %v2358 = vsel %vm772, %v2351, %v2353
    %v2359 = vsel %vm772, %v2353, %v2355
    %v2364 = vrot.slane %v2231, 4
    %v2365 = vrot.slane %v2232, 4
    %v2366 = vrot.slane %v2233, 4
    %v2367 = vrot.slane %v2234, 4
    %v2368 = vrot.slane %v2235, 4
    %2369 = vrot.lane.b32.xlu0 %v2364, 95
    %v2370 = vpop.permute.xlu0 %2369
    %2371 = vrot.lane.b32.xlu0 %v2365, 95
    %v2372 = vpop.permute.xlu0 %2371
    %2373 = vrot.lane.b32.xlu0 %v2366, 95
    %v2374 = vpop.permute.xlu0 %2373
    %2375 = vrot.lane.b32.xlu0 %v2367, 95
    %v2376 = vpop.permute.xlu0 %2375
    %2377 = vrot.lane.b32.xlu0 %v2368, 95
    %v2378 = vpop.permute.xlu0 %2377
    %v2379 = vsel %vm830, %v2370, %v2372
    %v2380 = vsel %vm830, %v2372, %v2374
    %v2381 = vsel %vm830, %v2374, %v2376
    %v2382 = vsel %vm830, %v2376, %v2378
    %v2387 = vsel %vm874, %v2035, %v2310
    %v2388 = vsel %vm874, %v2036, %v2311
    %v2389 = vsel %vm874, %v2037, %v2312
    %v2390 = vsel %vm874, %v2038, %v2313
    %v2391 = vsel %vm874, %v2091, %v2333
    %v2392 = vsel %vm874, %v2092, %v2334
    %v2393 = vsel %vm874, %v2093, %v2335
    %v2394 = vsel %vm874, %v2094, %v2336
    %v2395 = vsel %vm874, %v2155, %v2356
    %v2396 = vsel %vm874, %v2156, %v2357
    %v2397 = vsel %vm874, %v2157, %v2358
    %v2398 = vsel %vm874, %v2158, %v2359
    %v2399 = vsel %vm874, %v2219, %v2379
    %v2400 = vsel %vm874, %v2220, %v2380
    %v2401 = vsel %vm874, %v2221, %v2381
    %v2402 = vsel %vm874, %v2222, %v2382
    %v2403 = vmul.f32 %v2291, %v1499
    %v2404 = vmul.f32 %v2292, %v1503
    %v2405 = vmul.f32 %v2293, %v1507
    %v2406 = vmul.f32 %v2294, %v1511
    %v2407 = vld [vmem:[%s29] sm:$0xff]
    %v2408 = vld [vmem:[%s29 + $0x8] sm:$0xff]
    %v2409 = vmax.f32 %v2387, 0.0
    %v2410 = vmax.f32 %v2388, 0.0
    %v2411 = vmax.f32 %v2389, 0.0
    %v2412 = vmax.f32 %v2390, 0.0
    %v2413 = vmax.f32 %v2391, 0.0
    %v2414 = vmax.f32 %v2392, 0.0
    %v2415 = vmax.f32 %v2393, 0.0
    %v2416 = vmax.f32 %v2394, 0.0
    %v2417 = vmax.f32 %v2395, 0.0
    %v2418 = vmax.f32 %v2396, 0.0
    %v2419 = vmax.f32 %v2397, 0.0
    %v2420 = vmax.f32 %v2398, 0.0
    %v2421 = vmax.f32 %v2399, 0.0
    %v2422 = vmax.f32 %v2400, 0.0
    %v2423 = vmax.f32 %v2401, 0.0
    %v2424 = vmax.f32 %v2402, 0.0
    %v2425 = vmax.f32 %v2283, 0.0
    %v2426 = vmax.f32 %v2284, 0.0
    %v2427 = vmax.f32 %v2285, 0.0
    %v2428 = vmax.f32 %v2286, 0.0
    %v2430 = vsel %vm1543, %v2407, 0
    %v2433 = vsel %vm1543, %v2408, 0
    %v2436 = vsel %vm874, %v2425, 0
    %v2439 = vsel %vm874, %v2426, 0
    %v2442 = vsel %vm874, %v2427, 0
    %v2445 = vsel %vm874, %v2428, 0
    %2447 = vmatprep.subr.mxu0 %v2410
    %2448 = vmatpush1.msra.mxu0 %v2409
    %2449 = vmatprep.subr.mxu0 %v2414
    %2450 = vmatpush1.msra.mxu0 %v2413
    %2451 = vmatprep.subr.mxu0 %v2418
    %2452 = vmatpush1.msra.mxu0 %v2417
    %2453 = vmatprep.subr.mxu0 %v2422
    %2454 = vmatpush1.msra.mxu0 %v2421
    %2455 = vmatprep.subr.mxu0 %v2439
    %2456 = vmatpush1.msra.mxu0 %v2436
    %2457 = vmatprep.subr.mxu0 0.0
    %2458 = vmatpush1.msra.mxu0 0.0
    %2459 = vmatprep.subr.mxu0 0.0
    %2460 = vmatpush1.msra.mxu0 0.0
    %2461 = vmatprep.subr.mxu0 0.0
    %2462 = vmatpush1.msra.mxu0 0.0
    %2463 = vmatprep.subr.mxu0 0.0
    %2464 = vmatpush1.msra.mxu0 0.0
    %2465 = vmatprep.subr.mxu0 0.0
    %2466 = vmatpush1.msra.mxu0 0.0
    %2467 = vmatprep.subr.mxu0 0.0
    %2468 = vmatpush1.msra.mxu0 0.0
    %2469 = vmatprep.subr.mxu0 0.0
    %2470 = vmatpush1.msra.mxu0 0.0
    %2471 = vmatprep.subr.mxu0 0.0
    %2472 = vmatpush1.msra.mxu0 0.0
    %2473 = vmatprep.subr.mxu0 0.0
    %2474 = vmatpush1.msra.mxu0 0.0
    %2475 = vmatprep.subr.mxu0 0.0
    %2476 = vmatpush1.msra.mxu0 0.0
    %2477 = vmatprep.subr.mxu0 0.0
    %2478 = vmatpush1.msra.mxu0 0.0
    %2479 = vmatprep.subr.mxu0 0.0
    %2480 = vmatpush1.msra.mxu0 0.0
    %2481 = vmatprep.subr.mxu0 0.0
    %2482 = vmatpush1.msra.mxu0 0.0
    %2483 = vmatprep.subr.mxu0 0.0
    %2484 = vmatpush1.msra.mxu0 0.0
    %2485 = vmatprep.subr.mxu0 0.0
    %2486 = vmatpush1.msra.mxu0 0.0
    %2487 = vmatprep.subr.mxu0 0.0
    %2488 = vmatpush1.msra.mxu0 0.0
    %2489 = vmatprep.subr.mxu0 0.0
    %2490 = vmatpush1.msra.mxu0 0.0
    %2491 = vmatprep.subr.mxu0 0.0
    %2492 = vmatpush1.msra.mxu0 0.0
    %2493 = vmatprep.subr.mxu0 0.0
    %2494 = vmatpush1.msra.mxu0 0.0
    %2495 = vmatprep.subr.mxu0 0.0
    %2496 = vmatpush1.msra.mxu0 0.0
    %2497 = vmatprep.subr.mxu0 0.0
    %2498 = vmatpush1.msra.mxu0 0.0
    %2499 = vmatprep.subr.mxu0 0.0
    %2500 = vmatpush1.msra.mxu0 0.0
    %2501 = vmatprep.subr.mxu0 0.0
    %2502 = vmatpush1.msra.mxu0 0.0
    %2503 = vmatprep.subr.mxu0 0.0
    %2504 = vmatpush1.msra.mxu0 0.0
    %2505 = vmatprep.subr.mxu0 0.0
    %2506 = vmatpush1.msra.mxu0 0.0
    %2507 = vmatprep.subr.mxu0 0.0
    %2508 = vmatpush1.msra.mxu0 0.0
    %2509 = vmatprep.subr.mxu0 0.0
    %2510 = vmatpush1.msra.mxu0 0.0
    %2511 = vmatprep.mubr.f32.mxu0 0.0
    %2512 = vmatmul.mubr.f32.gmra.mrb[0].mxu0 %v2430
    %v2513 = vpop.f32.mrb[0].mxu0
    %v2514 = vadd.f32 0.0, %v2513
    %v2515 = vpop.f32.mrb[0].mxu0
    %v2516 = vadd.f32 0.0, %v2515
    %2517 = vmatprep.mubr.f32.mxu0 0.0
    %2518 = vmatmul.mubr.f32.gmra.mrb[0].mxu0 %v2433
    %v2519 = vpop.f32.mrb[0].mxu0
    %v2520 = vadd.f32 0.0, %v2519
    %v2521 = vpop.f32.mrb[0].mxu0
    %v2522 = vadd.f32 0.0, %v2521
    %2523 = vdwg.mxu0
    %2524 = vmatprep.subr.mxu0 %v2412
    %2525 = vmatpush1.msra.mxu0 %v2411
    %2526 = vmatprep.subr.mxu0 %v2416
    %2527 = vmatpush1.msra.mxu0 %v2415
    %2528 = vmatprep.subr.mxu0 %v2420
    %2529 = vmatpush1.msra.mxu0 %v2419
    %2530 = vmatprep.subr.mxu0 %v2424
    %2531 = vmatpush1.msra.mxu0 %v2423
    %2532 = vmatprep.subr.mxu0 %v2445
    %2533 = vmatpush1.msra.mxu0 %v2442
    %2534 = vmatprep.subr.mxu0 0.0
    %2535 = vmatpush1.msra.mxu0 0.0
    %2536 = vmatprep.subr.mxu0 0.0
    %2537 = vmatpush1.msra.mxu0 0.0
    %2538 = vmatprep.subr.mxu0 0.0
    %2539 = vmatpush1.msra.mxu0 0.0
    %2540 = vmatprep.subr.mxu0 0.0
    %2541 = vmatpush1.msra.mxu0 0.0
    %2542 = vmatprep.subr.mxu0 0.0
    %2543 = vmatpush1.msra.mxu0 0.0
    %2544 = vmatprep.subr.mxu0 0.0
    %2545 = vmatpush1.msra.mxu0 0.0
    %2546 = vmatprep.subr.mxu0 0.0
    %2547 = vmatpush1.msra.mxu0 0.0
    %2548 = vmatprep.subr.mxu0 0.0
    %2549 = vmatpush1.msra.mxu0 0.0
    %2550 = vmatprep.subr.mxu0 0.0
    %2551 = vmatpush1.msra.mxu0 0.0
    %2552 = vmatprep.subr.mxu0 0.0
    %2553 = vmatpush1.msra.mxu0 0.0
    %2554 = vmatprep.subr.mxu0 0.0
    %2555 = vmatpush1.msra.mxu0 0.0
    %2556 = vmatprep.subr.mxu0 0.0
    %2557 = vmatpush1.msra.mxu0 0.0
    %2558 = vmatprep.subr.mxu0 0.0
    %2559 = vmatpush1.msra.mxu0 0.0
    %2560 = vmatprep.subr.mxu0 0.0
    %2561 = vmatpush1.msra.mxu0 0.0
    %2562 = vmatprep.subr.mxu0 0.0
    %2563 = vmatpush1.msra.mxu0 0.0
    %2564 = vmatprep.subr.mxu0 0.0
    %2565 = vmatpush1.msra.mxu0 0.0
    %2566 = vmatprep.subr.mxu0 0.0
    %2567 = vmatpush1.msra.mxu0 0.0
    %2568 = vmatprep.subr.mxu0 0.0
    %2569 = vmatpush1.msra.mxu0 0.0
    %2570 = vmatprep.subr.mxu0 0.0
    %2571 = vmatpush1.msra.mxu0 0.0
    %2572 = vmatprep.subr.mxu0 0.0
    %2573 = vmatpush1.msra.mxu0 0.0
    %2574 = vmatprep.subr.mxu0 0.0
    %2575 = vmatpush1.msra.mxu0 0.0
    %2576 = vmatprep.subr.mxu0 0.0
    %2577 = vmatpush1.msra.mxu0 0.0
    %2578 = vmatprep.subr.mxu0 0.0
    %2579 = vmatpush1.msra.mxu0 0.0
    %2580 = vmatprep.subr.mxu0 0.0
    %2581 = vmatpush1.msra.mxu0 0.0
    %2582 = vmatprep.subr.mxu0 0.0
    %2583 = vmatpush1.msra.mxu0 0.0
    %2584 = vmatprep.subr.mxu0 0.0
    %2585 = vmatpush1.msra.mxu0 0.0
    %2586 = vmatprep.subr.mxu0 0.0
    %2587 = vmatpush1.msra.mxu0 0.0
    %2588 = vmatprep.mubr.f32.mxu0 0.0
    %2589 = vmatmul.mubr.f32.gmra.mrb[0].mxu0 %v2430
    %v2590 = vpop.f32.mrb[0].mxu0
    %v2591 = vadd.f32 0.0, %v2590
    %v2592 = vpop.f32.mrb[0].mxu0
    %v2593 = vadd.f32 0.0, %v2592
    %2594 = vmatprep.mubr.f32.mxu0 0.0
    %2595 = vmatmul.mubr.f32.gmra.mrb[0].mxu0 %v2433
    %v2596 = vpop.f32.mrb[0].mxu0
    %v2597 = vadd.f32 0.0, %v2596
    %v2598 = vpop.f32.mrb[0].mxu0
    %v2599 = vadd.f32 0.0, %v2598
    %2600 = vdwg.mxu0
    %v2601 = vadd.f32 %v2514, %v2516
    %v2602 = vadd.f32 %v2601, %v2591
    %v2603 = vadd.f32 %v2602, %v2593
    %2604 = vadd.xlane.f32.xlu0 %v2603
    %v2605 = vpop.xlane.xlu0 %2604
    %v2606 = vadd.f32 %v2520, %v2522
    %v2607 = vadd.f32 %v2606, %v2597
    %v2608 = vadd.f32 %v2607, %v2599
    %2609 = vadd.xlane.f32.xlu0 %v2608
    %v2610 = vpop.xlane.xlu0 %2609
    %v2611 = vmul.f32 %v2605, %v1058
    %v2612 = vmul.f32 %v2610, %v1058
    %v2613 = vsub.f32 %v2514, %v2611
    %v2614 = vsub.f32 %v2516, %v2611
    %v2615 = vsub.f32 %v2591, %v2611
    %v2616 = vsub.f32 %v2593, %v2611
    %v2617 = vsub.f32 %v2520, %v2612
    %v2618 = vsub.f32 %v2522, %v2612
    %v2619 = vsub.f32 %v2597, %v2612
    %v2620 = vsub.f32 %v2599, %v2612
    %v2621 = vmul.f32 %v2613, %v2613
    %v2622 = vmul.f32 %v2614, %v2614
    %v2623 = vmul.f32 %v2615, %v2615
    %v2624 = vmul.f32 %v2616, %v2616
    %v2625 = vmul.f32 %v2617, %v2617
    %v2626 = vmul.f32 %v2618, %v2618
    %v2627 = vmul.f32 %v2619, %v2619
    %v2628 = vmul.f32 %v2620, %v2620
    %v2629 = vadd.f32 %v2621, %v2622
    %v2630 = vadd.f32 %v2629, %v2623
    %v2631 = vadd.f32 %v2630, %v2624
    %2632 = vadd.xlane.f32.xlu0 %v2631
    %v2633 = vpop.xlane.xlu0 %2632
    %v2634 = vadd.f32 %v2625, %v2626
    %v2635 = vadd.f32 %v2634, %v2627
    %v2636 = vadd.f32 %v2635, %v2628
    %2637 = vadd.xlane.f32.xlu0 %v2636
    %v2638 = vpop.xlane.xlu0 %2637
    %v2639 = vmul.f32 %v2633, %v1058
    %v2640 = vmul.f32 %v2638, %v1058
    %v2641 = vadd.f32 %v2639, 1e-05
    %v2642 = vadd.f32 %v2640, 1e-05
    %v2643 = vrsqrt.pop %v2641
    %v2644 = vrsqrt.pop %v2642
    %v2645 = vmul.f32 %v2613, %v2643
    %v2646 = vmul.f32 %v2614, %v2643
    %v2647 = vmul.f32 %v2615, %v2643
    %v2648 = vmul.f32 %v2616, %v2643
    %v2649 = vmul.f32 %v2617, %v2644
    %v2650 = vmul.f32 %v2618, %v2644
    %v2651 = vmul.f32 %v2619, %v2644
    %v2652 = vmul.f32 %v2620, %v2644
    %v2653 = vld [vmem:[%s31] sm:$0xff]
    %v2654 = vld [vmem:[%s31 + $0x8] sm:$0xff]
    %2656 = vset.pattern.permute.xlu0 0
    %2657 = vperm.xlu0 %2656, %v2653
    %v2658 = vpop.permute.xlu0 %2657
    %2661 = vset.pattern.permute.xlu0 0
    %2662 = vperm.xlu0 %2661, %v2654
    %v2663 = vpop.permute.xlu0 %2662
    %v2665 = vmul.f32 %v2645, %v2658
    %v2666 = vmul.f32 %v2646, %v2658
    %v2667 = vmul.f32 %v2647, %v2658
    %v2668 = vmul.f32 %v2648, %v2658
    %v2669 = vmul.f32 %v2649, %v2663
    %v2670 = vmul.f32 %v2650, %v2663
    %v2671 = vmul.f32 %v2651, %v2663
    %v2672 = vmul.f32 %v2652, %v2663
    %v2673 = vld [vmem:[%s33] sm:$0xff]
    %v2674 = vld [vmem:[%s33 + $0x8] sm:$0xff]
    %2676 = vset.pattern.permute.xlu0 0
    %2677 = vperm.xlu0 %2676, %v2673
    %v2678 = vpop.permute.xlu0 %2677
    %2681 = vset.pattern.permute.xlu0 0
    %2682 = vperm.xlu0 %2681, %v2674
    %v2683 = vpop.permute.xlu0 %2682
    %v2685 = vadd.f32 %v2665, %v2678
    %v2686 = vadd.f32 %v2666, %v2678
    %v2687 = vadd.f32 %v2667, %v2678
    %v2688 = vadd.f32 %v2668, %v2678
    %v2689 = vadd.f32 %v2669, %v2683
    %v2690 = vadd.f32 %v2670, %v2683
    %v2691 = vadd.f32 %v2671, %v2683
    %v2692 = vadd.f32 %v2672, %v2683
    %s2693 = sld [smem:[#allocation2 + $0x101]]
    %v2694 = vstv %s2693
    %v2695 = vmul.f32 %v2694, %v1913
    %v2696 = vmul.f32 %v2694, %v1914
    %v2697 = vmul.f32 %v2694, %v1915
    %v2698 = vmul.f32 %v2694, %v1916
    %s2699 = sld [smem:[#allocation2 + $0x103]]
    %v2700 = vstv %s2699
    %v2701 = vmul.f32 %v2700, %v2685
    %v2702 = vmul.f32 %v2700, %v2686
    %v2703 = vmul.f32 %v2700, %v2687
    %v2704 = vmul.f32 %v2700, %v2688
    %v2705 = vadd.f32 %v2695, %v2701
    %v2706 = vadd.f32 %v2696, %v2702
    %v2707 = vadd.f32 %v2697, %v2703
    %v2708 = vadd.f32 %v2698, %v2704
    %s2709 = sld [smem:[#allocation2 + $0x102]]
    %v2710 = vstv %s2709
    %v2711 = vmul.f32 %v2710, %v2689
    %v2712 = vmul.f32 %v2710, %v2690
    %v2713 = vmul.f32 %v2710, %v2691
    %v2714 = vmul.f32 %v2710, %v2692
    %v2715 = vadd.f32 %v2705, %v2711
    %v2716 = vadd.f32 %v2706, %v2712
    %v2717 = vadd.f32 %v2707, %v2713
    %v2718 = vadd.f32 %v2708, %v2714
    %s2719 = sld [smem:[#allocation2 + $0x104]]
    %v2720 = vstv %s2719
    %v2721 = vmul.f32 %v2720, %v2403
    %v2722 = vmul.f32 %v2720, %v2404
    %v2723 = vmul.f32 %v2720, %v2405
    %v2724 = vmul.f32 %v2720, %v2406
    %v2725 = vadd.f32 %v2715, %v2721
    %v2726 = vadd.f32 %v2716, %v2722
    %v2727 = vadd.f32 %v2717, %v2723
    %v2728 = vadd.f32 %v2718, %v2724
    %v2729 = vadd.f32 %v1961, %v2725
    %v2730 = vadd.f32 %v1962, %v2726
    %v2731 = vadd.f32 %v1963, %v2727
    %v2732 = vadd.f32 %v1964, %v2728
    %s2733 = sld [smem:[#allocation2 + $0x201]]
    %v2734 = vstv %s2733
    %v2735 = vmul.f32 %v2734, %v1913
    %v2736 = vmul.f32 %v2734, %v1914
    %v2737 = vmul.f32 %v2734, %v1915
    %v2738 = vmul.f32 %v2734, %v1916
    %s2739 = sld [smem:[#allocation2 + $0x203]]
    %v2740 = vstv %s2739
    %v2741 = vmul.f32 %v2740, %v2685
    %v2742 = vmul.f32 %v2740, %v2686
    %v2743 = vmul.f32 %v2740, %v2687
    %v2744 = vmul.f32 %v2740, %v2688
    %v2749 = vrot.slane %v2741, 4
    %v2750 = vrot.slane %v2742, 4
    %v2751 = vrot.slane %v2743, 4
    %v2752 = vrot.slane %v2744, 4
    %v2757 = vadd.f32 %v2735, %v2749
    %v2758 = vadd.f32 %v2736, %v2750
    %v2759 = vadd.f32 %v2737, %v2751
    %v2760 = vadd.f32 %v2738, %v2752
    %s2761 = sld [smem:[#allocation2 + $0x202]]
    %v2762 = vstv %s2761
    %v2763 = vmul.f32 %v2762, %v2689
    %v2764 = vmul.f32 %v2762, %v2690
    %v2765 = vmul.f32 %v2762, %v2691
    %v2766 = vmul.f32 %v2762, %v2692
    %v2771 = vrot.slane %v2763, 4
    %v2772 = vrot.slane %v2764, 4
    %v2773 = vrot.slane %v2765, 4
    %v2774 = vrot.slane %v2766, 4
    %v2779 = vadd.f32 %v2757, %v2771
    %v2780 = vadd.f32 %v2758, %v2772
    %v2781 = vadd.f32 %v2759, %v2773
    %v2782 = vadd.f32 %v2760, %v2774
    %s2783 = sld [smem:[#allocation2 + $0x204]]
    %v2784 = vstv %s2783
    %v2785 = vmul.f32 %v2784, %v2403
    %v2786 = vmul.f32 %v2784, %v2404
    %v2787 = vmul.f32 %v2784, %v2405
    %v2788 = vmul.f32 %v2784, %v2406
    %v2789 = vadd.f32 %v2779, %v2785
    %v2790 = vadd.f32 %v2780, %v2786
    %v2791 = vadd.f32 %v2781, %v2787
    %v2792 = vadd.f32 %v2782, %v2788
    %v2793 = vadd.f32 %v2009, %v2789
    %v2794 = vadd.f32 %v2010, %v2790
    %v2795 = vadd.f32 %v2011, %v2791
    %v2796 = vadd.f32 %v2012, %v2792
    %2801 = vrot.lane.b32.xlu0 %v2729, 17
    %v2802 = vpop.permute.xlu0 %2801
    %2803 = vrot.lane.b32.xlu0 %v2730, 17
    %v2804 = vpop.permute.xlu0 %2803
    %2805 = vrot.lane.b32.xlu0 %v2731, 17
    %v2806 = vpop.permute.xlu0 %2805
    %2807 = vrot.lane.b32.xlu0 %v2732, 17
    %v2808 = vpop.permute.xlu0 %2807
    %v2809 = vsel %vm272, %v2802, %v2804
    %v2810 = vsel %vm272, %v2804, %v2806
    %v2811 = vsel %vm272, %v2806, %v2808
    %v2817 = vsel %vm272, 0.0, %v2802
    %v2818 = vsel %vm272, %v2808, 0.0
    %v2819 = vmul.f32 %v2817, %v288
    %v2820 = vmul.f32 %v2809, %v292
    %v2821 = vmul.f32 %v2810, %v296
    %v2822 = vmul.f32 %v2811, %v300
    %v2823 = vmul.f32 %v2817, %v329
    %v2824 = vmul.f32 %v2809, %v337
    %v2825 = vmul.f32 %v2810, %v338
    %v2826 = vmul.f32 %v2811, %v339
    %v2827 = vmul.f32 %v2818, %v335
    %2833 = vrot.lane.b32.xlu0 %v2823, 127
    %v2834 = vpop.permute.xlu0 %2833
    %2835 = vrot.lane.b32.xlu0 %v2824, 127
    %v2836 = vpop.permute.xlu0 %2835
    %2837 = vrot.lane.b32.xlu0 %v2825, 127
    %v2838 = vpop.permute.xlu0 %2837
    %2839 = vrot.lane.b32.xlu0 %v2826, 127
    %v2840 = vpop.permute.xlu0 %2839
    %2841 = vrot.lane.b32.xlu0 %v2827, 127
    %v2842 = vpop.permute.xlu0 %2841
    %v2843 = vsel %vm656, %v2834, %v2836
    %v2844 = vsel %vm656, %v2836, %v2838
    %v2845 = vsel %vm656, %v2838, %v2840
    %v2846 = vsel %vm656, %v2840, %v2842
    %v2851 = vadd.f32 %v2819, %v2843
    %v2852 = vadd.f32 %v2820, %v2844
    %v2853 = vadd.f32 %v2821, %v2845
    %v2854 = vadd.f32 %v2822, %v2846
    %v2855 = vmul.f32 %v2817, %v370
    %v2856 = vmul.f32 %v2809, %v378
    %v2857 = vmul.f32 %v2810, %v379
    %v2858 = vmul.f32 %v2811, %v380
    %v2859 = vmul.f32 %v2818, %v376
    %2865 = vrot.lane.b32.xlu0 %v2855, 126
    %v2866 = vpop.permute.xlu0 %2865
    %2867 = vrot.lane.b32.xlu0 %v2856, 126
    %v2868 = vpop.permute.xlu0 %2867
    %2869 = vrot.lane.b32.xlu0 %v2857, 126
    %v2870 = vpop.permute.xlu0 %2869
    %2871 = vrot.lane.b32.xlu0 %v2858, 126
    %v2872 = vpop.permute.xlu0 %2871
    %2873 = vrot.lane.b32.xlu0 %v2859, 126
    %v2874 = vpop.permute.xlu0 %2873
    %v2875 = vsel %vm685, %v2866, %v2868
    %v2876 = vsel %vm685, %v2868, %v2870
    %v2877 = vsel %vm685, %v2870, %v2872
    %v2878 = vsel %vm685, %v2872, %v2874
    %v2883 = vadd.f32 %v2851, %v2875
    %v2884 = vadd.f32 %v2852, %v2876
    %v2885 = vadd.f32 %v2853, %v2877
    %v2886 = vadd.f32 %v2854, %v2878
    %v2887 = vmul.f32 %v2817, %v411
    %v2888 = vmul.f32 %v2809, %v419
    %v2889 = vmul.f32 %v2810, %v420
    %v2890 = vmul.f32 %v2811, %v421
    %v2891 = vmul.f32 %v2818, %v417
    %2897 = vrot.lane.b32.xlu0 %v2887, 112
    %v2898 = vpop.permute.xlu0 %2897
    %2899 = vrot.lane.b32.xlu0 %v2888, 112
    %v2900 = vpop.permute.xlu0 %2899
    %2901 = vrot.lane.b32.xlu0 %v2889, 112
    %v2902 = vpop.permute.xlu0 %2901
    %2903 = vrot.lane.b32.xlu0 %v2890, 112
    %v2904 = vpop.permute.xlu0 %2903
    %2905 = vrot.lane.b32.xlu0 %v2891, 112
    %v2906 = vpop.permute.xlu0 %2905
    %v2907 = vsel %vm714, %v2898, %v2900
    %v2908 = vsel %vm714, %v2900, %v2902
    %v2909 = vsel %vm714, %v2902, %v2904
    %v2910 = vsel %vm714, %v2904, %v2906
    %v2915 = vadd.f32 %v2883, %v2907
    %v2916 = vadd.f32 %v2884, %v2908
    %v2917 = vadd.f32 %v2885, %v2909
    %v2918 = vadd.f32 %v2886, %v2910
    %v2919 = vmul.f32 %v2817, %v452
    %v2920 = vmul.f32 %v2809, %v459
    %v2921 = vmul.f32 %v2810, %v460
    %v2922 = vmul.f32 %v2811, %v461
    %v2923 = vmul.f32 %v2818, %v458
    %2929 = vrot.lane.b32.xlu0 %v2919, 111
    %v2930 = vpop.permute.xlu0 %2929
    %2931 = vrot.lane.b32.xlu0 %v2920, 111
    %v2932 = vpop.permute.xlu0 %2931
    %2933 = vrot.lane.b32.xlu0 %v2921, 111
    %v2934 = vpop.permute.xlu0 %2933
    %2935 = vrot.lane.b32.xlu0 %v2922, 111
    %v2936 = vpop.permute.xlu0 %2935
    %2937 = vrot.lane.b32.xlu0 %v2923, 111
    %v2938 = vpop.permute.xlu0 %2937
    %v2939 = vsel %vm743, %v2930, %v2932
    %v2940 = vsel %vm743, %v2932, %v2934
    %v2941 = vsel %vm743, %v2934, %v2936
    %v2942 = vsel %vm743, %v2936, %v2938
    %v2947 = vadd.f32 %v2915, %v2939
    %v2948 = vadd.f32 %v2916, %v2940
    %v2949 = vadd.f32 %v2917, %v2941
    %v2950 = vadd.f32 %v2918, %v2942
    %v2951 = vmul.f32 %v2817, %v492
    %v2952 = vmul.f32 %v2809, %v500
    %v2953 = vmul.f32 %v2810, %v501
    %v2954 = vmul.f32 %v2811, %v502
    %v2955 = vmul.f32 %v2818, %v498
    %2961 = vrot.lane.b32.xlu0 %v2951, 110
    %v2962 = vpop.permute.xlu0 %2961
    %2963 = vrot.lane.b32.xlu0 %v2952, 110
    %v2964 = vpop.permute.xlu0 %2963
    %2965 = vrot.lane.b32.xlu0 %v2953, 110
    %v2966 = vpop.permute.xlu0 %2965
    %2967 = vrot.lane.b32.xlu0 %v2954, 110
    %v2968 = vpop.permute.xlu0 %2967
    %2969 = vrot.lane.b32.xlu0 %v2955, 110
    %v2970 = vpop.permute.xlu0 %2969
    %v2971 = vsel %vm772, %v2962, %v2964
    %v2972 = vsel %vm772, %v2964, %v2966
    %v2973 = vsel %vm772, %v2966, %v2968
    %v2974 = vsel %vm772, %v2968, %v2970
    %v2979 = vadd.f32 %v2947, %v2971
    %v2980 = vadd.f32 %v2948, %v2972
    %v2981 = vadd.f32 %v2949, %v2973
    %v2982 = vadd.f32 %v2950, %v2974
    %v2983 = vmul.f32 %v2817, %v533
    %v2984 = vmul.f32 %v2809, %v541
    %v2985 = vmul.f32 %v2810, %v542
    %v2986 = vmul.f32 %v2811, %v543
    %v2987 = vmul.f32 %v2818, %v539
    %2993 = vrot.lane.b32.xlu0 %v2983, 96
    %v2994 = vpop.permute.xlu0 %2993
    %2995 = vrot.lane.b32.xlu0 %v2984, 96
    %v2996 = vpop.permute.xlu0 %2995
    %2997 = vrot.lane.b32.xlu0 %v2985, 96
    %v2998 = vpop.permute.xlu0 %2997
    %2999 = vrot.lane.b32.xlu0 %v2986, 96
    %v3000 = vpop.permute.xlu0 %2999
    %3001 = vrot.lane.b32.xlu0 %v2987, 96
    %v3002 = vpop.permute.xlu0 %3001
    %v3003 = vsel %vm801, %v2994, %v2996
    %v3004 = vsel %vm801, %v2996, %v2998
    %v3005 = vsel %vm801, %v2998, %v3000
    %v3006 = vsel %vm801, %v3000, %v3002
    %v3011 = vadd.f32 %v2979, %v3003
    %v3012 = vadd.f32 %v2980, %v3004
    %v3013 = vadd.f32 %v2981, %v3005
    %v3014 = vadd.f32 %v2982, %v3006
    %v3015 = vmul.f32 %v2817, %v574
    %v3016 = vmul.f32 %v2809, %v582
    %v3017 = vmul.f32 %v2810, %v583
    %v3018 = vmul.f32 %v2811, %v584
    %v3019 = vmul.f32 %v2818, %v580
    %3025 = vrot.lane.b32.xlu0 %v3015, 95
    %v3026 = vpop.permute.xlu0 %3025
    %3027 = vrot.lane.b32.xlu0 %v3016, 95
    %v3028 = vpop.permute.xlu0 %3027
    %3029 = vrot.lane.b32.xlu0 %v3017, 95
    %v3030 = vpop.permute.xlu0 %3029
    %3031 = vrot.lane.b32.xlu0 %v3018, 95
    %v3032 = vpop.permute.xlu0 %3031
    %3033 = vrot.lane.b32.xlu0 %v3019, 95
    %v3034 = vpop.permute.xlu0 %3033
    %v3035 = vsel %vm830, %v3026, %v3028
    %v3036 = vsel %vm830, %v3028, %v3030
    %v3037 = vsel %vm830, %v3030, %v3032
    %v3038 = vsel %vm830, %v3032, %v3034
    %v3043 = vadd.f32 %v3011, %v3035
    %v3044 = vadd.f32 %v3012, %v3036
    %v3045 = vadd.f32 %v3013, %v3037
    %v3046 = vadd.f32 %v3014, %v3038
    %v3047 = vmul.f32 %v2817, %v615
    %v3048 = vmul.f32 %v2809, %v623
    %v3049 = vmul.f32 %v2810, %v624
    %v3050 = vmul.f32 %v2811, %v625
    %v3051 = vmul.f32 %v2818, %v621
    %3057 = vrot.lane.b32.xlu0 %v3047, 94
    %v3058 = vpop.permute.xlu0 %3057
    %3059 = vrot.lane.b32.xlu0 %v3048, 94
    %v3060 = vpop.permute.xlu0 %3059
    %3061 = vrot.lane.b32.xlu0 %v3049, 94
    %v3062 = vpop.permute.xlu0 %3061
    %3063 = vrot.lane.b32.xlu0 %v3050, 94
    %v3064 = vpop.permute.xlu0 %3063
    %3065 = vrot.lane.b32.xlu0 %v3051, 94
    %v3066 = vpop.permute.xlu0 %3065
    %v3067 = vsel %vm854, %v3058, %v3060
    %v3068 = vsel %vm854, %v3060, %v3062
    %v3069 = vsel %vm854, %v3062, %v3064
    %v3070 = vsel %vm854, %v3064, %v3066
    %v3075 = vadd.f32 %v3043, %v3067
    %v3076 = vadd.f32 %v3044, %v3068
    %v3077 = vadd.f32 %v3045, %v3069
    %v3078 = vadd.f32 %v3046, %v3070
    %v3079 = vrot.slane %v2823, 4
    %v3080 = vrot.slane %v2824, 4
    %v3081 = vrot.slane %v2825, 4
    %v3082 = vrot.slane %v2826, 4
    %v3083 = vrot.slane %v2827, 4
    %3084 = vrot.lane.b32.xlu0 %v3079, 127
    %v3085 = vpop.permute.xlu0 %3084
    %3086 = vrot.lane.b32.xlu0 %v3080, 127
    %v3087 = vpop.permute.xlu0 %3086
    %3088 = vrot.lane.b32.xlu0 %v3081, 127
    %v3089 = vpop.permute.xlu0 %3088
    %3090 = vrot.lane.b32.xlu0 %v3082, 127
    %v3091 = vpop.permute.xlu0 %3090
    %3092 = vrot.lane.b32.xlu0 %v3083, 127
    %v3093 = vpop.permute.xlu0 %3092
    %v3094 = vsel %vm656, %v3085, %v3087
    %v3095 = vsel %vm656, %v3087, %v3089
    %v3096 = vsel %vm656, %v3089, %v3091
    %v3097 = vsel %vm656, %v3091, %v3093
    %v3102 = vrot.slane %v2887, 4
    %v3103 = vrot.slane %v2888, 4
    %v3104 = vrot.slane %v2889, 4
    %v3105 = vrot.slane %v2890, 4
    %v3106 = vrot.slane %v2891, 4
    %3107 = vrot.lane.b32.xlu0 %v3102, 112
    %v3108 = vpop.permute.xlu0 %3107
    %3109 = vrot.lane.b32.xlu0 %v3103, 112
    %v3110 = vpop.permute.xlu0 %3109
    %3111 = vrot.lane.b32.xlu0 %v3104, 112
    %v3112 = vpop.permute.xlu0 %3111
    %3113 = vrot.lane.b32.xlu0 %v3105, 112
    %v3114 = vpop.permute.xlu0 %3113
    %3115 = vrot.lane.b32.xlu0 %v3106, 112
    %v3116 = vpop.permute.xlu0 %3115
    %v3117 = vsel %vm714, %v3108, %v3110
    %v3118 = vsel %vm714, %v3110, %v3112
    %v3119 = vsel %vm714, %v3112, %v3114
    %v3120 = vsel %vm714, %v3114, %v3116
    %v3125 = vrot.slane %v2951, 4
    %v3126 = vrot.slane %v2952, 4
    %v3127 = vrot.slane %v2953, 4
    %v3128 = vrot.slane %v2954, 4
    %v3129 = vrot.slane %v2955, 4
    %3130 = vrot.lane.b32.xlu0 %v3125, 110
    %v3131 = vpop.permute.xlu0 %3130
    %3132 = vrot.lane.b32.xlu0 %v3126, 110
    %v3133 = vpop.permute.xlu0 %3132
    %3134 = vrot.lane.b32.xlu0 %v3127, 110
    %v3135 = vpop.permute.xlu0 %3134
    %3136 = vrot.lane.b32.xlu0 %v3128, 110
    %v3137 = vpop.permute.xlu0 %3136
    %3138 = vrot.lane.b32.xlu0 %v3129, 110
    %v3139 = vpop.permute.xlu0 %3138
    %v3140 = vsel %vm772, %v3131, %v3133
    %v3141 = vsel %vm772, %v3133, %v3135
    %v3142 = vsel %vm772, %v3135, %v3137
    %v3143 = vsel %vm772, %v3137, %v3139
    %v3148 = vrot.slane %v3015, 4
    %v3149 = vrot.slane %v3016, 4
    %v3150 = vrot.slane %v3017, 4
    %v3151 = vrot.slane %v3018, 4
    %v3152 = vrot.slane %v3019, 4
    %3153 = vrot.lane.b32.xlu0 %v3148, 95
    %v3154 = vpop.permute.xlu0 %3153
    %3155 = vrot.lane.b32.xlu0 %v3149, 95
    %v3156 = vpop.permute.xlu0 %3155
    %3157 = vrot.lane.b32.xlu0 %v3150, 95
    %v3158 = vpop.permute.xlu0 %3157
    %3159 = vrot.lane.b32.xlu0 %v3151, 95
    %v3160 = vpop.permute.xlu0 %3159
    %3161 = vrot.lane.b32.xlu0 %v3152, 95
    %v3162 = vpop.permute.xlu0 %3161
    %v3163 = vsel %vm830, %v3154, %v3156
    %v3164 = vsel %vm830, %v3156, %v3158
    %v3165 = vsel %vm830, %v3158, %v3160
    %v3166 = vsel %vm830, %v3160, %v3162
    %v3171 = vsel %vm874, %v2819, %v3094
    %v3172 = vsel %vm874, %v2820, %v3095
    %v3173 = vsel %vm874, %v2821, %v3096
    %v3174 = vsel %vm874, %v2822, %v3097
    %v3175 = vsel %vm874, %v2875, %v3117
    %v3176 = vsel %vm874, %v2876, %v3118
    %v3177 = vsel %vm874, %v2877, %v3119
    %v3178 = vsel %vm874, %v2878, %v3120
    %v3179 = vsel %vm874, %v2939, %v3140
    %v3180 = vsel %vm874, %v2940, %v3141
    %v3181 = vsel %vm874, %v2941, %v3142
    %v3182 = vsel %vm874, %v2942, %v3143
    %v3183 = vsel %vm874, %v3003, %v3163
    %v3184 = vsel %vm874, %v3004, %v3164
    %v3185 = vsel %vm874, %v3005, %v3165
    %v3186 = vsel %vm874, %v3006, %v3166
    %v3187 = vmul.f32 %v3075, %v1499
    %v3188 = vmul.f32 %v3076, %v1503
    %v3189 = vmul.f32 %v3077, %v1507
    %v3190 = vmul.f32 %v3078, %v1511
    %v3191 = vld [vmem:[%s35] sm:$0xff]
    %v3192 = vmax.f32 %v3171, 0.0
    %v3193 = vmax.f32 %v3172, 0.0
    %v3194 = vmax.f32 %v3173, 0.0
    %v3195 = vmax.f32 %v3174, 0.0
    %v3196 = vmax.f32 %v3175, 0.0
    %v3197 = vmax.f32 %v3176, 0.0
    %v3198 = vmax.f32 %v3177, 0.0
    %v3199 = vmax.f32 %v3178, 0.0
    %v3200 = vmax.f32 %v3179, 0.0
    %v3201 = vmax.f32 %v3180, 0.0
    %v3202 = vmax.f32 %v3181, 0.0
    %v3203 = vmax.f32 %v3182, 0.0
    %v3204 = vmax.f32 %v3183, 0.0
    %v3205 = vmax.f32 %v3184, 0.0
    %v3206 = vmax.f32 %v3185, 0.0
    %v3207 = vmax.f32 %v3186, 0.0
    %v3208 = vmax.f32 %v3067, 0.0
    %v3209 = vmax.f32 %v3068, 0.0
    %v3210 = vmax.f32 %v3069, 0.0
    %v3211 = vmax.f32 %v3070, 0.0
    %v3213 = vsel %vm1543, %v3191, 0
    %v3216 = vsel %vm874, %v3208, 0
    %v3219 = vsel %vm874, %v3209, 0
    %v3222 = vsel %vm874, %v3210, 0
    %v3225 = vsel %vm874, %v3211, 0
    %3227 = vmatprep.subr.mxu0 %v3193
    %3228 = vmatpush1.msra.mxu0 %v3192
    %3229 = vmatprep.subr.mxu0 %v3197
    %3230 = vmatpush1.msra.mxu0 %v3196
    %3231 = vmatprep.subr.mxu0 %v3201
    %3232 = vmatpush1.msra.mxu0 %v3200
    %3233 = vmatprep.subr.mxu0 %v3205
    %3234 = vmatpush1.msra.mxu0 %v3204
    %3235 = vmatprep.subr.mxu0 %v3219
    %3236 = vmatpush1.msra.mxu0 %v3216
    %3237 = vmatprep.subr.mxu0 0.0
    %3238 = vmatpush1.msra.mxu0 0.0
    %3239 = vmatprep.subr.mxu0 0.0
    %3240 = vmatpush1.msra.mxu0 0.0
    %3241 = vmatprep.subr.mxu0 0.0
    %3242 = vmatpush1.msra.mxu0 0.0
    %3243 = vmatprep.subr.mxu0 0.0
    %3244 = vmatpush1.msra.mxu0 0.0
    %3245 = vmatprep.subr.mxu0 0.0
    %3246 = vmatpush1.msra.mxu0 0.0
    %3247 = vmatprep.subr.mxu0 0.0
    %3248 = vmatpush1.msra.mxu0 0.0
    %3249 = vmatprep.subr.mxu0 0.0
    %3250 = vmatpush1.msra.mxu0 0.0
    %3251 = vmatprep.subr.mxu0 0.0
    %3252 = vmatpush1.msra.mxu0 0.0
    %3253 = vmatprep.subr.mxu0 0.0
    %3254 = vmatpush1.msra.mxu0 0.0
    %3255 = vmatprep.subr.mxu0 0.0
    %3256 = vmatpush1.msra.mxu0 0.0
    %3257 = vmatprep.subr.mxu0 0.0
    %3258 = vmatpush1.msra.mxu0 0.0
    %3259 = vmatprep.subr.mxu0 0.0
    %3260 = vmatpush1.msra.mxu0 0.0
    %3261 = vmatprep.subr.mxu0 0.0
    %3262 = vmatpush1.msra.mxu0 0.0
    %3263 = vmatprep.subr.mxu0 0.0
    %3264 = vmatpush1.msra.mxu0 0.0
    %3265 = vmatprep.subr.mxu0 0.0
    %3266 = vmatpush1.msra.mxu0 0.0
    %3267 = vmatprep.subr.mxu0 0.0
    %3268 = vmatpush1.msra.mxu0 0.0
    %3269 = vmatprep.subr.mxu0 0.0
    %3270 = vmatpush1.msra.mxu0 0.0
    %3271 = vmatprep.subr.mxu0 0.0
    %3272 = vmatpush1.msra.mxu0 0.0
    %3273 = vmatprep.subr.mxu0 0.0
    %3274 = vmatpush1.msra.mxu0 0.0
    %3275 = vmatprep.subr.mxu0 0.0
    %3276 = vmatpush1.msra.mxu0 0.0
    %3277 = vmatprep.subr.mxu0 0.0
    %3278 = vmatpush1.msra.mxu0 0.0
    %3279 = vmatprep.subr.mxu0 0.0
    %3280 = vmatpush1.msra.mxu0 0.0
    %3281 = vmatprep.subr.mxu0 0.0
    %3282 = vmatpush1.msra.mxu0 0.0
    %3283 = vmatprep.subr.mxu0 0.0
    %3284 = vmatpush1.msra.mxu0 0.0
    %3285 = vmatprep.subr.mxu0 0.0
    %3286 = vmatpush1.msra.mxu0 0.0
    %3287 = vmatprep.subr.mxu0 0.0
    %3288 = vmatpush1.msra.mxu0 0.0
    %3289 = vmatprep.subr.mxu0 0.0
    %3290 = vmatpush1.msra.mxu0 0.0
    %3291 = vmatprep.mubr.f32.mxu0 0.0
    %3292 = vmatmul.mubr.f32.gmra.mrb[0].mxu0 %v3213
    %v3293 = vpop.f32.mrb[0].mxu0
    %v3294 = vadd.f32 0.0, %v3293
    %v3295 = vpop.f32.mrb[0].mxu0
    %v3296 = vadd.f32 0.0, %v3295
    %3297 = vdwg.mxu0
    %3298 = vmatprep.subr.mxu0 %v3195
    %3299 = vmatpush1.msra.mxu0 %v3194
    %3300 = vmatprep.subr.mxu0 %v3199
    %3301 = vmatpush1.msra.mxu0 %v3198
    %3302 = vmatprep.subr.mxu0 %v3203
    %3303 = vmatpush1.msra.mxu0 %v3202
    %3304 = vmatprep.subr.mxu0 %v3207
    %3305 = vmatpush1.msra.mxu0 %v3206
    %3306 = vmatprep.subr.mxu0 %v3225
    %3307 = vmatpush1.msra.mxu0 %v3222
    %3308 = vmatprep.subr.mxu0 0.0
    %3309 = vmatpush1.msra.mxu0 0.0
    %3310 = vmatprep.subr.mxu0 0.0
    %3311 = vmatpush1.msra.mxu0 0.0
    %3312 = vmatprep.subr.mxu0 0.0
    %3313 = vmatpush1.msra.mxu0 0.0
    %3314 = vmatprep.subr.mxu0 0.0
    %3315 = vmatpush1.msra.mxu0 0.0
    %3316 = vmatprep.subr.mxu0 0.0
    %3317 = vmatpush1.msra.mxu0 0.0
    %3318 = vmatprep.subr.mxu0 0.0
    %3319 = vmatpush1.msra.mxu0 0.0
    %3320 = vmatprep.subr.mxu0 0.0
    %3321 = vmatpush1.msra.mxu0 0.0
    %3322 = vmatprep.subr.mxu0 0.0
    %3323 = vmatpush1.msra.mxu0 0.0
    %3324 = vmatprep.subr.mxu0 0.0
    %3325 = vmatpush1.msra.mxu0 0.0
    %3326 = vmatprep.subr.mxu0 0.0
    %3327 = vmatpush1.msra.mxu0 0.0
    %3328 = vmatprep.subr.mxu0 0.0
    %3329 = vmatpush1.msra.mxu0 0.0
    %3330 = vmatprep.subr.mxu0 0.0
    %3331 = vmatpush1.msra.mxu0 0.0
    %3332 = vmatprep.subr.mxu0 0.0
    %3333 = vmatpush1.msra.mxu0 0.0
    %3334 = vmatprep.subr.mxu0 0.0
    %3335 = vmatpush1.msra.mxu0 0.0
    %3336 = vmatprep.subr.mxu0 0.0
    %3337 = vmatpush1.msra.mxu0 0.0
    %3338 = vmatprep.subr.mxu0 0.0
    %3339 = vmatpush1.msra.mxu0 0.0
    %3340 = vmatprep.subr.mxu0 0.0
    %3341 = vmatpush1.msra.mxu0 0.0
    %3342 = vmatprep.subr.mxu0 0.0
    %3343 = vmatpush1.msra.mxu0 0.0
    %3344 = vmatprep.subr.mxu0 0.0
    %3345 = vmatpush1.msra.mxu0 0.0
    %3346 = vmatprep.subr.mxu0 0.0
    %3347 = vmatpush1.msra.mxu0 0.0
    %3348 = vmatprep.subr.mxu0 0.0
    %3349 = vmatpush1.msra.mxu0 0.0
    %3350 = vmatprep.subr.mxu0 0.0
    %3351 = vmatpush1.msra.mxu0 0.0
    %3352 = vmatprep.subr.mxu0 0.0
    %3353 = vmatpush1.msra.mxu0 0.0
    %3354 = vmatprep.subr.mxu0 0.0
    %3355 = vmatpush1.msra.mxu0 0.0
    %3356 = vmatprep.subr.mxu0 0.0
    %3357 = vmatpush1.msra.mxu0 0.0
    %3358 = vmatprep.subr.mxu0 0.0
    %3359 = vmatpush1.msra.mxu0 0.0
    %3360 = vmatprep.subr.mxu0 0.0
    %3361 = vmatpush1.msra.mxu0 0.0
    %3362 = vmatprep.mubr.f32.mxu0 0.0
    %3363 = vmatmul.mubr.f32.gmra.mrb[0].mxu0 %v3213
    %v3364 = vpop.f32.mrb[0].mxu0
    %v3365 = vadd.f32 0.0, %v3364
    %v3366 = vpop.f32.mrb[0].mxu0
    %v3367 = vadd.f32 0.0, %v3366
    %3368 = vdwg.mxu0
    %v3369 = vadd.f32 %v3294, %v3296
    %v3370 = vadd.f32 %v3369, %v3365
    %v3371 = vadd.f32 %v3370, %v3367
    %3372 = vadd.xlane.f32.xlu0 %v3371
    %v3373 = vpop.xlane.xlu0 %3372
    %v3374 = vmul.f32 %v3373, %v1058
    %v3375 = vsub.f32 %v3294, %v3374
    %v3376 = vsub.f32 %v3296, %v3374
    %v3377 = vsub.f32 %v3365, %v3374
    %v3378 = vsub.f32 %v3367, %v3374
    %v3379 = vmul.f32 %v3375, %v3375
    %v3380 = vmul.f32 %v3376, %v3376
    %v3381 = vmul.f32 %v3377, %v3377
    %v3382 = vmul.f32 %v3378, %v3378
    %v3383 = vadd.f32 %v3379, %v3380
    %v3384 = vadd.f32 %v3383, %v3381
    %v3385 = vadd.f32 %v3384, %v3382
    %3386 = vadd.xlane.f32.xlu0 %v3385
    %v3387 = vpop.xlane.xlu0 %3386
    %v3388 = vmul.f32 %v3387, %v1058
    %v3389 = vadd.f32 %v3388, 1e-05
    %v3390 = vrsqrt.pop %v3389
    %v3391 = vmul.f32 %v3375, %v3390
    %v3392 = vmul.f32 %v3376, %v3390
    %v3393 = vmul.f32 %v3377, %v3390
    %v3394 = vmul.f32 %v3378, %v3390
    %v3395 = vld [vmem:[%s37] sm:$0xff]
    %3397 = vset.pattern.permute.xlu0 0
    %3398 = vperm.xlu0 %3397, %v3395
    %v3399 = vpop.permute.xlu0 %3398
    %v3401 = vmul.f32 %v3391, %v3399
    %v3402 = vmul.f32 %v3392, %v3399
    %v3403 = vmul.f32 %v3393, %v3399
    %v3404 = vmul.f32 %v3394, %v3399
    %v3405 = vld [vmem:[%s39] sm:$0xff]
    %3407 = vset.pattern.permute.xlu0 0
    %3408 = vperm.xlu0 %3407, %v3405
    %v3409 = vpop.permute.xlu0 %3408
    %v3411 = vadd.f32 %v3401, %v3409
    %v3412 = vadd.f32 %v3402, %v3409
    %v3413 = vadd.f32 %v3403, %v3409
    %v3414 = vadd.f32 %v3404, %v3409
    %s3415 = sld [smem:[#allocation2 + $0x281]]
    %v3416 = vstv %s3415
    %v3417 = vmul.f32 %v3416, %v2729
    %v3418 = vmul.f32 %v3416, %v2730
    %v3419 = vmul.f32 %v3416, %v2731
    %v3420 = vmul.f32 %v3416, %v2732
    %s3421 = sld [smem:[#allocation2 + $0x283]]
    %v3422 = vstv %s3421
    %v3423 = vmul.f32 %v3422, %v3411
    %v3424 = vmul.f32 %v3422, %v3412
    %v3425 = vmul.f32 %v3422, %v3413
    %v3426 = vmul.f32 %v3422, %v3414
    %v3427 = vadd.f32 %v3417, %v3423
    %v3428 = vadd.f32 %v3418, %v3424
    %v3429 = vadd.f32 %v3419, %v3425
    %v3430 = vadd.f32 %v3420, %v3426
    %s3431 = sld [smem:[#allocation2 + $0x282]]
    %v3432 = vstv %s3431
    %v3433 = vmul.f32 %v3432, %v3411
    %v3434 = vmul.f32 %v3432, %v3412
    %v3435 = vmul.f32 %v3432, %v3413
    %v3436 = vmul.f32 %v3432, %v3414
    %v3441 = vrot.slane %v3433, 4
    %v3442 = vrot.slane %v3434, 4
    %v3443 = vrot.slane %v3435, 4
    %v3444 = vrot.slane %v3436, 4
    %v3449 = vadd.f32 %v3427, %v3441
    %v3450 = vadd.f32 %v3428, %v3442
    %v3451 = vadd.f32 %v3429, %v3443
    %v3452 = vadd.f32 %v3430, %v3444
    %s3453 = sld [smem:[#allocation2 + $0x284]]
    %v3454 = vstv %s3453
    %v3455 = vmul.f32 %v3454, %v3187
    %v3456 = vmul.f32 %v3454, %v3188
    %v3457 = vmul.f32 %v3454, %v3189
    %v3458 = vmul.f32 %v3454, %v3190
    %v3459 = vadd.f32 %v3449, %v3455
    %v3460 = vadd.f32 %v3450, %v3456
    %v3461 = vadd.f32 %v3451, %v3457
    %v3462 = vadd.f32 %v3452, %v3458
    %v3463 = vadd.f32 %v2793, %v3459
    %v3464 = vadd.f32 %v2794, %v3460
    %v3465 = vadd.f32 %v2795, %v3461
    %v3466 = vadd.f32 %v2796, %v3462
    %3471 = vrot.lane.b32.xlu0 %v3463, 17
    %v3472 = vpop.permute.xlu0 %3471
    %3473 = vrot.lane.b32.xlu0 %v3464, 17
    %v3474 = vpop.permute.xlu0 %3473
    %3475 = vrot.lane.b32.xlu0 %v3465, 17
    %v3476 = vpop.permute.xlu0 %3475
    %3477 = vrot.lane.b32.xlu0 %v3466, 17
    %v3478 = vpop.permute.xlu0 %3477
    %v3479 = vsel %vm272, %v3472, %v3474
    %v3480 = vsel %vm272, %v3474, %v3476
    %v3481 = vsel %vm272, %v3476, %v3478
    %v3487 = vsel %vm272, 0.0, %v3472
    %v3488 = vsel %vm272, %v3478, 0.0
    %v3489 = vmul.f32 %v3487, %v288
    %v3490 = vmul.f32 %v3479, %v292
    %v3491 = vmul.f32 %v3480, %v296
    %v3492 = vmul.f32 %v3481, %v300
    %v3493 = vmul.f32 %v3487, %v329
    %v3494 = vmul.f32 %v3479, %v337
    %v3495 = vmul.f32 %v3480, %v338
    %v3496 = vmul.f32 %v3481, %v339
    %v3497 = vmul.f32 %v3488, %v335
    %v3498 = vmul.f32 %v3487, %v370
    %v3499 = vmul.f32 %v3479, %v378
    %v3500 = vmul.f32 %v3480, %v379
    %v3501 = vmul.f32 %v3481, %v380
    %v3502 = vmul.f32 %v3488, %v376
    %v3503 = vmul.f32 %v3487, %v411
    %v3504 = vmul.f32 %v3479, %v419
    %v3505 = vmul.f32 %v3480, %v420
    %v3506 = vmul.f32 %v3481, %v421
    %v3507 = vmul.f32 %v3488, %v417
    %v3508 = vmul.f32 %v3487, %v452
    %v3509 = vmul.f32 %v3479, %v459
    %v3510 = vmul.f32 %v3480, %v460
    %v3511 = vmul.f32 %v3481, %v461
    %v3512 = vmul.f32 %v3488, %v458
    %v3513 = vmul.f32 %v3487, %v492
    %v3514 = vmul.f32 %v3479, %v500
    %v3515 = vmul.f32 %v3480, %v501
    %v3516 = vmul.f32 %v3481, %v502
    %v3517 = vmul.f32 %v3488, %v498
    %v3518 = vmul.f32 %v3487, %v533
    %v3519 = vmul.f32 %v3479, %v541
    %v3520 = vmul.f32 %v3480, %v542
    %v3521 = vmul.f32 %v3481, %v543
    %v3522 = vmul.f32 %v3488, %v539
    %v3523 = vmul.f32 %v3487, %v574
    %v3524 = vmul.f32 %v3479, %v582
    %v3525 = vmul.f32 %v3480, %v583
    %v3526 = vmul.f32 %v3481, %v584
    %v3527 = vmul.f32 %v3488, %v580
    %v3528 = vmul.f32 %v3487, %v615
    %v3529 = vmul.f32 %v3479, %v623
    %v3530 = vmul.f32 %v3480, %v624
    %v3531 = vmul.f32 %v3481, %v625
    %v3532 = vmul.f32 %v3488, %v621
    %v3538 = vrot.slane %v3493, 4
    %v3539 = vrot.slane %v3494, 4
    %v3540 = vrot.slane %v3495, 4
    %v3541 = vrot.slane %v3496, 4
    %v3542 = vrot.slane %v3497, 4
    %3543 = vrot.lane.b32.xlu0 %v3538, 127
    %v3544 = vpop.permute.xlu0 %3543
    %3545 = vrot.lane.b32.xlu0 %v3539, 127
    %v3546 = vpop.permute.xlu0 %3545
    %3547 = vrot.lane.b32.xlu0 %v3540, 127
    %v3548 = vpop.permute.xlu0 %3547
    %3549 = vrot.lane.b32.xlu0 %v3541, 127
    %v3550 = vpop.permute.xlu0 %3549
    %3551 = vrot.lane.b32.xlu0 %v3542, 127
    %v3552 = vpop.permute.xlu0 %3551
    %v3553 = vsel %vm656, %v3544, %v3546
    %v3554 = vsel %vm656, %v3546, %v3548
    %v3555 = vsel %vm656, %v3548, %v3550
    %v3556 = vsel %vm656, %v3550, %v3552
    %3566 = vrot.lane.b32.xlu0 %v3498, 126
    %v3567 = vpop.permute.xlu0 %3566
    %3568 = vrot.lane.b32.xlu0 %v3499, 126
    %v3569 = vpop.permute.xlu0 %3568
    %3570 = vrot.lane.b32.xlu0 %v3500, 126
    %v3571 = vpop.permute.xlu0 %3570
    %3572 = vrot.lane.b32.xlu0 %v3501, 126
    %v3573 = vpop.permute.xlu0 %3572
    %3574 = vrot.lane.b32.xlu0 %v3502, 126
    %v3575 = vpop.permute.xlu0 %3574
    %v3576 = vsel %vm685, %v3567, %v3569
    %v3577 = vsel %vm685, %v3569, %v3571
    %v3578 = vsel %vm685, %v3571, %v3573
    %v3579 = vsel %vm685, %v3573, %v3575
    %v3589 = vrot.slane %v3503, 4
    %v3590 = vrot.slane %v3504, 4
    %v3591 = vrot.slane %v3505, 4
    %v3592 = vrot.slane %v3506, 4
    %v3593 = vrot.slane %v3507, 4
    %3594 = vrot.lane.b32.xlu0 %v3589, 112
    %v3595 = vpop.permute.xlu0 %3594
    %3596 = vrot.lane.b32.xlu0 %v3590, 112
    %v3597 = vpop.permute.xlu0 %3596
    %3598 = vrot.lane.b32.xlu0 %v3591, 112
    %v3599 = vpop.permute.xlu0 %3598
    %3600 = vrot.lane.b32.xlu0 %v3592, 112
    %v3601 = vpop.permute.xlu0 %3600
    %3602 = vrot.lane.b32.xlu0 %v3593, 112
    %v3603 = vpop.permute.xlu0 %3602
    %v3604 = vsel %vm714, %v3595, %v3597
    %v3605 = vsel %vm714, %v3597, %v3599
    %v3606 = vsel %vm714, %v3599, %v3601
    %v3607 = vsel %vm714, %v3601, %v3603
    %3617 = vrot.lane.b32.xlu0 %v3508, 111
    %v3618 = vpop.permute.xlu0 %3617
    %3619 = vrot.lane.b32.xlu0 %v3509, 111
    %v3620 = vpop.permute.xlu0 %3619
    %3621 = vrot.lane.b32.xlu0 %v3510, 111
    %v3622 = vpop.permute.xlu0 %3621
    %3623 = vrot.lane.b32.xlu0 %v3511, 111
    %v3624 = vpop.permute.xlu0 %3623
    %3625 = vrot.lane.b32.xlu0 %v3512, 111
    %v3626 = vpop.permute.xlu0 %3625
    %v3627 = vsel %vm743, %v3618, %v3620
    %v3628 = vsel %vm743, %v3620, %v3622
    %v3629 = vsel %vm743, %v3622, %v3624
    %v3630 = vsel %vm743, %v3624, %v3626
    %v3640 = vrot.slane %v3513, 4
    %v3641 = vrot.slane %v3514, 4
    %v3642 = vrot.slane %v3515, 4
    %v3643 = vrot.slane %v3516, 4
    %v3644 = vrot.slane %v3517, 4
    %3645 = vrot.lane.b32.xlu0 %v3640, 110
    %v3646 = vpop.permute.xlu0 %3645
    %3647 = vrot.lane.b32.xlu0 %v3641, 110
    %v3648 = vpop.permute.xlu0 %3647
    %3649 = vrot.lane.b32.xlu0 %v3642, 110
    %v3650 = vpop.permute.xlu0 %3649
    %3651 = vrot.lane.b32.xlu0 %v3643, 110
    %v3652 = vpop.permute.xlu0 %3651
    %3653 = vrot.lane.b32.xlu0 %v3644, 110
    %v3654 = vpop.permute.xlu0 %3653
    %v3655 = vsel %vm772, %v3646, %v3648
    %v3656 = vsel %vm772, %v3648, %v3650
    %v3657 = vsel %vm772, %v3650, %v3652
    %v3658 = vsel %vm772, %v3652, %v3654
    %3668 = vrot.lane.b32.xlu0 %v3518, 96
    %v3669 = vpop.permute.xlu0 %3668
    %3670 = vrot.lane.b32.xlu0 %v3519, 96
    %v3671 = vpop.permute.xlu0 %3670
    %3672 = vrot.lane.b32.xlu0 %v3520, 96
    %v3673 = vpop.permute.xlu0 %3672
    %3674 = vrot.lane.b32.xlu0 %v3521, 96
    %v3675 = vpop.permute.xlu0 %3674
    %3676 = vrot.lane.b32.xlu0 %v3522, 96
    %v3677 = vpop.permute.xlu0 %3676
    %v3678 = vsel %vm801, %v3669, %v3671
    %v3679 = vsel %vm801, %v3671, %v3673
    %v3680 = vsel %vm801, %v3673, %v3675
    %v3681 = vsel %vm801, %v3675, %v3677
    %v3691 = vrot.slane %v3523, 4
    %v3692 = vrot.slane %v3524, 4
    %v3693 = vrot.slane %v3525, 4
    %v3694 = vrot.slane %v3526, 4
    %v3695 = vrot.slane %v3527, 4
    %3696 = vrot.lane.b32.xlu0 %v3691, 95
    %v3697 = vpop.permute.xlu0 %3696
    %3698 = vrot.lane.b32.xlu0 %v3692, 95
    %v3699 = vpop.permute.xlu0 %3698
    %3700 = vrot.lane.b32.xlu0 %v3693, 95
    %v3701 = vpop.permute.xlu0 %3700
    %3702 = vrot.lane.b32.xlu0 %v3694, 95
    %v3703 = vpop.permute.xlu0 %3702
    %3704 = vrot.lane.b32.xlu0 %v3695, 95
    %v3705 = vpop.permute.xlu0 %3704
    %v3706 = vsel %vm830, %v3697, %v3699
    %v3707 = vsel %vm830, %v3699, %v3701
    %v3708 = vsel %vm830, %v3701, %v3703
    %v3709 = vsel %vm830, %v3703, %v3705
    %3719 = vrot.lane.b32.xlu0 %v3528, 94
    %v3720 = vpop.permute.xlu0 %3719
    %3721 = vrot.lane.b32.xlu0 %v3529, 94
    %v3722 = vpop.permute.xlu0 %3721
    %3723 = vrot.lane.b32.xlu0 %v3530, 94
    %v3724 = vpop.permute.xlu0 %3723
    %3725 = vrot.lane.b32.xlu0 %v3531, 94
    %v3726 = vpop.permute.xlu0 %3725
    %3727 = vrot.lane.b32.xlu0 %v3532, 94
    %v3728 = vpop.permute.xlu0 %3727
    %v3729 = vsel %vm854, %v3720, %v3722
    %v3730 = vsel %vm854, %v3722, %v3724
    %v3731 = vsel %vm854, %v3724, %v3726
    %v3732 = vsel %vm854, %v3726, %v3728
    %v3737 = vsel %vm874, %v3489, %v3553
    %v3738 = vsel %vm874, %v3490, %v3554
    %v3739 = vsel %vm874, %v3491, %v3555
    %v3740 = vsel %vm874, %v3492, %v3556
    %v3741 = vsel %vm874, %v3576, %v3604
    %v3742 = vsel %vm874, %v3577, %v3605
    %v3743 = vsel %vm874, %v3578, %v3606
    %v3744 = vsel %vm874, %v3579, %v3607
    %v3745 = vsel %vm874, %v3627, %v3655
    %v3746 = vsel %vm874, %v3628, %v3656
    %v3747 = vsel %vm874, %v3629, %v3657
    %v3748 = vsel %vm874, %v3630, %v3658
    %v3749 = vsel %vm874, %v3678, %v3706
    %v3750 = vsel %vm874, %v3679, %v3707
    %v3751 = vsel %vm874, %v3680, %v3708
    %v3752 = vsel %vm874, %v3681, %v3709
    %v3753 = vld [vmem:[%s41] sm:$0xff]
    %v3754 = vld [vmem:[%s41 + $0x8] sm:$0xff]
    %v3755 = vld [vmem:[%s41 + $0x10] sm:$0xff]
    %v3756 = vld [vmem:[%s41 + $0x18] sm:$0xff]
    %v3757 = vld [vmem:[%s41 + $0x20] sm:$0xff]
    %v3758 = vld [vmem:[%s41 + $0x28] sm:$0xff]
    %v3759 = vld [vmem:[%s41 + $0x30] sm:$0xff]
    %v3760 = vld [vmem:[%s41 + $0x38] sm:$0xff]
    %v3761 = vld [vmem:[%s41 + $0x40] sm:$0xff]
    %v3762 = vld [vmem:[%s41 + $0x48] sm:$0xff]
    %v3763 = vld [vmem:[%s41 + $0x50] sm:$0xff]
    %v3764 = vld [vmem:[%s41 + $0x58] sm:$0xff]
    %v3765 = vld [vmem:[%s41 + $0x60] sm:$0xff]
    %v3766 = vld [vmem:[%s41 + $0x68] sm:$0xff]
    %v3767 = vld [vmem:[%s41 + $0x70] sm:$0xff]
    %v3768 = vld [vmem:[%s41 + $0x78] sm:$0xff]
    %v3769 = vld [vmem:[%s41 + $0x80] sm:$0xff]
    %v3770 = vld [vmem:[%s41 + $0x88] sm:$0xff]
    %v3771 = vld [vmem:[%s41 + $0x90] sm:$0xff]
    %v3772 = vld [vmem:[%s41 + $0x98] sm:$0xff]
    %v3773 = vld [vmem:[%s41 + $0xa0] sm:$0xff]
    %v3774 = vld [vmem:[%s41 + $0xa8] sm:$0xff]
    %v3775 = vld [vmem:[%s41 + $0xb0] sm:$0xff]
    %v3776 = vld [vmem:[%s41 + $0xb8] sm:$0xff]
    %v3777 = vld [vmem:[%s41 + $0xc0] sm:$0xff]
    %v3778 = vld [vmem:[%s41 + $0xc8] sm:$0xff]
    %v3779 = vld [vmem:[%s41 + $0xd0] sm:$0xff]
    %v3780 = vld [vmem:[%s41 + $0xd8] sm:$0xff]
    %v3781 = vld [vmem:[%s41 + $0xe0] sm:$0xff]
    %v3782 = vld [vmem:[%s41 + $0xe8] sm:$0xff]
    %v3783 = vld [vmem:[%s41 + $0xf0] sm:$0xff]
    %v3784 = vld [vmem:[%s41 + $0xf8] sm:$0xff]
    %v3785 = vld [vmem:[%s41 + $0x100] sm:$0xff]
    %v3786 = vld [vmem:[%s41 + $0x108] sm:$0xff]
    %v3787 = vld [vmem:[%s41 + $0x110] sm:$0xff]
    %v3788 = vld [vmem:[%s41 + $0x118] sm:$0xff]
    %v3789 = vld [vmem:[%s41 + $0x120] sm:$0xff]
    %v3790 = vld [vmem:[%s41 + $0x128] sm:$0xff]
    %v3791 = vld [vmem:[%s41 + $0x130] sm:$0xff]
    %v3792 = vld [vmem:[%s41 + $0x138] sm:$0xff]
    %v3793 = vld [vmem:[%s41 + $0x140] sm:$0xff]
    %v3794 = vld [vmem:[%s41 + $0x148] sm:$0xff]
    %v3795 = vld [vmem:[%s41 + $0x150] sm:$0xff]
    %v3796 = vld [vmem:[%s41 + $0x158] sm:$0xff]
    %v3797 = vld [vmem:[%s41 + $0x160] sm:$0xff]
    %v3798 = vld [vmem:[%s41 + $0x168] sm:$0xff]
    %v3799 = vld [vmem:[%s41 + $0x170] sm:$0xff]
    %v3800 = vld [vmem:[%s41 + $0x178] sm:$0xff]
    %v3801 = vld [vmem:[%s41 + $0x180] sm:$0xff]
    %v3802 = vld [vmem:[%s41 + $0x188] sm:$0xff]
    %v3803 = vld [vmem:[%s41 + $0x190] sm:$0xff]
    %v3804 = vld [vmem:[%s41 + $0x198] sm:$0xff]
    %v3805 = vld [vmem:[%s41 + $0x1a0] sm:$0xff]
    %v3806 = vld [vmem:[%s41 + $0x1a8] sm:$0xff]
    %v3807 = vld [vmem:[%s41 + $0x1b0] sm:$0xff]
    %v3808 = vld [vmem:[%s41 + $0x1b8] sm:$0xff]
    %v3809 = vld [vmem:[%s41 + $0x1c0] sm:$0xff]
    %v3810 = vld [vmem:[%s41 + $0x1c8] sm:$0xff]
    %v3811 = vld [vmem:[%s41 + $0x1d0] sm:$0xff]
    %v3812 = vld [vmem:[%s41 + $0x1d8] sm:$0xff]
    %v3813 = vld [vmem:[%s41 + $0x1e0] sm:$0xff]
    %v3814 = vld [vmem:[%s41 + $0x1e8] sm:$0xff]
    %v3815 = vld [vmem:[%s41 + $0x1f0] sm:$0xff]
    %v3816 = vld [vmem:[%s41 + $0x1f8] sm:$0xff]
    %3817 = vmatprep.subr.mxu0 0.0
    %3818 = vmatpush1.msra.mxu0 %v3753
    %3819 = vmatprep.subr.mxu0 0.0
    %3820 = vmatpush1.msra.mxu0 %v3754
    %3821 = vmatprep.subr.mxu0 0.0
    %3822 = vmatpush1.msra.mxu0 %v3755
    %3823 = vmatprep.subr.mxu0 0.0
    %3824 = vmatpush1.msra.mxu0 %v3756
    %3825 = vmatprep.subr.mxu0 0.0
    %3826 = vmatpush1.msra.mxu0 %v3757
    %3827 = vmatprep.subr.mxu0 0.0
    %3828 = vmatpush1.msra.mxu0 %v3758
    %3829 = vmatprep.subr.mxu0 0.0
    %3830 = vmatpush1.msra.mxu0 %v3759
    %3831 = vmatprep.subr.mxu0 0.0
    %3832 = vmatpush1.msra.mxu0 %v3760
    %3833 = vmatprep.subr.mxu0 0.0
    %3834 = vmatpush1.msra.mxu0 %v3761
    %3835 = vmatprep.subr.mxu0 0.0
    %3836 = vmatpush1.msra.mxu0 %v3762
    %3837 = vmatprep.subr.mxu0 0.0
    %3838 = vmatpush1.msra.mxu0 %v3763
    %3839 = vmatprep.subr.mxu0 0.0
    %3840 = vmatpush1.msra.mxu0 %v3764
    %3841 = vmatprep.subr.mxu0 0.0
    %3842 = vmatpush1.msra.mxu0 %v3765
    %3843 = vmatprep.subr.mxu0 0.0
    %3844 = vmatpush1.msra.mxu0 %v3766
    %3845 = vmatprep.subr.mxu0 0.0
    %3846 = vmatpush1.msra.mxu0 %v3767
    %3847 = vmatprep.subr.mxu0 0.0
    %3848 = vmatpush1.msra.mxu0 %v3768
    %3849 = vmatprep.subr.mxu0 0.0
    %3850 = vmatpush1.msra.mxu0 %v3769
    %3851 = vmatprep.subr.mxu0 0.0
    %3852 = vmatpush1.msra.mxu0 %v3770
    %3853 = vmatprep.subr.mxu0 0.0
    %3854 = vmatpush1.msra.mxu0 %v3771
    %3855 = vmatprep.subr.mxu0 0.0
    %3856 = vmatpush1.msra.mxu0 %v3772
    %3857 = vmatprep.subr.mxu0 0.0
    %3858 = vmatpush1.msra.mxu0 %v3773
    %3859 = vmatprep.subr.mxu0 0.0
    %3860 = vmatpush1.msra.mxu0 %v3774
    %3861 = vmatprep.subr.mxu0 0.0
    %3862 = vmatpush1.msra.mxu0 %v3775
    %3863 = vmatprep.subr.mxu0 0.0
    %3864 = vmatpush1.msra.mxu0 %v3776
    %3865 = vmatprep.subr.mxu0 0.0
    %3866 = vmatpush1.msra.mxu0 %v3777
    %3867 = vmatprep.subr.mxu0 0.0
    %3868 = vmatpush1.msra.mxu0 %v3778
    %3869 = vmatprep.subr.mxu0 0.0
    %3870 = vmatpush1.msra.mxu0 %v3779
    %3871 = vmatprep.subr.mxu0 0.0
    %3872 = vmatpush1.msra.mxu0 %v3780
    %3873 = vmatprep.subr.mxu0 0.0
    %3874 = vmatpush1.msra.mxu0 %v3781
    %3875 = vmatprep.subr.mxu0 0.0
    %3876 = vmatpush1.msra.mxu0 %v3782
    %3877 = vmatprep.subr.mxu0 0.0
    %3878 = vmatpush1.msra.mxu0 %v3783
    %3879 = vmatprep.subr.mxu0 0.0
    %3880 = vmatpush1.msra.mxu0 %v3784
    %3881 = vmatprep.mubr.f32.mxu0 %v3738
    %3882 = vmatmul.mubr.f32.gmra.mrb[0].mxu0 %v3737
    %v3883 = vpop.f32.mrb[0].mxu0
    %v3884 = vadd.f32 0.0, %v3883
    %v3885 = vpop.f32.mrb[0].mxu0
    %3886 = vmatprep.mubr.f32.mxu0 %v3742
    %3887 = vmatmul.mubr.f32.gmra.mrb[0].mxu0 %v3741
    %v3888 = vpop.f32.mrb[0].mxu0
    %v3889 = vadd.f32 0.0, %v3888
    %v3890 = vpop.f32.mrb[0].mxu0
    %3891 = vmatprep.mubr.f32.mxu0 %v3746
    %3892 = vmatmul.mubr.f32.gmra.mrb[0].mxu0 %v3745
    %v3893 = vpop.f32.mrb[0].mxu0
    %v3894 = vadd.f32 0.0, %v3893
    %v3895 = vpop.f32.mrb[0].mxu0
    %3896 = vmatprep.mubr.f32.mxu0 %v3750
    %3897 = vmatmul.mubr.f32.gmra.mrb[0].mxu0 %v3749
    %v3898 = vpop.f32.mrb[0].mxu0
    %v3899 = vadd.f32 0.0, %v3898
    %v3900 = vpop.f32.mrb[0].mxu0
    %3901 = vmatprep.mubr.f32.mxu0 %v3730
    %3902 = vmatmul.mubr.f32.gmra.mrb[0].mxu0 %v3729
    %v3903 = vpop.f32.mrb[0].mxu0
    %v3904 = vadd.f32 0.0, %v3903
    %v3905 = vpop.f32.mrb[0].mxu0
    %3906 = vdwg.mxu0
    %3907 = vmatprep.subr.mxu0 0.0
    %3908 = vmatpush1.msra.mxu0 %v3785
    %3909 = vmatprep.subr.mxu0 0.0
    %3910 = vmatpush1.msra.mxu0 %v3786
    %3911 = vmatprep.subr.mxu0 0.0
    %3912 = vmatpush1.msra.mxu0 %v3787
    %3913 = vmatprep.subr.mxu0 0.0
    %3914 = vmatpush1.msra.mxu0 %v3788
    %3915 = vmatprep.subr.mxu0 0.0
    %3916 = vmatpush1.msra.mxu0 %v3789
    %3917 = vmatprep.subr.mxu0 0.0
    %3918 = vmatpush1.msra.mxu0 %v3790
    %3919 = vmatprep.subr.mxu0 0.0
    %3920 = vmatpush1.msra.mxu0 %v3791
    %3921 = vmatprep.subr.mxu0 0.0
    %3922 = vmatpush1.msra.mxu0 %v3792
    %3923 = vmatprep.subr.mxu0 0.0
    %3924 = vmatpush1.msra.mxu0 %v3793
    %3925 = vmatprep.subr.mxu0 0.0
    %3926 = vmatpush1.msra.mxu0 %v3794
    %3927 = vmatprep.subr.mxu0 0.0
    %3928 = vmatpush1.msra.mxu0 %v3795
    %3929 = vmatprep.subr.mxu0 0.0
    %3930 = vmatpush1.msra.mxu0 %v3796
    %3931 = vmatprep.subr.mxu0 0.0
    %3932 = vmatpush1.msra.mxu0 %v3797
    %3933 = vmatprep.subr.mxu0 0.0
    %3934 = vmatpush1.msra.mxu0 %v3798
    %3935 = vmatprep.subr.mxu0 0.0
    %3936 = vmatpush1.msra.mxu0 %v3799
    %3937 = vmatprep.subr.mxu0 0.0
    %3938 = vmatpush1.msra.mxu0 %v3800
    %3939 = vmatprep.subr.mxu0 0.0
    %3940 = vmatpush1.msra.mxu0 %v3801
    %3941 = vmatprep.subr.mxu0 0.0
    %3942 = vmatpush1.msra.mxu0 %v3802
    %3943 = vmatprep.subr.mxu0 0.0
    %3944 = vmatpush1.msra.mxu0 %v3803
    %3945 = vmatprep.subr.mxu0 0.0
    %3946 = vmatpush1.msra.mxu0 %v3804
    %3947 = vmatprep.subr.mxu0 0.0
    %3948 = vmatpush1.msra.mxu0 %v3805
    %3949 = vmatprep.subr.mxu0 0.0
    %3950 = vmatpush1.msra.mxu0 %v3806
    %3951 = vmatprep.subr.mxu0 0.0
    %3952 = vmatpush1.msra.mxu0 %v3807
    %3953 = vmatprep.subr.mxu0 0.0
    %3954 = vmatpush1.msra.mxu0 %v3808
    %3955 = vmatprep.subr.mxu0 0.0
    %3956 = vmatpush1.msra.mxu0 %v3809
    %3957 = vmatprep.subr.mxu0 0.0
    %3958 = vmatpush1.msra.mxu0 %v3810
    %3959 = vmatprep.subr.mxu0 0.0
    %3960 = vmatpush1.msra.mxu0 %v3811
    %3961 = vmatprep.subr.mxu0 0.0
    %3962 = vmatpush1.msra.mxu0 %v3812
    %3963 = vmatprep.subr.mxu0 0.0
    %3964 = vmatpush1.msra.mxu0 %v3813
    %3965 = vmatprep.subr.mxu0 0.0
    %3966 = vmatpush1.msra.mxu0 %v3814
    %3967 = vmatprep.subr.mxu0 0.0
    %3968 = vmatpush1.msra.mxu0 %v3815
    %3969 = vmatprep.subr.mxu0 0.0
    %3970 = vmatpush1.msra.mxu0 %v3816
    %3971 = vmatprep.mubr.f32.mxu0 %v3740
    %3972 = vmatmul.mubr.f32.gmra.mrb[0].mxu0 %v3739
    %v3973 = vpop.f32.mrb[0].mxu0
    %v3974 = vadd.f32 %v3884, %v3973
    %v3975 = vpop.f32.mrb[0].mxu0
    %3976 = vmatprep.mubr.f32.mxu0 %v3744
    %3977 = vmatmul.mubr.f32.gmra.mrb[0].mxu0 %v3743
    %v3978 = vpop.f32.mrb[0].mxu0
    %v3979 = vadd.f32 %v3889, %v3978
    %v3980 = vpop.f32.mrb[0].mxu0
    %3981 = vmatprep.mubr.f32.mxu0 %v3748
    %3982 = vmatmul.mubr.f32.gmra.mrb[0].mxu0 %v3747
    %v3983 = vpop.f32.mrb[0].mxu0
    %v3984 = vadd.f32 %v3894, %v3983
    %v3985 = vpop.f32.mrb[0].mxu0
    %3986 = vmatprep.mubr.f32.mxu0 %v3752
    %3987 = vmatmul.mubr.f32.gmra.mrb[0].mxu0 %v3751
    %v3988 = vpop.f32.mrb[0].mxu0
    %v3989 = vadd.f32 %v3899, %v3988
    %v3990 = vpop.f32.mrb[0].mxu0
    %3991 = vmatprep.mubr.f32.mxu0 %v3732
    %3992 = vmatmul.mubr.f32.gmra.mrb[0].mxu0 %v3731
    %v3993 = vpop.f32.mrb[0].mxu0
    %v3994 = vadd.f32 %v3904, %v3993
    %v3995 = vpop.f32.mrb[0].mxu0
    %3996 = vdwg.mxu0
    %v3997 = vld [vmem:[%s43] sm:$0xff]
    %v3998 = vmax.f32 %v3974, 0.0
    %v3999 = vmax.f32 %v3979, 0.0
    %v4000 = vmax.f32 %v3984, 0.0
    %v4001 = vmax.f32 %v3989, 0.0
    %v4002 = vmax.f32 %v3994, 0.0
    %v4004 = vsel %vm1543, %v3997, 0
    %v4007 = vsel %vm874, %v4002, 0
    %4009 = vmatprep.subr.mxu0 0.0
    %4010 = vmatpush1.msra.mxu0 %v3998
    %4011 = vmatprep.subr.mxu0 0.0
    %4012 = vmatpush1.msra.mxu0 %v3999
    %4013 = vmatprep.subr.mxu0 0.0
    %4014 = vmatpush1.msra.mxu0 %v4000
    %4015 = vmatprep.subr.mxu0 0.0
    %4016 = vmatpush1.msra.mxu0 %v4001
    %4017 = vmatprep.subr.mxu0 0.0
    %4018 = vmatpush1.msra.mxu0 %v4007
    %4019 = vmatprep.subr.mxu0 0.0
    %4020 = vmatpush1.msra.mxu0 0.0
    %4021 = vmatprep.subr.mxu0 0.0
    %4022 = vmatpush1.msra.mxu0 0.0
    %4023 = vmatprep.subr.mxu0 0.0
    %4024 = vmatpush1.msra.mxu0 0.0
    %4025 = vmatprep.subr.mxu0 0.0
    %4026 = vmatpush1.msra.mxu0 0.0
    %4027 = vmatprep.subr.mxu0 0.0
    %4028 = vmatpush1.msra.mxu0 0.0
    %4029 = vmatprep.subr.mxu0 0.0
    %4030 = vmatpush1.msra.mxu0 0.0
    %4031 = vmatprep.subr.mxu0 0.0
    %4032 = vmatpush1.msra.mxu0 0.0
    %4033 = vmatprep.subr.mxu0 0.0
    %4034 = vmatpush1.msra.mxu0 0.0
    %4035 = vmatprep.subr.mxu0 0.0
    %4036 = vmatpush1.msra.mxu0 0.0
    %4037 = vmatprep.subr.mxu0 0.0
    %4038 = vmatpush1.msra.mxu0 0.0
    %4039 = vmatprep.subr.mxu0 0.0
    %4040 = vmatpush1.msra.mxu0 0.0
    %4041 = vmatprep.subr.mxu0 0.0
    %4042 = vmatpush1.msra.mxu0 0.0
    %4043 = vmatprep.subr.mxu0 0.0
    %4044 = vmatpush1.msra.mxu0 0.0
    %4045 = vmatprep.subr.mxu0 0.0
    %4046 = vmatpush1.msra.mxu0 0.0
    %4047 = vmatprep.subr.mxu0 0.0
    %4048 = vmatpush1.msra.mxu0 0.0
    %4049 = vmatprep.subr.mxu0 0.0
    %4050 = vmatpush1.msra.mxu0 0.0
    %4051 = vmatprep.subr.mxu0 0.0
    %4052 = vmatpush1.msra.mxu0 0.0
    %4053 = vmatprep.subr.mxu0 0.0
    %4054 = vmatpush1.msra.mxu0 0.0
    %4055 = vmatprep.subr.mxu0 0.0
    %4056 = vmatpush1.msra.mxu0 0.0
    %4057 = vmatprep.subr.mxu0 0.0
    %4058 = vmatpush1.msra.mxu0 0.0
    %4059 = vmatprep.subr.mxu0 0.0
    %4060 = vmatpush1.msra.mxu0 0.0
    %4061 = vmatprep.subr.mxu0 0.0
    %4062 = vmatpush1.msra.mxu0 0.0
    %4063 = vmatprep.subr.mxu0 0.0
    %4064 = vmatpush1.msra.mxu0 0.0
    %4065 = vmatprep.subr.mxu0 0.0
    %4066 = vmatpush1.msra.mxu0 0.0
    %4067 = vmatprep.subr.mxu0 0.0
    %4068 = vmatpush1.msra.mxu0 0.0
    %4069 = vmatprep.subr.mxu0 0.0
    %4070 = vmatpush1.msra.mxu0 0.0
    %4071 = vmatprep.subr.mxu0 0.0
    %4072 = vmatpush1.msra.mxu0 0.0
    %4073 = vmatprep.mubr.f32.mxu0 0.0
    %4074 = vmatmul.mubr.f32.gmra.mrb[0].mxu0 %v4004
    %v4075 = vpop.f32.mrb[0].mxu0
    %v4076 = vadd.f32 0.0, %v4075
    %v4077 = vpop.f32.mrb[0].mxu0
    %4078 = vdwg.mxu0
    %4079 = vadd.xlane.f32.xlu0 %v4076
    %v4080 = vpop.xlane.xlu0 %4079
    %v4081 = vrcp.pop 128.0
    %v4082 = vmul.f32 %v4080, %v4081
    %v4083 = vsub.f32 %v4076, %v4082
    %v4084 = vmul.f32 %v4083, %v4083
    %4085 = vadd.xlane.f32.xlu0 %v4084
    %v4086 = vpop.xlane.xlu0 %4085
    %v4087 = vmul.f32 %v4086, %v4081
    %v4088 = vadd.f32 %v4087, 1e-05
    %v4089 = vrsqrt.pop %v4088
    %v4090 = vmul.f32 %v4083, %v4089
    %v4091 = vld [vmem:[%s45] sm:$0xff]
    %4093 = vset.pattern.permute.xlu0 0
    %4094 = vperm.xlu0 %4093, %v4091
    %v4095 = vpop.permute.xlu0 %4094
    %v4097 = vmul.f32 %v4090, %v4095
    %v4098 = vld [vmem:[%s47] sm:$0xff]
    %4100 = vset.pattern.permute.xlu0 0
    %4101 = vperm.xlu0 %4100, %v4098
    %v4102 = vpop.permute.xlu0 %4101
    %v4104 = vadd.f32 %v4097, %v4102
    %4106 = vrot.lane.b32.xlu0 %v4104, 9
    %v4107 = vpop.permute.xlu0 %4106
    %vm4109 = vcmask 72704
    %v4110 = vsel %vm4109, 0.0, %v4107
    %v4111 = vsel %vm4109, %v4107, 0.0
    %v4112 = vld [vmem:[%s9] sm:$0x1]
    %v4113 = vlaneseq
    %v4114 = vshrl.u32 %v4113, 7
    %v4115 = vsub.s32 0, %v4114
    %v4116 = vrot.slane %v4112, %v4115
    %v4117 = vmul.f32 %v4110, %v4116
    %v4118 = vld [vmem:[%s9 + $0x1] sm:$0x1]
    %v4119 = vlaneseq
    %v4120 = vshrl.u32 %v4119, 7
    %v4121 = vsub.s32 0, %v4120
    %v4122 = vrot.slane %v4118, %v4121
    %4124 = vrot.lane.b32.xlu0 %v4122, 1
    %v4125 = vpop.permute.xlu0 %4124
    %v4127 = vmul.f32 %v4110, %v4125
    %v4128 = vmul.f32 %v4111, %v4125
    %v4129 = vld [vmem:[%s9 + $0x2] sm:$0x1]
    %v4130 = vlaneseq
    %v4131 = vshrl.u32 %v4130, 7
    %v4132 = vsub.s32 0, %v4131
    %v4133 = vrot.slane %v4129, %v4132
    %4135 = vrot.lane.b32.xlu0 %v4133, 2
    %v4136 = vpop.permute.xlu0 %4135
    %v4138 = vmul.f32 %v4110, %v4136
    %v4139 = vmul.f32 %v4111, %v4136
    %v4140 = vld [vmem:[%s9 + $0x3] sm:$0x1]
    %v4141 = vlaneseq
    %v4142 = vshrl.u32 %v4141, 7
    %v4143 = vsub.s32 0, %v4142
    %v4144 = vrot.slane %v4140, %v4143
    %4146 = vrot.lane.b32.xlu0 %v4144, 8
    %v4147 = vpop.permute.xlu0 %4146
    %v4149 = vmul.f32 %v4110, %v4147
    %v4150 = vmul.f32 %v4111, %v4147
    %v4151 = vld [vmem:[%s9 + $0x4] sm:$0x1]
    %v4152 = vlaneseq
    %v4153 = vshrl.u32 %v4152, 7
    %v4154 = vsub.s32 0, %v4153
    %v4155 = vrot.slane %v4151, %v4154
    %4157 = vrot.lane.b32.xlu0 %v4155, 9
    %v4158 = vpop.permute.xlu0 %4157
    %v4160 = vmul.f32 %v4110, %v4158
    %v4161 = vmul.f32 %v4111, %v4158
    %v4162 = vld [vmem:[%s9 + $0x5] sm:$0x1]
    %v4163 = vlaneseq
    %v4164 = vshrl.u32 %v4163, 7
    %v4165 = vsub.s32 0, %v4164
    %v4166 = vrot.slane %v4162, %v4165
    %4168 = vrot.lane.b32.xlu0 %v4166, 10
    %v4169 = vpop.permute.xlu0 %4168
    %v4171 = vmul.f32 %v4110, %v4169
    %v4172 = vmul.f32 %v4111, %v4169
    %v4173 = vld [vmem:[%s9 + $0x6] sm:$0x1]
    %v4174 = vlaneseq
    %v4175 = vshrl.u32 %v4174, 7
    %v4176 = vsub.s32 0, %v4175
    %v4177 = vrot.slane %v4173, %v4176
    %4179 = vrot.lane.b32.xlu0 %v4177, 16
    %v4180 = vpop.permute.xlu0 %4179
    %v4182 = vmul.f32 %v4110, %v4180
    %v4183 = vmul.f32 %v4111, %v4180
    %v4184 = vld [vmem:[%s9 + $0x7] sm:$0x1]
    %v4185 = vlaneseq
    %v4186 = vshrl.u32 %v4185, 7
    %v4187 = vsub.s32 0, %v4186
    %v4188 = vrot.slane %v4184, %v4187
    %4190 = vrot.lane.b32.xlu0 %v4188, 17
    %v4191 = vpop.permute.xlu0 %4190
    %v4193 = vmul.f32 %v4110, %v4191
    %v4194 = vmul.f32 %v4111, %v4191
    %v4195 = vld [vmem:[%s9 + $0x8] sm:$0x1]
    %v4196 = vlaneseq
    %v4197 = vshrl.u32 %v4196, 7
    %v4198 = vsub.s32 0, %v4197
    %v4199 = vrot.slane %v4195, %v4198
    %4201 = vrot.lane.b32.xlu0 %v4199, 18
    %v4202 = vpop.permute.xlu0 %4201
    %v4204 = vmul.f32 %v4110, %v4202
    %v4205 = vmul.f32 %v4111, %v4202
    %4208 = vrot.lane.b32.xlu0 %v4127, 127
    %v4209 = vpop.permute.xlu0 %4208
    %4210 = vrot.lane.b32.xlu0 %v4128, 127
    %v4211 = vpop.permute.xlu0 %4210
    %v4212 = vsel %vm656, %v4209, %v4211
    %4216 = vrot.lane.b32.xlu0 %v4138, 126
    %v4217 = vpop.permute.xlu0 %4216
    %4218 = vrot.lane.b32.xlu0 %v4139, 126
    %v4219 = vpop.permute.xlu0 %4218
    %v4220 = vsel %vm685, %v4217, %v4219
    %4224 = vrot.lane.b32.xlu0 %v4149, 120
    %v4225 = vpop.permute.xlu0 %4224
    %4226 = vrot.lane.b32.xlu0 %v4150, 120
    %v4227 = vpop.permute.xlu0 %4226
    %vm4228 = vcmask 982016
    %v4229 = vsel %vm4228, %v4225, %v4227
    %4233 = vrot.lane.b32.xlu0 %v4160, 119
    %v4234 = vpop.permute.xlu0 %4233
    %4235 = vrot.lane.b32.xlu0 %v4161, 119
    %v4236 = vpop.permute.xlu0 %4235
    %vm4237 = vcmask 973824
    %v4238 = vsel %vm4237, %v4234, %v4236
    %4242 = vrot.lane.b32.xlu0 %v4171, 118
    %v4243 = vpop.permute.xlu0 %4242
    %4244 = vrot.lane.b32.xlu0 %v4172, 118
    %v4245 = vpop.permute.xlu0 %4244
    %vm4246 = vcmask 965632
    %v4247 = vsel %vm4246, %v4243, %v4245
    %4251 = vrot.lane.b32.xlu0 %v4182, 112
    %v4252 = vpop.permute.xlu0 %4251
    %4253 = vrot.lane.b32.xlu0 %v4183, 112
    %v4254 = vpop.permute.xlu0 %4253
    %v4255 = vsel %vm714, %v4252, %v4254
    %4259 = vrot.lane.b32.xlu0 %v4193, 111
    %v4260 = vpop.permute.xlu0 %4259
    %4261 = vrot.lane.b32.xlu0 %v4194, 111
    %v4262 = vpop.permute.xlu0 %4261
    %v4263 = vsel %vm743, %v4260, %v4262
    %4267 = vrot.lane.b32.xlu0 %v4204, 110
    %v4268 = vpop.permute.xlu0 %4267
    %4269 = vrot.lane.b32.xlu0 %v4205, 110
    %v4270 = vpop.permute.xlu0 %4269
    %v4271 = vsel %vm772, %v4268, %v4270
    %v4273 = vld [vmem:[%s49] sm:$0xff]
    %v4274 = vmax.f32 %v4117, 0.0
    %v4275 = vmax.f32 %v4212, 0.0
    %v4276 = vmax.f32 %v4220, 0.0
    %v4277 = vmax.f32 %v4229, 0.0
    %v4278 = vmax.f32 %v4238, 0.0
    %v4279 = vmax.f32 %v4247, 0.0
    %v4280 = vmax.f32 %v4255, 0.0
    %v4281 = vmax.f32 %v4263, 0.0
    %v4282 = vmax.f32 %v4271, 0.0
    %vm4283 = vcmask 588800
    %v4285 = vsel %vm4283, %v4273, 0
    %4287 = vmatprep.subr.mxu0 0.0
    %4288 = vmatpush1.msra.mxu0 %v4274
    %4289 = vmatprep.subr.mxu0 0.0
    %4290 = vmatpush1.msra.mxu0 %v4275
    %4291 = vmatprep.subr.mxu0 0.0
    %4292 = vmatpush1.msra.mxu0 %v4276
    %4293 = vmatprep.subr.mxu0 0.0
    %4294 = vmatpush1.msra.mxu0 %v4277
    %4295 = vmatprep.subr.mxu0 0.0
    %4296 = vmatpush1.msra.mxu0 %v4278
    %4297 = vmatprep.subr.mxu0 0.0
    %4298 = vmatpush1.msra.mxu0 %v4279
    %4299 = vmatprep.subr.mxu0 0.0
    %4300 = vmatpush1.msra.mxu0 %v4280
    %4301 = vmatprep.subr.mxu0 0.0
    %4302 = vmatpush1.msra.mxu0 %v4281
    %4303 = vmatprep.subr.mxu0 0.0
    %4304 = vmatpush1.msra.mxu0 %v4282
    %4305 = vmatprep.subr.mxu0 0.0
    %4306 = vmatpush1.msra.mxu0 0.0
    %4307 = vmatprep.subr.mxu0 0.0
    %4308 = vmatpush1.msra.mxu0 0.0
    %4309 = vmatprep.subr.mxu0 0.0
    %4310 = vmatpush1.msra.mxu0 0.0
    %4311 = vmatprep.subr.mxu0 0.0
    %4312 = vmatpush1.msra.mxu0 0.0
    %4313 = vmatprep.subr.mxu0 0.0
    %4314 = vmatpush1.msra.mxu0 0.0
    %4315 = vmatprep.subr.mxu0 0.0
    %4316 = vmatpush1.msra.mxu0 0.0
    %4317 = vmatprep.subr.mxu0 0.0
    %4318 = vmatpush1.msra.mxu0 0.0
    %4319 = vmatprep.subr.mxu0 0.0
    %4320 = vmatpush1.msra.mxu0 0.0
    %4321 = vmatprep.subr.mxu0 0.0
    %4322 = vmatpush1.msra.mxu0 0.0
    %4323 = vmatprep.subr.mxu0 0.0
    %4324 = vmatpush1.msra.mxu0 0.0
    %4325 = vmatprep.subr.mxu0 0.0
    %4326 = vmatpush1.msra.mxu0 0.0
    %4327 = vmatprep.subr.mxu0 0.0
    %4328 = vmatpush1.msra.mxu0 0.0
    %4329 = vmatprep.subr.mxu0 0.0
    %4330 = vmatpush1.msra.mxu0 0.0
    %4331 = vmatprep.subr.mxu0 0.0
    %4332 = vmatpush1.msra.mxu0 0.0
    %4333 = vmatprep.subr.mxu0 0.0
    %4334 = vmatpush1.msra.mxu0 0.0
    %4335 = vmatprep.subr.mxu0 0.0
    %4336 = vmatpush1.msra.mxu0 0.0
    %4337 = vmatprep.subr.mxu0 0.0
    %4338 = vmatpush1.msra.mxu0 0.0
    %4339 = vmatprep.subr.mxu0 0.0
    %4340 = vmatpush1.msra.mxu0 0.0
    %4341 = vmatprep.subr.mxu0 0.0
    %4342 = vmatpush1.msra.mxu0 0.0
    %4343 = vmatprep.subr.mxu0 0.0
    %4344 = vmatpush1.msra.mxu0 0.0
    %4345 = vmatprep.subr.mxu0 0.0
    %4346 = vmatpush1.msra.mxu0 0.0
    %4347 = vmatprep.subr.mxu0 0.0
    %4348 = vmatpush1.msra.mxu0 0.0
    %4349 = vmatprep.subr.mxu0 0.0
    %4350 = vmatpush1.msra.mxu0 0.0
    %4351 = vmatprep.mubr.f32.mxu0 0.0
    %4352 = vmatmul.mubr.f32.gmra.mrb[0].mxu0 %v4285
    %v4353 = vpop.f32.mrb[0].mxu0
    %v4354 = vadd.f32 0.0, %v4353
    %v4355 = vpop.f32.mrb[0].mxu0
    %4356 = vdwg.mxu0
    %4357 = vadd.xlane.f32.xlu0 %v4354
    %v4358 = vpop.xlane.xlu0 %4357
    %v4359 = vmul.f32 %v4358, %v4081
    %v4360 = vsub.f32 %v4354, %v4359
    %v4361 = vmul.f32 %v4360, %v4360
    %4362 = vadd.xlane.f32.xlu0 %v4361
    %v4363 = vpop.xlane.xlu0 %4362
    %v4364 = vmul.f32 %v4363, %v4081
    %v4365 = vadd.f32 %v4364, 1e-05
    %v4366 = vrsqrt.pop %v4365
    %v4367 = vmul.f32 %v4360, %v4366
    %v4368 = vld [vmem:[%s51] sm:$0xff]
    %4370 = vset.pattern.permute.xlu0 0
    %4371 = vperm.xlu0 %4370, %v4368
    %v4372 = vpop.permute.xlu0 %4371
    %v4374 = vmul.f32 %v4367, %v4372
    %v4375 = vld [vmem:[%s53] sm:$0xff]
    %4377 = vset.pattern.permute.xlu0 0
    %4378 = vperm.xlu0 %4377, %v4375
    %v4379 = vpop.permute.xlu0 %4378
    %v4381 = vadd.f32 %v4374, %v4379
    %v4383 = vrot.slane %v3984, 4
    %v4385 = vadd.f32 %v3984, %v4383
    %v4387 = vrot.slane %v3989, 4
    %v4389 = vadd.f32 %v4385, %v4387
    %v4390 = vadd.f32 %v4389, %v3994
    %v4391 = vmul.f32 %v4390, 0.25
    %v4392 = vld [vmem:[%s55] sm:$0xff]
    %vm4393 = vcmask 31744
    %v4395 = vsel %vm4393, %v4392, 0
    %v4398 = vsel %vm874, %v4391, 0
    %4400 = vmatprep.subr.mxu0 0.0
    %4401 = vmatpush1.msra.mxu0 %v4398
    %4402 = vmatprep.subr.mxu0 0.0
    %4403 = vmatpush1.msra.mxu0 0.0
    %4404 = vmatprep.subr.mxu0 0.0
    %4405 = vmatpush1.msra.mxu0 0.0
    %4406 = vmatprep.subr.mxu0 0.0
    %4407 = vmatpush1.msra.mxu0 0.0
    %4408 = vmatprep.subr.mxu0 0.0
    %4409 = vmatpush1.msra.mxu0 0.0
    %4410 = vmatprep.subr.mxu0 0.0
    %4411 = vmatpush1.msra.mxu0 0.0
    %4412 = vmatprep.subr.mxu0 0.0
    %4413 = vmatpush1.msra.mxu0 0.0
    %4414 = vmatprep.subr.mxu0 0.0
    %4415 = vmatpush1.msra.mxu0 0.0
    %4416 = vmatprep.subr.mxu0 0.0
    %4417 = vmatpush1.msra.mxu0 0.0
    %4418 = vmatprep.subr.mxu0 0.0
    %4419 = vmatpush1.msra.mxu0 0.0
    %4420 = vmatprep.subr.mxu0 0.0
    %4421 = vmatpush1.msra.mxu0 0.0
    %4422 = vmatprep.subr.mxu0 0.0
    %4423 = vmatpush1.msra.mxu0 0.0
    %4424 = vmatprep.subr.mxu0 0.0
    %4425 = vmatpush1.msra.mxu0 0.0
    %4426 = vmatprep.subr.mxu0 0.0
    %4427 = vmatpush1.msra.mxu0 0.0
    %4428 = vmatprep.subr.mxu0 0.0
    %4429 = vmatpush1.msra.mxu0 0.0
    %4430 = vmatprep.subr.mxu0 0.0
    %4431 = vmatpush1.msra.mxu0 0.0
    %4432 = vmatprep.subr.mxu0 0.0
    %4433 = vmatpush1.msra.mxu0 0.0
    %4434 = vmatprep.subr.mxu0 0.0
    %4435 = vmatpush1.msra.mxu0 0.0
    %4436 = vmatprep.subr.mxu0 0.0
    %4437 = vmatpush1.msra.mxu0 0.0
    %4438 = vmatprep.subr.mxu0 0.0
    %4439 = vmatpush1.msra.mxu0 0.0
    %4440 = vmatprep.subr.mxu0 0.0
    %4441 = vmatpush1.msra.mxu0 0.0
    %4442 = vmatprep.subr.mxu0 0.0
    %4443 = vmatpush1.msra.mxu0 0.0
    %4444 = vmatprep.subr.mxu0 0.0
    %4445 = vmatpush1.msra.mxu0 0.0
    %4446 = vmatprep.subr.mxu0 0.0
    %4447 = vmatpush1.msra.mxu0 0.0
    %4448 = vmatprep.subr.mxu0 0.0
    %4449 = vmatpush1.msra.mxu0 0.0
    %4450 = vmatprep.subr.mxu0 0.0
    %4451 = vmatpush1.msra.mxu0 0.0
    %4452 = vmatprep.subr.mxu0 0.0
    %4453 = vmatpush1.msra.mxu0 0.0
    %4454 = vmatprep.subr.mxu0 0.0
    %4455 = vmatpush1.msra.mxu0 0.0
    %4456 = vmatprep.subr.mxu0 0.0
    %4457 = vmatpush1.msra.mxu0 0.0
    %4458 = vmatprep.subr.mxu0 0.0
    %4459 = vmatpush1.msra.mxu0 0.0
    %4460 = vmatprep.subr.mxu0 0.0
    %4461 = vmatpush1.msra.mxu0 0.0
    %4462 = vmatprep.subr.mxu0 0.0
    %4463 = vmatpush1.msra.mxu0 0.0
    %4464 = vmatprep.mubr.f32.mxu0 0.0
    %4465 = vmatmul.mubr.f32.gmra.mrb[0].mxu0 %v4395
    %v4466 = vpop.f32.mrb[0].mxu0
    %v4467 = vadd.f32 0.0, %v4466
    %v4468 = vpop.f32.mrb[0].mxu0
    %4469 = vdwg.mxu0
    %v4470 = vadd.f32 %v4381, %v4467
    %4472 = vrot.lane.b32.xlu0 %v4470, 9
    %v4473 = vpop.permute.xlu0 %4472
    %v4475 = vsel %vm4109, 0.0, %v4473
    %v4476 = vsel %vm4109, %v4473, 0.0
    %v4477 = vmul.f32 %v4475, %v4116
    %v4478 = vmul.f32 %v4475, %v4125
    %v4479 = vmul.f32 %v4476, %v4125
    %4482 = vrot.lane.b32.xlu0 %v4478, 127
    %v4483 = vpop.permute.xlu0 %4482
    %4484 = vrot.lane.b32.xlu0 %v4479, 127
    %v4485 = vpop.permute.xlu0 %4484
    %v4486 = vsel %vm656, %v4483, %v4485
    %v4488 = vadd.f32 %v4477, %v4486
    %v4489 = vmul.f32 %v4475, %v4136
    %v4490 = vmul.f32 %v4476, %v4136
    %4493 = vrot.lane.b32.xlu0 %v4489, 126
    %v4494 = vpop.permute.xlu0 %4493
    %4495 = vrot.lane.b32.xlu0 %v4490, 126
    %v4496 = vpop.permute.xlu0 %4495
    %v4497 = vsel %vm685, %v4494, %v4496
    %v4499 = vadd.f32 %v4488, %v4497
    %v4500 = vmul.f32 %v4475, %v4147
    %v4501 = vmul.f32 %v4476, %v4147
    %4504 = vrot.lane.b32.xlu0 %v4500, 120
    %v4505 = vpop.permute.xlu0 %4504
    %4506 = vrot.lane.b32.xlu0 %v4501, 120
    %v4507 = vpop.permute.xlu0 %4506
    %v4508 = vsel %vm4228, %v4505, %v4507
    %v4510 = vadd.f32 %v4499, %v4508
    %v4511 = vmul.f32 %v4475, %v4158
    %v4512 = vmul.f32 %v4476, %v4158
    %4515 = vrot.lane.b32.xlu0 %v4511, 119
    %v4516 = vpop.permute.xlu0 %4515
    %4517 = vrot.lane.b32.xlu0 %v4512, 119
    %v4518 = vpop.permute.xlu0 %4517
    %v4519 = vsel %vm4237, %v4516, %v4518
    %v4521 = vadd.f32 %v4510, %v4519
    %v4522 = vmul.f32 %v4475, %v4169
    %v4523 = vmul.f32 %v4476, %v4169
    %4526 = vrot.lane.b32.xlu0 %v4522, 118
    %v4527 = vpop.permute.xlu0 %4526
    %4528 = vrot.lane.b32.xlu0 %v4523, 118
    %v4529 = vpop.permute.xlu0 %4528
    %v4530 = vsel %vm4246, %v4527, %v4529
    %v4532 = vadd.f32 %v4521, %v4530
    %v4533 = vmul.f32 %v4475, %v4180
    %v4534 = vmul.f32 %v4476, %v4180
    %4537 = vrot.lane.b32.xlu0 %v4533, 112
    %v4538 = vpop.permute.xlu0 %4537
    %4539 = vrot.lane.b32.xlu0 %v4534, 112
    %v4540 = vpop.permute.xlu0 %4539
    %v4541 = vsel %vm714, %v4538, %v4540
    %v4543 = vadd.f32 %v4532, %v4541
    %v4544 = vmul.f32 %v4475, %v4191
    %v4545 = vmul.f32 %v4476, %v4191
    %4548 = vrot.lane.b32.xlu0 %v4544, 111
    %v4549 = vpop.permute.xlu0 %4548
    %4550 = vrot.lane.b32.xlu0 %v4545, 111
    %v4551 = vpop.permute.xlu0 %4550
    %v4552 = vsel %vm743, %v4549, %v4551
    %v4554 = vadd.f32 %v4543, %v4552
    %v4555 = vmul.f32 %v4475, %v4202
    %v4556 = vmul.f32 %v4476, %v4202
    %4559 = vrot.lane.b32.xlu0 %v4555, 110
    %v4560 = vpop.permute.xlu0 %4559
    %4561 = vrot.lane.b32.xlu0 %v4556, 110
    %v4562 = vpop.permute.xlu0 %4561
    %v4563 = vsel %vm772, %v4560, %v4562
    %v4565 = vadd.f32 %v4554, %v4563
    %v4566 = vld [vmem:[%s11] sm:$0x1]
    %v4568 = vlaneseq
    %v4569 = vshrl.u32 %v4568, 7
    %v4570 = vsub.s32 0, %v4569
    %v4571 = vrot.slane %v4566, %v4570
    %v4573 = vmul.f32 %v4565, %v4571
    %v4574 = vld [vmem:[%s57] sm:$0xff]
    %v4575 = vld [vmem:[%s57 + $0x8] sm:$0xff]
    %v4576 = vld [vmem:[%s57 + $0x10] sm:$0xff]
    %v4577 = vld [vmem:[%s57 + $0x18] sm:$0xff]
    %v4578 = vld [vmem:[%s57 + $0x20] sm:$0xff]
    %v4579 = vld [vmem:[%s57 + $0x28] sm:$0xff]
    %v4580 = vmax.f32 %v4477, 0.0
    %v4581 = vmax.f32 %v4486, 0.0
    %v4582 = vmax.f32 %v4497, 0.0
    %v4583 = vmax.f32 %v4508, 0.0
    %v4584 = vmax.f32 %v4519, 0.0
    %v4585 = vmax.f32 %v4530, 0.0
    %v4586 = vmax.f32 %v4541, 0.0
    %v4587 = vmax.f32 %v4552, 0.0
    %v4588 = vmax.f32 %v4563, 0.0
    %v4590 = vsel %vm4283, %v4574, 0
    %v4593 = vsel %vm4283, %v4575, 0
    %v4596 = vsel %vm4283, %v4576, 0
    %v4599 = vsel %vm4283, %v4577, 0
    %v4602 = vsel %vm4283, %v4578, 0
    %v4605 = vsel %vm4283, %v4579, 0
    %4607 = vmatprep.subr.mxu0 0.0
    %4608 = vmatpush1.msra.mxu0 %v4580
    %4609 = vmatprep.subr.mxu0 0.0
    %4610 = vmatpush1.msra.mxu0 %v4581
    %4611 = vmatprep.subr.mxu0 0.0
    %4612 = vmatpush1.msra.mxu0 %v4582
    %4613 = vmatprep.subr.mxu0 0.0
    %4614 = vmatpush1.msra.mxu0 %v4583
    %4615 = vmatprep.subr.mxu0 0.0
    %4616 = vmatpush1.msra.mxu0 %v4584
    %4617 = vmatprep.subr.mxu0 0.0
    %4618 = vmatpush1.msra.mxu0 %v4585
    %4619 = vmatprep.subr.mxu0 0.0
    %4620 = vmatpush1.msra.mxu0 %v4586
    %4621 = vmatprep.subr.mxu0 0.0
    %4622 = vmatpush1.msra.mxu0 %v4587
    %4623 = vmatprep.subr.mxu0 0.0
    %4624 = vmatpush1.msra.mxu0 %v4588
    %4625 = vmatprep.subr.mxu0 0.0
    %4626 = vmatpush1.msra.mxu0 0.0
    %4627 = vmatprep.subr.mxu0 0.0
    %4628 = vmatpush1.msra.mxu0 0.0
    %4629 = vmatprep.subr.mxu0 0.0
    %4630 = vmatpush1.msra.mxu0 0.0
    %4631 = vmatprep.subr.mxu0 0.0
    %4632 = vmatpush1.msra.mxu0 0.0
    %4633 = vmatprep.subr.mxu0 0.0
    %4634 = vmatpush1.msra.mxu0 0.0
    %4635 = vmatprep.subr.mxu0 0.0
    %4636 = vmatpush1.msra.mxu0 0.0
    %4637 = vmatprep.subr.mxu0 0.0
    %4638 = vmatpush1.msra.mxu0 0.0
    %4639 = vmatprep.subr.mxu0 0.0
    %4640 = vmatpush1.msra.mxu0 0.0
    %4641 = vmatprep.subr.mxu0 0.0
    %4642 = vmatpush1.msra.mxu0 0.0
    %4643 = vmatprep.subr.mxu0 0.0
    %4644 = vmatpush1.msra.mxu0 0.0
    %4645 = vmatprep.subr.mxu0 0.0
    %4646 = vmatpush1.msra.mxu0 0.0
    %4647 = vmatprep.subr.mxu0 0.0
    %4648 = vmatpush1.msra.mxu0 0.0
    %4649 = vmatprep.subr.mxu0 0.0
    %4650 = vmatpush1.msra.mxu0 0.0
    %4651 = vmatprep.subr.mxu0 0.0
    %4652 = vmatpush1.msra.mxu0 0.0
    %4653 = vmatprep.subr.mxu0 0.0
    %4654 = vmatpush1.msra.mxu0 0.0
    %4655 = vmatprep.subr.mxu0 0.0
    %4656 = vmatpush1.msra.mxu0 0.0
    %4657 = vmatprep.subr.mxu0 0.0
    %4658 = vmatpush1.msra.mxu0 0.0
    %4659 = vmatprep.subr.mxu0 0.0
    %4660 = vmatpush1.msra.mxu0 0.0
    %4661 = vmatprep.subr.mxu0 0.0
    %4662 = vmatpush1.msra.mxu0 0.0
    %4663 = vmatprep.subr.mxu0 0.0
    %4664 = vmatpush1.msra.mxu0 0.0
    %4665 = vmatprep.subr.mxu0 0.0
    %4666 = vmatpush1.msra.mxu0 0.0
    %4667 = vmatprep.subr.mxu0 0.0
    %4668 = vmatpush1.msra.mxu0 0.0
    %4669 = vmatprep.subr.mxu0 0.0
    %4670 = vmatpush1.msra.mxu0 0.0
    %4671 = vmatprep.mubr.f32.mxu0 0.0
    %4672 = vmatmul.mubr.f32.gmra.mrb[0].mxu0 %v4590
    %v4673 = vpop.f32.mrb[0].mxu0
    %v4674 = vadd.f32 0.0, %v4673
    %v4675 = vpop.f32.mrb[0].mxu0
    %4676 = vmatprep.mubr.f32.mxu0 0.0
    %4677 = vmatmul.mubr.f32.gmra.mrb[0].mxu0 %v4593
    %v4678 = vpop.f32.mrb[0].mxu0
    %v4679 = vadd.f32 0.0, %v4678
    %v4680 = vpop.f32.mrb[0].mxu0
    %4681 = vmatprep.mubr.f32.mxu0 0.0
    %4682 = vmatmul.mubr.f32.gmra.mrb[0].mxu0 %v4596
    %v4683 = vpop.f32.mrb[0].mxu0
    %v4684 = vadd.f32 0.0, %v4683
    %v4685 = vpop.f32.mrb[0].mxu0
    %4686 = vmatprep.mubr.f32.mxu0 0.0
    %4687 = vmatmul.mubr.f32.gmra.mrb[0].mxu0 %v4599
    %v4688 = vpop.f32.mrb[0].mxu0
    %v4689 = vadd.f32 0.0, %v4688
    %v4690 = vpop.f32.mrb[0].mxu0
    %4691 = vmatprep.mubr.f32.mxu0 0.0
    %4692 = vmatmul.mubr.f32.gmra.mrb[0].mxu0 %v4602
    %v4693 = vpop.f32.mrb[0].mxu0
    %v4694 = vadd.f32 0.0, %v4693
    %v4695 = vpop.f32.mrb[0].mxu0
    %4696 = vmatprep.mubr.f32.mxu0 0.0
    %4697 = vmatmul.mubr.f32.gmra.mrb[0].mxu0 %v4605
    %v4698 = vpop.f32.mrb[0].mxu0
    %v4699 = vadd.f32 0.0, %v4698
    %v4700 = vpop.f32.mrb[0].mxu0
    %4701 = vdwg.mxu0
    %4702 = vadd.xlane.f32.xlu0 %v4674
    %v4703 = vpop.xlane.xlu0 %4702
    %4704 = vadd.xlane.f32.xlu0 %v4679
    %v4705 = vpop.xlane.xlu0 %4704
    %4706 = vadd.xlane.f32.xlu0 %v4684
    %v4707 = vpop.xlane.xlu0 %4706
    %4708 = vadd.xlane.f32.xlu0 %v4689
    %v4709 = vpop.xlane.xlu0 %4708
    %4710 = vadd.xlane.f32.xlu0 %v4694
    %v4711 = vpop.xlane.xlu0 %4710
    %4712 = vadd.xlane.f32.xlu0 %v4699
    %v4713 = vpop.xlane.xlu0 %4712
    %v4714 = vmul.f32 %v4703, %v4081
    %v4715 = vmul.f32 %v4705, %v4081
    %v4716 = vmul.f32 %v4707, %v4081
    %v4717 = vmul.f32 %v4709, %v4081
    %v4718 = vmul.f32 %v4711, %v4081
    %v4719 = vmul.f32 %v4713, %v4081
    %v4720 = vsub.f32 %v4674, %v4714
    %v4721 = vsub.f32 %v4679, %v4715
    %v4722 = vsub.f32 %v4684, %v4716
    %v4723 = vsub.f32 %v4689, %v4717
    %v4724 = vsub.f32 %v4694, %v4718
    %v4725 = vsub.f32 %v4699, %v4719
    %v4726 = vmul.f32 %v4720, %v4720
    %v4727 = vmul.f32 %v4721, %v4721
    %v4728 = vmul.f32 %v4722, %v4722
    %v4729 = vmul.f32 %v4723, %v4723
    %v4730 = vmul.f32 %v4724, %v4724
    %v4731 = vmul.f32 %v4725, %v4725
    %4732 = vadd.xlane.f32.xlu0 %v4726
    %v4733 = vpop.xlane.xlu0 %4732
    %4734 = vadd.xlane.f32.xlu0 %v4727
    %v4735 = vpop.xlane.xlu0 %4734
    %4736 = vadd.xlane.f32.xlu0 %v4728
    %v4737 = vpop.xlane.xlu0 %4736
    %4738 = vadd.xlane.f32.xlu0 %v4729
    %v4739 = vpop.xlane.xlu0 %4738
    %4740 = vadd.xlane.f32.xlu0 %v4730
    %v4741 = vpop.xlane.xlu0 %4740
    %4742 = vadd.xlane.f32.xlu0 %v4731
    %v4743 = vpop.xlane.xlu0 %4742
    %v4744 = vmul.f32 %v4733, %v4081
    %v4745 = vmul.f32 %v4735, %v4081
    %v4746 = vmul.f32 %v4737, %v4081
    %v4747 = vmul.f32 %v4739, %v4081
    %v4748 = vmul.f32 %v4741, %v4081
    %v4749 = vmul.f32 %v4743, %v4081
    %v4750 = vadd.f32 %v4744, 1e-05
    %v4751 = vadd.f32 %v4745, 1e-05
    %v4752 = vadd.f32 %v4746, 1e-05
    %v4753 = vadd.f32 %v4747, 1e-05
    %v4754 = vadd.f32 %v4748, 1e-05
    %v4755 = vadd.f32 %v4749, 1e-05
    %v4756 = vrsqrt.pop %v4750
    %v4757 = vrsqrt.pop %v4751
    %v4758 = vrsqrt.pop %v4752
    %v4759 = vrsqrt.pop %v4753
    %v4760 = vrsqrt.pop %v4754
    %v4761 = vrsqrt.pop %v4755
    %v4762 = vmul.f32 %v4720, %v4756
    %v4763 = vmul.f32 %v4721, %v4757
    %v4764 = vmul.f32 %v4722, %v4758
    %v4765 = vmul.f32 %v4723, %v4759
    %v4766 = vmul.f32 %v4724, %v4760
    %v4767 = vmul.f32 %v4725, %v4761
    %v4768 = vld [vmem:[%s59] sm:$0xff]
    %v4769 = vld [vmem:[%s59 + $0x8] sm:$0xff]
    %v4770 = vld [vmem:[%s59 + $0x10] sm:$0xff]
    %v4771 = vld [vmem:[%s59 + $0x18] sm:$0xff]
    %v4772 = vld [vmem:[%s59 + $0x20] sm:$0xff]
    %v4773 = vld [vmem:[%s59 + $0x28] sm:$0xff]
    %4775 = vset.pattern.permute.xlu0 0
    %4776 = vperm.xlu0 %4775, %v4768
    %v4777 = vpop.permute.xlu0 %4776
    %4780 = vset.pattern.permute.xlu0 0
    %4781 = vperm.xlu0 %4780, %v4769
    %v4782 = vpop.permute.xlu0 %4781
    %4785 = vset.pattern.permute.xlu0 0
    %4786 = vperm.xlu0 %4785, %v4770
    %v4787 = vpop.permute.xlu0 %4786
    %4790 = vset.pattern.permute.xlu0 0
    %4791 = vperm.xlu0 %4790, %v4771
    %v4792 = vpop.permute.xlu0 %4791
    %4795 = vset.pattern.permute.xlu0 0
    %4796 = vperm.xlu0 %4795, %v4772
    %v4797 = vpop.permute.xlu0 %4796
    %4800 = vset.pattern.permute.xlu0 0
    %4801 = vperm.xlu0 %4800, %v4773
    %v4802 = vpop.permute.xlu0 %4801
    %v4804 = vmul.f32 %v4762, %v4777
    %v4805 = vmul.f32 %v4763, %v4782
    %v4806 = vmul.f32 %v4764, %v4787
    %v4807 = vmul.f32 %v4765, %v4792
    %v4808 = vmul.f32 %v4766, %v4797
    %v4809 = vmul.f32 %v4767, %v4802
    %v4810 = vld [vmem:[%s61] sm:$0xff]
    %v4811 = vld [vmem:[%s61 + $0x8] sm:$0xff]
    %v4812 = vld [vmem:[%s61 + $0x10] sm:$0xff]
    %v4813 = vld [vmem:[%s61 + $0x18] sm:$0xff]
    %v4814 = vld [vmem:[%s61 + $0x20] sm:$0xff]
    %v4815 = vld [vmem:[%s61 + $0x28] sm:$0xff]
    %4817 = vset.pattern.permute.xlu0 0
    %4818 = vperm.xlu0 %4817, %v4810
    %v4819 = vpop.permute.xlu0 %4818
    %4822 = vset.pattern.permute.xlu0 0
    %4823 = vperm.xlu0 %4822, %v4811
    %v4824 = vpop.permute.xlu0 %4823
    %4827 = vset.pattern.permute.xlu0 0
    %4828 = vperm.xlu0 %4827, %v4812
    %v4829 = vpop.permute.xlu0 %4828
    %4832 = vset.pattern.permute.xlu0 0
    %4833 = vperm.xlu0 %4832, %v4813
    %v4834 = vpop.permute.xlu0 %4833
    %4837 = vset.pattern.permute.xlu0 0
    %4838 = vperm.xlu0 %4837, %v4814
    %v4839 = vpop.permute.xlu0 %4838
    %4842 = vset.pattern.permute.xlu0 0
    %4843 = vperm.xlu0 %4842, %v4815
    %v4844 = vpop.permute.xlu0 %4843
    %v4846 = vadd.f32 %v4804, %v4819
    %v4847 = vadd.f32 %v4805, %v4824
    %v4848 = vadd.f32 %v4806, %v4829
    %v4849 = vadd.f32 %v4807, %v4834
    %v4850 = vadd.f32 %v4808, %v4839
    %v4851 = vadd.f32 %v4809, %v4844
    %v4852 = vmul.f32 %v1870, %v4470
    %v4853 = vmul.f32 %v1876, %v4846
    %v4854 = vadd.f32 %v4852, %v4853
    %v4855 = vmul.f32 %v1886, %v4849
    %v4856 = vadd.f32 %v4854, %v4855
    %v4857 = vmul.f32 %v1908, %v4573
    %v4858 = vadd.f32 %v4856, %v4857
    %v4859 = vmul.f32 %v1918, %v4470
    %v4860 = vmul.f32 %v1924, %v4847
    %v4861 = vadd.f32 %v4859, %v4860
    %v4862 = vmul.f32 %v1946, %v4850
    %v4863 = vadd.f32 %v4861, %v4862
    %v4864 = vmul.f32 %v1956, %v4573
    %v4865 = vadd.f32 %v4863, %v4864
    %v4866 = vmul.f32 %v1966, %v4470
    %v4867 = vmul.f32 %v1972, %v4848
    %v4868 = vadd.f32 %v4866, %v4867
    %v4869 = vmul.f32 %v1982, %v4851
    %v4870 = vadd.f32 %v4868, %v4869
    %v4871 = vmul.f32 %v2004, %v4573
    %v4872 = vadd.f32 %v4870, %v4871
    %4874 = vrot.lane.b32.xlu0 %v4858, 9
    %v4875 = vpop.permute.xlu0 %4874
    %v4877 = vsel %vm4109, 0.0, %v4875
    %v4878 = vsel %vm4109, %v4875, 0.0
    %v4879 = vmul.f32 %v4877, %v4116
    %v4880 = vmul.f32 %v4877, %v4125
    %v4881 = vmul.f32 %v4878, %v4125
    %4884 = vrot.lane.b32.xlu0 %v4880, 127
    %v4885 = vpop.permute.xlu0 %4884
    %4886 = vrot.lane.b32.xlu0 %v4881, 127
    %v4887 = vpop.permute.xlu0 %4886
    %v4888 = vsel %vm656, %v4885, %v4887
    %v4890 = vadd.f32 %v4879, %v4888
    %v4891 = vmul.f32 %v4877, %v4136
    %v4892 = vmul.f32 %v4878, %v4136
    %4895 = vrot.lane.b32.xlu0 %v4891, 126
    %v4896 = vpop.permute.xlu0 %4895
    %4897 = vrot.lane.b32.xlu0 %v4892, 126
    %v4898 = vpop.permute.xlu0 %4897
    %v4899 = vsel %vm685, %v4896, %v4898
    %v4901 = vadd.f32 %v4890, %v4899
    %v4902 = vmul.f32 %v4877, %v4147
    %v4903 = vmul.f32 %v4878, %v4147
    %4906 = vrot.lane.b32.xlu0 %v4902, 120
    %v4907 = vpop.permute.xlu0 %4906
    %4908 = vrot.lane.b32.xlu0 %v4903, 120
    %v4909 = vpop.permute.xlu0 %4908
    %v4910 = vsel %vm4228, %v4907, %v4909
    %v4912 = vadd.f32 %v4901, %v4910
    %v4913 = vmul.f32 %v4877, %v4158
    %v4914 = vmul.f32 %v4878, %v4158
    %4917 = vrot.lane.b32.xlu0 %v4913, 119
    %v4918 = vpop.permute.xlu0 %4917
    %4919 = vrot.lane.b32.xlu0 %v4914, 119
    %v4920 = vpop.permute.xlu0 %4919
    %v4921 = vsel %vm4237, %v4918, %v4920
    %v4923 = vadd.f32 %v4912, %v4921
    %v4924 = vmul.f32 %v4877, %v4169
    %v4925 = vmul.f32 %v4878, %v4169
    %4928 = vrot.lane.b32.xlu0 %v4924, 118
    %v4929 = vpop.permute.xlu0 %4928
    %4930 = vrot.lane.b32.xlu0 %v4925, 118
    %v4931 = vpop.permute.xlu0 %4930
    %v4932 = vsel %vm4246, %v4929, %v4931
    %v4934 = vadd.f32 %v4923, %v4932
    %v4935 = vmul.f32 %v4877, %v4180
    %v4936 = vmul.f32 %v4878, %v4180
    %4939 = vrot.lane.b32.xlu0 %v4935, 112
    %v4940 = vpop.permute.xlu0 %4939
    %4941 = vrot.lane.b32.xlu0 %v4936, 112
    %v4942 = vpop.permute.xlu0 %4941
    %v4943 = vsel %vm714, %v4940, %v4942
    %v4945 = vadd.f32 %v4934, %v4943
    %v4946 = vmul.f32 %v4877, %v4191
    %v4947 = vmul.f32 %v4878, %v4191
    %4950 = vrot.lane.b32.xlu0 %v4946, 111
    %v4951 = vpop.permute.xlu0 %4950
    %4952 = vrot.lane.b32.xlu0 %v4947, 111
    %v4953 = vpop.permute.xlu0 %4952
    %v4954 = vsel %vm743, %v4951, %v4953
    %v4956 = vadd.f32 %v4945, %v4954
    %v4957 = vmul.f32 %v4877, %v4202
    %v4958 = vmul.f32 %v4878, %v4202
    %4961 = vrot.lane.b32.xlu0 %v4957, 110
    %v4962 = vpop.permute.xlu0 %4961
    %4963 = vrot.lane.b32.xlu0 %v4958, 110
    %v4964 = vpop.permute.xlu0 %4963
    %v4965 = vsel %vm772, %v4962, %v4964
    %v4967 = vadd.f32 %v4956, %v4965
    %v4968 = vmul.f32 %v4967, %v4571
    %v4969 = vld [vmem:[%s63] sm:$0xff]
    %v4970 = vld [vmem:[%s63 + $0x8] sm:$0xff]
    %v4971 = vld [vmem:[%s63 + $0x10] sm:$0xff]
    %v4972 = vld [vmem:[%s63 + $0x18] sm:$0xff]
    %v4973 = vmax.f32 %v4879, 0.0
    %v4974 = vmax.f32 %v4888, 0.0
    %v4975 = vmax.f32 %v4899, 0.0
    %v4976 = vmax.f32 %v4910, 0.0
    %v4977 = vmax.f32 %v4921, 0.0
    %v4978 = vmax.f32 %v4932, 0.0
    %v4979 = vmax.f32 %v4943, 0.0
    %v4980 = vmax.f32 %v4954, 0.0
    %v4981 = vmax.f32 %v4965, 0.0
    %v4983 = vsel %vm4283, %v4969, 0
    %v4986 = vsel %vm4283, %v4970, 0
    %v4989 = vsel %vm4283, %v4971, 0
    %v4992 = vsel %vm4283, %v4972, 0
    %4994 = vmatprep.subr.mxu0 0.0
    %4995 = vmatpush1.msra.mxu0 %v4973
    %4996 = vmatprep.subr.mxu0 0.0
    %4997 = vmatpush1.msra.mxu0 %v4974
    %4998 = vmatprep.subr.mxu0 0.0
    %4999 = vmatpush1.msra.mxu0 %v4975
    %5000 = vmatprep.subr.mxu0 0.0
    %5001 = vmatpush1.msra.mxu0 %v4976
    %5002 = vmatprep.subr.mxu0 0.0
    %5003 = vmatpush1.msra.mxu0 %v4977
    %5004 = vmatprep.subr.mxu0 0.0
    %5005 = vmatpush1.msra.mxu0 %v4978
    %5006 = vmatprep.subr.mxu0 0.0
    %5007 = vmatpush1.msra.mxu0 %v4979
    %5008 = vmatprep.subr.mxu0 0.0
    %5009 = vmatpush1.msra.mxu0 %v4980
    %5010 = vmatprep.subr.mxu0 0.0
    %5011 = vmatpush1.msra.mxu0 %v4981
    %5012 = vmatprep.subr.mxu0 0.0
    %5013 = vmatpush1.msra.mxu0 0.0
    %5014 = vmatprep.subr.mxu0 0.0
    %5015 = vmatpush1.msra.mxu0 0.0
    %5016 = vmatprep.subr.mxu0 0.0
    %5017 = vmatpush1.msra.mxu0 0.0
    %5018 = vmatprep.subr.mxu0 0.0
    %5019 = vmatpush1.msra.mxu0 0.0
    %5020 = vmatprep.subr.mxu0 0.0
    %5021 = vmatpush1.msra.mxu0 0.0
    %5022 = vmatprep.subr.mxu0 0.0
    %5023 = vmatpush1.msra.mxu0 0.0
    %5024 = vmatprep.subr.mxu0 0.0
    %5025 = vmatpush1.msra.mxu0 0.0
    %5026 = vmatprep.subr.mxu0 0.0
    %5027 = vmatpush1.msra.mxu0 0.0
    %5028 = vmatprep.subr.mxu0 0.0
    %5029 = vmatpush1.msra.mxu0 0.0
    %5030 = vmatprep.subr.mxu0 0.0
    %5031 = vmatpush1.msra.mxu0 0.0
    %5032 = vmatprep.subr.mxu0 0.0
    %5033 = vmatpush1.msra.mxu0 0.0
    %5034 = vmatprep.subr.mxu0 0.0
    %5035 = vmatpush1.msra.mxu0 0.0
    %5036 = vmatprep.subr.mxu0 0.0
    %5037 = vmatpush1.msra.mxu0 0.0
    %5038 = vmatprep.subr.mxu0 0.0
    %5039 = vmatpush1.msra.mxu0 0.0
    %5040 = vmatprep.subr.mxu0 0.0
    %5041 = vmatpush1.msra.mxu0 0.0
    %5042 = vmatprep.subr.mxu0 0.0
    %5043 = vmatpush1.msra.mxu0 0.0
    %5044 = vmatprep.subr.mxu0 0.0
    %5045 = vmatpush1.msra.mxu0 0.0
    %5046 = vmatprep.subr.mxu0 0.0
    %5047 = vmatpush1.msra.mxu0 0.0
    %5048 = vmatprep.subr.mxu0 0.0
    %5049 = vmatpush1.msra.mxu0 0.0
    %5050 = vmatprep.subr.mxu0 0.0
    %5051 = vmatpush1.msra.mxu0 0.0
    %5052 = vmatprep.subr.mxu0 0.0
    %5053 = vmatpush1.msra.mxu0 0.0
    %5054 = vmatprep.subr.mxu0 0.0
    %5055 = vmatpush1.msra.mxu0 0.0
    %5056 = vmatprep.subr.mxu0 0.0
    %5057 = vmatpush1.msra.mxu0 0.0
    %5058 = vmatprep.mubr.f32.mxu0 0.0
    %5059 = vmatmul.mubr.f32.gmra.mrb[0].mxu0 %v4983
    %v5060 = vpop.f32.mrb[0].mxu0
    %v5061 = vadd.f32 0.0, %v5060
    %v5062 = vpop.f32.mrb[0].mxu0
    %5063 = vmatprep.mubr.f32.mxu0 0.0
    %5064 = vmatmul.mubr.f32.gmra.mrb[0].mxu0 %v4986
    %v5065 = vpop.f32.mrb[0].mxu0
    %v5066 = vadd.f32 0.0, %v5065
    %v5067 = vpop.f32.mrb[0].mxu0
    %5068 = vmatprep.mubr.f32.mxu0 0.0
    %5069 = vmatmul.mubr.f32.gmra.mrb[0].mxu0 %v4989
    %v5070 = vpop.f32.mrb[0].mxu0
    %v5071 = vadd.f32 0.0, %v5070
    %v5072 = vpop.f32.mrb[0].mxu0
    %5073 = vmatprep.mubr.f32.mxu0 0.0
    %5074 = vmatmul.mubr.f32.gmra.mrb[0].mxu0 %v4992
    %v5075 = vpop.f32.mrb[0].mxu0
    %v5076 = vadd.f32 0.0, %v5075
    %v5077 = vpop.f32.mrb[0].mxu0
    %5078 = vdwg.mxu0
    %5079 = vadd.xlane.f32.xlu0 %v5061
    %v5080 = vpop.xlane.xlu0 %5079
    %5081 = vadd.xlane.f32.xlu0 %v5066
    %v5082 = vpop.xlane.xlu0 %5081
    %5083 = vadd.xlane.f32.xlu0 %v5071
    %v5084 = vpop.xlane.xlu0 %5083
    %5085 = vadd.xlane.f32.xlu0 %v5076
    %v5086 = vpop.xlane.xlu0 %5085
    %v5087 = vmul.f32 %v5080, %v4081
    %v5088 = vmul.f32 %v5082, %v4081
    %v5089 = vmul.f32 %v5084, %v4081
    %v5090 = vmul.f32 %v5086, %v4081
    %v5091 = vsub.f32 %v5061, %v5087
    %v5092 = vsub.f32 %v5066, %v5088
    %v5093 = vsub.f32 %v5071, %v5089
    %v5094 = vsub.f32 %v5076, %v5090
    %v5095 = vmul.f32 %v5091, %v5091
    %v5096 = vmul.f32 %v5092, %v5092
    %v5097 = vmul.f32 %v5093, %v5093
    %v5098 = vmul.f32 %v5094, %v5094
    %5099 = vadd.xlane.f32.xlu0 %v5095
    %v5100 = vpop.xlane.xlu0 %5099
    %5101 = vadd.xlane.f32.xlu0 %v5096
    %v5102 = vpop.xlane.xlu0 %5101
    %5103 = vadd.xlane.f32.xlu0 %v5097
    %v5104 = vpop.xlane.xlu0 %5103
    %5105 = vadd.xlane.f32.xlu0 %v5098
    %v5106 = vpop.xlane.xlu0 %5105
    %v5107 = vmul.f32 %v5100, %v4081
    %v5108 = vmul.f32 %v5102, %v4081
    %v5109 = vmul.f32 %v5104, %v4081
    %v5110 = vmul.f32 %v5106, %v4081
    %v5111 = vadd.f32 %v5107, 1e-05
    %v5112 = vadd.f32 %v5108, 1e-05
    %v5113 = vadd.f32 %v5109, 1e-05
    %v5114 = vadd.f32 %v5110, 1e-05
    %v5115 = vrsqrt.pop %v5111
    %v5116 = vrsqrt.pop %v5112
    %v5117 = vrsqrt.pop %v5113
    %v5118 = vrsqrt.pop %v5114
    %v5119 = vmul.f32 %v5091, %v5115
    %v5120 = vmul.f32 %v5092, %v5116
    %v5121 = vmul.f32 %v5093, %v5117
    %v5122 = vmul.f32 %v5094, %v5118
    %v5123 = vld [vmem:[%s65] sm:$0xff]
    %v5124 = vld [vmem:[%s65 + $0x8] sm:$0xff]
    %v5125 = vld [vmem:[%s65 + $0x10] sm:$0xff]
    %v5126 = vld [vmem:[%s65 + $0x18] sm:$0xff]
    %5128 = vset.pattern.permute.xlu0 0
    %5129 = vperm.xlu0 %5128, %v5123
    %v5130 = vpop.permute.xlu0 %5129
    %5133 = vset.pattern.permute.xlu0 0
    %5134 = vperm.xlu0 %5133, %v5124
    %v5135 = vpop.permute.xlu0 %5134
    %5138 = vset.pattern.permute.xlu0 0
    %5139 = vperm.xlu0 %5138, %v5125
    %v5140 = vpop.permute.xlu0 %5139
    %5143 = vset.pattern.permute.xlu0 0
    %5144 = vperm.xlu0 %5143, %v5126
    %v5145 = vpop.permute.xlu0 %5144
    %v5147 = vmul.f32 %v5119, %v5130
    %v5148 = vmul.f32 %v5120, %v5135
    %v5149 = vmul.f32 %v5121, %v5140
    %v5150 = vmul.f32 %v5122, %v5145
    %v5151 = vld [vmem:[%s67] sm:$0xff]
    %v5152 = vld [vmem:[%s67 + $0x8] sm:$0xff]
    %v5153 = vld [vmem:[%s67 + $0x10] sm:$0xff]
    %v5154 = vld [vmem:[%s67 + $0x18] sm:$0xff]
    %5156 = vset.pattern.permute.xlu0 0
    %5157 = vperm.xlu0 %5156, %v5151
    %v5158 = vpop.permute.xlu0 %5157
    %5161 = vset.pattern.permute.xlu0 0
    %5162 = vperm.xlu0 %5161, %v5152
    %v5163 = vpop.permute.xlu0 %5162
    %5166 = vset.pattern.permute.xlu0 0
    %5167 = vperm.xlu0 %5166, %v5153
    %v5168 = vpop.permute.xlu0 %5167
    %5171 = vset.pattern.permute.xlu0 0
    %5172 = vperm.xlu0 %5171, %v5154
    %v5173 = vpop.permute.xlu0 %5172
    %v5175 = vadd.f32 %v5147, %v5158
    %v5176 = vadd.f32 %v5148, %v5163
    %v5177 = vadd.f32 %v5149, %v5168
    %v5178 = vadd.f32 %v5150, %v5173
    %v5179 = vmul.f32 %v2694, %v4858
    %v5180 = vmul.f32 %v2700, %v5175
    %v5181 = vadd.f32 %v5179, %v5180
    %v5182 = vmul.f32 %v2710, %v5177
    %v5183 = vadd.f32 %v5181, %v5182
    %v5184 = vmul.f32 %v2720, %v4968
    %v5185 = vadd.f32 %v5183, %v5184
    %v5186 = vadd.f32 %v4865, %v5185
    %v5187 = vmul.f32 %v2734, %v4858
    %v5188 = vmul.f32 %v2740, %v5176
    %v5189 = vadd.f32 %v5187, %v5188
    %v5190 = vmul.f32 %v2762, %v5178
    %v5191 = vadd.f32 %v5189, %v5190
    %v5192 = vmul.f32 %v2784, %v4968
    %v5193 = vadd.f32 %v5191, %v5192
    %v5194 = vadd.f32 %v4872, %v5193
    %5196 = vrot.lane.b32.xlu0 %v5186, 9
    %v5197 = vpop.permute.xlu0 %5196
    %v5199 = vsel %vm4109, 0.0, %v5197
    %v5200 = vsel %vm4109, %v5197, 0.0
    %v5201 = vmul.f32 %v5199, %v4116
    %v5202 = vmul.f32 %v5199, %v4125
    %v5203 = vmul.f32 %v5200, %v4125
    %5206 = vrot.lane.b32.xlu0 %v5202, 127
    %v5207 = vpop.permute.xlu0 %5206
    %5208 = vrot.lane.b32.xlu0 %v5203, 127
    %v5209 = vpop.permute.xlu0 %5208
    %v5210 = vsel %vm656, %v5207, %v5209
    %v5212 = vadd.f32 %v5201, %v5210
    %v5213 = vmul.f32 %v5199, %v4136
    %v5214 = vmul.f32 %v5200, %v4136
    %5217 = vrot.lane.b32.xlu0 %v5213, 126
    %v5218 = vpop.permute.xlu0 %5217
    %5219 = vrot.lane.b32.xlu0 %v5214, 126
    %v5220 = vpop.permute.xlu0 %5219
    %v5221 = vsel %vm685, %v5218, %v5220
    %v5223 = vadd.f32 %v5212, %v5221
    %v5224 = vmul.f32 %v5199, %v4147
    %v5225 = vmul.f32 %v5200, %v4147
    %5228 = vrot.lane.b32.xlu0 %v5224, 120
    %v5229 = vpop.permute.xlu0 %5228
    %5230 = vrot.lane.b32.xlu0 %v5225, 120
    %v5231 = vpop.permute.xlu0 %5230
    %v5232 = vsel %vm4228, %v5229, %v5231
    %v5234 = vadd.f32 %v5223, %v5232
    %v5235 = vmul.f32 %v5199, %v4158
    %v5236 = vmul.f32 %v5200, %v4158
    %5239 = vrot.lane.b32.xlu0 %v5235, 119
    %v5240 = vpop.permute.xlu0 %5239
    %5241 = vrot.lane.b32.xlu0 %v5236, 119
    %v5242 = vpop.permute.xlu0 %5241
    %v5243 = vsel %vm4237, %v5240, %v5242
    %v5245 = vadd.f32 %v5234, %v5243
    %v5246 = vmul.f32 %v5199, %v4169
    %v5247 = vmul.f32 %v5200, %v4169
    %5250 = vrot.lane.b32.xlu0 %v5246, 118
    %v5251 = vpop.permute.xlu0 %5250
    %5252 = vrot.lane.b32.xlu0 %v5247, 118
    %v5253 = vpop.permute.xlu0 %5252
    %v5254 = vsel %vm4246, %v5251, %v5253
    %v5256 = vadd.f32 %v5245, %v5254
    %v5257 = vmul.f32 %v5199, %v4180
    %v5258 = vmul.f32 %v5200, %v4180
    %5261 = vrot.lane.b32.xlu0 %v5257, 112
    %v5262 = vpop.permute.xlu0 %5261
    %5263 = vrot.lane.b32.xlu0 %v5258, 112
    %v5264 = vpop.permute.xlu0 %5263
    %v5265 = vsel %vm714, %v5262, %v5264
    %v5267 = vadd.f32 %v5256, %v5265
    %v5268 = vmul.f32 %v5199, %v4191
    %v5269 = vmul.f32 %v5200, %v4191
    %5272 = vrot.lane.b32.xlu0 %v5268, 111
    %v5273 = vpop.permute.xlu0 %5272
    %5274 = vrot.lane.b32.xlu0 %v5269, 111
    %v5275 = vpop.permute.xlu0 %5274
    %v5276 = vsel %vm743, %v5273, %v5275
    %v5278 = vadd.f32 %v5267, %v5276
    %v5279 = vmul.f32 %v5199, %v4202
    %v5280 = vmul.f32 %v5200, %v4202
    %5283 = vrot.lane.b32.xlu0 %v5279, 110
    %v5284 = vpop.permute.xlu0 %5283
    %5285 = vrot.lane.b32.xlu0 %v5280, 110
    %v5286 = vpop.permute.xlu0 %5285
    %v5287 = vsel %vm772, %v5284, %v5286
    %v5289 = vadd.f32 %v5278, %v5287
    %v5290 = vmul.f32 %v5289, %v4571
    %v5291 = vld [vmem:[%s69] sm:$0xff]
    %v5292 = vld [vmem:[%s69 + $0x8] sm:$0xff]
    %v5293 = vmax.f32 %v5201, 0.0
    %v5294 = vmax.f32 %v5210, 0.0
    %v5295 = vmax.f32 %v5221, 0.0
    %v5296 = vmax.f32 %v5232, 0.0
    %v5297 = vmax.f32 %v5243, 0.0
    %v5298 = vmax.f32 %v5254, 0.0
    %v5299 = vmax.f32 %v5265, 0.0
    %v5300 = vmax.f32 %v5276, 0.0
    %v5301 = vmax.f32 %v5287, 0.0
    %v5303 = vsel %vm4283, %v5291, 0
    %v5306 = vsel %vm4283, %v5292, 0
    %5308 = vmatprep.subr.mxu0 0.0
    %5309 = vmatpush1.msra.mxu0 %v5293
    %5310 = vmatprep.subr.mxu0 0.0
    %5311 = vmatpush1.msra.mxu0 %v5294
    %5312 = vmatprep.subr.mxu0 0.0
    %5313 = vmatpush1.msra.mxu0 %v5295
    %5314 = vmatprep.subr.mxu0 0.0
    %5315 = vmatpush1.msra.mxu0 %v5296
    %5316 = vmatprep.subr.mxu0 0.0
    %5317 = vmatpush1.msra.mxu0 %v5297
    %5318 = vmatprep.subr.mxu0 0.0
    %5319 = vmatpush1.msra.mxu0 %v5298
    %5320 = vmatprep.subr.mxu0 0.0
    %5321 = vmatpush1.msra.mxu0 %v5299
    %5322 = vmatprep.subr.mxu0 0.0
    %5323 = vmatpush1.msra.mxu0 %v5300
    %5324 = vmatprep.subr.mxu0 0.0
    %5325 = vmatpush1.msra.mxu0 %v5301
    %5326 = vmatprep.subr.mxu0 0.0
    %5327 = vmatpush1.msra.mxu0 0.0
    %5328 = vmatprep.subr.mxu0 0.0
    %5329 = vmatpush1.msra.mxu0 0.0
    %5330 = vmatprep.subr.mxu0 0.0
    %5331 = vmatpush1.msra.mxu0 0.0
    %5332 = vmatprep.subr.mxu0 0.0
    %5333 = vmatpush1.msra.mxu0 0.0
    %5334 = vmatprep.subr.mxu0 0.0
    %5335 = vmatpush1.msra.mxu0 0.0
    %5336 = vmatprep.subr.mxu0 0.0
    %5337 = vmatpush1.msra.mxu0 0.0
    %5338 = vmatprep.subr.mxu0 0.0
    %5339 = vmatpush1.msra.mxu0 0.0
    %5340 = vmatprep.subr.mxu0 0.0
    %5341 = vmatpush1.msra.mxu0 0.0
    %5342 = vmatprep.subr.mxu0 0.0
    %5343 = vmatpush1.msra.mxu0 0.0
    %5344 = vmatprep.subr.mxu0 0.0
    %5345 = vmatpush1.msra.mxu0 0.0
    %5346 = vmatprep.subr.mxu0 0.0
    %5347 = vmatpush1.msra.mxu0 0.0
    %5348 = vmatprep.subr.mxu0 0.0
    %5349 = vmatpush1.msra.mxu0 0.0
    %5350 = vmatprep.subr.mxu0 0.0
    %5351 = vmatpush1.msra.mxu0 0.0
    %5352 = vmatprep.subr.mxu0 0.0
    %5353 = vmatpush1.msra.mxu0 0.0
    %5354 = vmatprep.subr.mxu0 0.0
    %5355 = vmatpush1.msra.mxu0 0.0
    %5356 = vmatprep.subr.mxu0 0.0
    %5357 = vmatpush1.msra.mxu0 0.0
    %5358 = vmatprep.subr.mxu0 0.0
    %5359 = vmatpush1.msra.mxu0 0.0
    %5360 = vmatprep.subr.mxu0 0.0
    %5361 = vmatpush1.msra.mxu0 0.0
    %5362 = vmatprep.subr.mxu0 0.0
    %5363 = vmatpush1.msra.mxu0 0.0
    %5364 = vmatprep.subr.mxu0 0.0
    %5365 = vmatpush1.msra.mxu0 0.0
    %5366 = vmatprep.subr.mxu0 0.0
    %5367 = vmatpush1.msra.mxu0 0.0
    %5368 = vmatprep.subr.mxu0 0.0
    %5369 = vmatpush1.msra.mxu0 0.0
    %5370 = vmatprep.subr.mxu0 0.0
    %5371 = vmatpush1.msra.mxu0 0.0
    %5372 = vmatprep.mubr.f32.mxu0 0.0
    %5373 = vmatmul.mubr.f32.gmra.mrb[0].mxu0 %v5303
    %v5374 = vpop.f32.mrb[0].mxu0
    %v5375 = vadd.f32 0.0, %v5374
    %v5376 = vpop.f32.mrb[0].mxu0
    %5377 = vmatprep.mubr.f32.mxu0 0.0
    %5378 = vmatmul.mubr.f32.gmra.mrb[0].mxu0 %v5306
    %v5379 = vpop.f32.mrb[0].mxu0
    %v5380 = vadd.f32 0.0, %v5379
    %v5381 = vpop.f32.mrb[0].mxu0
    %5382 = vdwg.mxu0
    %5383 = vadd.xlane.f32.xlu0 %v5375
    %v5384 = vpop.xlane.xlu0 %5383
    %5385 = vadd.xlane.f32.xlu0 %v5380
    %v5386 = vpop.xlane.xlu0 %5385
    %v5387 = vmul.f32 %v5384, %v4081
    %v5388 = vmul.f32 %v5386, %v4081
    %v5389 = vsub.f32 %v5375, %v5387
    %v5390 = vsub.f32 %v5380, %v5388
    %v5391 = vmul.f32 %v5389, %v5389
    %v5392 = vmul.f32 %v5390, %v5390
    %5393 = vadd.xlane.f32.xlu0 %v5391
    %v5394 = vpop.xlane.xlu0 %5393
    %5395 = vadd.xlane.f32.xlu0 %v5392
    %v5396 = vpop.xlane.xlu0 %5395
    %v5397 = vmul.f32 %v5394, %v4081
    %v5398 = vmul.f32 %v5396, %v4081
    %v5399 = vadd.f32 %v5397, 1e-05
    %v5400 = vadd.f32 %v5398, 1e-05
    %v5401 = vrsqrt.pop %v5399
    %v5402 = vrsqrt.pop %v5400
    %v5403 = vmul.f32 %v5389, %v5401
    %v5404 = vmul.f32 %v5390, %v5402
    %v5405 = vld [vmem:[%s71] sm:$0xff]
    %v5406 = vld [vmem:[%s71 + $0x8] sm:$0xff]
    %5408 = vset.pattern.permute.xlu0 0
    %5409 = vperm.xlu0 %5408, %v5405
    %v5410 = vpop.permute.xlu0 %5409
    %5413 = vset.pattern.permute.xlu0 0
    %5414 = vperm.xlu0 %5413, %v5406
    %v5415 = vpop.permute.xlu0 %5414
    %v5417 = vmul.f32 %v5403, %v5410
    %v5418 = vmul.f32 %v5404, %v5415
    %v5419 = vld [vmem:[%s73] sm:$0xff]
    %v5420 = vld [vmem:[%s73 + $0x8] sm:$0xff]
    %5422 = vset.pattern.permute.xlu0 0
    %5423 = vperm.xlu0 %5422, %v5419
    %v5424 = vpop.permute.xlu0 %5423
    %5427 = vset.pattern.permute.xlu0 0
    %5428 = vperm.xlu0 %5427, %v5420
    %v5429 = vpop.permute.xlu0 %5428
    %v5431 = vadd.f32 %v5417, %v5424
    %v5432 = vadd.f32 %v5418, %v5429
    %v5433 = vmul.f32 %v3416, %v5186
    %v5434 = vmul.f32 %v3422, %v5431
    %v5435 = vadd.f32 %v5433, %v5434
    %v5436 = vmul.f32 %v3432, %v5432
    %v5437 = vadd.f32 %v5435, %v5436
    %v5438 = vmul.f32 %v3454, %v5290
    %v5439 = vadd.f32 %v5437, %v5438
    %v5440 = vadd.f32 %v5194, %v5439
    %5442 = vrot.lane.b32.xlu0 %v5440, 9
    %v5443 = vpop.permute.xlu0 %5442
    %v5445 = vsel %vm4109, 0.0, %v5443
    %v5446 = vsel %vm4109, %v5443, 0.0
    %v5447 = vmul.f32 %v5445, %v4116
    %v5448 = vmul.f32 %v5445, %v4125
    %v5449 = vmul.f32 %v5446, %v4125
    %v5450 = vmul.f32 %v5445, %v4136
    %v5451 = vmul.f32 %v5446, %v4136
    %v5452 = vmul.f32 %v5445, %v4147
    %v5453 = vmul.f32 %v5446, %v4147
    %v5454 = vmul.f32 %v5445, %v4158
    %v5455 = vmul.f32 %v5446, %v4158
    %v5456 = vmul.f32 %v5445, %v4169
    %v5457 = vmul.f32 %v5446, %v4169
    %v5458 = vmul.f32 %v5445, %v4180
    %v5459 = vmul.f32 %v5446, %v4180
    %v5460 = vmul.f32 %v5445, %v4191
    %v5461 = vmul.f32 %v5446, %v4191
    %v5462 = vmul.f32 %v5445, %v4202
    %v5463 = vmul.f32 %v5446, %v4202
    %5466 = vrot.lane.b32.xlu0 %v5448, 127
    %v5467 = vpop.permute.xlu0 %5466
    %5468 = vrot.lane.b32.xlu0 %v5449, 127
    %v5469 = vpop.permute.xlu0 %5468
    %v5470 = vsel %vm656, %v5467, %v5469
    %5474 = vrot.lane.b32.xlu0 %v5450, 126
    %v5475 = vpop.permute.xlu0 %5474
    %5476 = vrot.lane.b32.xlu0 %v5451, 126
    %v5477 = vpop.permute.xlu0 %5476
    %v5478 = vsel %vm685, %v5475, %v5477
    %5482 = vrot.lane.b32.xlu0 %v5452, 120
    %v5483 = vpop.permute.xlu0 %5482
    %5484 = vrot.lane.b32.xlu0 %v5453, 120
    %v5485 = vpop.permute.xlu0 %5484
    %v5486 = vsel %vm4228, %v5483, %v5485
    %5490 = vrot.lane.b32.xlu0 %v5454, 119
    %v5491 = vpop.permute.xlu0 %5490
    %5492 = vrot.lane.b32.xlu0 %v5455, 119
    %v5493 = vpop.permute.xlu0 %5492
    %v5494 = vsel %vm4237, %v5491, %v5493
    %5498 = vrot.lane.b32.xlu0 %v5456, 118
    %v5499 = vpop.permute.xlu0 %5498
    %5500 = vrot.lane.b32.xlu0 %v5457, 118
    %v5501 = vpop.permute.xlu0 %5500
    %v5502 = vsel %vm4246, %v5499, %v5501
    %5506 = vrot.lane.b32.xlu0 %v5458, 112
    %v5507 = vpop.permute.xlu0 %5506
    %5508 = vrot.lane.b32.xlu0 %v5459, 112
    %v5509 = vpop.permute.xlu0 %5508
    %v5510 = vsel %vm714, %v5507, %v5509
    %5514 = vrot.lane.b32.xlu0 %v5460, 111
    %v5515 = vpop.permute.xlu0 %5514
    %5516 = vrot.lane.b32.xlu0 %v5461, 111
    %v5517 = vpop.permute.xlu0 %5516
    %v5518 = vsel %vm743, %v5515, %v5517
    %5522 = vrot.lane.b32.xlu0 %v5462, 110
    %v5523 = vpop.permute.xlu0 %5522
    %5524 = vrot.lane.b32.xlu0 %v5463, 110
    %v5525 = vpop.permute.xlu0 %5524
    %v5526 = vsel %vm772, %v5523, %v5525
    %v5528 = vld [vmem:[%s75] sm:$0xff]
    %v5529 = vld [vmem:[%s75 + $0x8] sm:$0xff]
    %v5530 = vld [vmem:[%s75 + $0x10] sm:$0xff]
    %v5531 = vld [vmem:[%s75 + $0x18] sm:$0xff]
    %v5532 = vld [vmem:[%s75 + $0x20] sm:$0xff]
    %v5533 = vld [vmem:[%s75 + $0x28] sm:$0xff]
    %v5534 = vld [vmem:[%s75 + $0x30] sm:$0xff]
    %v5535 = vld [vmem:[%s75 + $0x38] sm:$0xff]
    %v5536 = vld [vmem:[%s75 + $0x40] sm:$0xff]
    %v5537 = vld [vmem:[%s75 + $0x48] sm:$0xff]
    %v5538 = vld [vmem:[%s75 + $0x50] sm:$0xff]
    %v5539 = vld [vmem:[%s75 + $0x58] sm:$0xff]
    %v5540 = vld [vmem:[%s75 + $0x60] sm:$0xff]
    %v5541 = vld [vmem:[%s75 + $0x68] sm:$0xff]
    %v5542 = vld [vmem:[%s75 + $0x70] sm:$0xff]
    %v5543 = vld [vmem:[%s75 + $0x78] sm:$0xff]
    %5544 = vmatprep.subr.mxu0 0.0
    %5545 = vmatpush1.msra.mxu0 %v5528
    %5546 = vmatprep.subr.mxu0 0.0
    %5547 = vmatpush1.msra.mxu0 %v5529
    %5548 = vmatprep.subr.mxu0 0.0
    %5549 = vmatpush1.msra.mxu0 %v5530
    %5550 = vmatprep.subr.mxu0 0.0
    %5551 = vmatpush1.msra.mxu0 %v5531
    %5552 = vmatprep.subr.mxu0 0.0
    %5553 = vmatpush1.msra.mxu0 %v5532
    %5554 = vmatprep.subr.mxu0 0.0
    %5555 = vmatpush1.msra.mxu0 %v5533
    %5556 = vmatprep.subr.mxu0 0.0
    %5557 = vmatpush1.msra.mxu0 %v5534
    %5558 = vmatprep.subr.mxu0 0.0
    %5559 = vmatpush1.msra.mxu0 %v5535
    %5560 = vmatprep.subr.mxu0 0.0
    %5561 = vmatpush1.msra.mxu0 %v5536
    %5562 = vmatprep.subr.mxu0 0.0
    %5563 = vmatpush1.msra.mxu0 %v5537
    %5564 = vmatprep.subr.mxu0 0.0
    %5565 = vmatpush1.msra.mxu0 %v5538
    %5566 = vmatprep.subr.mxu0 0.0
    %5567 = vmatpush1.msra.mxu0 %v5539
    %5568 = vmatprep.subr.mxu0 0.0
    %5569 = vmatpush1.msra.mxu0 %v5540
    %5570 = vmatprep.subr.mxu0 0.0
    %5571 = vmatpush1.msra.mxu0 %v5541
    %5572 = vmatprep.subr.mxu0 0.0
    %5573 = vmatpush1.msra.mxu0 %v5542
    %5574 = vmatprep.subr.mxu0 0.0
    %5575 = vmatpush1.msra.mxu0 %v5543
    %5576 = vmatprep.subr.mxu0 0.0
    %5577 = vmatpush1.msra.mxu0 0.0
    %5578 = vmatprep.subr.mxu0 0.0
    %5579 = vmatpush1.msra.mxu0 0.0
    %5580 = vmatprep.subr.mxu0 0.0
    %5581 = vmatpush1.msra.mxu0 0.0
    %5582 = vmatprep.subr.mxu0 0.0
    %5583 = vmatpush1.msra.mxu0 0.0
    %5584 = vmatprep.subr.mxu0 0.0
    %5585 = vmatpush1.msra.mxu0 0.0
    %5586 = vmatprep.subr.mxu0 0.0
    %5587 = vmatpush1.msra.mxu0 0.0
    %5588 = vmatprep.subr.mxu0 0.0
    %5589 = vmatpush1.msra.mxu0 0.0
    %5590 = vmatprep.subr.mxu0 0.0
    %5591 = vmatpush1.msra.mxu0 0.0
    %5592 = vmatprep.subr.mxu0 0.0
    %5593 = vmatpush1.msra.mxu0 0.0
    %5594 = vmatprep.subr.mxu0 0.0
    %5595 = vmatpush1.msra.mxu0 0.0
    %5596 = vmatprep.subr.mxu0 0.0
    %5597 = vmatpush1.msra.mxu0 0.0
    %5598 = vmatprep.subr.mxu0 0.0
    %5599 = vmatpush1.msra.mxu0 0.0
    %5600 = vmatprep.subr.mxu0 0.0
    %5601 = vmatpush1.msra.mxu0 0.0
    %5602 = vmatprep.subr.mxu0 0.0
    %5603 = vmatpush1.msra.mxu0 0.0
    %5604 = vmatprep.subr.mxu0 0.0
    %5605 = vmatpush1.msra.mxu0 0.0
    %5606 = vmatprep.subr.mxu0 0.0
    %5607 = vmatpush1.msra.mxu0 0.0
    %5608 = vmatprep.mubr.f32.mxu0 0.0
    %5609 = vmatmul.mubr.f32.gmra.mrb[0].mxu0 %v5447
    %v5610 = vpop.f32.mrb[0].mxu0
    %v5611 = vadd.f32 0.0, %v5610
    %v5612 = vpop.f32.mrb[0].mxu0
    %5613 = vmatprep.mubr.f32.mxu0 0.0
    %5614 = vmatmul.mubr.f32.gmra.mrb[0].mxu0 %v5470
    %v5615 = vpop.f32.mrb[0].mxu0
    %v5616 = vadd.f32 0.0, %v5615
    %v5617 = vpop.f32.mrb[0].mxu0
    %5618 = vmatprep.mubr.f32.mxu0 0.0
    %5619 = vmatmul.mubr.f32.gmra.mrb[0].mxu0 %v5478
    %v5620 = vpop.f32.mrb[0].mxu0
    %v5621 = vadd.f32 0.0, %v5620
    %v5622 = vpop.f32.mrb[0].mxu0
    %5623 = vmatprep.mubr.f32.mxu0 0.0
    %5624 = vmatmul.mubr.f32.gmra.mrb[0].mxu0 %v5486
    %v5625 = vpop.f32.mrb[0].mxu0
    %v5626 = vadd.f32 0.0, %v5625
    %v5627 = vpop.f32.mrb[0].mxu0
    %5628 = vmatprep.mubr.f32.mxu0 0.0
    %5629 = vmatmul.mubr.f32.gmra.mrb[0].mxu0 %v5494
    %v5630 = vpop.f32.mrb[0].mxu0
    %v5631 = vadd.f32 0.0, %v5630
    %v5632 = vpop.f32.mrb[0].mxu0
    %5633 = vmatprep.mubr.f32.mxu0 0.0
    %5634 = vmatmul.mubr.f32.gmra.mrb[0].mxu0 %v5502
    %v5635 = vpop.f32.mrb[0].mxu0
    %v5636 = vadd.f32 0.0, %v5635
    %v5637 = vpop.f32.mrb[0].mxu0
    %5638 = vmatprep.mubr.f32.mxu0 0.0
    %5639 = vmatmul.mubr.f32.gmra.mrb[0].mxu0 %v5510
    %v5640 = vpop.f32.mrb[0].mxu0
    %v5641 = vadd.f32 0.0, %v5640
    %v5642 = vpop.f32.mrb[0].mxu0
    %5643 = vmatprep.mubr.f32.mxu0 0.0
    %5644 = vmatmul.mubr.f32.gmra.mrb[0].mxu0 %v5518
    %v5645 = vpop.f32.mrb[0].mxu0
    %v5646 = vadd.f32 0.0, %v5645
    %v5647 = vpop.f32.mrb[0].mxu0
    %5648 = vmatprep.mubr.f32.mxu0 0.0
    %5649 = vmatmul.mubr.f32.gmra.mrb[0].mxu0 %v5526
    %v5650 = vpop.f32.mrb[0].mxu0
    %v5651 = vadd.f32 0.0, %v5650
    %v5652 = vpop.f32.mrb[0].mxu0
    %5653 = vdwg.mxu0
    %v5654 = vld [vmem:[%s77] sm:$0xff]
    %v5655 = vld [vmem:[%s77 + $0x8] sm:$0xff]
    %v5656 = vmax.f32 %v5611, 0.0
    %v5657 = vmax.f32 %v5616, 0.0
    %v5658 = vmax.f32 %v5621, 0.0
    %v5659 = vmax.f32 %v5626, 0.0
    %v5660 = vmax.f32 %v5631, 0.0
    %v5661 = vmax.f32 %v5636, 0.0
    %v5662 = vmax.f32 %v5641, 0.0
    %v5663 = vmax.f32 %v5646, 0.0
    %v5664 = vmax.f32 %v5651, 0.0
    %v5666 = vsel %vm4283, %v5654, 0
    %v5669 = vsel %vm4283, %v5655, 0
    %5671 = vmatprep.subr.mxu0 0.0
    %5672 = vmatpush1.msra.mxu0 %v5656
    %5673 = vmatprep.subr.mxu0 0.0
    %5674 = vmatpush1.msra.mxu0 %v5657
    %5675 = vmatprep.subr.mxu0 0.0
    %5676 = vmatpush1.msra.mxu0 %v5658
    %5677 = vmatprep.subr.mxu0 0.0
    %5678 = vmatpush1.msra.mxu0 %v5659
    %5679 = vmatprep.subr.mxu0 0.0
    %5680 = vmatpush1.msra.mxu0 %v5660
    %5681 = vmatprep.subr.mxu0 0.0
    %5682 = vmatpush1.msra.mxu0 %v5661
    %5683 = vmatprep.subr.mxu0 0.0
    %5684 = vmatpush1.msra.mxu0 %v5662
    %5685 = vmatprep.subr.mxu0 0.0
    %5686 = vmatpush1.msra.mxu0 %v5663
    %5687 = vmatprep.subr.mxu0 0.0
    %5688 = vmatpush1.msra.mxu0 %v5664
    %5689 = vmatprep.subr.mxu0 0.0
    %5690 = vmatpush1.msra.mxu0 0.0
    %5691 = vmatprep.subr.mxu0 0.0
    %5692 = vmatpush1.msra.mxu0 0.0
    %5693 = vmatprep.subr.mxu0 0.0
    %5694 = vmatpush1.msra.mxu0 0.0
    %5695 = vmatprep.subr.mxu0 0.0
    %5696 = vmatpush1.msra.mxu0 0.0
    %5697 = vmatprep.subr.mxu0 0.0
    %5698 = vmatpush1.msra.mxu0 0.0
    %5699 = vmatprep.subr.mxu0 0.0
    %5700 = vmatpush1.msra.mxu0 0.0
    %5701 = vmatprep.subr.mxu0 0.0
    %5702 = vmatpush1.msra.mxu0 0.0
    %5703 = vmatprep.subr.mxu0 0.0
    %5704 = vmatpush1.msra.mxu0 0.0
    %5705 = vmatprep.subr.mxu0 0.0
    %5706 = vmatpush1.msra.mxu0 0.0
    %5707 = vmatprep.subr.mxu0 0.0
    %5708 = vmatpush1.msra.mxu0 0.0
    %5709 = vmatprep.subr.mxu0 0.0
    %5710 = vmatpush1.msra.mxu0 0.0
    %5711 = vmatprep.subr.mxu0 0.0
    %5712 = vmatpush1.msra.mxu0 0.0
    %5713 = vmatprep.subr.mxu0 0.0
    %5714 = vmatpush1.msra.mxu0 0.0
    %5715 = vmatprep.subr.mxu0 0.0
    %5716 = vmatpush1.msra.mxu0 0.0
    %5717 = vmatprep.subr.mxu0 0.0
    %5718 = vmatpush1.msra.mxu0 0.0
    %5719 = vmatprep.subr.mxu0 0.0
    %5720 = vmatpush1.msra.mxu0 0.0
    %5721 = vmatprep.subr.mxu0 0.0
    %5722 = vmatpush1.msra.mxu0 0.0
    %5723 = vmatprep.subr.mxu0 0.0
    %5724 = vmatpush1.msra.mxu0 0.0
    %5725 = vmatprep.subr.mxu0 0.0
    %5726 = vmatpush1.msra.mxu0 0.0
    %5727 = vmatprep.subr.mxu0 0.0
    %5728 = vmatpush1.msra.mxu0 0.0
    %5729 = vmatprep.subr.mxu0 0.0
    %5730 = vmatpush1.msra.mxu0 0.0
    %5731 = vmatprep.subr.mxu0 0.0
    %5732 = vmatpush1.msra.mxu0 0.0
    %5733 = vmatprep.subr.mxu0 0.0
    %5734 = vmatpush1.msra.mxu0 0.0
    %5735 = vmatprep.mubr.f32.mxu0 0.0
    %5736 = vmatmul.mubr.f32.gmra.mrb[0].mxu0 %v5666
    %v5737 = vpop.f32.mrb[0].mxu0
    %v5738 = vadd.f32 0.0, %v5737
    %v5739 = vpop.f32.mrb[0].mxu0
    %5740 = vmatprep.mubr.f32.mxu0 0.0
    %5741 = vmatmul.mubr.f32.gmra.mrb[0].mxu0 %v5669
    %v5742 = vpop.f32.mrb[0].mxu0
    %v5743 = vadd.f32 0.0, %v5742
    %v5744 = vpop.f32.mrb[0].mxu0
    %5745 = vdwg.mxu0
    %v5746 = vsel %vm540, %v5738, 0.0
    %5747 = vadd.xlane.f32.xlu0 %v5746
    %v5748 = vpop.xlane.xlu0 %5747
    %v5749 = vsel %vm540, %v5743, 0.0
    %5750 = vadd.xlane.f32.xlu0 %v5749
    %v5751 = vpop.xlane.xlu0 %5750
    %v5752 = vrcp.pop 32.0
    %v5753 = vmul.f32 %v5748, %v5752
    %v5754 = vmul.f32 %v5751, %v5752
    %v5755 = vsub.f32 %v5738, %v5753
    %v5756 = vsub.f32 %v5743, %v5754
    %v5757 = vmul.f32 %v5755, %v5755
    %v5758 = vmul.f32 %v5756, %v5756
    %v5759 = vsel %vm540, %v5757, 0.0
    %5760 = vadd.xlane.f32.xlu0 %v5759
    %v5761 = vpop.xlane.xlu0 %5760
    %v5762 = vsel %vm540, %v5758, 0.0
    %5763 = vadd.xlane.f32.xlu0 %v5762
    %v5764 = vpop.xlane.xlu0 %5763
    %v5765 = vmul.f32 %v5761, %v5752
    %v5766 = vmul.f32 %v5764, %v5752
    %v5767 = vadd.f32 %v5765, 1e-05
    %v5768 = vadd.f32 %v5766, 1e-05
    %v5769 = vrsqrt.pop %v5767
    %v5770 = vrsqrt.pop %v5768
    %v5771 = vmul.f32 %v5755, %v5769
    %v5772 = vmul.f32 %v5756, %v5770
    %v5773 = vld [vmem:[%s79] sm:$0xff]
    %v5774 = vld [vmem:[%s79 + $0x8] sm:$0xff]
    %5776 = vset.pattern.permute.xlu0 0
    %5777 = vperm.xlu0 %5776, %v5773
    %v5778 = vpop.permute.xlu0 %5777
    %5781 = vset.pattern.permute.xlu0 0
    %5782 = vperm.xlu0 %5781, %v5774
    %v5783 = vpop.permute.xlu0 %5782
    %v5785 = vmul.f32 %v5771, %v5778
    %v5786 = vmul.f32 %v5772, %v5783
    %v5787 = vld [vmem:[%s81] sm:$0xff]
    %v5788 = vld [vmem:[%s81 + $0x8] sm:$0xff]
    %5790 = vset.pattern.permute.xlu0 0
    %5791 = vperm.xlu0 %5790, %v5787
    %v5792 = vpop.permute.xlu0 %5791
    %5795 = vset.pattern.permute.xlu0 0
    %5796 = vperm.xlu0 %5795, %v5788
    %v5797 = vpop.permute.xlu0 %5796
    %v5799 = vadd.f32 %v5785, %v5792
    %v5800 = vadd.f32 %v5786, %v5797
    %5803 = vrot.lane.b32.xlu0 %v5799, 5
    %v5804 = vpop.permute.xlu0 %5803
    %5805 = vrot.lane.b32.xlu0 %v5800, 5
    %v5806 = vpop.permute.xlu0 %5805
    %vm5809 = vcmask 39936
    %v5810 = vsel %vm5809, 0.0, %v5804
    %v5811 = vsel %vm5809, 0.0, %v5806
    %vm5812 = vcmask 302080
    %v5813 = vsel %vm5812, %v5810, 0.0
    %v5814 = vsel %vm5812, %v5811, 0.0
    %v5815 = vld [vmem:[%s13] sm:$0x1]
    %v5816 = vlaneseq
    %v5817 = vshrl.u32 %v5816, 7
    %v5818 = vsub.s32 0, %v5817
    %v5819 = vrot.slane %v5815, %v5818
    %v5820 = vmul.f32 %v5813, %v5819
    %v5821 = vmul.f32 %v5814, %v5819
    %v5822 = vld [vmem:[%s13 + $0x1] sm:$0x1]
    %v5823 = vlaneseq
    %v5824 = vshrl.u32 %v5823, 7
    %v5825 = vsub.s32 0, %v5824
    %v5826 = vrot.slane %v5822, %v5825
    %5828 = vrot.lane.b32.xlu0 %v5826, 1
    %v5829 = vpop.permute.xlu0 %5828
    %v5831 = vmul.f32 %v5813, %v5829
    %v5832 = vmul.f32 %v5814, %v5829
    %v5833 = vld [vmem:[%s13 + $0x2] sm:$0x1]
    %v5834 = vlaneseq
    %v5835 = vshrl.u32 %v5834, 7
    %v5836 = vsub.s32 0, %v5835
    %v5837 = vrot.slane %v5833, %v5836
    %5839 = vrot.lane.b32.xlu0 %v5837, 2
    %v5840 = vpop.permute.xlu0 %5839
    %v5842 = vmul.f32 %v5813, %v5840
    %v5843 = vmul.f32 %v5814, %v5840
    %v5844 = vld [vmem:[%s13 + $0x3] sm:$0x1]
    %v5845 = vlaneseq
    %v5846 = vshrl.u32 %v5845, 7
    %v5847 = vsub.s32 0, %v5846
    %v5848 = vrot.slane %v5844, %v5847
    %5850 = vrot.lane.b32.xlu0 %v5848, 4
    %v5851 = vpop.permute.xlu0 %5850
    %v5853 = vmul.f32 %v5813, %v5851
    %v5854 = vmul.f32 %v5814, %v5851
    %v5855 = vld [vmem:[%s13 + $0x4] sm:$0x1]
    %v5856 = vlaneseq
    %v5857 = vshrl.u32 %v5856, 7
    %v5858 = vsub.s32 0, %v5857
    %v5859 = vrot.slane %v5855, %v5858
    %5861 = vrot.lane.b32.xlu0 %v5859, 5
    %v5862 = vpop.permute.xlu0 %5861
    %v5864 = vmul.f32 %v5813, %v5862
    %v5865 = vmul.f32 %v5814, %v5862
    %v5866 = vld [vmem:[%s13 + $0x5] sm:$0x1]
    %v5867 = vlaneseq
    %v5868 = vshrl.u32 %v5867, 7
    %v5869 = vsub.s32 0, %v5868
    %v5870 = vrot.slane %v5866, %v5869
    %5872 = vrot.lane.b32.xlu0 %v5870, 6
    %v5873 = vpop.permute.xlu0 %5872
    %v5875 = vmul.f32 %v5813, %v5873
    %v5876 = vmul.f32 %v5814, %v5873
    %v5877 = vld [vmem:[%s13 + $0x6] sm:$0x1]
    %v5878 = vlaneseq
    %v5879 = vshrl.u32 %v5878, 7
    %v5880 = vsub.s32 0, %v5879
    %v5881 = vrot.slane %v5877, %v5880
    %5883 = vrot.lane.b32.xlu0 %v5881, 8
    %v5884 = vpop.permute.xlu0 %5883
    %v5886 = vmul.f32 %v5813, %v5884
    %v5887 = vmul.f32 %v5814, %v5884
    %v5888 = vld [vmem:[%s13 + $0x7] sm:$0x1]
    %v5889 = vlaneseq
    %v5890 = vshrl.u32 %v5889, 7
    %v5891 = vsub.s32 0, %v5890
    %v5892 = vrot.slane %v5888, %v5891
    %5894 = vrot.lane.b32.xlu0 %v5892, 9
    %v5895 = vpop.permute.xlu0 %5894
    %v5897 = vmul.f32 %v5813, %v5895
    %v5898 = vmul.f32 %v5814, %v5895
    %v5899 = vld [vmem:[%s13 + $0x8] sm:$0x1]
    %v5900 = vlaneseq
    %v5901 = vshrl.u32 %v5900, 7
    %v5902 = vsub.s32 0, %v5901
    %v5903 = vrot.slane %v5899, %v5902
    %5905 = vrot.lane.b32.xlu0 %v5903, 10
    %v5906 = vpop.permute.xlu0 %5905
    %v5908 = vmul.f32 %v5813, %v5906
    %v5909 = vmul.f32 %v5814, %v5906
    %5912 = vrot.lane.b32.xlu0 %v5831, 127
    %v5913 = vpop.permute.xlu0 %5912
    %5914 = vrot.lane.b32.xlu0 %v5832, 127
    %v5915 = vpop.permute.xlu0 %5914
    %5920 = vrot.lane.b32.xlu0 %v5842, 126
    %v5921 = vpop.permute.xlu0 %5920
    %5922 = vrot.lane.b32.xlu0 %v5843, 126
    %v5923 = vpop.permute.xlu0 %5922
    %5928 = vrot.lane.b32.xlu0 %v5853, 124
    %v5929 = vpop.permute.xlu0 %5928
    %5930 = vrot.lane.b32.xlu0 %v5854, 124
    %v5931 = vpop.permute.xlu0 %5930
    %5936 = vrot.lane.b32.xlu0 %v5864, 123
    %v5937 = vpop.permute.xlu0 %5936
    %5938 = vrot.lane.b32.xlu0 %v5865, 123
    %v5939 = vpop.permute.xlu0 %5938
    %5944 = vrot.lane.b32.xlu0 %v5875, 122
    %v5945 = vpop.permute.xlu0 %5944
    %5946 = vrot.lane.b32.xlu0 %v5876, 122
    %v5947 = vpop.permute.xlu0 %5946
    %5952 = vrot.lane.b32.xlu0 %v5886, 120
    %v5953 = vpop.permute.xlu0 %5952
    %5954 = vrot.lane.b32.xlu0 %v5887, 120
    %v5955 = vpop.permute.xlu0 %5954
    %5960 = vrot.lane.b32.xlu0 %v5897, 119
    %v5961 = vpop.permute.xlu0 %5960
    %5962 = vrot.lane.b32.xlu0 %v5898, 119
    %v5963 = vpop.permute.xlu0 %5962
    %5968 = vrot.lane.b32.xlu0 %v5908, 118
    %v5969 = vpop.permute.xlu0 %5968
    %5970 = vrot.lane.b32.xlu0 %v5909, 118
    %v5971 = vpop.permute.xlu0 %5970
    %v5974 = vld [vmem:[%s83] sm:$0xff]
    %v5975 = vld [vmem:[%s83 + $0x8] sm:$0xff]
    %v5976 = vld [vmem:[%s83 + $0x10] sm:$0xff]
    %v5977 = vld [vmem:[%s83 + $0x18] sm:$0xff]
    %v5978 = vmax.f32 %v5820, 0.0
    %v5979 = vmax.f32 %v5821, 0.0
    %v5980 = vmax.f32 %v5913, 0.0
    %v5981 = vmax.f32 %v5915, 0.0
    %v5982 = vmax.f32 %v5921, 0.0
    %v5983 = vmax.f32 %v5923, 0.0
    %v5984 = vmax.f32 %v5929, 0.0
    %v5985 = vmax.f32 %v5931, 0.0
    %v5986 = vmax.f32 %v5937, 0.0
    %v5987 = vmax.f32 %v5939, 0.0
    %v5988 = vmax.f32 %v5945, 0.0
    %v5989 = vmax.f32 %v5947, 0.0
    %v5990 = vmax.f32 %v5953, 0.0
    %v5991 = vmax.f32 %v5955, 0.0
    %v5992 = vmax.f32 %v5961, 0.0
    %v5993 = vmax.f32 %v5963, 0.0
    %v5994 = vmax.f32 %v5969, 0.0
    %v5995 = vmax.f32 %v5971, 0.0
    %v5997 = vsel %vm418, %v5975, 0
    %v6000 = vsel %vm418, %v5977, 0
    %6002 = vmatprep.subr.mxu0 0.0
    %6003 = vmatpush1.msra.mxu0 %v5978
    %6004 = vmatprep.subr.mxu0 0.0
    %6005 = vmatpush1.msra.mxu0 %v5979
    %6006 = vmatprep.subr.mxu0 0.0
    %6007 = vmatpush1.msra.mxu0 %v5980
    %6008 = vmatprep.subr.mxu0 0.0
    %6009 = vmatpush1.msra.mxu0 %v5981
    %6010 = vmatprep.subr.mxu0 0.0
    %6011 = vmatpush1.msra.mxu0 %v5982
    %6012 = vmatprep.subr.mxu0 0.0
    %6013 = vmatpush1.msra.mxu0 %v5983
    %6014 = vmatprep.subr.mxu0 0.0
    %6015 = vmatpush1.msra.mxu0 %v5984
    %6016 = vmatprep.subr.mxu0 0.0
    %6017 = vmatpush1.msra.mxu0 %v5985
    %6018 = vmatprep.subr.mxu0 0.0
    %6019 = vmatpush1.msra.mxu0 %v5986
    %6020 = vmatprep.subr.mxu0 0.0
    %6021 = vmatpush1.msra.mxu0 %v5987
    %6022 = vmatprep.subr.mxu0 0.0
    %6023 = vmatpush1.msra.mxu0 %v5988
    %6024 = vmatprep.subr.mxu0 0.0
    %6025 = vmatpush1.msra.mxu0 %v5989
    %6026 = vmatprep.subr.mxu0 0.0
    %6027 = vmatpush1.msra.mxu0 %v5990
    %6028 = vmatprep.subr.mxu0 0.0
    %6029 = vmatpush1.msra.mxu0 %v5991
    %6030 = vmatprep.subr.mxu0 0.0
    %6031 = vmatpush1.msra.mxu0 %v5992
    %6032 = vmatprep.subr.mxu0 0.0
    %6033 = vmatpush1.msra.mxu0 %v5993
    %6034 = vmatprep.subr.mxu0 0.0
    %6035 = vmatpush1.msra.mxu0 %v5994
    %6036 = vmatprep.subr.mxu0 0.0
    %6037 = vmatpush1.msra.mxu0 %v5995
    %6038 = vmatprep.subr.mxu0 0.0
    %6039 = vmatpush1.msra.mxu0 0.0
    %6040 = vmatprep.subr.mxu0 0.0
    %6041 = vmatpush1.msra.mxu0 0.0
    %6042 = vmatprep.subr.mxu0 0.0
    %6043 = vmatpush1.msra.mxu0 0.0
    %6044 = vmatprep.subr.mxu0 0.0
    %6045 = vmatpush1.msra.mxu0 0.0
    %6046 = vmatprep.subr.mxu0 0.0
    %6047 = vmatpush1.msra.mxu0 0.0
    %6048 = vmatprep.subr.mxu0 0.0
    %6049 = vmatpush1.msra.mxu0 0.0
    %6050 = vmatprep.subr.mxu0 0.0
    %6051 = vmatpush1.msra.mxu0 0.0
    %6052 = vmatprep.subr.mxu0 0.0
    %6053 = vmatpush1.msra.mxu0 0.0
    %6054 = vmatprep.subr.mxu0 0.0
    %6055 = vmatpush1.msra.mxu0 0.0
    %6056 = vmatprep.subr.mxu0 0.0
    %6057 = vmatpush1.msra.mxu0 0.0
    %6058 = vmatprep.subr.mxu0 0.0
    %6059 = vmatpush1.msra.mxu0 0.0
    %6060 = vmatprep.subr.mxu0 0.0
    %6061 = vmatpush1.msra.mxu0 0.0
    %6062 = vmatprep.subr.mxu0 0.0
    %6063 = vmatpush1.msra.mxu0 0.0
    %6064 = vmatprep.subr.mxu0 0.0
    %6065 = vmatpush1.msra.mxu0 0.0
    %6066 = vmatprep.mubr.f32.mxu0 %v5997
    %6067 = vmatmul.mubr.f32.gmra.mrb[0].mxu0 %v5974
    %v6068 = vpop.f32.mrb[0].mxu0
    %v6069 = vadd.f32 0.0, %v6068
    %v6070 = vpop.f32.mrb[0].mxu0
    %6071 = vmatprep.mubr.f32.mxu0 %v6000
    %6072 = vmatmul.mubr.f32.gmra.mrb[0].mxu0 %v5976
    %v6073 = vpop.f32.mrb[0].mxu0
    %v6074 = vadd.f32 0.0, %v6073
    %v6075 = vpop.f32.mrb[0].mxu0
    %6076 = vdwg.mxu0
    %v6077 = vsel %vm540, %v6069, 0.0
    %6078 = vadd.xlane.f32.xlu0 %v6077
    %v6079 = vpop.xlane.xlu0 %6078
    %v6080 = vsel %vm540, %v6074, 0.0
    %6081 = vadd.xlane.f32.xlu0 %v6080
    %v6082 = vpop.xlane.xlu0 %6081
    %v6083 = vmul.f32 %v6079, %v5752
    %v6084 = vmul.f32 %v6082, %v5752
    %v6085 = vsub.f32 %v6069, %v6083
    %v6086 = vsub.f32 %v6074, %v6084
    %v6087 = vmul.f32 %v6085, %v6085
    %v6088 = vmul.f32 %v6086, %v6086
    %v6089 = vsel %vm540, %v6087, 0.0
    %6090 = vadd.xlane.f32.xlu0 %v6089
    %v6091 = vpop.xlane.xlu0 %6090
    %v6092 = vsel %vm540, %v6088, 0.0
    %6093 = vadd.xlane.f32.xlu0 %v6092
    %v6094 = vpop.xlane.xlu0 %6093
    %v6095 = vmul.f32 %v6091, %v5752
    %v6096 = vmul.f32 %v6094, %v5752
    %v6097 = vadd.f32 %v6095, 1e-05
    %v6098 = vadd.f32 %v6096, 1e-05
    %v6099 = vrsqrt.pop %v6097
    %v6100 = vrsqrt.pop %v6098
    %v6101 = vmul.f32 %v6085, %v6099
    %v6102 = vmul.f32 %v6086, %v6100
    %v6103 = vld [vmem:[%s85] sm:$0xff]
    %v6104 = vld [vmem:[%s85 + $0x8] sm:$0xff]
    %6106 = vset.pattern.permute.xlu0 0
    %6107 = vperm.xlu0 %6106, %v6103
    %v6108 = vpop.permute.xlu0 %6107
    %6111 = vset.pattern.permute.xlu0 0
    %6112 = vperm.xlu0 %6111, %v6104
    %v6113 = vpop.permute.xlu0 %6112
    %v6115 = vmul.f32 %v6101, %v6108
    %v6116 = vmul.f32 %v6102, %v6113
    %v6117 = vld [vmem:[%s87] sm:$0xff]
    %v6118 = vld [vmem:[%s87 + $0x8] sm:$0xff]
    %6120 = vset.pattern.permute.xlu0 0
    %6121 = vperm.xlu0 %6120, %v6117
    %v6122 = vpop.permute.xlu0 %6121
    %6125 = vset.pattern.permute.xlu0 0
    %6126 = vperm.xlu0 %6125, %v6118
    %v6127 = vpop.permute.xlu0 %6126
    %v6129 = vadd.f32 %v6115, %v6122
    %v6130 = vadd.f32 %v6116, %v6127
    %v6131 = vadd.f32 %v5631, %v5636
    %v6132 = vadd.f32 %v6131, %v5646
    %v6133 = vadd.f32 %v6132, %v5651
    %v6134 = vmul.f32 %v6133, 0.25
    %v6135 = vld [vmem:[%s89] sm:$0xff]
    %v6136 = vld [vmem:[%s89 + $0x8] sm:$0xff]
    %vm6137 = vcmask 64512
    %v6139 = vsel %vm6137, %v6135, 0
    %v6142 = vsel %vm6137, %v6136, 0
    %6144 = vmatprep.subr.mxu0 0.0
    %6145 = vmatpush1.msra.mxu0 %v6134
    %6146 = vmatprep.subr.mxu0 0.0
    %6147 = vmatpush1.msra.mxu0 0.0
    %6148 = vmatprep.subr.mxu0 0.0
    %6149 = vmatpush1.msra.mxu0 0.0
    %6150 = vmatprep.subr.mxu0 0.0
    %6151 = vmatpush1.msra.mxu0 0.0
    %6152 = vmatprep.subr.mxu0 0.0
    %6153 = vmatpush1.msra.mxu0 0.0
    %6154 = vmatprep.subr.mxu0 0.0
    %6155 = vmatpush1.msra.mxu0 0.0
    %6156 = vmatprep.subr.mxu0 0.0
    %6157 = vmatpush1.msra.mxu0 0.0
    %6158 = vmatprep.subr.mxu0 0.0
    %6159 = vmatpush1.msra.mxu0 0.0
    %6160 = vmatprep.subr.mxu0 0.0
    %6161 = vmatpush1.msra.mxu0 0.0
    %6162 = vmatprep.subr.mxu0 0.0
    %6163 = vmatpush1.msra.mxu0 0.0
    %6164 = vmatprep.subr.mxu0 0.0
    %6165 = vmatpush1.msra.mxu0 0.0
    %6166 = vmatprep.subr.mxu0 0.0
    %6167 = vmatpush1.msra.mxu0 0.0
    %6168 = vmatprep.subr.mxu0 0.0
    %6169 = vmatpush1.msra.mxu0 0.0
    %6170 = vmatprep.subr.mxu0 0.0
    %6171 = vmatpush1.msra.mxu0 0.0
    %6172 = vmatprep.subr.mxu0 0.0
    %6173 = vmatpush1.msra.mxu0 0.0
    %6174 = vmatprep.subr.mxu0 0.0
    %6175 = vmatpush1.msra.mxu0 0.0
    %6176 = vmatprep.subr.mxu0 0.0
    %6177 = vmatpush1.msra.mxu0 0.0
    %6178 = vmatprep.subr.mxu0 0.0
    %6179 = vmatpush1.msra.mxu0 0.0
    %6180 = vmatprep.subr.mxu0 0.0
    %6181 = vmatpush1.msra.mxu0 0.0
    %6182 = vmatprep.subr.mxu0 0.0
    %6183 = vmatpush1.msra.mxu0 0.0
    %6184 = vmatprep.subr.mxu0 0.0
    %6185 = vmatpush1.msra.mxu0 0.0
    %6186 = vmatprep.subr.mxu0 0.0
    %6187 = vmatpush1.msra.mxu0 0.0
    %6188 = vmatprep.subr.mxu0 0.0
    %6189 = vmatpush1.msra.mxu0 0.0
    %6190 = vmatprep.subr.mxu0 0.0
    %6191 = vmatpush1.msra.mxu0 0.0
    %6192 = vmatprep.subr.mxu0 0.0
    %6193 = vmatpush1.msra.mxu0 0.0
    %6194 = vmatprep.subr.mxu0 0.0
    %6195 = vmatpush1.msra.mxu0 0.0
    %6196 = vmatprep.subr.mxu0 0.0
    %6197 = vmatpush1.msra.mxu0 0.0
    %6198 = vmatprep.subr.mxu0 0.0
    %6199 = vmatpush1.msra.mxu0 0.0
    %6200 = vmatprep.subr.mxu0 0.0
    %6201 = vmatpush1.msra.mxu0 0.0
    %6202 = vmatprep.subr.mxu0 0.0
    %6203 = vmatpush1.msra.mxu0 0.0
    %6204 = vmatprep.subr.mxu0 0.0
    %6205 = vmatpush1.msra.mxu0 0.0
    %6206 = vmatprep.subr.mxu0 0.0
    %6207 = vmatpush1.msra.mxu0 0.0
    %6208 = vmatprep.mubr.f32.mxu0 0.0
    %6209 = vmatmul.mubr.f32.gmra.mrb[0].mxu0 %v6139
    %v6210 = vpop.f32.mrb[0].mxu0
    %v6211 = vadd.f32 0.0, %v6210
    %v6212 = vpop.f32.mrb[0].mxu0
    %6213 = vmatprep.mubr.f32.mxu0 0.0
    %6214 = vmatmul.mubr.f32.gmra.mrb[0].mxu0 %v6142
    %v6215 = vpop.f32.mrb[0].mxu0
    %v6216 = vadd.f32 0.0, %v6215
    %v6217 = vpop.f32.mrb[0].mxu0
    %6218 = vdwg.mxu0
    %v6219 = vadd.f32 %v6129, %v6211
    %v6220 = vadd.f32 %v6130, %v6216
    %6223 = vrot.lane.b32.xlu0 %v6219, 5
    %v6224 = vpop.permute.xlu0 %6223
    %6225 = vrot.lane.b32.xlu0 %v6220, 5
    %v6226 = vpop.permute.xlu0 %6225
    %v6229 = vsel %vm5809, 0.0, %v6224
    %v6230 = vsel %vm5809, 0.0, %v6226
    %v6231 = vsel %vm5812, %v6229, 0.0
    %v6232 = vsel %vm5812, %v6230, 0.0
    %v6233 = vmul.f32 %v6231, %v5819
    %v6234 = vmul.f32 %v6232, %v5819
    %v6235 = vmul.f32 %v6231, %v5829
    %v6236 = vmul.f32 %v6232, %v5829
    %6239 = vrot.lane.b32.xlu0 %v6235, 127
    %v6240 = vpop.permute.xlu0 %6239
    %6241 = vrot.lane.b32.xlu0 %v6236, 127
    %v6242 = vpop.permute.xlu0 %6241
    %v6245 = vadd.f32 %v6233, %v6240
    %v6246 = vadd.f32 %v6234, %v6242
    %v6247 = vmul.f32 %v6231, %v5840
    %v6248 = vmul.f32 %v6232, %v5840
    %6251 = vrot.lane.b32.xlu0 %v6247, 126
    %v6252 = vpop.permute.xlu0 %6251
    %6253 = vrot.lane.b32.xlu0 %v6248, 126
    %v6254 = vpop.permute.xlu0 %6253
    %v6257 = vadd.f32 %v6245, %v6252
    %v6258 = vadd.f32 %v6246, %v6254
    %v6259 = vmul.f32 %v6231, %v5851
    %v6260 = vmul.f32 %v6232, %v5851
    %6263 = vrot.lane.b32.xlu0 %v6259, 124
    %v6264 = vpop.permute.xlu0 %6263
    %6265 = vrot.lane.b32.xlu0 %v6260, 124
    %v6266 = vpop.permute.xlu0 %6265
    %v6269 = vadd.f32 %v6257, %v6264
    %v6270 = vadd.f32 %v6258, %v6266
    %v6271 = vmul.f32 %v6231, %v5862
    %v6272 = vmul.f32 %v6232, %v5862
    %6275 = vrot.lane.b32.xlu0 %v6271, 123
    %v6276 = vpop.permute.xlu0 %6275
    %6277 = vrot.lane.b32.xlu0 %v6272, 123
    %v6278 = vpop.permute.xlu0 %6277
    %v6281 = vadd.f32 %v6269, %v6276
    %v6282 = vadd.f32 %v6270, %v6278
    %v6283 = vmul.f32 %v6231, %v5873
    %v6284 = vmul.f32 %v6232, %v5873
    %6287 = vrot.lane.b32.xlu0 %v6283, 122
    %v6288 = vpop.permute.xlu0 %6287
    %6289 = vrot.lane.b32.xlu0 %v6284, 122
    %v6290 = vpop.permute.xlu0 %6289
    %v6293 = vadd.f32 %v6281, %v6288
    %v6294 = vadd.f32 %v6282, %v6290
    %v6295 = vmul.f32 %v6231, %v5884
    %v6296 = vmul.f32 %v6232, %v5884
    %6299 = vrot.lane.b32.xlu0 %v6295, 120
    %v6300 = vpop.permute.xlu0 %6299
    %6301 = vrot.lane.b32.xlu0 %v6296, 120
    %v6302 = vpop.permute.xlu0 %6301
    %v6305 = vadd.f32 %v6293, %v6300
    %v6306 = vadd.f32 %v6294, %v6302
    %v6307 = vmul.f32 %v6231, %v5895
    %v6308 = vmul.f32 %v6232, %v5895
    %6311 = vrot.lane.b32.xlu0 %v6307, 119
    %v6312 = vpop.permute.xlu0 %6311
    %6313 = vrot.lane.b32.xlu0 %v6308, 119
    %v6314 = vpop.permute.xlu0 %6313
    %v6317 = vadd.f32 %v6305, %v6312
    %v6318 = vadd.f32 %v6306, %v6314
    %v6319 = vmul.f32 %v6231, %v5906
    %v6320 = vmul.f32 %v6232, %v5906
    %6323 = vrot.lane.b32.xlu0 %v6319, 118
    %v6324 = vpop.permute.xlu0 %6323
    %6325 = vrot.lane.b32.xlu0 %v6320, 118
    %v6326 = vpop.permute.xlu0 %6325
    %v6329 = vadd.f32 %v6317, %v6324
    %v6330 = vadd.f32 %v6318, %v6326
    %v6331 = vld [vmem:[%s15] sm:$0x1]
    %v6333 = vlaneseq
    %v6334 = vshrl.u32 %v6333, 7
    %v6335 = vsub.s32 0, %v6334
    %v6336 = vrot.slane %v6331, %v6335
    %v6338 = vmul.f32 %v6329, %v6336
    %v6339 = vmul.f32 %v6330, %v6336
    %v6340 = vld [vmem:[%s91] sm:$0xff]
    %v6341 = vld [vmem:[%s91 + $0x8] sm:$0xff]
    %v6342 = vld [vmem:[%s91 + $0x10] sm:$0xff]
    %v6343 = vld [vmem:[%s91 + $0x18] sm:$0xff]
    %v6344 = vld [vmem:[%s91 + $0x20] sm:$0xff]
    %v6345 = vld [vmem:[%s91 + $0x28] sm:$0xff]
    %v6346 = vld [vmem:[%s91 + $0x30] sm:$0xff]
    %v6347 = vld [vmem:[%s91 + $0x38] sm:$0xff]
    %v6348 = vld [vmem:[%s91 + $0x40] sm:$0xff]
    %v6349 = vld [vmem:[%s91 + $0x48] sm:$0xff]
    %v6350 = vld [vmem:[%s91 + $0x50] sm:$0xff]
    %v6351 = vld [vmem:[%s91 + $0x58] sm:$0xff]
    %v6352 = vld [vmem:[%s91 + $0x60] sm:$0xff]
    %v6353 = vld [vmem:[%s91 + $0x68] sm:$0xff]
    %v6354 = vld [vmem:[%s91 + $0x70] sm:$0xff]
    %v6355 = vld [vmem:[%s91 + $0x78] sm:$0xff]
    %v6356 = vld [vmem:[%s91 + $0x80] sm:$0xff]
    %v6357 = vld [vmem:[%s91 + $0x88] sm:$0xff]
    %v6358 = vld [vmem:[%s91 + $0x90] sm:$0xff]
    %v6359 = vld [vmem:[%s91 + $0x98] sm:$0xff]
    %v6360 = vld [vmem:[%s91 + $0xa0] sm:$0xff]
    %v6361 = vld [vmem:[%s91 + $0xa8] sm:$0xff]
    %v6362 = vld [vmem:[%s91 + $0xb0] sm:$0xff]
    %v6363 = vld [vmem:[%s91 + $0xb8] sm:$0xff]
    %v6364 = vmax.f32 %v6233, 0.0
    %v6365 = vmax.f32 %v6234, 0.0
    %v6366 = vmax.f32 %v6240, 0.0
    %v6367 = vmax.f32 %v6242, 0.0
    %v6368 = vmax.f32 %v6252, 0.0
    %v6369 = vmax.f32 %v6254, 0.0
    %v6370 = vmax.f32 %v6264, 0.0
    %v6371 = vmax.f32 %v6266, 0.0
    %v6372 = vmax.f32 %v6276, 0.0
    %v6373 = vmax.f32 %v6278, 0.0
    %v6374 = vmax.f32 %v6288, 0.0
    %v6375 = vmax.f32 %v6290, 0.0
    %v6376 = vmax.f32 %v6300, 0.0
    %v6377 = vmax.f32 %v6302, 0.0
    %v6378 = vmax.f32 %v6312, 0.0
    %v6379 = vmax.f32 %v6314, 0.0
    %v6380 = vmax.f32 %v6324, 0.0
    %v6381 = vmax.f32 %v6326, 0.0
    %v6383 = vsel %vm418, %v6341, 0
    %v6386 = vsel %vm418, %v6343, 0
    %v6389 = vsel %vm418, %v6345, 0
    %v6392 = vsel %vm418, %v6347, 0
    %v6395 = vsel %vm418, %v6349, 0
    %v6398 = vsel %vm418, %v6351, 0
    %v6401 = vsel %vm418, %v6353, 0
    %v6404 = vsel %vm418, %v6355, 0
    %v6407 = vsel %vm418, %v6357, 0
    %v6410 = vsel %vm418, %v6359, 0
    %v6413 = vsel %vm418, %v6361, 0
    %v6416 = vsel %vm418, %v6363, 0
    %6418 = vmatprep.subr.mxu0 0.0
    %6419 = vmatpush1.msra.mxu0 %v6364
    %6420 = vmatprep.subr.mxu0 0.0
    %6421 = vmatpush1.msra.mxu0 %v6365
    %6422 = vmatprep.subr.mxu0 0.0
    %6423 = vmatpush1.msra.mxu0 %v6366
    %6424 = vmatprep.subr.mxu0 0.0
    %6425 = vmatpush1.msra.mxu0 %v6367
    %6426 = vmatprep.subr.mxu0 0.0
    %6427 = vmatpush1.msra.mxu0 %v6368
    %6428 = vmatprep.subr.mxu0 0.0
    %6429 = vmatpush1.msra.mxu0 %v6369
    %6430 = vmatprep.subr.mxu0 0.0
    %6431 = vmatpush1.msra.mxu0 %v6370
    %6432 = vmatprep.subr.mxu0 0.0
    %6433 = vmatpush1.msra.mxu0 %v6371
    %6434 = vmatprep.subr.mxu0 0.0
    %6435 = vmatpush1.msra.mxu0 %v6372
    %6436 = vmatprep.subr.mxu0 0.0
    %6437 = vmatpush1.msra.mxu0 %v6373
    %6438 = vmatprep.subr.mxu0 0.0
    %6439 = vmatpush1.msra.mxu0 %v6374
    %6440 = vmatprep.subr.mxu0 0.0
    %6441 = vmatpush1.msra.mxu0 %v6375
    %6442 = vmatprep.subr.mxu0 0.0
    %6443 = vmatpush1.msra.mxu0 %v6376
    %6444 = vmatprep.subr.mxu0 0.0
    %6445 = vmatpush1.msra.mxu0 %v6377
    %6446 = vmatprep.subr.mxu0 0.0
    %6447 = vmatpush1.msra.mxu0 %v6378
    %6448 = vmatprep.subr.mxu0 0.0
    %6449 = vmatpush1.msra.mxu0 %v6379
    %6450 = vmatprep.subr.mxu0 0.0
    %6451 = vmatpush1.msra.mxu0 %v6380
    %6452 = vmatprep.subr.mxu0 0.0
    %6453 = vmatpush1.msra.mxu0 %v6381
    %6454 = vmatprep.subr.mxu0 0.0
    %6455 = vmatpush1.msra.mxu0 0.0
    %6456 = vmatprep.subr.mxu0 0.0
    %6457 = vmatpush1.msra.mxu0 0.0
    %6458 = vmatprep.subr.mxu0 0.0
    %6459 = vmatpush1.msra.mxu0 0.0
    %6460 = vmatprep.subr.mxu0 0.0
    %6461 = vmatpush1.msra.mxu0 0.0
    %6462 = vmatprep.subr.mxu0 0.0
    %6463 = vmatpush1.msra.mxu0 0.0
    %6464 = vmatprep.subr.mxu0 0.0
    %6465 = vmatpush1.msra.mxu0 0.0
    %6466 = vmatprep.subr.mxu0 0.0
    %6467 = vmatpush1.msra.mxu0 0.0
    %6468 = vmatprep.subr.mxu0 0.0
    %6469 = vmatpush1.msra.mxu0 0.0
    %6470 = vmatprep.subr.mxu0 0.0
    %6471 = vmatpush1.msra.mxu0 0.0
    %6472 = vmatprep.subr.mxu0 0.0
    %6473 = vmatpush1.msra.mxu0 0.0
    %6474 = vmatprep.subr.mxu0 0.0
    %6475 = vmatpush1.msra.mxu0 0.0
    %6476 = vmatprep.subr.mxu0 0.0
    %6477 = vmatpush1.msra.mxu0 0.0
    %6478 = vmatprep.subr.mxu0 0.0
    %6479 = vmatpush1.msra.mxu0 0.0
    %6480 = vmatprep.subr.mxu0 0.0
    %6481 = vmatpush1.msra.mxu0 0.0
    %6482 = vmatprep.mubr.f32.mxu0 %v6383
    %6483 = vmatmul.mubr.f32.gmra.mrb[0].mxu0 %v6340
    %v6484 = vpop.f32.mrb[0].mxu0
    %v6485 = vadd.f32 0.0, %v6484
    %v6486 = vpop.f32.mrb[0].mxu0
    %6487 = vmatprep.mubr.f32.mxu0 %v6386
    %6488 = vmatmul.mubr.f32.gmra.mrb[0].mxu0 %v6342
    %v6489 = vpop.f32.mrb[0].mxu0
    %v6490 = vadd.f32 0.0, %v6489
    %v6491 = vpop.f32.mrb[0].mxu0
    %6492 = vmatprep.mubr.f32.mxu0 %v6389
    %6493 = vmatmul.mubr.f32.gmra.mrb[0].mxu0 %v6344
    %v6494 = vpop.f32.mrb[0].mxu0
    %v6495 = vadd.f32 0.0, %v6494
    %v6496 = vpop.f32.mrb[0].mxu0
    %6497 = vmatprep.mubr.f32.mxu0 %v6392
    %6498 = vmatmul.mubr.f32.gmra.mrb[0].mxu0 %v6346
    %v6499 = vpop.f32.mrb[0].mxu0
    %v6500 = vadd.f32 0.0, %v6499
    %v6501 = vpop.f32.mrb[0].mxu0
    %6502 = vmatprep.mubr.f32.mxu0 %v6395
    %6503 = vmatmul.mubr.f32.gmra.mrb[0].mxu0 %v6348
    %v6504 = vpop.f32.mrb[0].mxu0
    %v6505 = vadd.f32 0.0, %v6504
    %v6506 = vpop.f32.mrb[0].mxu0
    %6507 = vmatprep.mubr.f32.mxu0 %v6398
    %6508 = vmatmul.mubr.f32.gmra.mrb[0].mxu0 %v6350
    %v6509 = vpop.f32.mrb[0].mxu0
    %v6510 = vadd.f32 0.0, %v6509
    %v6511 = vpop.f32.mrb[0].mxu0
    %6512 = vmatprep.mubr.f32.mxu0 %v6401
    %6513 = vmatmul.mubr.f32.gmra.mrb[0].mxu0 %v6352
    %v6514 = vpop.f32.mrb[0].mxu0
    %v6515 = vadd.f32 0.0, %v6514
    %v6516 = vpop.f32.mrb[0].mxu0
    %6517 = vmatprep.mubr.f32.mxu0 %v6404
    %6518 = vmatmul.mubr.f32.gmra.mrb[0].mxu0 %v6354
    %v6519 = vpop.f32.mrb[0].mxu0
    %v6520 = vadd.f32 0.0, %v6519
    %v6521 = vpop.f32.mrb[0].mxu0
    %6522 = vmatprep.mubr.f32.mxu0 %v6407
    %6523 = vmatmul.mubr.f32.gmra.mrb[0].mxu0 %v6356
    %v6524 = vpop.f32.mrb[0].mxu0
    %v6525 = vadd.f32 0.0, %v6524
    %v6526 = vpop.f32.mrb[0].mxu0
    %6527 = vmatprep.mubr.f32.mxu0 %v6410
    %6528 = vmatmul.mubr.f32.gmra.mrb[0].mxu0 %v6358
    %v6529 = vpop.f32.mrb[0].mxu0
    %v6530 = vadd.f32 0.0, %v6529
    %v6531 = vpop.f32.mrb[0].mxu0
    %6532 = vmatprep.mubr.f32.mxu0 %v6413
    %6533 = vmatmul.mubr.f32.gmra.mrb[0].mxu0 %v6360
    %v6534 = vpop.f32.mrb[0].mxu0
    %v6535 = vadd.f32 0.0, %v6534
    %v6536 = vpop.f32.mrb[0].mxu0
    %6537 = vmatprep.mubr.f32.mxu0 %v6416
    %6538 = vmatmul.mubr.f32.gmra.mrb[0].mxu0 %v6362
    %v6539 = vpop.f32.mrb[0].mxu0
    %v6540 = vadd.f32 0.0, %v6539
    %v6541 = vpop.f32.mrb[0].mxu0
    %6542 = vdwg.mxu0
    %v6543 = vsel %vm540, %v6485, 0.0
    %6544 = vadd.xlane.f32.xlu0 %v6543
    %v6545 = vpop.xlane.xlu0 %6544
    %v6546 = vsel %vm540, %v6490, 0.0
    %6547 = vadd.xlane.f32.xlu0 %v6546
    %v6548 = vpop.xlane.xlu0 %6547
    %v6549 = vsel %vm540, %v6495, 0.0
    %6550 = vadd.xlane.f32.xlu0 %v6549
    %v6551 = vpop.xlane.xlu0 %6550
    %v6552 = vsel %vm540, %v6500, 0.0
    %6553 = vadd.xlane.f32.xlu0 %v6552
    %v6554 = vpop.xlane.xlu0 %6553
    %v6555 = vsel %vm540, %v6505, 0.0
    %6556 = vadd.xlane.f32.xlu0 %v6555
    %v6557 = vpop.xlane.xlu0 %6556
    %v6558 = vsel %vm540, %v6510, 0.0
    %6559 = vadd.xlane.f32.xlu0 %v6558
    %v6560 = vpop.xlane.xlu0 %6559
    %v6561 = vsel %vm540, %v6515, 0.0
    %6562 = vadd.xlane.f32.xlu0 %v6561
    %v6563 = vpop.xlane.xlu0 %6562
    %v6564 = vsel %vm540, %v6520, 0.0
    %6565 = vadd.xlane.f32.xlu0 %v6564
    %v6566 = vpop.xlane.xlu0 %6565
    %v6567 = vsel %vm540, %v6525, 0.0
    %6568 = vadd.xlane.f32.xlu0 %v6567
    %v6569 = vpop.xlane.xlu0 %6568
    %v6570 = vsel %vm540, %v6530, 0.0
    %6571 = vadd.xlane.f32.xlu0 %v6570
    %v6572 = vpop.xlane.xlu0 %6571
    %v6573 = vsel %vm540, %v6535, 0.0
    %6574 = vadd.xlane.f32.xlu0 %v6573
    %v6575 = vpop.xlane.xlu0 %6574
    %v6576 = vsel %vm540, %v6540, 0.0
    %6577 = vadd.xlane.f32.xlu0 %v6576
    %v6578 = vpop.xlane.xlu0 %6577
    %v6579 = vmul.f32 %v6545, %v5752
    %v6580 = vmul.f32 %v6548, %v5752
    %v6581 = vmul.f32 %v6551, %v5752
    %v6582 = vmul.f32 %v6554, %v5752
    %v6583 = vmul.f32 %v6557, %v5752
    %v6584 = vmul.f32 %v6560, %v5752
    %v6585 = vmul.f32 %v6563, %v5752
    %v6586 = vmul.f32 %v6566, %v5752
    %v6587 = vmul.f32 %v6569, %v5752
    %v6588 = vmul.f32 %v6572, %v5752
    %v6589 = vmul.f32 %v6575, %v5752
    %v6590 = vmul.f32 %v6578, %v5752
    %v6591 = vsub.f32 %v6485, %v6579
    %v6592 = vsub.f32 %v6490, %v6580
    %v6593 = vsub.f32 %v6495, %v6581
    %v6594 = vsub.f32 %v6500, %v6582
    %v6595 = vsub.f32 %v6505, %v6583
    %v6596 = vsub.f32 %v6510, %v6584
    %v6597 = vsub.f32 %v6515, %v6585
    %v6598 = vsub.f32 %v6520, %v6586
    %v6599 = vsub.f32 %v6525, %v6587
    %v6600 = vsub.f32 %v6530, %v6588
    %v6601 = vsub.f32 %v6535, %v6589
    %v6602 = vsub.f32 %v6540, %v6590
    %v6603 = vmul.f32 %v6591, %v6591
    %v6604 = vmul.f32 %v6592, %v6592
    %v6605 = vmul.f32 %v6593, %v6593
    %v6606 = vmul.f32 %v6594, %v6594
    %v6607 = vmul.f32 %v6595, %v6595
    %v6608 = vmul.f32 %v6596, %v6596
    %v6609 = vmul.f32 %v6597, %v6597
    %v6610 = vmul.f32 %v6598, %v6598
    %v6611 = vmul.f32 %v6599, %v6599
    %v6612 = vmul.f32 %v6600, %v6600
    %v6613 = vmul.f32 %v6601, %v6601
    %v6614 = vmul.f32 %v6602, %v6602
    %v6615 = vsel %vm540, %v6603, 0.0
    %6616 = vadd.xlane.f32.xlu0 %v6615
    %v6617 = vpop.xlane.xlu0 %6616
    %v6618 = vsel %vm540, %v6604, 0.0
    %6619 = vadd.xlane.f32.xlu0 %v6618
    %v6620 = vpop.xlane.xlu0 %6619
    %v6621 = vsel %vm540, %v6605, 0.0
    %6622 = vadd.xlane.f32.xlu0 %v6621
    %v6623 = vpop.xlane.xlu0 %6622
    %v6624 = vsel %vm540, %v6606, 0.0
    %6625 = vadd.xlane.f32.xlu0 %v6624
    %v6626 = vpop.xlane.xlu0 %6625
    %v6627 = vsel %vm540, %v6607, 0.0
    %6628 = vadd.xlane.f32.xlu0 %v6627
    %v6629 = vpop.xlane.xlu0 %6628
    %v6630 = vsel %vm540, %v6608, 0.0
    %6631 = vadd.xlane.f32.xlu0 %v6630
    %v6632 = vpop.xlane.xlu0 %6631
    %v6633 = vsel %vm540, %v6609, 0.0
    %6634 = vadd.xlane.f32.xlu0 %v6633
    %v6635 = vpop.xlane.xlu0 %6634
    %v6636 = vsel %vm540, %v6610, 0.0
    %6637 = vadd.xlane.f32.xlu0 %v6636
    %v6638 = vpop.xlane.xlu0 %6637
    %v6639 = vsel %vm540, %v6611, 0.0
    %6640 = vadd.xlane.f32.xlu0 %v6639
    %v6641 = vpop.xlane.xlu0 %6640
    %v6642 = vsel %vm540, %v6612, 0.0
    %6643 = vadd.xlane.f32.xlu0 %v6642
    %v6644 = vpop.xlane.xlu0 %6643
    %v6645 = vsel %vm540, %v6613, 0.0
    %6646 = vadd.xlane.f32.xlu0 %v6645
    %v6647 = vpop.xlane.xlu0 %6646
    %v6648 = vsel %vm540, %v6614, 0.0
    %6649 = vadd.xlane.f32.xlu0 %v6648
    %v6650 = vpop.xlane.xlu0 %6649
    %v6651 = vmul.f32 %v6617, %v5752
    %v6652 = vmul.f32 %v6620, %v5752
    %v6653 = vmul.f32 %v6623, %v5752
    %v6654 = vmul.f32 %v6626, %v5752
    %v6655 = vmul.f32 %v6629, %v5752
    %v6656 = vmul.f32 %v6632, %v5752
    %v6657 = vmul.f32 %v6635, %v5752
    %v6658 = vmul.f32 %v6638, %v5752
    %v6659 = vmul.f32 %v6641, %v5752
    %v6660 = vmul.f32 %v6644, %v5752
    %v6661 = vmul.f32 %v6647, %v5752
    %v6662 = vmul.f32 %v6650, %v5752
    %v6663 = vadd.f32 %v6651, 1e-05
    %v6664 = vadd.f32 %v6652, 1e-05
    %v6665 = vadd.f32 %v6653, 1e-05
    %v6666 = vadd.f32 %v6654, 1e-05
    %v6667 = vadd.f32 %v6655, 1e-05
    %v6668 = vadd.f32 %v6656, 1e-05
    %v6669 = vadd.f32 %v6657, 1e-05
    %v6670 = vadd.f32 %v6658, 1e-05
    %v6671 = vadd.f32 %v6659, 1e-05
    %v6672 = vadd.f32 %v6660, 1e-05
    %v6673 = vadd.f32 %v6661, 1e-05
    %v6674 = vadd.f32 %v6662, 1e-05
    %v6675 = vrsqrt.pop %v6663
    %v6676 = vrsqrt.pop %v6664
    %v6677 = vrsqrt.pop %v6665
    %v6678 = vrsqrt.pop %v6666
    %v6679 = vrsqrt.pop %v6667
    %v6680 = vrsqrt.pop %v6668
    %v6681 = vrsqrt.pop %v6669
    %v6682 = vrsqrt.pop %v6670
    %v6683 = vrsqrt.pop %v6671
    %v6684 = vrsqrt.pop %v6672
    %v6685 = vrsqrt.pop %v6673
    %v6686 = vrsqrt.pop %v6674
    %v6687 = vmul.f32 %v6591, %v6675
    %v6688 = vmul.f32 %v6592, %v6676
    %v6689 = vmul.f32 %v6593, %v6677
    %v6690 = vmul.f32 %v6594, %v6678
    %v6691 = vmul.f32 %v6595, %v6679
    %v6692 = vmul.f32 %v6596, %v6680
    %v6693 = vmul.f32 %v6597, %v6681
    %v6694 = vmul.f32 %v6598, %v6682
    %v6695 = vmul.f32 %v6599, %v6683
    %v6696 = vmul.f32 %v6600, %v6684
    %v6697 = vmul.f32 %v6601, %v6685
    %v6698 = vmul.f32 %v6602, %v6686
    %v6699 = vld [vmem:[%s93] sm:$0xff]
    %v6700 = vld [vmem:[%s93 + $0x8] sm:$0xff]
    %v6701 = vld [vmem:[%s93 + $0x10] sm:$0xff]
    %v6702 = vld [vmem:[%s93 + $0x18] sm:$0xff]
    %v6703 = vld [vmem:[%s93 + $0x20] sm:$0xff]
    %v6704 = vld [vmem:[%s93 + $0x28] sm:$0xff]
    %v6705 = vld [vmem:[%s93 + $0x30] sm:$0xff]
    %v6706 = vld [vmem:[%s93 + $0x38] sm:$0xff]
    %v6707 = vld [vmem:[%s93 + $0x40] sm:$0xff]
    %v6708 = vld [vmem:[%s93 + $0x48] sm:$0xff]
    %v6709 = vld [vmem:[%s93 + $0x50] sm:$0xff]
    %v6710 = vld [vmem:[%s93 + $0x58] sm:$0xff]
    %6712 = vset.pattern.permute.xlu0 0
    %6713 = vperm.xlu0 %6712, %v6699
    %v6714 = vpop.permute.xlu0 %6713
    %6717 = vset.pattern.permute.xlu0 0
    %6718 = vperm.xlu0 %6717, %v6700
    %v6719 = vpop.permute.xlu0 %6718
    %6722 = vset.pattern.permute.xlu0 0
    %6723 = vperm.xlu0 %6722, %v6701
    %v6724 = vpop.permute.xlu0 %6723
    %6727 = vset.pattern.permute.xlu0 0
    %6728 = vperm.xlu0 %6727, %v6702
    %v6729 = vpop.permute.xlu0 %6728
    %6732 = vset.pattern.permute.xlu0 0
    %6733 = vperm.xlu0 %6732, %v6703
    %v6734 = vpop.permute.xlu0 %6733
    %6737 = vset.pattern.permute.xlu0 0
    %6738 = vperm.xlu0 %6737, %v6704
    %v6739 = vpop.permute.xlu0 %6738
    %6742 = vset.pattern.permute.xlu0 0
    %6743 = vperm.xlu0 %6742, %v6705
    %v6744 = vpop.permute.xlu0 %6743
    %6747 = vset.pattern.permute.xlu0 0
    %6748 = vperm.xlu0 %6747, %v6706
    %v6749 = vpop.permute.xlu0 %6748
    %6752 = vset.pattern.permute.xlu0 0
    %6753 = vperm.xlu0 %6752, %v6707
    %v6754 = vpop.permute.xlu0 %6753
    %6757 = vset.pattern.permute.xlu0 0
    %6758 = vperm.xlu0 %6757, %v6708
    %v6759 = vpop.permute.xlu0 %6758
    %6762 = vset.pattern.permute.xlu0 0
    %6763 = vperm.xlu0 %6762, %v6709
    %v6764 = vpop.permute.xlu0 %6763
    %6767 = vset.pattern.permute.xlu0 0
    %6768 = vperm.xlu0 %6767, %v6710
    %v6769 = vpop.permute.xlu0 %6768
    %v6771 = vmul.f32 %v6687, %v6714
    %v6772 = vmul.f32 %v6688, %v6719
    %v6773 = vmul.f32 %v6689, %v6724
    %v6774 = vmul.f32 %v6690, %v6729
    %v6775 = vmul.f32 %v6691, %v6734
    %v6776 = vmul.f32 %v6692, %v6739
    %v6777 = vmul.f32 %v6693, %v6744
    %v6778 = vmul.f32 %v6694, %v6749
    %v6779 = vmul.f32 %v6695, %v6754
    %v6780 = vmul.f32 %v6696, %v6759
    %v6781 = vmul.f32 %v6697, %v6764
    %v6782 = vmul.f32 %v6698, %v6769
    %v6783 = vld [vmem:[%s95] sm:$0xff]
    %v6784 = vld [vmem:[%s95 + $0x8] sm:$0xff]
    %v6785 = vld [vmem:[%s95 + $0x10] sm:$0xff]
    %v6786 = vld [vmem:[%s95 + $0x18] sm:$0xff]
    %v6787 = vld [vmem:[%s95 + $0x20] sm:$0xff]
    %v6788 = vld [vmem:[%s95 + $0x28] sm:$0xff]
    %v6789 = vld [vmem:[%s95 + $0x30] sm:$0xff]
    %v6790 = vld [vmem:[%s95 + $0x38] sm:$0xff]
    %v6791 = vld [vmem:[%s95 + $0x40] sm:$0xff]
    %v6792 = vld [vmem:[%s95 + $0x48] sm:$0xff]
    %v6793 = vld [vmem:[%s95 + $0x50] sm:$0xff]
    %v6794 = vld [vmem:[%s95 + $0x58] sm:$0xff]
    %6796 = vset.pattern.permute.xlu0 0
    %6797 = vperm.xlu0 %6796, %v6783
    %v6798 = vpop.permute.xlu0 %6797
    %6801 = vset.pattern.permute.xlu0 0
    %6802 = vperm.xlu0 %6801, %v6784
    %v6803 = vpop.permute.xlu0 %6802
    %6806 = vset.pattern.permute.xlu0 0
    %6807 = vperm.xlu0 %6806, %v6785
    %v6808 = vpop.permute.xlu0 %6807
    %6811 = vset.pattern.permute.xlu0 0
    %6812 = vperm.xlu0 %6811, %v6786
    %v6813 = vpop.permute.xlu0 %6812
    %6816 = vset.pattern.permute.xlu0 0
    %6817 = vperm.xlu0 %6816, %v6787
    %v6818 = vpop.permute.xlu0 %6817
    %6821 = vset.pattern.permute.xlu0 0
    %6822 = vperm.xlu0 %6821, %v6788
    %v6823 = vpop.permute.xlu0 %6822
    %6826 = vset.pattern.permute.xlu0 0
    %6827 = vperm.xlu0 %6826, %v6789
    %v6828 = vpop.permute.xlu0 %6827
    %6831 = vset.pattern.permute.xlu0 0
    %6832 = vperm.xlu0 %6831, %v6790
    %v6833 = vpop.permute.xlu0 %6832
    %6836 = vset.pattern.permute.xlu0 0
    %6837 = vperm.xlu0 %6836, %v6791
    %v6838 = vpop.permute.xlu0 %6837
    %6841 = vset.pattern.permute.xlu0 0
    %6842 = vperm.xlu0 %6841, %v6792
    %v6843 = vpop.permute.xlu0 %6842
    %6846 = vset.pattern.permute.xlu0 0
    %6847 = vperm.xlu0 %6846, %v6793
    %v6848 = vpop.permute.xlu0 %6847
    %6851 = vset.pattern.permute.xlu0 0
    %6852 = vperm.xlu0 %6851, %v6794
    %v6853 = vpop.permute.xlu0 %6852
    %v6855 = vadd.f32 %v6771, %v6798
    %v6856 = vadd.f32 %v6772, %v6803
    %v6857 = vadd.f32 %v6773, %v6808
    %v6858 = vadd.f32 %v6774, %v6813
    %v6859 = vadd.f32 %v6775, %v6818
    %v6860 = vadd.f32 %v6776, %v6823
    %v6861 = vadd.f32 %v6777, %v6828
    %v6862 = vadd.f32 %v6778, %v6833
    %v6863 = vadd.f32 %v6779, %v6838
    %v6864 = vadd.f32 %v6780, %v6843
    %v6865 = vadd.f32 %v6781, %v6848
    %v6866 = vadd.f32 %v6782, %v6853
    %v6867 = vmul.f32 %v1870, %v6219
    %v6868 = vmul.f32 %v1870, %v6220
    %v6869 = vmul.f32 %v1876, %v6855
    %v6870 = vmul.f32 %v1876, %v6856
    %v6871 = vadd.f32 %v6867, %v6869
    %v6872 = vadd.f32 %v6868, %v6870
    %v6873 = vmul.f32 %v1886, %v6861
    %v6874 = vmul.f32 %v1886, %v6862
    %v6875 = vadd.f32 %v6871, %v6873
    %v6876 = vadd.f32 %v6872, %v6874
    %v6877 = vmul.f32 %v1908, %v6338
    %v6878 = vmul.f32 %v1908, %v6339
    %v6879 = vadd.f32 %v6875, %v6877
    %v6880 = vadd.f32 %v6876, %v6878
    %v6881 = vmul.f32 %v1918, %v6219
    %v6882 = vmul.f32 %v1918, %v6220
    %v6883 = vmul.f32 %v1924, %v6857
    %v6884 = vmul.f32 %v1924, %v6858
    %v6885 = vadd.f32 %v6881, %v6883
    %v6886 = vadd.f32 %v6882, %v6884
    %v6887 = vmul.f32 %v1946, %v6863
    %v6888 = vmul.f32 %v1946, %v6864
    %v6889 = vadd.f32 %v6885, %v6887
    %v6890 = vadd.f32 %v6886, %v6888
    %v6891 = vmul.f32 %v1956, %v6338
    %v6892 = vmul.f32 %v1956, %v6339
    %v6893 = vadd.f32 %v6889, %v6891
    %v6894 = vadd.f32 %v6890, %v6892
    %v6895 = vmul.f32 %v1966, %v6219
    %v6896 = vmul.f32 %v1966, %v6220
    %v6897 = vmul.f32 %v1972, %v6859
    %v6898 = vmul.f32 %v1972, %v6860
    %v6899 = vadd.f32 %v6895, %v6897
    %v6900 = vadd.f32 %v6896, %v6898
    %v6901 = vmul.f32 %v1982, %v6865
    %v6902 = vmul.f32 %v1982, %v6866
    %v6903 = vadd.f32 %v6899, %v6901
    %v6904 = vadd.f32 %v6900, %v6902
    %v6905 = vmul.f32 %v2004, %v6338
    %v6906 = vmul.f32 %v2004, %v6339
    %v6907 = vadd.f32 %v6903, %v6905
    %v6908 = vadd.f32 %v6904, %v6906
    %6911 = vrot.lane.b32.xlu0 %v6879, 5
    %v6912 = vpop.permute.xlu0 %6911
    %6913 = vrot.lane.b32.xlu0 %v6880, 5
    %v6914 = vpop.permute.xlu0 %6913
    %v6917 = vsel %vm5809, 0.0, %v6912
    %v6918 = vsel %vm5809, 0.0, %v6914
    %v6919 = vsel %vm5812, %v6917, 0.0
    %v6920 = vsel %vm5812, %v6918, 0.0
    %v6921 = vmul.f32 %v6919, %v5819
    %v6922 = vmul.f32 %v6920, %v5819
    %v6923 = vmul.f32 %v6919, %v5829
    %v6924 = vmul.f32 %v6920, %v5829
    %6927 = vrot.lane.b32.xlu0 %v6923, 127
    %v6928 = vpop.permute.xlu0 %6927
    %6929 = vrot.lane.b32.xlu0 %v6924, 127
    %v6930 = vpop.permute.xlu0 %6929
    %v6933 = vadd.f32 %v6921, %v6928
    %v6934 = vadd.f32 %v6922, %v6930
    %v6935 = vmul.f32 %v6919, %v5840
    %v6936 = vmul.f32 %v6920, %v5840
    %6939 = vrot.lane.b32.xlu0 %v6935, 126
    %v6940 = vpop.permute.xlu0 %6939
    %6941 = vrot.lane.b32.xlu0 %v6936, 126
    %v6942 = vpop.permute.xlu0 %6941
    %v6945 = vadd.f32 %v6933, %v6940
    %v6946 = vadd.f32 %v6934, %v6942
    %v6947 = vmul.f32 %v6919, %v5851
    %v6948 = vmul.f32 %v6920, %v5851
    %6951 = vrot.lane.b32.xlu0 %v6947, 124
    %v6952 = vpop.permute.xlu0 %6951
    %6953 = vrot.lane.b32.xlu0 %v6948, 124
    %v6954 = vpop.permute.xlu0 %6953
    %v6957 = vadd.f32 %v6945, %v6952
    %v6958 = vadd.f32 %v6946, %v6954
    %v6959 = vmul.f32 %v6919, %v5862
    %v6960 = vmul.f32 %v6920, %v5862
    %6963 = vrot.lane.b32.xlu0 %v6959, 123
    %v6964 = vpop.permute.xlu0 %6963
    %6965 = vrot.lane.b32.xlu0 %v6960, 123
    %v6966 = vpop.permute.xlu0 %6965
    %v6969 = vadd.f32 %v6957, %v6964
    %v6970 = vadd.f32 %v6958, %v6966
    %v6971 = vmul.f32 %v6919, %v5873
    %v6972 = vmul.f32 %v6920, %v5873
    %6975 = vrot.lane.b32.xlu0 %v6971, 122
    %v6976 = vpop.permute.xlu0 %6975
    %6977 = vrot.lane.b32.xlu0 %v6972, 122
    %v6978 = vpop.permute.xlu0 %6977
    %v6981 = vadd.f32 %v6969, %v6976
    %v6982 = vadd.f32 %v6970, %v6978
    %v6983 = vmul.f32 %v6919, %v5884
    %v6984 = vmul.f32 %v6920, %v5884
    %6987 = vrot.lane.b32.xlu0 %v6983, 120
    %v6988 = vpop.permute.xlu0 %6987
    %6989 = vrot.lane.b32.xlu0 %v6984, 120
    %v6990 = vpop.permute.xlu0 %6989
    %v6993 = vadd.f32 %v6981, %v6988
    %v6994 = vadd.f32 %v6982, %v6990
    %v6995 = vmul.f32 %v6919, %v5895
    %v6996 = vmul.f32 %v6920, %v5895
    %6999 = vrot.lane.b32.xlu0 %v6995, 119
    %v7000 = vpop.permute.xlu0 %6999
    %7001 = vrot.lane.b32.xlu0 %v6996, 119
    %v7002 = vpop.permute.xlu0 %7001
    %v7005 = vadd.f32 %v6993, %v7000
    %v7006 = vadd.f32 %v6994, %v7002
    %v7007 = vmul.f32 %v6919, %v5906
    %v7008 = vmul.f32 %v6920, %v5906
    %7011 = vrot.lane.b32.xlu0 %v7007, 118
    %v7012 = vpop.permute.xlu0 %7011
    %7013 = vrot.lane.b32.xlu0 %v7008, 118
    %v7014 = vpop.permute.xlu0 %7013
    %v7017 = vadd.f32 %v7005, %v7012
    %v7018 = vadd.f32 %v7006, %v7014
    %v7019 = vmul.f32 %v7017, %v6336
    %v7020 = vmul.f32 %v7018, %v6336
    %v7021 = vld [vmem:[%s97] sm:$0xff]
    %v7022 = vld [vmem:[%s97 + $0x8] sm:$0xff]
    %v7023 = vld [vmem:[%s97 + $0x10] sm:$0xff]
    %v7024 = vld [vmem:[%s97 + $0x18] sm:$0xff]
    %v7025 = vld [vmem:[%s97 + $0x20] sm:$0xff]
    %v7026 = vld [vmem:[%s97 + $0x28] sm:$0xff]
    %v7027 = vld [vmem:[%s97 + $0x30] sm:$0xff]
    %v7028 = vld [vmem:[%s97 + $0x38] sm:$0xff]
    %v7029 = vld [vmem:[%s97 + $0x40] sm:$0xff]
    %v7030 = vld [vmem:[%s97 + $0x48] sm:$0xff]
    %v7031 = vld [vmem:[%s97 + $0x50] sm:$0xff]
    %v7032 = vld [vmem:[%s97 + $0x58] sm:$0xff]
    %v7033 = vld [vmem:[%s97 + $0x60] sm:$0xff]
    %v7034 = vld [vmem:[%s97 + $0x68] sm:$0xff]
    %v7035 = vld [vmem:[%s97 + $0x70] sm:$0xff]
    %v7036 = vld [vmem:[%s97 + $0x78] sm:$0xff]
    %v7037 = vmax.f32 %v6921, 0.0
    %v7038 = vmax.f32 %v6922, 0.0
    %v7039 = vmax.f32 %v6928, 0.0
    %v7040 = vmax.f32 %v6930, 0.0
    %v7041 = vmax.f32 %v6940, 0.0
    %v7042 = vmax.f32 %v6942, 0.0
    %v7043 = vmax.f32 %v6952, 0.0
    %v7044 = vmax.f32 %v6954, 0.0
    %v7045 = vmax.f32 %v6964, 0.0
    %v7046 = vmax.f32 %v6966, 0.0
    %v7047 = vmax.f32 %v6976, 0.0
    %v7048 = vmax.f32 %v6978, 0.0
    %v7049 = vmax.f32 %v6988, 0.0
    %v7050 = vmax.f32 %v6990, 0.0
    %v7051 = vmax.f32 %v7000, 0.0
    %v7052 = vmax.f32 %v7002, 0.0
    %v7053 = vmax.f32 %v7012, 0.0
    %v7054 = vmax.f32 %v7014, 0.0
    %v7056 = vsel %vm418, %v7022, 0
    %v7059 = vsel %vm418, %v7024, 0
    %v7062 = vsel %vm418, %v7026, 0
    %v7065 = vsel %vm418, %v7028, 0
    %v7068 = vsel %vm418, %v7030, 0
    %v7071 = vsel %vm418, %v7032, 0
    %v7074 = vsel %vm418, %v7034, 0
    %v7077 = vsel %vm418, %v7036, 0
    %7079 = vmatprep.subr.mxu0 0.0
    %7080 = vmatpush1.msra.mxu0 %v7037
    %7081 = vmatprep.subr.mxu0 0.0
    %7082 = vmatpush1.msra.mxu0 %v7038
    %7083 = vmatprep.subr.mxu0 0.0
    %7084 = vmatpush1.msra.mxu0 %v7039
    %7085 = vmatprep.subr.mxu0 0.0
    %7086 = vmatpush1.msra.mxu0 %v7040
    %7087 = vmatprep.subr.mxu0 0.0
    %7088 = vmatpush1.msra.mxu0 %v7041
    %7089 = vmatprep.subr.mxu0 0.0
    %7090 = vmatpush1.msra.mxu0 %v7042
    %7091 = vmatprep.subr.mxu0 0.0
    %7092 = vmatpush1.msra.mxu0 %v7043
    %7093 = vmatprep.subr.mxu0 0.0
    %7094 = vmatpush1.msra.mxu0 %v7044
    %7095 = vmatprep.subr.mxu0 0.0
    %7096 = vmatpush1.msra.mxu0 %v7045
    %7097 = vmatprep.subr.mxu0 0.0
    %7098 = vmatpush1.msra.mxu0 %v7046
    %7099 = vmatprep.subr.mxu0 0.0
    %7100 = vmatpush1.msra.mxu0 %v7047
    %7101 = vmatprep.subr.mxu0 0.0
    %7102 = vmatpush1.msra.mxu0 %v7048
    %7103 = vmatprep.subr.mxu0 0.0
    %7104 = vmatpush1.msra.mxu0 %v7049
    %7105 = vmatprep.subr.mxu0 0.0
    %7106 = vmatpush1.msra.mxu0 %v7050
    %7107 = vmatprep.subr.mxu0 0.0
    %7108 = vmatpush1.msra.mxu0 %v7051
    %7109 = vmatprep.subr.mxu0 0.0
    %7110 = vmatpush1.msra.mxu0 %v7052
    %7111 = vmatprep.subr.mxu0 0.0
    %7112 = vmatpush1.msra.mxu0 %v7053
    %7113 = vmatprep.subr.mxu0 0.0
    %7114 = vmatpush1.msra.mxu0 %v7054
    %7115 = vmatprep.subr.mxu0 0.0
    %7116 = vmatpush1.msra.mxu0 0.0
    %7117 = vmatprep.subr.mxu0 0.0
    %7118 = vmatpush1.msra.mxu0 0.0
    %7119 = vmatprep.subr.mxu0 0.0
    %7120 = vmatpush1.msra.mxu0 0.0
    %7121 = vmatprep.subr.mxu0 0.0
    %7122 = vmatpush1.msra.mxu0 0.0
    %7123 = vmatprep.subr.mxu0 0.0
    %7124 = vmatpush1.msra.mxu0 0.0
    %7125 = vmatprep.subr.mxu0 0.0
    %7126 = vmatpush1.msra.mxu0 0.0
    %7127 = vmatprep.subr.mxu0 0.0
    %7128 = vmatpush1.msra.mxu0 0.0
    %7129 = vmatprep.subr.mxu0 0.0
    %7130 = vmatpush1.msra.mxu0 0.0
    %7131 = vmatprep.subr.mxu0 0.0
    %7132 = vmatpush1.msra.mxu0 0.0
    %7133 = vmatprep.subr.mxu0 0.0
    %7134 = vmatpush1.msra.mxu0 0.0
    %7135 = vmatprep.subr.mxu0 0.0
    %7136 = vmatpush1.msra.mxu0 0.0
    %7137 = vmatprep.subr.mxu0 0.0
    %7138 = vmatpush1.msra.mxu0 0.0
    %7139 = vmatprep.subr.mxu0 0.0
    %7140 = vmatpush1.msra.mxu0 0.0
    %7141 = vmatprep.subr.mxu0 0.0
    %7142 = vmatpush1.msra.mxu0 0.0
    %7143 = vmatprep.mubr.f32.mxu0 %v7056
    %7144 = vmatmul.mubr.f32.gmra.mrb[0].mxu0 %v7021
    %v7145 = vpop.f32.mrb[0].mxu0
    %v7146 = vadd.f32 0.0, %v7145
    %v7147 = vpop.f32.mrb[0].mxu0
    %7148 = vmatprep.mubr.f32.mxu0 %v7059
    %7149 = vmatmul.mubr.f32.gmra.mrb[0].mxu0 %v7023
    %v7150 = vpop.f32.mrb[0].mxu0
    %v7151 = vadd.f32 0.0, %v7150
    %v7152 = vpop.f32.mrb[0].mxu0
    %7153 = vmatprep.mubr.f32.mxu0 %v7062
    %7154 = vmatmul.mubr.f32.gmra.mrb[0].mxu0 %v7025
    %v7155 = vpop.f32.mrb[0].mxu0
    %v7156 = vadd.f32 0.0, %v7155
    %v7157 = vpop.f32.mrb[0].mxu0
    %7158 = vmatprep.mubr.f32.mxu0 %v7065
    %7159 = vmatmul.mubr.f32.gmra.mrb[0].mxu0 %v7027
    %v7160 = vpop.f32.mrb[0].mxu0
    %v7161 = vadd.f32 0.0, %v7160
    %v7162 = vpop.f32.mrb[0].mxu0
    %7163 = vmatprep.mubr.f32.mxu0 %v7068
    %7164 = vmatmul.mubr.f32.gmra.mrb[0].mxu0 %v7029
    %v7165 = vpop.f32.mrb[0].mxu0
    %v7166 = vadd.f32 0.0, %v7165
    %v7167 = vpop.f32.mrb[0].mxu0
    %7168 = vmatprep.mubr.f32.mxu0 %v7071
    %7169 = vmatmul.mubr.f32.gmra.mrb[0].mxu0 %v7031
    %v7170 = vpop.f32.mrb[0].mxu0
    %v7171 = vadd.f32 0.0, %v7170
    %v7172 = vpop.f32.mrb[0].mxu0
    %7173 = vmatprep.mubr.f32.mxu0 %v7074
    %7174 = vmatmul.mubr.f32.gmra.mrb[0].mxu0 %v7033
    %v7175 = vpop.f32.mrb[0].mxu0
    %v7176 = vadd.f32 0.0, %v7175
    %v7177 = vpop.f32.mrb[0].mxu0
    %7178 = vmatprep.mubr.f32.mxu0 %v7077
    %7179 = vmatmul.mubr.f32.gmra.mrb[0].mxu0 %v7035
    %v7180 = vpop.f32.mrb[0].mxu0
    %v7181 = vadd.f32 0.0, %v7180
    %v7182 = vpop.f32.mrb[0].mxu0
    %7183 = vdwg.mxu0
    %v7184 = vsel %vm540, %v7146, 0.0
    %7185 = vadd.xlane.f32.xlu0 %v7184
    %v7186 = vpop.xlane.xlu0 %7185
    %v7187 = vsel %vm540, %v7151, 0.0
    %7188 = vadd.xlane.f32.xlu0 %v7187
    %v7189 = vpop.xlane.xlu0 %7188
    %v7190 = vsel %vm540, %v7156, 0.0
    %7191 = vadd.xlane.f32.xlu0 %v7190
    %v7192 = vpop.xlane.xlu0 %7191
    %v7193 = vsel %vm540, %v7161, 0.0
    %7194 = vadd.xlane.f32.xlu0 %v7193
    %v7195 = vpop.xlane.xlu0 %7194
    %v7196 = vsel %vm540, %v7166, 0.0
    %7197 = vadd.xlane.f32.xlu0 %v7196
    %v7198 = vpop.xlane.xlu0 %7197
    %v7199 = vsel %vm540, %v7171, 0.0
    %7200 = vadd.xlane.f32.xlu0 %v7199
    %v7201 = vpop.xlane.xlu0 %7200
    %v7202 = vsel %vm540, %v7176, 0.0
    %7203 = vadd.xlane.f32.xlu0 %v7202
    %v7204 = vpop.xlane.xlu0 %7203
    %v7205 = vsel %vm540, %v7181, 0.0
    %7206 = vadd.xlane.f32.xlu0 %v7205
    %v7207 = vpop.xlane.xlu0 %7206
    %v7208 = vmul.f32 %v7186, %v5752
    %v7209 = vmul.f32 %v7189, %v5752
    %v7210 = vmul.f32 %v7192, %v5752
    %v7211 = vmul.f32 %v7195, %v5752
    %v7212 = vmul.f32 %v7198, %v5752
    %v7213 = vmul.f32 %v7201, %v5752
    %v7214 = vmul.f32 %v7204, %v5752
    %v7215 = vmul.f32 %v7207, %v5752
    %v7216 = vsub.f32 %v7146, %v7208
    %v7217 = vsub.f32 %v7151, %v7209
    %v7218 = vsub.f32 %v7156, %v7210
    %v7219 = vsub.f32 %v7161, %v7211
    %v7220 = vsub.f32 %v7166, %v7212
    %v7221 = vsub.f32 %v7171, %v7213
    %v7222 = vsub.f32 %v7176, %v7214
    %v7223 = vsub.f32 %v7181, %v7215
    %v7224 = vmul.f32 %v7216, %v7216
    %v7225 = vmul.f32 %v7217, %v7217
    %v7226 = vmul.f32 %v7218, %v7218
    %v7227 = vmul.f32 %v7219, %v7219
    %v7228 = vmul.f32 %v7220, %v7220
    %v7229 = vmul.f32 %v7221, %v7221
    %v7230 = vmul.f32 %v7222, %v7222
    %v7231 = vmul.f32 %v7223, %v7223
    %v7232 = vsel %vm540, %v7224, 0.0
    %7233 = vadd.xlane.f32.xlu0 %v7232
    %v7234 = vpop.xlane.xlu0 %7233
    %v7235 = vsel %vm540, %v7225, 0.0
    %7236 = vadd.xlane.f32.xlu0 %v7235
    %v7237 = vpop.xlane.xlu0 %7236
    %v7238 = vsel %vm540, %v7226, 0.0
    %7239 = vadd.xlane.f32.xlu0 %v7238
    %v7240 = vpop.xlane.xlu0 %7239
    %v7241 = vsel %vm540, %v7227, 0.0
    %7242 = vadd.xlane.f32.xlu0 %v7241
    %v7243 = vpop.xlane.xlu0 %7242
    %v7244 = vsel %vm540, %v7228, 0.0
    %7245 = vadd.xlane.f32.xlu0 %v7244
    %v7246 = vpop.xlane.xlu0 %7245
    %v7247 = vsel %vm540, %v7229, 0.0
    %7248 = vadd.xlane.f32.xlu0 %v7247
    %v7249 = vpop.xlane.xlu0 %7248
    %v7250 = vsel %vm540, %v7230, 0.0
    %7251 = vadd.xlane.f32.xlu0 %v7250
    %v7252 = vpop.xlane.xlu0 %7251
    %v7253 = vsel %vm540, %v7231, 0.0
    %7254 = vadd.xlane.f32.xlu0 %v7253
    %v7255 = vpop.xlane.xlu0 %7254
    %v7256 = vmul.f32 %v7234, %v5752
    %v7257 = vmul.f32 %v7237, %v5752
    %v7258 = vmul.f32 %v7240, %v5752
    %v7259 = vmul.f32 %v7243, %v5752
    %v7260 = vmul.f32 %v7246, %v5752
    %v7261 = vmul.f32 %v7249, %v5752
    %v7262 = vmul.f32 %v7252, %v5752
    %v7263 = vmul.f32 %v7255, %v5752
    %v7264 = vadd.f32 %v7256, 1e-05
    %v7265 = vadd.f32 %v7257, 1e-05
    %v7266 = vadd.f32 %v7258, 1e-05
    %v7267 = vadd.f32 %v7259, 1e-05
    %v7268 = vadd.f32 %v7260, 1e-05
    %v7269 = vadd.f32 %v7261, 1e-05
    %v7270 = vadd.f32 %v7262, 1e-05
    %v7271 = vadd.f32 %v7263, 1e-05
    %v7272 = vrsqrt.pop %v7264
    %v7273 = vrsqrt.pop %v7265
    %v7274 = vrsqrt.pop %v7266
    %v7275 = vrsqrt.pop %v7267
    %v7276 = vrsqrt.pop %v7268
    %v7277 = vrsqrt.pop %v7269
    %v7278 = vrsqrt.pop %v7270
    %v7279 = vrsqrt.pop %v7271
    %v7280 = vmul.f32 %v7216, %v7272
    %v7281 = vmul.f32 %v7217, %v7273
    %v7282 = vmul.f32 %v7218, %v7274
    %v7283 = vmul.f32 %v7219, %v7275
    %v7284 = vmul.f32 %v7220, %v7276
    %v7285 = vmul.f32 %v7221, %v7277
    %v7286 = vmul.f32 %v7222, %v7278
    %v7287 = vmul.f32 %v7223, %v7279
    %v7288 = vld [vmem:[%s99] sm:$0xff]
    %v7289 = vld [vmem:[%s99 + $0x8] sm:$0xff]
    %v7290 = vld [vmem:[%s99 + $0x10] sm:$0xff]
    %v7291 = vld [vmem:[%s99 + $0x18] sm:$0xff]
    %v7292 = vld [vmem:[%s99 + $0x20] sm:$0xff]
    %v7293 = vld [vmem:[%s99 + $0x28] sm:$0xff]
    %v7294 = vld [vmem:[%s99 + $0x30] sm:$0xff]
    %v7295 = vld [vmem:[%s99 + $0x38] sm:$0xff]
    %7297 = vset.pattern.permute.xlu0 0
    %7298 = vperm.xlu0 %7297, %v7288
    %v7299 = vpop.permute.xlu0 %7298
    %7302 = vset.pattern.permute.xlu0 0
    %7303 = vperm.xlu0 %7302, %v7289
    %v7304 = vpop.permute.xlu0 %7303
    %7307 = vset.pattern.permute.xlu0 0
    %7308 = vperm.xlu0 %7307, %v7290
    %v7309 = vpop.permute.xlu0 %7308
    %7312 = vset.pattern.permute.xlu0 0
    %7313 = vperm.xlu0 %7312, %v7291
    %v7314 = vpop.permute.xlu0 %7313
    %7317 = vset.pattern.permute.xlu0 0
    %7318 = vperm.xlu0 %7317, %v7292
    %v7319 = vpop.permute.xlu0 %7318
    %7322 = vset.pattern.permute.xlu0 0
    %7323 = vperm.xlu0 %7322, %v7293
    %v7324 = vpop.permute.xlu0 %7323
    %7327 = vset.pattern.permute.xlu0 0
    %7328 = vperm.xlu0 %7327, %v7294
    %v7329 = vpop.permute.xlu0 %7328
    %7332 = vset.pattern.permute.xlu0 0
    %7333 = vperm.xlu0 %7332, %v7295
    %v7334 = vpop.permute.xlu0 %7333
    %v7336 = vmul.f32 %v7280, %v7299
    %v7337 = vmul.f32 %v7281, %v7304
    %v7338 = vmul.f32 %v7282, %v7309
    %v7339 = vmul.f32 %v7283, %v7314
    %v7340 = vmul.f32 %v7284, %v7319
    %v7341 = vmul.f32 %v7285, %v7324
    %v7342 = vmul.f32 %v7286, %v7329
    %v7343 = vmul.f32 %v7287, %v7334
    %v7344 = vld [vmem:[%s101] sm:$0xff]
    %v7345 = vld [vmem:[%s101 + $0x8] sm:$0xff]
    %v7346 = vld [vmem:[%s101 + $0x10] sm:$0xff]
    %v7347 = vld [vmem:[%s101 + $0x18] sm:$0xff]
    %v7348 = vld [vmem:[%s101 + $0x20] sm:$0xff]
    %v7349 = vld [vmem:[%s101 + $0x28] sm:$0xff]
    %v7350 = vld [vmem:[%s101 + $0x30] sm:$0xff]
    %v7351 = vld [vmem:[%s101 + $0x38] sm:$0xff]
    %7353 = vset.pattern.permute.xlu0 0
    %7354 = vperm.xlu0 %7353, %v7344
    %v7355 = vpop.permute.xlu0 %7354
    %7358 = vset.pattern.permute.xlu0 0
    %7359 = vperm.xlu0 %7358, %v7345
    %v7360 = vpop.permute.xlu0 %7359
    %7363 = vset.pattern.permute.xlu0 0
    %7364 = vperm.xlu0 %7363, %v7346
    %v7365 = vpop.permute.xlu0 %7364
    %7368 = vset.pattern.permute.xlu0 0
    %7369 = vperm.xlu0 %7368, %v7347
    %v7370 = vpop.permute.xlu0 %7369
    %7373 = vset.pattern.permute.xlu0 0
    %7374 = vperm.xlu0 %7373, %v7348
    %v7375 = vpop.permute.xlu0 %7374
    %7378 = vset.pattern.permute.xlu0 0
    %7379 = vperm.xlu0 %7378, %v7349
    %v7380 = vpop.permute.xlu0 %7379
    %7383 = vset.pattern.permute.xlu0 0
    %7384 = vperm.xlu0 %7383, %v7350
    %v7385 = vpop.permute.xlu0 %7384
    %7388 = vset.pattern.permute.xlu0 0
    %7389 = vperm.xlu0 %7388, %v7351
    %v7390 = vpop.permute.xlu0 %7389
    %v7392 = vadd.f32 %v7336, %v7355
    %v7393 = vadd.f32 %v7337, %v7360
    %v7394 = vadd.f32 %v7338, %v7365
    %v7395 = vadd.f32 %v7339, %v7370
    %v7396 = vadd.f32 %v7340, %v7375
    %v7397 = vadd.f32 %v7341, %v7380
    %v7398 = vadd.f32 %v7342, %v7385
    %v7399 = vadd.f32 %v7343, %v7390
    %v7400 = vmul.f32 %v2694, %v6879
    %v7401 = vmul.f32 %v2694, %v6880
    %v7402 = vmul.f32 %v2700, %v7392
    %v7403 = vmul.f32 %v2700, %v7393
    %v7404 = vadd.f32 %v7400, %v7402
    %v7405 = vadd.f32 %v7401, %v7403
    %v7406 = vmul.f32 %v2710, %v7396
    %v7407 = vmul.f32 %v2710, %v7397
    %v7408 = vadd.f32 %v7404, %v7406
    %v7409 = vadd.f32 %v7405, %v7407
    %v7410 = vmul.f32 %v2720, %v7019
    %v7411 = vmul.f32 %v2720, %v7020
    %v7412 = vadd.f32 %v7408, %v7410
    %v7413 = vadd.f32 %v7409, %v7411
    %v7414 = vadd.f32 %v6893, %v7412
    %v7415 = vadd.f32 %v6894, %v7413
    %v7416 = vmul.f32 %v2734, %v6879
    %v7417 = vmul.f32 %v2734, %v6880
    %v7418 = vmul.f32 %v2740, %v7394
    %v7419 = vmul.f32 %v2740, %v7395
    %v7420 = vadd.f32 %v7416, %v7418
    %v7421 = vadd.f32 %v7417, %v7419
    %v7422 = vmul.f32 %v2762, %v7398
    %v7423 = vmul.f32 %v2762, %v7399
    %v7424 = vadd.f32 %v7420, %v7422
    %v7425 = vadd.f32 %v7421, %v7423
    %v7426 = vmul.f32 %v2784, %v7019
    %v7427 = vmul.f32 %v2784, %v7020
    %v7428 = vadd.f32 %v7424, %v7426
    %v7429 = vadd.f32 %v7425, %v7427
    %v7430 = vadd.f32 %v6907, %v7428
    %v7431 = vadd.f32 %v6908, %v7429
    %7434 = vrot.lane.b32.xlu0 %v7414, 5
    %v7435 = vpop.permute.xlu0 %7434
    %7436 = vrot.lane.b32.xlu0 %v7415, 5
    %v7437 = vpop.permute.xlu0 %7436
    %v7440 = vsel %vm5809, 0.0, %v7435
    %v7441 = vsel %vm5809, 0.0, %v7437
    %v7442 = vsel %vm5812, %v7440, 0.0
    %v7443 = vsel %vm5812, %v7441, 0.0
    %v7444 = vmul.f32 %v7442, %v5819
    %v7445 = vmul.f32 %v7443, %v5819
    %v7446 = vmul.f32 %v7442, %v5829
    %v7447 = vmul.f32 %v7443, %v5829
    %7450 = vrot.lane.b32.xlu0 %v7446, 127
    %v7451 = vpop.permute.xlu0 %7450
    %7452 = vrot.lane.b32.xlu0 %v7447, 127
    %v7453 = vpop.permute.xlu0 %7452
    %v7456 = vadd.f32 %v7444, %v7451
    %v7457 = vadd.f32 %v7445, %v7453
    %v7458 = vmul.f32 %v7442, %v5840
    %v7459 = vmul.f32 %v7443, %v5840
    %7462 = vrot.lane.b32.xlu0 %v7458, 126
    %v7463 = vpop.permute.xlu0 %7462
    %7464 = vrot.lane.b32.xlu0 %v7459, 126
    %v7465 = vpop.permute.xlu0 %7464
    %v7468 = vadd.f32 %v7456, %v7463
    %v7469 = vadd.f32 %v7457, %v7465
    %v7470 = vmul.f32 %v7442, %v5851
    %v7471 = vmul.f32 %v7443, %v5851
    %7474 = vrot.lane.b32.xlu0 %v7470, 124
    %v7475 = vpop.permute.xlu0 %7474
    %7476 = vrot.lane.b32.xlu0 %v7471, 124
    %v7477 = vpop.permute.xlu0 %7476
    %v7480 = vadd.f32 %v7468, %v7475
    %v7481 = vadd.f32 %v7469, %v7477
    %v7482 = vmul.f32 %v7442, %v5862
    %v7483 = vmul.f32 %v7443, %v5862
    %7486 = vrot.lane.b32.xlu0 %v7482, 123
    %v7487 = vpop.permute.xlu0 %7486
    %7488 = vrot.lane.b32.xlu0 %v7483, 123
    %v7489 = vpop.permute.xlu0 %7488
    %v7492 = vadd.f32 %v7480, %v7487
    %v7493 = vadd.f32 %v7481, %v7489
    %v7494 = vmul.f32 %v7442, %v5873
    %v7495 = vmul.f32 %v7443, %v5873
    %7498 = vrot.lane.b32.xlu0 %v7494, 122
    %v7499 = vpop.permute.xlu0 %7498
    %7500 = vrot.lane.b32.xlu0 %v7495, 122
    %v7501 = vpop.permute.xlu0 %7500
    %v7504 = vadd.f32 %v7492, %v7499
    %v7505 = vadd.f32 %v7493, %v7501
    %v7506 = vmul.f32 %v7442, %v5884
    %v7507 = vmul.f32 %v7443, %v5884
    %7510 = vrot.lane.b32.xlu0 %v7506, 120
    %v7511 = vpop.permute.xlu0 %7510
    %7512 = vrot.lane.b32.xlu0 %v7507, 120
    %v7513 = vpop.permute.xlu0 %7512
    %v7516 = vadd.f32 %v7504, %v7511
    %v7517 = vadd.f32 %v7505, %v7513
    %v7518 = vmul.f32 %v7442, %v5895
    %v7519 = vmul.f32 %v7443, %v5895
    %7522 = vrot.lane.b32.xlu0 %v7518, 119
    %v7523 = vpop.permute.xlu0 %7522
    %7524 = vrot.lane.b32.xlu0 %v7519, 119
    %v7525 = vpop.permute.xlu0 %7524
    %v7528 = vadd.f32 %v7516, %v7523
    %v7529 = vadd.f32 %v7517, %v7525
    %v7530 = vmul.f32 %v7442, %v5906
    %v7531 = vmul.f32 %v7443, %v5906
    %7534 = vrot.lane.b32.xlu0 %v7530, 118
    %v7535 = vpop.permute.xlu0 %7534
    %7536 = vrot.lane.b32.xlu0 %v7531, 118
    %v7537 = vpop.permute.xlu0 %7536
    %v7540 = vadd.f32 %v7528, %v7535
    %v7541 = vadd.f32 %v7529, %v7537
    %v7542 = vmul.f32 %v7540, %v6336
    %v7543 = vmul.f32 %v7541, %v6336
    %v7544 = vld [vmem:[%s103] sm:$0xff]
    %v7545 = vld [vmem:[%s103 + $0x8] sm:$0xff]
    %v7546 = vld [vmem:[%s103 + $0x10] sm:$0xff]
    %v7547 = vld [vmem:[%s103 + $0x18] sm:$0xff]
    %v7548 = vld [vmem:[%s103 + $0x20] sm:$0xff]
    %v7549 = vld [vmem:[%s103 + $0x28] sm:$0xff]
    %v7550 = vld [vmem:[%s103 + $0x30] sm:$0xff]
    %v7551 = vld [vmem:[%s103 + $0x38] sm:$0xff]
    %v7552 = vmax.f32 %v7444, 0.0
    %v7553 = vmax.f32 %v7445, 0.0
    %v7554 = vmax.f32 %v7451, 0.0
    %v7555 = vmax.f32 %v7453, 0.0
    %v7556 = vmax.f32 %v7463, 0.0
    %v7557 = vmax.f32 %v7465, 0.0
    %v7558 = vmax.f32 %v7475, 0.0
    %v7559 = vmax.f32 %v7477, 0.0
    %v7560 = vmax.f32 %v7487, 0.0
    %v7561 = vmax.f32 %v7489, 0.0
    %v7562 = vmax.f32 %v7499, 0.0
    %v7563 = vmax.f32 %v7501, 0.0
    %v7564 = vmax.f32 %v7511, 0.0
    %v7565 = vmax.f32 %v7513, 0.0
    %v7566 = vmax.f32 %v7523, 0.0
    %v7567 = vmax.f32 %v7525, 0.0
    %v7568 = vmax.f32 %v7535, 0.0
    %v7569 = vmax.f32 %v7537, 0.0
    %v7571 = vsel %vm418, %v7545, 0
    %v7574 = vsel %vm418, %v7547, 0
    %v7577 = vsel %vm418, %v7549, 0
    %v7580 = vsel %vm418, %v7551, 0
    %7582 = vmatprep.subr.mxu0 0.0
    %7583 = vmatpush1.msra.mxu0 %v7552
    %7584 = vmatprep.subr.mxu0 0.0
    %7585 = vmatpush1.msra.mxu0 %v7553
    %7586 = vmatprep.subr.mxu0 0.0
    %7587 = vmatpush1.msra.mxu0 %v7554
    %7588 = vmatprep.subr.mxu0 0.0
    %7589 = vmatpush1.msra.mxu0 %v7555
    %7590 = vmatprep.subr.mxu0 0.0
    %7591 = vmatpush1.msra.mxu0 %v7556
    %7592 = vmatprep.subr.mxu0 0.0
    %7593 = vmatpush1.msra.mxu0 %v7557
    %7594 = vmatprep.subr.mxu0 0.0
    %7595 = vmatpush1.msra.mxu0 %v7558
    %7596 = vmatprep.subr.mxu0 0.0
    %7597 = vmatpush1.msra.mxu0 %v7559
    %7598 = vmatprep.subr.mxu0 0.0
    %7599 = vmatpush1.msra.mxu0 %v7560
    %7600 = vmatprep.subr.mxu0 0.0
    %7601 = vmatpush1.msra.mxu0 %v7561
    %7602 = vmatprep.subr.mxu0 0.0
    %7603 = vmatpush1.msra.mxu0 %v7562
    %7604 = vmatprep.subr.mxu0 0.0
    %7605 = vmatpush1.msra.mxu0 %v7563
    %7606 = vmatprep.subr.mxu0 0.0
    %7607 = vmatpush1.msra.mxu0 %v7564
    %7608 = vmatprep.subr.mxu0 0.0
    %7609 = vmatpush1.msra.mxu0 %v7565
    %7610 = vmatprep.subr.mxu0 0.0
    %7611 = vmatpush1.msra.mxu0 %v7566
    %7612 = vmatprep.subr.mxu0 0.0
    %7613 = vmatpush1.msra.mxu0 %v7567
    %7614 = vmatprep.subr.mxu0 0.0
    %7615 = vmatpush1.msra.mxu0 %v7568
    %7616 = vmatprep.subr.mxu0 0.0
    %7617 = vmatpush1.msra.mxu0 %v7569
    %7618 = vmatprep.subr.mxu0 0.0
    %7619 = vmatpush1.msra.mxu0 0.0
    %7620 = vmatprep.subr.mxu0 0.0
    %7621 = vmatpush1.msra.mxu0 0.0
    %7622 = vmatprep.subr.mxu0 0.0
    %7623 = vmatpush1.msra.mxu0 0.0
    %7624 = vmatprep.subr.mxu0 0.0
    %7625 = vmatpush1.msra.mxu0 0.0
    %7626 = vmatprep.subr.mxu0 0.0
    %7627 = vmatpush1.msra.mxu0 0.0
    %7628 = vmatprep.subr.mxu0 0.0
    %7629 = vmatpush1.msra.mxu0 0.0
    %7630 = vmatprep.subr.mxu0 0.0
    %7631 = vmatpush1.msra.mxu0 0.0
    %7632 = vmatprep.subr.mxu0 0.0
    %7633 = vmatpush1.msra.mxu0 0.0
    %7634 = vmatprep.subr.mxu0 0.0
    %7635 = vmatpush1.msra.mxu0 0.0
    %7636 = vmatprep.subr.mxu0 0.0
    %7637 = vmatpush1.msra.mxu0 0.0
    %7638 = vmatprep.subr.mxu0 0.0
    %7639 = vmatpush1.msra.mxu0 0.0
    %7640 = vmatprep.subr.mxu0 0.0
    %7641 = vmatpush1.msra.mxu0 0.0
    %7642 = vmatprep.subr.mxu0 0.0
    %7643 = vmatpush1.msra.mxu0 0.0
    %7644 = vmatprep.subr.mxu0 0.0
    %7645 = vmatpush1.msra.mxu0 0.0
    %7646 = vmatprep.mubr.f32.mxu0 %v7571
    %7647 = vmatmul.mubr.f32.gmra.mrb[0].mxu0 %v7544
    %v7648 = vpop.f32.mrb[0].mxu0
    %v7649 = vadd.f32 0.0, %v7648
    %v7650 = vpop.f32.mrb[0].mxu0
    %7651 = vmatprep.mubr.f32.mxu0 %v7574
    %7652 = vmatmul.mubr.f32.gmra.mrb[0].mxu0 %v7546
    %v7653 = vpop.f32.mrb[0].mxu0
    %v7654 = vadd.f32 0.0, %v7653
    %v7655 = vpop.f32.mrb[0].mxu0
    %7656 = vmatprep.mubr.f32.mxu0 %v7577
    %7657 = vmatmul.mubr.f32.gmra.mrb[0].mxu0 %v7548
    %v7658 = vpop.f32.mrb[0].mxu0
    %v7659 = vadd.f32 0.0, %v7658
    %v7660 = vpop.f32.mrb[0].mxu0
    %7661 = vmatprep.mubr.f32.mxu0 %v7580
    %7662 = vmatmul.mubr.f32.gmra.mrb[0].mxu0 %v7550
    %v7663 = vpop.f32.mrb[0].mxu0
    %v7664 = vadd.f32 0.0, %v7663
    %v7665 = vpop.f32.mrb[0].mxu0
    %7666 = vdwg.mxu0
    %v7667 = vsel %vm540, %v7649, 0.0
    %7668 = vadd.xlane.f32.xlu0 %v7667
    %v7669 = vpop.xlane.xlu0 %7668
    %v7670 = vsel %vm540, %v7654, 0.0
    %7671 = vadd.xlane.f32.xlu0 %v7670
    %v7672 = vpop.xlane.xlu0 %7671
    %v7673 = vsel %vm540, %v7659, 0.0
    %7674 = vadd.xlane.f32.xlu0 %v7673
    %v7675 = vpop.xlane.xlu0 %7674
    %v7676 = vsel %vm540, %v7664, 0.0
    %7677 = vadd.xlane.f32.xlu0 %v7676
    %v7678 = vpop.xlane.xlu0 %7677
    %v7679 = vmul.f32 %v7669, %v5752
    %v7680 = vmul.f32 %v7672, %v5752
    %v7681 = vmul.f32 %v7675, %v5752
    %v7682 = vmul.f32 %v7678, %v5752
    %v7683 = vsub.f32 %v7649, %v7679
    %v7684 = vsub.f32 %v7654, %v7680
    %v7685 = vsub.f32 %v7659, %v7681
    %v7686 = vsub.f32 %v7664, %v7682
    %v7687 = vmul.f32 %v7683, %v7683
    %v7688 = vmul.f32 %v7684, %v7684
    %v7689 = vmul.f32 %v7685, %v7685
    %v7690 = vmul.f32 %v7686, %v7686
    %v7691 = vsel %vm540, %v7687, 0.0
    %7692 = vadd.xlane.f32.xlu0 %v7691
    %v7693 = vpop.xlane.xlu0 %7692
    %v7694 = vsel %vm540, %v7688, 0.0
    %7695 = vadd.xlane.f32.xlu0 %v7694
    %v7696 = vpop.xlane.xlu0 %7695
    %v7697 = vsel %vm540, %v7689, 0.0
    %7698 = vadd.xlane.f32.xlu0 %v7697
    %v7699 = vpop.xlane.xlu0 %7698
    %v7700 = vsel %vm540, %v7690, 0.0
    %7701 = vadd.xlane.f32.xlu0 %v7700
    %v7702 = vpop.xlane.xlu0 %7701
    %v7703 = vmul.f32 %v7693, %v5752
    %v7704 = vmul.f32 %v7696, %v5752
    %v7705 = vmul.f32 %v7699, %v5752
    %v7706 = vmul.f32 %v7702, %v5752
    %v7707 = vadd.f32 %v7703, 1e-05
    %v7708 = vadd.f32 %v7704, 1e-05
    %v7709 = vadd.f32 %v7705, 1e-05
    %v7710 = vadd.f32 %v7706, 1e-05
    %v7711 = vrsqrt.pop %v7707
    %v7712 = vrsqrt.pop %v7708
    %v7713 = vrsqrt.pop %v7709
    %v7714 = vrsqrt.pop %v7710
    %v7715 = vmul.f32 %v7683, %v7711
    %v7716 = vmul.f32 %v7684, %v7712
    %v7717 = vmul.f32 %v7685, %v7713
    %v7718 = vmul.f32 %v7686, %v7714
    %v7719 = vld [vmem:[%s105] sm:$0xff]
    %v7720 = vld [vmem:[%s105 + $0x8] sm:$0xff]
    %v7721 = vld [vmem:[%s105 + $0x10] sm:$0xff]
    %v7722 = vld [vmem:[%s105 + $0x18] sm:$0xff]
    %7724 = vset.pattern.permute.xlu0 0
    %7725 = vperm.xlu0 %7724, %v7719
    %v7726 = vpop.permute.xlu0 %7725
    %7729 = vset.pattern.permute.xlu0 0
    %7730 = vperm.xlu0 %7729, %v7720
    %v7731 = vpop.permute.xlu0 %7730
    %7734 = vset.pattern.permute.xlu0 0
    %7735 = vperm.xlu0 %7734, %v7721
    %v7736 = vpop.permute.xlu0 %7735
    %7739 = vset.pattern.permute.xlu0 0
    %7740 = vperm.xlu0 %7739, %v7722
    %v7741 = vpop.permute.xlu0 %7740
    %v7743 = vmul.f32 %v7715, %v7726
    %v7744 = vmul.f32 %v7716, %v7731
    %v7745 = vmul.f32 %v7717, %v7736
    %v7746 = vmul.f32 %v7718, %v7741
    %v7747 = vld [vmem:[%s107] sm:$0xff]
    %v7748 = vld [vmem:[%s107 + $0x8] sm:$0xff]
    %v7749 = vld [vmem:[%s107 + $0x10] sm:$0xff]
    %v7750 = vld [vmem:[%s107 + $0x18] sm:$0xff]
    %7752 = vset.pattern.permute.xlu0 0
    %7753 = vperm.xlu0 %7752, %v7747
    %v7754 = vpop.permute.xlu0 %7753
    %7757 = vset.pattern.permute.xlu0 0
    %7758 = vperm.xlu0 %7757, %v7748
    %v7759 = vpop.permute.xlu0 %7758
    %7762 = vset.pattern.permute.xlu0 0
    %7763 = vperm.xlu0 %7762, %v7749
    %v7764 = vpop.permute.xlu0 %7763
    %7767 = vset.pattern.permute.xlu0 0
    %7768 = vperm.xlu0 %7767, %v7750
    %v7769 = vpop.permute.xlu0 %7768
    %v7771 = vadd.f32 %v7743, %v7754
    %v7772 = vadd.f32 %v7744, %v7759
    %v7773 = vadd.f32 %v7745, %v7764
    %v7774 = vadd.f32 %v7746, %v7769
    %v7775 = vmul.f32 %v3416, %v7414
    %v7776 = vmul.f32 %v3416, %v7415
    %v7777 = vmul.f32 %v3422, %v7771
    %v7778 = vmul.f32 %v3422, %v7772
    %v7779 = vadd.f32 %v7775, %v7777
    %v7780 = vadd.f32 %v7776, %v7778
    %v7781 = vmul.f32 %v3432, %v7773
    %v7782 = vmul.f32 %v3432, %v7774
    %v7783 = vadd.f32 %v7779, %v7781
    %v7784 = vadd.f32 %v7780, %v7782
    %v7785 = vmul.f32 %v3454, %v7542
    %v7786 = vmul.f32 %v3454, %v7543
    %v7787 = vadd.f32 %v7783, %v7785
    %v7788 = vadd.f32 %v7784, %v7786
    %v7789 = vadd.f32 %v7430, %v7787
    %v7790 = vadd.f32 %v7431, %v7788
    %v7791 = vsel %vm540, %v7789, 0.0
    %7792 = vadd.xlane.f32.xlu0 %v7791
    %v7793 = vpop.xlane.xlu0 %7792
    %v7794 = vsel %vm540, %v7790, 0.0
    %7795 = vadd.xlane.f32.xlu0 %v7794
    %v7796 = vpop.xlane.xlu0 %7795
    %v7797 = vmul.f32 %v7793, %v5752
    %v7798 = vmul.f32 %v7796, %v5752
    %v7799 = vsub.f32 %v7789, %v7797
    %v7800 = vsub.f32 %v7790, %v7798
    %v7801 = vmul.f32 %v7799, %v7799
    %v7802 = vmul.f32 %v7800, %v7800
    %v7803 = vsel %vm540, %v7801, 0.0
    %7804 = vadd.xlane.f32.xlu0 %v7803
    %v7805 = vpop.xlane.xlu0 %7804
    %v7806 = vsel %vm540, %v7802, 0.0
    %7807 = vadd.xlane.f32.xlu0 %v7806
    %v7808 = vpop.xlane.xlu0 %7807
    %v7809 = vmul.f32 %v7805, %v5752
    %v7810 = vmul.f32 %v7808, %v5752
    %v7811 = vadd.f32 %v7809, 1e-05
    %v7812 = vadd.f32 %v7810, 1e-05
    %v7813 = vrsqrt.pop %v7811
    %v7814 = vrsqrt.pop %v7812
    %v7815 = vmul.f32 %v7799, %v7813
    %v7816 = vmul.f32 %v7800, %v7814
    %v7817 = vld [vmem:[%s109] sm:$0xff]
    %v7818 = vld [vmem:[%s109 + $0x8] sm:$0xff]
    %7820 = vset.pattern.permute.xlu0 0
    %7821 = vperm.xlu0 %7820, %v7817
    %v7822 = vpop.permute.xlu0 %7821
    %7825 = vset.pattern.permute.xlu0 0
    %7826 = vperm.xlu0 %7825, %v7818
    %v7827 = vpop.permute.xlu0 %7826
    %v7829 = vmul.f32 %v7815, %v7822
    %v7830 = vmul.f32 %v7816, %v7827
    %v7831 = vld [vmem:[%s111] sm:$0xff]
    %v7832 = vld [vmem:[%s111 + $0x8] sm:$0xff]
    %7834 = vset.pattern.permute.xlu0 0
    %7835 = vperm.xlu0 %7834, %v7831
    %v7836 = vpop.permute.xlu0 %7835
    %7839 = vset.pattern.permute.xlu0 0
    %7840 = vperm.xlu0 %7839, %v7832
    %v7841 = vpop.permute.xlu0 %7840
    %v7843 = vadd.f32 %v7829, %v7836
    %v7844 = vadd.f32 %v7830, %v7841
    %v7845 = vmax.f32 %v7843, 0.0
    %v7846 = vmax.f32 %v7844, 0.0
    %v7847 = vld [vmem:[%s113] sm:$0xff]
    %v7848 = vld [vmem:[%s113 + $0x8] sm:$0xff]
    %v7849 = vld [vmem:[%s113 + $0x10] sm:$0xff]
    %v7850 = vld [vmem:[%s113 + $0x18] sm:$0xff]
    %v7852 = vsel %vm540, %v7845, 0
    %v7855 = vsel %vm540, %v7846, 0
    %7857 = vmatprep.subr.mxu0 0.0
    %7858 = vmatpush1.msra.mxu0 %v7847
    %7859 = vmatprep.subr.mxu0 0.0
    %7860 = vmatpush1.msra.mxu0 %v7848
    %7861 = vmatprep.subr.mxu0 0.0
    %7862 = vmatpush1.msra.mxu0 %v7849
    %7863 = vmatprep.subr.mxu0 0.0
    %7864 = vmatpush1.msra.mxu0 %v7850
    %7865 = vmatprep.subr.mxu0 0.0
    %7866 = vmatpush1.msra.mxu0 0.0
    %7867 = vmatprep.subr.mxu0 0.0
    %7868 = vmatpush1.msra.mxu0 0.0
    %7869 = vmatprep.subr.mxu0 0.0
    %7870 = vmatpush1.msra.mxu0 0.0
    %7871 = vmatprep.subr.mxu0 0.0
    %7872 = vmatpush1.msra.mxu0 0.0
    %7873 = vmatprep.subr.mxu0 0.0
    %7874 = vmatpush1.msra.mxu0 0.0
    %7875 = vmatprep.subr.mxu0 0.0
    %7876 = vmatpush1.msra.mxu0 0.0
    %7877 = vmatprep.subr.mxu0 0.0
    %7878 = vmatpush1.msra.mxu0 0.0
    %7879 = vmatprep.subr.mxu0 0.0
    %7880 = vmatpush1.msra.mxu0 0.0
    %7881 = vmatprep.subr.mxu0 0.0
    %7882 = vmatpush1.msra.mxu0 0.0
    %7883 = vmatprep.subr.mxu0 0.0
    %7884 = vmatpush1.msra.mxu0 0.0
    %7885 = vmatprep.subr.mxu0 0.0
    %7886 = vmatpush1.msra.mxu0 0.0
    %7887 = vmatprep.subr.mxu0 0.0
    %7888 = vmatpush1.msra.mxu0 0.0
    %7889 = vmatprep.subr.mxu0 0.0
    %7890 = vmatpush1.msra.mxu0 0.0
    %7891 = vmatprep.subr.mxu0 0.0
    %7892 = vmatpush1.msra.mxu0 0.0
    %7893 = vmatprep.subr.mxu0 0.0
    %7894 = vmatpush1.msra.mxu0 0.0
    %7895 = vmatprep.subr.mxu0 0.0
    %7896 = vmatpush1.msra.mxu0 0.0
    %7897 = vmatprep.subr.mxu0 0.0
    %7898 = vmatpush1.msra.mxu0 0.0
    %7899 = vmatprep.subr.mxu0 0.0
    %7900 = vmatpush1.msra.mxu0 0.0
    %7901 = vmatprep.subr.mxu0 0.0
    %7902 = vmatpush1.msra.mxu0 0.0
    %7903 = vmatprep.subr.mxu0 0.0
    %7904 = vmatpush1.msra.mxu0 0.0
    %7905 = vmatprep.subr.mxu0 0.0
    %7906 = vmatpush1.msra.mxu0 0.0
    %7907 = vmatprep.subr.mxu0 0.0
    %7908 = vmatpush1.msra.mxu0 0.0
    %7909 = vmatprep.subr.mxu0 0.0
    %7910 = vmatpush1.msra.mxu0 0.0
    %7911 = vmatprep.subr.mxu0 0.0
    %7912 = vmatpush1.msra.mxu0 0.0
    %7913 = vmatprep.subr.mxu0 0.0
    %7914 = vmatpush1.msra.mxu0 0.0
    %7915 = vmatprep.subr.mxu0 0.0
    %7916 = vmatpush1.msra.mxu0 0.0
    %7917 = vmatprep.subr.mxu0 0.0
    %7918 = vmatpush1.msra.mxu0 0.0
    %7919 = vmatprep.subr.mxu0 0.0
    %7920 = vmatpush1.msra.mxu0 0.0
    %7921 = vmatprep.mubr.f32.mxu0 0.0
    %7922 = vmatmul.mubr.f32.gmra.mrb[0].mxu0 %v7852
    %v7923 = vpop.f32.mrb[0].mxu0
    %v7924 = vadd.f32 0.0, %v7923
    %v7925 = vpop.f32.mrb[0].mxu0
    %7926 = vmatprep.mubr.f32.mxu0 0.0
    %7927 = vmatmul.mubr.f32.gmra.mrb[0].mxu0 %v7855
    %v7928 = vpop.f32.mrb[0].mxu0
    %v7929 = vadd.f32 0.0, %v7928
    %v7930 = vpop.f32.mrb[0].mxu0
    %7931 = vdwg.mxu0
    %7932 = vst.msk [vmem:[%s119] sm:$0xff] %vm377, %v7924
    %7933 = vst.msk [vmem:[%s119 + $0x8] sm:$0xff] %vm377, %v7929
    %v7934 = vld [vmem:[%s115] sm:$0xff]
    %v7935 = vld [vmem:[%s115 + $0x8] sm:$0x3]
    %v7936 = vld [vmem:[%s117] sm:$0xff]
    %v7937 = vld [vmem:[%s117 + $0x8] sm:$0x3]
    %7939 = vset.pattern.permute.xlu0 0
    %7940 = vperm.xlu0 %7939, %v7936
    %v7941 = vpop.permute.xlu0 %7940
    %7944 = vset.pattern.permute.xlu0 0
    %7945 = vperm.xlu0 %7944, %v7937
    %v7946 = vpop.permute.xlu0 %7945
    %v7949 = vsel %vm418, %v7934, 0
    %v7952 = vsel %vm418, %v7935, 0
    %7954 = vmatprep.subr.mxu0 0.0
    %7955 = vmatpush1.msra.mxu0 %v7924
    %7956 = vmatprep.subr.mxu0 0.0
    %7957 = vmatpush1.msra.mxu0 %v7929
    %7958 = vmatprep.subr.mxu0 0.0
    %7959 = vmatpush1.msra.mxu0 0.0
    %7960 = vmatprep.subr.mxu0 0.0
    %7961 = vmatpush1.msra.mxu0 0.0
    %7962 = vmatprep.subr.mxu0 0.0
    %7963 = vmatpush1.msra.mxu0 0.0
    %7964 = vmatprep.subr.mxu0 0.0
    %7965 = vmatpush1.msra.mxu0 0.0
    %7966 = vmatprep.subr.mxu0 0.0
    %7967 = vmatpush1.msra.mxu0 0.0
    %7968 = vmatprep.subr.mxu0 0.0
    %7969 = vmatpush1.msra.mxu0 0.0
    %7970 = vmatprep.subr.mxu0 0.0
    %7971 = vmatpush1.msra.mxu0 0.0
    %7972 = vmatprep.subr.mxu0 0.0
    %7973 = vmatpush1.msra.mxu0 0.0
    %7974 = vmatprep.subr.mxu0 0.0
    %7975 = vmatpush1.msra.mxu0 0.0
    %7976 = vmatprep.subr.mxu0 0.0
    %7977 = vmatpush1.msra.mxu0 0.0
    %7978 = vmatprep.subr.mxu0 0.0
    %7979 = vmatpush1.msra.mxu0 0.0
    %7980 = vmatprep.subr.mxu0 0.0
    %7981 = vmatpush1.msra.mxu0 0.0
    %7982 = vmatprep.subr.mxu0 0.0
    %7983 = vmatpush1.msra.mxu0 0.0
    %7984 = vmatprep.subr.mxu0 0.0
    %7985 = vmatpush1.msra.mxu0 0.0
    %7986 = vmatprep.subr.mxu0 0.0
    %7987 = vmatpush1.msra.mxu0 0.0
    %7988 = vmatprep.subr.mxu0 0.0
    %7989 = vmatpush1.msra.mxu0 0.0
    %7990 = vmatprep.subr.mxu0 0.0
    %7991 = vmatpush1.msra.mxu0 0.0
    %7992 = vmatprep.subr.mxu0 0.0
    %7993 = vmatpush1.msra.mxu0 0.0
    %7994 = vmatprep.subr.mxu0 0.0
    %7995 = vmatpush1.msra.mxu0 0.0
    %7996 = vmatprep.subr.mxu0 0.0
    %7997 = vmatpush1.msra.mxu0 0.0
    %7998 = vmatprep.subr.mxu0 0.0
    %7999 = vmatpush1.msra.mxu0 0.0
    %8000 = vmatprep.subr.mxu0 0.0
    %8001 = vmatpush1.msra.mxu0 0.0
    %8002 = vmatprep.subr.mxu0 0.0
    %8003 = vmatpush1.msra.mxu0 0.0
    %8004 = vmatprep.subr.mxu0 0.0
    %8005 = vmatpush1.msra.mxu0 0.0
    %8006 = vmatprep.subr.mxu0 0.0
    %8007 = vmatpush1.msra.mxu0 0.0
    %8008 = vmatprep.subr.mxu0 0.0
    %8009 = vmatpush1.msra.mxu0 0.0
    %8010 = vmatprep.subr.mxu0 0.0
    %8011 = vmatpush1.msra.mxu0 0.0
    %8012 = vmatprep.subr.mxu0 0.0
    %8013 = vmatpush1.msra.mxu0 0.0
    %8014 = vmatprep.subr.mxu0 0.0
    %8015 = vmatpush1.msra.mxu0 0.0
    %8016 = vmatprep.subr.mxu0 0.0
    %8017 = vmatpush1.msra.mxu0 0.0
    %8018 = vmatprep.mubr.f32.mxu0 0.0
    %8019 = vmatmul.mubr.f32.gmra.mrb[0].mxu0 %v7949
    %v8020 = vpop.f32.mrb[0].mxu0
    %v8021 = vadd.f32 %v7941, %v8020
    %v8022 = vpop.f32.mrb[0].mxu0
    %8023 = vmatprep.mubr.f32.mxu0 0.0
    %8024 = vmatmul.mubr.f32.gmra.mrb[0].mxu0 %v7952
    %v8025 = vpop.f32.mrb[0].mxu0
    %v8026 = vadd.f32 %v7946, %v8025
    %v8027 = vpop.f32.mrb[0].mxu0
    %8028 = vdwg.mxu0
    %8029 = vst.msk [vmem:[%s121] sm:$0xff] %vm377, %v8021
    %vm8030 = vcmask 9216
    %8031 = vst.msk [vmem:[%s121 + $0x8] sm:$0x3] %vm8030, %v8026
    // Predicated region
    $region242: #{_lambda_.1} parent=1 // pred_check
      _
    $region243: #{_lambda_.1} parent=1 // pred_check_branch
      %8033 = sbr.rel (0) target = $region245
    $region244: #{_lambda_.1} parent=1 // pred_region
      _
    $region245: #{_lambda_.1} parent=1 // pred_fallthru
      _
    // Predicated region
    $region246: #{_lambda_.1} parent=1 // pred_check
      _
    $region247: #{_lambda_.1} parent=1 // pred_check_branch
      %8035 = sbr.rel (0) target = $region249
    $region248: #{_lambda_.1} parent=1 // pred_region
      _
    $region249: #{_lambda_.1} parent=1 // pred_fallthru
      _
    // Predicated region
    $region250: #{_lambda_.1} parent=1 // pred_check
      _
    $region251: #{_lambda_.1} parent=1 // pred_check_branch
      %8037 = sbr.rel (0) target = $region253
    $region252: #{_lambda_.1} parent=1 // pred_region
      _
    $region253: #{_lambda_.1} parent=1 // pred_fallthru
      _
    // Predicated region
    $region254: #{_lambda_.1} parent=1 // pred_check
      _
    $region255: #{_lambda_.1} parent=1 // pred_check_branch
      %8039 = sbr.rel (0) target = $region257
    $region256: #{_lambda_.1} parent=1 // pred_region
      _
    $region257: #{_lambda_.1} parent=1 // pred_fallthru
      _
    %8040 = vsyncpa [#allocation3], 1

</llo_original>
